<compile_context>
chip_gen: v7x
topology: tpu7x:2x2x1
jax: 0.10.0
libtpu: 0.0.40
codegen_flags: <defaults>
</compile_context>

<pallas_src>
import functools

import jax
import jax.numpy as jnp
from jax.experimental import pallas as pl
from jax.experimental.pallas import tpu as pltpu

NEG_BIG = -1e10
LN_EPS = 1e-5


# ---------------------------------------------------------------------------
# In-kernel helpers (trace into the Pallas kernel body)
# ---------------------------------------------------------------------------
def _layer_norm(x, g, b):
    mean = jnp.mean(x, axis=-1, keepdims=True)
    xc = x - mean                         # reused (saves one VPU subtract)
    var = jnp.mean(xc * xc, axis=-1, keepdims=True)
    return xc * jax.lax.rsqrt(var + LN_EPS) * g + b


def _mha(x_q, kh, vh, mask_add, wq, bq, wo, bo, n_heads, head_dim):
    """Multi-head attention with pre-projected, head-major K/V.

    x_q      : (Tq, H) f32 query rows (H = n_heads * head_dim)
    kh, vh   : (n_heads, Skv, head_dim) bf16, projected on the host
    mask_add : f32 additive mask broadcastable to (Tq, Skv)
    Returns (out (Tq, H) f32, attn (n_heads, Tq, Skv) f32).
    """
    Tq = x_q.shape[0]
    H = n_heads * head_dim
    bf16 = jnp.bfloat16

    # Q projection (1/sqrt(head_dim) already folded into wq/bq on the host).
    q = jnp.dot(x_q.astype(bf16), wq, preferred_element_type=jnp.float32) + bq
    qh = q.reshape(Tq, n_heads, head_dim).transpose(1, 0, 2).astype(bf16)

    energy = jnp.einsum("hqd,hkd->hqk", qh, kh,
                        preferred_element_type=jnp.float32)        # (nh,Tq,Skv)
    energy = energy + mask_add[None, :, :]

    # TODO(synk): for very long T/S, tile the key axis (online softmax) so the
    # (nh, Tq, Skv) intermediates stay bounded on v7x's 64 MiB VMEM.
    m = jnp.max(energy, axis=-1, keepdims=True)
    e = jnp.exp(energy - m)
    attn = e * pl.reciprocal(jnp.sum(e, axis=-1, keepdims=True), approx=True)

    ctx = jnp.einsum("hqk,hkd->hqd", attn.astype(bf16), vh,
                     preferred_element_type=jnp.float32)           # (nh,Tq,hd)
    ctx = ctx.transpose(1, 0, 2).reshape(Tq, H)                    # (Tq, H)

    out = jnp.dot(ctx.astype(bf16), wo, preferred_element_type=jnp.float32) + bo
    return out, attn


# ---------------------------------------------------------------------------
# Pallas kernel: one (batch, query-row block) step of the decoder layer
# ---------------------------------------------------------------------------
def decoder_layer_kernel(
    trg_ref, k_self_ref, v_self_ref, k_cross_ref, v_cross_ref,
    tmask_ref, emask_ref,
    wq1, bq1, wo1, bo1, g1, be1,
    wq2, bq2, wo2, bo2, g2, be2,
    w_ff1, b_ff1, w_ff2, b_ff2, g3, be3,
    out_ref, att_ref,
    *, n_heads, head_dim,
):
    x = trg_ref[0]                                   # (TQ, H) f32 query rows
    tmask_add = tmask_ref[0].astype(jnp.float32)     # (TQ, T) additive mask
    emask_add = emask_ref[0].astype(jnp.float32)     # (1, S)  additive mask

    # --- masked self-attention + residual + LayerNorm ---
    # TODO(synk): dropout layers are identity (inference-mode semantics).
    sa, _ = _mha(x, k_self_ref[0], v_self_ref[0], tmask_add,
                 wq1[...], bq1[...], wo1[...], bo1[...], n_heads, head_dim)
    x = _layer_norm(x + sa, g1[...], be1[...])

    # --- encoder-decoder cross attention + residual + LayerNorm ---
    ca, att = _mha(x, k_cross_ref[0], v_cross_ref[0], emask_add,
                   wq2[...], bq2[...], wo2[...], bo2[...], n_heads, head_dim)
    att_ref[0] = att.astype(att_ref.dtype)           # single all-heads store
    x = _layer_norm(x + ca, g2[...], be2[...])

    # --- position-wise feed-forward + residual + LayerNorm ---
    h1 = jnp.maximum(
        jnp.dot(x.astype(jnp.bfloat16), w_ff1[...],
                preferred_element_type=jnp.float32) + b_ff1[...], 0.0)
    ff = jnp.dot(h1.astype(jnp.bfloat16), w_ff2[...],
                 preferred_element_type=jnp.float32) + b_ff2[...]
    x = _layer_norm(x + ff, g3[...], be3[...])

    out_ref[0] = x.astype(out_ref.dtype)


# ---------------------------------------------------------------------------
# Host-side helpers
# ---------------------------------------------------------------------------
def _project_heads(x, w, b, n_heads, head_dim):
    """(x @ w + b) reshaped head-major (B, n_heads, L, head_dim) in bf16."""
    Bx, L, _ = x.shape
    y = (x @ w + b).reshape(Bx, L, n_heads, head_dim).transpose(0, 2, 1, 3)
    return y.astype(jnp.bfloat16)


def _estimate_vmem_bytes(T, S, H, pf_dim, n_heads, TQ, att_itemsize):
    """Rough resident-set estimate used to derive vmem_limit_bytes."""
    bf16, f32 = 2, 4
    weights = (4 * H * H + 2 * H * pf_dim) * bf16 + (10 * H + pf_dim) * f32
    acts = 2 * (                                  # double-buffered tiles
        2 * TQ * H * f32                          # query rows in + out tile
        + 2 * T * H * bf16                        # self-attn K/V heads
        + 2 * S * H * bf16                        # cross-attn K/V heads
        + TQ * T * bf16 + S * bf16                # additive masks
        + n_heads * TQ * S * att_itemsize)        # attention writeback tile
    scores = 2 * n_heads * TQ * max(T, S) * f32   # energy + probs
    ffn = TQ * pf_dim * f32
    return weights + acts + scores + ffn


# ---------------------------------------------------------------------------
# Host wrapper
# ---------------------------------------------------------------------------
def decoder_layer(trg, en_src, trg_mask, enc_mask, params, n_heads,
                  *, tq=None, att_dtype=jnp.float32):
    B, T, H = trg.shape
    S = en_src.shape[1]
    head_dim = H // n_heads
    pf_dim = params["w_ff1"].shape[1]
    bf16 = jnp.bfloat16

    # Query-row tiling: softmax rows are independent; K/V are pre-projected.
    # TODO(synk): prefer tq=256 on v6e (128 MiB VMEM, 256-wide MXU) when
    # T % 256 == 0; keep 128 on v5e/v7x.
    if tq is None:
        tq = T if T <= 128 else 128
    assert T % tq == 0, "T must be a multiple of the query tile"
    num_tq = T // tq

    # --- hoisted K/V projections: once per sequence, not per query tile ---
    k_self = _project_heads(trg, params["wk1"], params["bk1"], n_heads, head_dim)
    v_self = _project_heads(trg, params["wv1"], params["bv1"], n_heads, head_dim)
    k_cross = _project_heads(en_src, params["wk2"], params["bk2"], n_heads, head_dim)
    v_cross = _project_heads(en_src, params["wv2"], params["bv2"], n_heads, head_dim)

    # Additive masks in bf16 (half the DMA of int32, no in-kernel compare).
    tmask_add = jnp.where(trg_mask == 0, NEG_BIG, 0.0).astype(bf16)
    emask_add = jnp.where(enc_mask == 0, NEG_BIG, 0.0).astype(bf16)

    # Weight operands: bf16 matmul weights (f32 MXU accumulation), f32 biases
    # and LayerNorm params; 1/sqrt(head_dim) folded into the Q projections.
    scale = jnp.sqrt(jnp.float32(head_dim))
    flat = [
        (params["wq1"] / scale).astype(bf16), params["bq1"] / scale,
        params["wo1"].astype(bf16), params["bo1"], params["g1"], params["be1"],
        (params["wq2"] / scale).astype(bf16), params["bq2"] / scale,
        params["wo2"].astype(bf16), params["bo2"], params["g2"], params["be2"],
        params["w_ff1"].astype(bf16), params["b_ff1"],
        params["w_ff2"].astype(bf16), params["b_ff2"],
        params["g3"], params["be3"],
    ]

    def make_in_specs(single_buffer_weights):
        def wspec(arr):
            nd = arr.ndim
            idx = lambda b, t, _nd=nd: (0,) * _nd
            if single_buffer_weights:
                # Grid-invariant: one resident copy instead of a double buffer.
                return pl.BlockSpec(arr.shape, idx, pipeline_mode=pl.Buffered(1))
            return pl.BlockSpec(arr.shape, idx)

        return [
            pl.BlockSpec((1, tq, H), lambda b, t: (b, t, 0)),                 # query rows (f32)
            pl.BlockSpec((1, n_heads, T, head_dim), lambda b, t: (b, 0, 0, 0)),  # K self (bf16)
            pl.BlockSpec((1, n_heads, T, head_dim), lambda b, t: (b, 0, 0, 0)),  # V self (bf16)
            pl.BlockSpec((1, n_heads, S, head_dim), lambda b, t: (b, 0, 0, 0)),  # K cross (bf16)
            pl.BlockSpec((1, n_heads, S, head_dim), lambda b, t: (b, 0, 0, 0)),  # V cross (bf16)
            pl.BlockSpec((1, tq, T), lambda b, t: (b, t, 0)),                 # trg additive mask
            pl.BlockSpec((1, 1, S), lambda b, t: (b, 0, 0)),                  # enc additive mask
        ] + [wspec(a) for a in flat]

    out_specs = [
        pl.BlockSpec((1, tq, H), lambda b, t: (b, t, 0)),
        pl.BlockSpec((1, n_heads, tq, S), lambda b, t: (b, 0, t, 0)),
    ]
    out_shape = [
        jax.ShapeDtypeStruct((B, T, H), jnp.float32),
        jax.ShapeDtypeStruct((B, n_heads, T, S), att_dtype),
    ]

    # Derive the scoped-VMEM budget from the estimated resident set instead of
    # a flat constant; clamp to [32 MiB, 64 MiB] so it is safe on v7x.
    vmem_limit = int(min(64 * 1024 * 1024,
                         max(32 * 1024 * 1024,
                             1.5 * _estimate_vmem_bytes(
                                 T, S, H, pf_dim, n_heads, tq,
                                 jnp.dtype(att_dtype).itemsize))))

    kernel = functools.partial(decoder_layer_kernel,
                               n_heads=n_heads, head_dim=head_dim)

    def run(single_buffer_weights):
        return pl.pallas_call(
            kernel,
            grid=(B, num_tq),
            in_specs=make_in_specs(single_buffer_weights),
            out_specs=out_specs,
            out_shape=out_shape,
            compiler_params=pltpu.CompilerParams(
                dimension_semantics=("parallel", "parallel"),
                vmem_limit_bytes=vmem_limit),
        )(trg, k_self, v_self, k_cross, v_cross, tmask_add, emask_add, *flat)

    try:
        return run(True)
    except Exception:
        # TODO(synk): pl.Buffered(1) single-buffering of the grid-invariant
        # weights is not supported by every jax/Mosaic version; fall back to
        # the default (double-buffered) weight pipeline.
        return run(False)


# ---------------------------------------------------------------------------
# Deterministic parameter init (PyTorch nn.Linear-style uniform bounds)
# ---------------------------------------------------------------------------
def init_params(key, hid_dim, pf_dim):
    def linear(k, in_d, out_d):
        k1, k2 = jax.random.split(k)
        bound = 1.0 / (in_d ** 0.5)
        w = jax.random.uniform(k1, (in_d, out_d), jnp.float32, -bound, bound)
        b = jax.random.uniform(k2, (1, out_d), jnp.float32, -bound, bound)
        return w, b

    keys = jax.random.split(key, 10)
    p = {}
    p["wq1"], p["bq1"] = linear(keys[0], hid_dim, hid_dim)
    p["wk1"], p["bk1"] = linear(keys[1], hid_dim, hid_dim)
    p["wv1"], p["bv1"] = linear(keys[2], hid_dim, hid_dim)
    p["wo1"], p["bo1"] = linear(keys[3], hid_dim, hid_dim)
    p["wq2"], p["bq2"] = linear(keys[4], hid_dim, hid_dim)
    p["wk2"], p["bk2"] = linear(keys[5], hid_dim, hid_dim)
    p["wv2"], p["bv2"] = linear(keys[6], hid_dim, hid_dim)
    p["wo2"], p["bo2"] = linear(keys[7], hid_dim, hid_dim)
    p["w_ff1"], p["b_ff1"] = linear(keys[8], hid_dim, pf_dim)
    p["w_ff2"], p["b_ff2"] = linear(keys[9], pf_dim, hid_dim)
    for name in ("g1", "g2", "g3"):
        p[name] = jnp.ones((1, hid_dim), jnp.float32)
    for name in ("be1", "be2", "be3"):
        p[name] = jnp.zeros((1, hid_dim), jnp.float32)
    return p


# ---------------------------------------------------------------------------
# Pure-JAX reference (mirrors the PyTorch module, dropout = identity, f32)
# ---------------------------------------------------------------------------
def _mha_ref(xq, xkv, mask, wq, bq, wk, bk, wv, bv, wo, bo, n_heads):
    B, T, H = xq.shape
    S = xkv.shape[1]
    hd = H // n_heads
    Q = (xq @ wq + bq).reshape(B, T, n_heads, hd).transpose(0, 2, 1, 3)
    K = (xkv @ wk + bk).reshape(B, S, n_heads, hd).transpose(0, 2, 1, 3)
    V = (xkv @ wv + bv).reshape(B, S, n_heads, hd).transpose(0, 2, 1, 3)
    energy = jnp.einsum("bhtd,bhsd->bhts", Q, K) / jnp.sqrt(jnp.float32(hd))
    energy = jnp.where(mask[:, None] == 0, NEG_BIG, energy)
    att = jax.nn.softmax(energy, axis=-1)
    x = jnp.einsum("bhts,bhsd->bhtd", att, V).transpose(0, 2, 1, 3).reshape(B, T, H)
    return x @ wo + bo, att


def _ln_ref(x, g, b):
    mean = jnp.mean(x, axis=-1, keepdims=True)
    var = jnp.mean(jnp.square(x - mean), axis=-1, keepdims=True)
    return (x - mean) * jax.lax.rsqrt(var + LN_EPS) * g + b


def decoder_layer_ref(trg, en_src, trg_mask, enc_mask, p, n_heads):
    sa, _ = _mha_ref(trg, trg, trg_mask,
                     p["wq1"], p["bq1"], p["wk1"], p["bk1"],
                     p["wv1"], p["bv1"], p["wo1"], p["bo1"], n_heads)
    trg = _ln_ref(trg + sa, p["g1"], p["be1"])
    ca, att = _mha_ref(trg, en_src, enc_mask,
                       p["wq2"], p["bq2"], p["wk2"], p["bk2"],
                       p["wv2"], p["bv2"], p["wo2"], p["bo2"], n_heads)
    trg = _ln_ref(trg + ca, p["g2"], p["be2"])
    h1 = jnp.maximum(trg @ p["w_ff1"] + p["b_ff1"], 0.0)
    ff = h1 @ p["w_ff2"] + p["b_ff2"]
    trg = _ln_ref(trg + ff, p["g3"], p["be3"])
    return trg, att


# ---------------------------------------------------------------------------
if __name__ == "__main__":
    B, T, S = 2, 8, 16
    hid_dim, n_heads, pf_dim = 32, 4, 64

    key = jax.random.PRNGKey(0)
    k_trg, k_src, k_param = jax.random.split(key, 3)

    trg = jax.random.normal(k_trg, (B, T, hid_dim), jnp.float32)
    en_src = jax.random.normal(k_src, (B, S, hid_dim), jnp.float32)

    # causal target mask (1 = keep)
    trg_mask = jnp.broadcast_to(
        jnp.tril(jnp.ones((T, T), jnp.int32))[None], (B, T, T)
    ).astype(jnp.int32)
    # encoder mask: mask out last 3 source positions of batch element 1
    enc_mask = jnp.ones((B, 1, S), jnp.int32).at[1, 0, S - 3:].set(0)

    params = init_params(k_param, hid_dim, pf_dim)

    out, att = decoder_layer(trg, en_src, trg_mask, enc_mask, params, n_heads)
    out = jax.block_until_ready(out)
    att = jax.block_until_ready(att)

    ref_out, ref_att = decoder_layer_ref(trg, en_src, trg_mask, enc_mask,
                                         params, n_heads)

    assert out.shape == (B, T, hid_dim)
    assert att.shape == (B, n_heads, T, S)
    # Tolerances loosened vs the f32 reference: kernel uses bf16 MXU operands
    # (f32 accumulation) and an approximate-reciprocal softmax denominator.
    assert jnp.allclose(att, ref_att, atol=2e-2, rtol=2e-2), "attention mismatch"
    assert jnp.allclose(out, ref_out, atol=1e-1, rtol=1e-1), "output mismatch"

    print("KERNEL_OK")
</pallas_src>

<mosaic_0001>
module attributes {stable_mosaic.version = 11 : i64} {
  func.func @decoder_layer_kernel(%arg0: i32, %arg1: i32, %arg2: memref<1x8x32xf32, #tpu.memory_space<vmem>>, %arg3: memref<1x4x8x8xbf16, #tpu.memory_space<vmem>>, %arg4: memref<1x4x8x8xbf16, #tpu.memory_space<vmem>>, %arg5: memref<1x4x16x8xbf16, #tpu.memory_space<vmem>>, %arg6: memref<1x4x16x8xbf16, #tpu.memory_space<vmem>>, %arg7: memref<1x8x8xbf16, #tpu.memory_space<vmem>>, %arg8: memref<1x1x16xbf16, #tpu.memory_space<vmem>>, %arg9: memref<32x32xbf16, #tpu.memory_space<vmem>>, %arg10: memref<1x32xf32, #tpu.memory_space<vmem>>, %arg11: memref<32x32xbf16, #tpu.memory_space<vmem>>, %arg12: memref<1x32xf32, #tpu.memory_space<vmem>>, %arg13: memref<1x32xf32, #tpu.memory_space<vmem>>, %arg14: memref<1x32xf32, #tpu.memory_space<vmem>>, %arg15: memref<32x32xbf16, #tpu.memory_space<vmem>>, %arg16: memref<1x32xf32, #tpu.memory_space<vmem>>, %arg17: memref<32x32xbf16, #tpu.memory_space<vmem>>, %arg18: memref<1x32xf32, #tpu.memory_space<vmem>>, %arg19: memref<1x32xf32, #tpu.memory_space<vmem>>, %arg20: memref<1x32xf32, #tpu.memory_space<vmem>>, %arg21: memref<32x64xbf16, #tpu.memory_space<vmem>>, %arg22: memref<1x64xf32, #tpu.memory_space<vmem>>, %arg23: memref<64x32xbf16, #tpu.memory_space<vmem>>, %arg24: memref<1x32xf32, #tpu.memory_space<vmem>>, %arg25: memref<1x32xf32, #tpu.memory_space<vmem>>, %arg26: memref<1x32xf32, #tpu.memory_space<vmem>>, %arg27: memref<1x8x32xf32, #tpu.memory_space<vmem>>, %arg28: memref<1x4x8x16xf32, #tpu.memory_space<vmem>>) attributes {dimension_semantics = [#tpu.dimension_semantics<parallel>, #tpu.dimension_semantics<parallel>], iteration_bounds = array<i64: 2, 1>, scalar_prefetch = 0 : i64, scratch_operands = 0 : i64, tpu.core_type = #tpu.core_type<tc>, window_params = [{transform_indices = @transform_0, window_bounds = array<i64: 1, 8, 32>}, {transform_indices = @transform_1, window_bounds = array<i64: 1, 4, 8, 8>}, {transform_indices = @transform_2, window_bounds = array<i64: 1, 4, 8, 8>}, {transform_indices = @transform_3, window_bounds = array<i64: 1, 4, 16, 8>}, {transform_indices = @transform_4, window_bounds = array<i64: 1, 4, 16, 8>}, {transform_indices = @transform_5, window_bounds = array<i64: 1, 8, 8>}, {transform_indices = @transform_6, window_bounds = array<i64: 1, 1, 16>}, {pipeline_mode = #tpu.pipeline_mode<synchronous>, transform_indices = @transform_7, window_bounds = array<i64: 32, 32>}, {pipeline_mode = #tpu.pipeline_mode<synchronous>, transform_indices = @transform_8, window_bounds = array<i64: 1, 32>}, {pipeline_mode = #tpu.pipeline_mode<synchronous>, transform_indices = @transform_9, window_bounds = array<i64: 32, 32>}, {pipeline_mode = #tpu.pipeline_mode<synchronous>, transform_indices = @transform_10, window_bounds = array<i64: 1, 32>}, {pipeline_mode = #tpu.pipeline_mode<synchronous>, transform_indices = @transform_11, window_bounds = array<i64: 1, 32>}, {pipeline_mode = #tpu.pipeline_mode<synchronous>, transform_indices = @transform_12, window_bounds = array<i64: 1, 32>}, {pipeline_mode = #tpu.pipeline_mode<synchronous>, transform_indices = @transform_13, window_bounds = array<i64: 32, 32>}, {pipeline_mode = #tpu.pipeline_mode<synchronous>, transform_indices = @transform_14, window_bounds = array<i64: 1, 32>}, {pipeline_mode = #tpu.pipeline_mode<synchronous>, transform_indices = @transform_15, window_bounds = array<i64: 32, 32>}, {pipeline_mode = #tpu.pipeline_mode<synchronous>, transform_indices = @transform_16, window_bounds = array<i64: 1, 32>}, {pipeline_mode = #tpu.pipeline_mode<synchronous>, transform_indices = @transform_17, window_bounds = array<i64: 1, 32>}, {pipeline_mode = #tpu.pipeline_mode<synchronous>, transform_indices = @transform_18, window_bounds = array<i64: 1, 32>}, {pipeline_mode = #tpu.pipeline_mode<synchronous>, transform_indices = @transform_19, window_bounds = array<i64: 32, 64>}, {pipeline_mode = #tpu.pipeline_mode<synchronous>, transform_indices = @transform_20, window_bounds = array<i64: 1, 64>}, {pipeline_mode = #tpu.pipeline_mode<synchronous>, transform_indices = @transform_21, window_bounds = array<i64: 64, 32>}, {pipeline_mode = #tpu.pipeline_mode<synchronous>, transform_indices = @transform_22, window_bounds = array<i64: 1, 32>}, {pipeline_mode = #tpu.pipeline_mode<synchronous>, transform_indices = @transform_23, window_bounds = array<i64: 1, 32>}, {pipeline_mode = #tpu.pipeline_mode<synchronous>, transform_indices = @transform_24, window_bounds = array<i64: 1, 32>}, {transform_indices = @transform_25, window_bounds = array<i64: 1, 8, 32>}, {transform_indices = @transform_26, window_bounds = array<i64: 1, 4, 8, 16>}]} {
    %c0 = arith.constant 0 : index
    %c0_0 = arith.constant 0 : index
    %c0_1 = arith.constant 0 : index
    %0 = vector.load %arg2[%c0, %c0_0, %c0_1] : memref<1x8x32xf32, #tpu.memory_space<vmem>>, vector<1x8x32xf32>
    %1 = vector.shape_cast %0 : vector<1x8x32xf32> to vector<8x32xf32>
    %c0_2 = arith.constant 0 : index
    %c0_3 = arith.constant 0 : index
    %c0_4 = arith.constant 0 : index
    %2 = vector.load %arg7[%c0_2, %c0_3, %c0_4] : memref<1x8x8xbf16, #tpu.memory_space<vmem>>, vector<1x8x8xbf16>
    %3 = vector.shape_cast %2 : vector<1x8x8xbf16> to vector<8x8xbf16>
    %4 = arith.extf %3 : vector<8x8xbf16> to vector<8x8xf32>
    %c0_5 = arith.constant 0 : index
    %c0_6 = arith.constant 0 : index
    %c0_7 = arith.constant 0 : index
    %5 = vector.load %arg8[%c0_5, %c0_6, %c0_7] : memref<1x1x16xbf16, #tpu.memory_space<vmem>>, vector<1x1x16xbf16>
    %6 = vector.shape_cast %5 : vector<1x1x16xbf16> to vector<1x16xbf16>
    %7 = arith.extf %6 : vector<1x16xbf16> to vector<1x16xf32>
    %c0_8 = arith.constant 0 : index
    %c0_9 = arith.constant 0 : index
    %c0_10 = arith.constant 0 : index
    %c0_11 = arith.constant 0 : index
    %8 = vector.load %arg3[%c0_8, %c0_9, %c0_10, %c0_11] : memref<1x4x8x8xbf16, #tpu.memory_space<vmem>>, vector<1x4x8x8xbf16>
    %9 = vector.shape_cast %8 : vector<1x4x8x8xbf16> to vector<4x8x8xbf16>
    %c0_12 = arith.constant 0 : index
    %c0_13 = arith.constant 0 : index
    %c0_14 = arith.constant 0 : index
    %c0_15 = arith.constant 0 : index
    %10 = vector.load %arg4[%c0_12, %c0_13, %c0_14, %c0_15] : memref<1x4x8x8xbf16, #tpu.memory_space<vmem>>, vector<1x4x8x8xbf16>
    %11 = vector.shape_cast %10 : vector<1x4x8x8xbf16> to vector<4x8x8xbf16>
    %c0_16 = arith.constant 0 : index
    %c0_17 = arith.constant 0 : index
    %12 = vector.load %arg9[%c0_16, %c0_17] : memref<32x32xbf16, #tpu.memory_space<vmem>>, vector<32x32xbf16>
    %c0_18 = arith.constant 0 : index
    %c0_19 = arith.constant 0 : index
    %13 = vector.load %arg10[%c0_18, %c0_19] : memref<1x32xf32, #tpu.memory_space<vmem>>, vector<1x32xf32>
    %c0_20 = arith.constant 0 : index
    %c0_21 = arith.constant 0 : index
    %14 = vector.load %arg11[%c0_20, %c0_21] : memref<32x32xbf16, #tpu.memory_space<vmem>>, vector<32x32xbf16>
    %c0_22 = arith.constant 0 : index
    %c0_23 = arith.constant 0 : index
    %15 = vector.load %arg12[%c0_22, %c0_23] : memref<1x32xf32, #tpu.memory_space<vmem>>, vector<1x32xf32>
    %16 = arith.truncf %1 : vector<8x32xf32> to vector<8x32xbf16>
    %cst = arith.constant dense<0.000000e+00> : vector<8x32xf32>
    %17 = tpu.matmul %16, %12, %cst {dimension_numbers = #tpu.dot_dimension_numbers<[1], [0], [0], [1], [0, 0, 1, 1], [], []>} : vector<8x32xbf16>, vector<32x32xbf16>, vector<8x32xf32> -> vector<8x32xf32>
    %18 = vector.broadcast %13 : vector<1x32xf32> to vector<8x32xf32>
    %19 = arith.addf %17, %18 : vector<8x32xf32>
    %20 = vector.shape_cast %19 : vector<8x32xf32> to vector<8x4x8xf32>
    %21 = tpu.transpose %20, [1, 0, 2] : vector<8x4x8xf32> -> vector<4x8x8xf32>
    %22 = arith.truncf %21 : vector<4x8x8xf32> to vector<4x8x8xbf16>
    "tpu.trace_start"() <{level = 10 : i32, message = "hqd,hkd->hqk"}> : () -> ()
    %cst_24 = arith.constant dense<0.000000e+00> : vector<4x8x8xf32>
    %23 = tpu.matmul %22, %9, %cst_24 {dimension_numbers = #tpu.dot_dimension_numbers<[2], [2], [1], [1], [0, 0, 0, 1, 1, 1], [0], [0]>} : vector<4x8x8xbf16>, vector<4x8x8xbf16>, vector<4x8x8xf32> -> vector<4x8x8xf32>
    "tpu.trace_stop"() : () -> ()
    %24 = vector.shape_cast %4 : vector<8x8xf32> to vector<1x8x8xf32>
    %25 = vector.broadcast %24 : vector<1x8x8xf32> to vector<4x8x8xf32>
    %26 = arith.addf %23, %25 : vector<4x8x8xf32>
    %cst_25 = arith.constant dense<0xFF800000> : vector<4x8xf32>
    %27 = vector.multi_reduction <maximumf>, %26, %cst_25 [2] : vector<4x8x8xf32> to vector<4x8xf32>
    %28 = vector.shape_cast %27 : vector<4x8xf32> to vector<4x8x1xf32>
    %29 = vector.broadcast %28 : vector<4x8x1xf32> to vector<4x8x8xf32>
    %30 = arith.subf %26, %29 : vector<4x8x8xf32>
    %31 = math.exp %30 : vector<4x8x8xf32>
    %cst_26 = arith.constant dense<0.000000e+00> : vector<4x8xf32>
    %32 = vector.multi_reduction <add>, %31, %cst_26 [2] : vector<4x8x8xf32> to vector<4x8xf32>
    %33 = vector.shape_cast %32 : vector<4x8xf32> to vector<4x8x1xf32>
    %34 = tpu.reciprocal %33 {approx = true} : vector<4x8x1xf32> -> vector<4x8x1xf32>
    %35 = vector.broadcast %34 : vector<4x8x1xf32> to vector<4x8x8xf32>
    %36 = arith.mulf %31, %35 : vector<4x8x8xf32>
    %37 = arith.truncf %36 : vector<4x8x8xf32> to vector<4x8x8xbf16>
    "tpu.trace_start"() <{level = 10 : i32, message = "hqk,hkd->hqd"}> : () -> ()
    %cst_27 = arith.constant dense<0.000000e+00> : vector<4x8x8xf32>
    %38 = tpu.matmul %37, %11, %cst_27 {dimension_numbers = #tpu.dot_dimension_numbers<[2], [1], [1], [2], [0, 0, 0, 1, 1, 2], [0], [0]>} : vector<4x8x8xbf16>, vector<4x8x8xbf16>, vector<4x8x8xf32> -> vector<4x8x8xf32>
    "tpu.trace_stop"() : () -> ()
    %39 = tpu.transpose %38, [1, 0, 2] : vector<4x8x8xf32> -> vector<8x4x8xf32>
    %40 = vector.shape_cast %39 : vector<8x4x8xf32> to vector<8x32xf32>
    %41 = arith.truncf %40 : vector<8x32xf32> to vector<8x32xbf16>
    %cst_28 = arith.constant dense<0.000000e+00> : vector<8x32xf32>
    %42 = tpu.matmul %41, %14, %cst_28 {dimension_numbers = #tpu.dot_dimension_numbers<[1], [0], [0], [1], [0, 0, 1, 1], [], []>} : vector<8x32xbf16>, vector<32x32xbf16>, vector<8x32xf32> -> vector<8x32xf32>
    %43 = vector.broadcast %15 : vector<1x32xf32> to vector<8x32xf32>
    %44 = arith.addf %42, %43 : vector<8x32xf32>
    %45 = arith.addf %1, %44 : vector<8x32xf32>
    %c0_29 = arith.constant 0 : index
    %c0_30 = arith.constant 0 : index
    %46 = vector.load %arg13[%c0_29, %c0_30] : memref<1x32xf32, #tpu.memory_space<vmem>>, vector<1x32xf32>
    %c0_31 = arith.constant 0 : index
    %c0_32 = arith.constant 0 : index
    %47 = vector.load %arg14[%c0_31, %c0_32] : memref<1x32xf32, #tpu.memory_space<vmem>>, vector<1x32xf32>
    %cst_33 = arith.constant dense<0.000000e+00> : vector<8xf32>
    %48 = vector.multi_reduction <add>, %45, %cst_33 [1] : vector<8x32xf32> to vector<8xf32>
    %49 = vector.shape_cast %48 : vector<8xf32> to vector<8x1xf32>
    %cst_34 = arith.constant 3.200000e+01 : f32
    %50 = vector.broadcast %cst_34 : f32 to vector<8x1xf32>
    %51 = arith.divf %49, %50 : vector<8x1xf32>
    %52 = vector.broadcast %51 : vector<8x1xf32> to vector<8x32xf32>
    %53 = arith.subf %45, %52 : vector<8x32xf32>
    %54 = arith.mulf %53, %53 : vector<8x32xf32>
    %cst_35 = arith.constant dense<0.000000e+00> : vector<8xf32>
    %55 = vector.multi_reduction <add>, %54, %cst_35 [1] : vector<8x32xf32> to vector<8xf32>
    %56 = vector.shape_cast %55 : vector<8xf32> to vector<8x1xf32>
    %cst_36 = arith.constant 3.200000e+01 : f32
    %57 = vector.broadcast %cst_36 : f32 to vector<8x1xf32>
    %58 = arith.divf %56, %57 : vector<8x1xf32>
    %cst_37 = arith.constant 9.99999974E-6 : f32
    %59 = vector.broadcast %cst_37 : f32 to vector<8x1xf32>
    %60 = arith.addf %58, %59 : vector<8x1xf32>
    %61 = math.rsqrt %60 : vector<8x1xf32>
    %62 = vector.broadcast %61 : vector<8x1xf32> to vector<8x32xf32>
    %63 = arith.mulf %53, %62 : vector<8x32xf32>
    %64 = vector.broadcast %46 : vector<1x32xf32> to vector<8x32xf32>
    %65 = arith.mulf %63, %64 : vector<8x32xf32>
    %66 = vector.broadcast %47 : vector<1x32xf32> to vector<8x32xf32>
    %67 = arith.addf %65, %66 : vector<8x32xf32>
    %c0_38 = arith.constant 0 : index
    %c0_39 = arith.constant 0 : index
    %c0_40 = arith.constant 0 : index
    %c0_41 = arith.constant 0 : index
    %68 = vector.load %arg5[%c0_38, %c0_39, %c0_40, %c0_41] : memref<1x4x16x8xbf16, #tpu.memory_space<vmem>>, vector<1x4x16x8xbf16>
    %69 = vector.shape_cast %68 : vector<1x4x16x8xbf16> to vector<4x16x8xbf16>
    %c0_42 = arith.constant 0 : index
    %c0_43 = arith.constant 0 : index
    %c0_44 = arith.constant 0 : index
    %c0_45 = arith.constant 0 : index
    %70 = vector.load %arg6[%c0_42, %c0_43, %c0_44, %c0_45] : memref<1x4x16x8xbf16, #tpu.memory_space<vmem>>, vector<1x4x16x8xbf16>
    %71 = vector.shape_cast %70 : vector<1x4x16x8xbf16> to vector<4x16x8xbf16>
    %c0_46 = arith.constant 0 : index
    %c0_47 = arith.constant 0 : index
    %72 = vector.load %arg15[%c0_46, %c0_47] : memref<32x32xbf16, #tpu.memory_space<vmem>>, vector<32x32xbf16>
    %c0_48 = arith.constant 0 : index
    %c0_49 = arith.constant 0 : index
    %73 = vector.load %arg16[%c0_48, %c0_49] : memref<1x32xf32, #tpu.memory_space<vmem>>, vector<1x32xf32>
    %c0_50 = arith.constant 0 : index
    %c0_51 = arith.constant 0 : index
    %74 = vector.load %arg17[%c0_50, %c0_51] : memref<32x32xbf16, #tpu.memory_space<vmem>>, vector<32x32xbf16>
    %c0_52 = arith.constant 0 : index
    %c0_53 = arith.constant 0 : index
    %75 = vector.load %arg18[%c0_52, %c0_53] : memref<1x32xf32, #tpu.memory_space<vmem>>, vector<1x32xf32>
    %76 = arith.truncf %67 : vector<8x32xf32> to vector<8x32xbf16>
    %cst_54 = arith.constant dense<0.000000e+00> : vector<8x32xf32>
    %77 = tpu.matmul %76, %72, %cst_54 {dimension_numbers = #tpu.dot_dimension_numbers<[1], [0], [0], [1], [0, 0, 1, 1], [], []>} : vector<8x32xbf16>, vector<32x32xbf16>, vector<8x32xf32> -> vector<8x32xf32>
    %78 = vector.broadcast %73 : vector<1x32xf32> to vector<8x32xf32>
    %79 = arith.addf %77, %78 : vector<8x32xf32>
    %80 = vector.shape_cast %79 : vector<8x32xf32> to vector<8x4x8xf32>
    %81 = tpu.transpose %80, [1, 0, 2] : vector<8x4x8xf32> -> vector<4x8x8xf32>
    %82 = arith.truncf %81 : vector<4x8x8xf32> to vector<4x8x8xbf16>
    "tpu.trace_start"() <{level = 10 : i32, message = "hqd,hkd->hqk"}> : () -> ()
    %cst_55 = arith.constant dense<0.000000e+00> : vector<4x8x16xf32>
    %83 = tpu.matmul %82, %69, %cst_55 {dimension_numbers = #tpu.dot_dimension_numbers<[2], [2], [1], [1], [0, 0, 0, 1, 1, 1], [0], [0]>} : vector<4x8x8xbf16>, vector<4x16x8xbf16>, vector<4x8x16xf32> -> vector<4x8x16xf32>
    "tpu.trace_stop"() : () -> ()
    %84 = vector.shape_cast %7 : vector<1x16xf32> to vector<1x1x16xf32>
    %85 = vector.broadcast %84 : vector<1x1x16xf32> to vector<4x8x16xf32>
    %86 = arith.addf %83, %85 : vector<4x8x16xf32>
    %cst_56 = arith.constant dense<0xFF800000> : vector<4x8xf32>
    %87 = vector.multi_reduction <maximumf>, %86, %cst_56 [2] : vector<4x8x16xf32> to vector<4x8xf32>
    %88 = vector.shape_cast %87 : vector<4x8xf32> to vector<4x8x1xf32>
    %89 = vector.broadcast %88 : vector<4x8x1xf32> to vector<4x8x16xf32>
    %90 = arith.subf %86, %89 : vector<4x8x16xf32>
    %91 = math.exp %90 : vector<4x8x16xf32>
    %cst_57 = arith.constant dense<0.000000e+00> : vector<4x8xf32>
    %92 = vector.multi_reduction <add>, %91, %cst_57 [2] : vector<4x8x16xf32> to vector<4x8xf32>
    %93 = vector.shape_cast %92 : vector<4x8xf32> to vector<4x8x1xf32>
    %94 = tpu.reciprocal %93 {approx = true} : vector<4x8x1xf32> -> vector<4x8x1xf32>
    %95 = vector.broadcast %94 : vector<4x8x1xf32> to vector<4x8x16xf32>
    %96 = arith.mulf %91, %95 : vector<4x8x16xf32>
    %97 = arith.truncf %96 : vector<4x8x16xf32> to vector<4x8x16xbf16>
    "tpu.trace_start"() <{level = 10 : i32, message = "hqk,hkd->hqd"}> : () -> ()
    %cst_58 = arith.constant dense<0.000000e+00> : vector<4x8x8xf32>
    %98 = tpu.matmul %97, %71, %cst_58 {dimension_numbers = #tpu.dot_dimension_numbers<[2], [1], [1], [2], [0, 0, 0, 1, 1, 2], [0], [0]>} : vector<4x8x16xbf16>, vector<4x16x8xbf16>, vector<4x8x8xf32> -> vector<4x8x8xf32>
    "tpu.trace_stop"() : () -> ()
    %99 = tpu.transpose %98, [1, 0, 2] : vector<4x8x8xf32> -> vector<8x4x8xf32>
    %100 = vector.shape_cast %99 : vector<8x4x8xf32> to vector<8x32xf32>
    %101 = arith.truncf %100 : vector<8x32xf32> to vector<8x32xbf16>
    %cst_59 = arith.constant dense<0.000000e+00> : vector<8x32xf32>
    %102 = tpu.matmul %101, %74, %cst_59 {dimension_numbers = #tpu.dot_dimension_numbers<[1], [0], [0], [1], [0, 0, 1, 1], [], []>} : vector<8x32xbf16>, vector<32x32xbf16>, vector<8x32xf32> -> vector<8x32xf32>
    %103 = vector.broadcast %75 : vector<1x32xf32> to vector<8x32xf32>
    %104 = arith.addf %102, %103 : vector<8x32xf32>
    %c0_60 = arith.constant 0 : index
    %c0_61 = arith.constant 0 : index
    %c0_62 = arith.constant 0 : index
    %c0_63 = arith.constant 0 : index
    %105 = vector.load %arg28[%c0_60, %c0_61, %c0_62, %c0_63] : memref<1x4x8x16xf32, #tpu.memory_space<vmem>>, vector<1x4x8x16xf32>
    %106 = vector.shape_cast %105 : vector<1x4x8x16xf32> to vector<4x8x16xf32>
    %107 = vector.shape_cast %96 : vector<4x8x16xf32> to vector<1x4x8x16xf32>
    tpu.vector_store %arg28[%c0_60, %c0_61, %c0_62, %c0_63], %107 {strides = array<i32>} : memref<1x4x8x16xf32, #tpu.memory_space<vmem>>, vector<1x4x8x16xf32>,
    %108 = arith.addf %67, %104 : vector<8x32xf32>
    %c0_64 = arith.constant 0 : index
    %c0_65 = arith.constant 0 : index
    %109 = vector.load %arg19[%c0_64, %c0_65] : memref<1x32xf32, #tpu.memory_space<vmem>>, vector<1x32xf32>
    %c0_66 = arith.constant 0 : index
    %c0_67 = arith.constant 0 : index
    %110 = vector.load %arg20[%c0_66, %c0_67] : memref<1x32xf32, #tpu.memory_space<vmem>>, vector<1x32xf32>
    %cst_68 = arith.constant dense<0.000000e+00> : vector<8xf32>
    %111 = vector.multi_reduction <add>, %108, %cst_68 [1] : vector<8x32xf32> to vector<8xf32>
    %112 = vector.shape_cast %111 : vector<8xf32> to vector<8x1xf32>
    %cst_69 = arith.constant 3.200000e+01 : f32
    %113 = vector.broadcast %cst_69 : f32 to vector<8x1xf32>
    %114 = arith.divf %112, %113 : vector<8x1xf32>
    %115 = vector.broadcast %114 : vector<8x1xf32> to vector<8x32xf32>
    %116 = arith.subf %108, %115 : vector<8x32xf32>
    %117 = arith.mulf %116, %116 : vector<8x32xf32>
    %cst_70 = arith.constant dense<0.000000e+00> : vector<8xf32>
    %118 = vector.multi_reduction <add>, %117, %cst_70 [1] : vector<8x32xf32> to vector<8xf32>
    %119 = vector.shape_cast %118 : vector<8xf32> to vector<8x1xf32>
    %cst_71 = arith.constant 3.200000e+01 : f32
    %120 = vector.broadcast %cst_71 : f32 to vector<8x1xf32>
    %121 = arith.divf %119, %120 : vector<8x1xf32>
    %cst_72 = arith.constant 9.99999974E-6 : f32
    %122 = vector.broadcast %cst_72 : f32 to vector<8x1xf32>
    %123 = arith.addf %121, %122 : vector<8x1xf32>
    %124 = math.rsqrt %123 : vector<8x1xf32>
    %125 = vector.broadcast %124 : vector<8x1xf32> to vector<8x32xf32>
    %126 = arith.mulf %116, %125 : vector<8x32xf32>
    %127 = vector.broadcast %109 : vector<1x32xf32> to vector<8x32xf32>
    %128 = arith.mulf %126, %127 : vector<8x32xf32>
    %129 = vector.broadcast %110 : vector<1x32xf32> to vector<8x32xf32>
    %130 = arith.addf %128, %129 : vector<8x32xf32>
    %131 = arith.truncf %130 : vector<8x32xf32> to vector<8x32xbf16>
    %c0_73 = arith.constant 0 : index
    %c0_74 = arith.constant 0 : index
    %132 = vector.load %arg21[%c0_73, %c0_74] : memref<32x64xbf16, #tpu.memory_space<vmem>>, vector<32x64xbf16>
    %cst_75 = arith.constant dense<0.000000e+00> : vector<8x64xf32>
    %133 = tpu.matmul %131, %132, %cst_75 {dimension_numbers = #tpu.dot_dimension_numbers<[1], [0], [0], [1], [0, 0, 1, 1], [], []>} : vector<8x32xbf16>, vector<32x64xbf16>, vector<8x64xf32> -> vector<8x64xf32>
    %c0_76 = arith.constant 0 : index
    %c0_77 = arith.constant 0 : index
    %134 = vector.load %arg22[%c0_76, %c0_77] : memref<1x64xf32, #tpu.memory_space<vmem>>, vector<1x64xf32>
    %135 = vector.broadcast %134 : vector<1x64xf32> to vector<8x64xf32>
    %136 = arith.addf %133, %135 : vector<8x64xf32>
    %cst_78 = arith.constant 0.000000e+00 : f32
    %137 = vector.broadcast %cst_78 : f32 to vector<8x64xf32>
    %138 = arith.maximumf %136, %137 : vector<8x64xf32>
    %139 = arith.truncf %138 : vector<8x64xf32> to vector<8x64xbf16>
    %c0_79 = arith.constant 0 : index
    %c0_80 = arith.constant 0 : index
    %140 = vector.load %arg23[%c0_79, %c0_80] : memref<64x32xbf16, #tpu.memory_space<vmem>>, vector<64x32xbf16>
    %cst_81 = arith.constant dense<0.000000e+00> : vector<8x32xf32>
    %141 = tpu.matmul %139, %140, %cst_81 {dimension_numbers = #tpu.dot_dimension_numbers<[1], [0], [0], [1], [0, 0, 1, 1], [], []>} : vector<8x64xbf16>, vector<64x32xbf16>, vector<8x32xf32> -> vector<8x32xf32>
    %c0_82 = arith.constant 0 : index
    %c0_83 = arith.constant 0 : index
    %142 = vector.load %arg24[%c0_82, %c0_83] : memref<1x32xf32, #tpu.memory_space<vmem>>, vector<1x32xf32>
    %143 = vector.broadcast %142 : vector<1x32xf32> to vector<8x32xf32>
    %144 = arith.addf %141, %143 : vector<8x32xf32>
    %145 = arith.addf %130, %144 : vector<8x32xf32>
    %c0_84 = arith.constant 0 : index
    %c0_85 = arith.constant 0 : index
    %146 = vector.load %arg25[%c0_84, %c0_85] : memref<1x32xf32, #tpu.memory_space<vmem>>, vector<1x32xf32>
    %c0_86 = arith.constant 0 : index
    %c0_87 = arith.constant 0 : index
    %147 = vector.load %arg26[%c0_86, %c0_87] : memref<1x32xf32, #tpu.memory_space<vmem>>, vector<1x32xf32>
    %cst_88 = arith.constant dense<0.000000e+00> : vector<8xf32>
    %148 = vector.multi_reduction <add>, %145, %cst_88 [1] : vector<8x32xf32> to vector<8xf32>
    %149 = vector.shape_cast %148 : vector<8xf32> to vector<8x1xf32>
    %cst_89 = arith.constant 3.200000e+01 : f32
    %150 = vector.broadcast %cst_89 : f32 to vector<8x1xf32>
    %151 = arith.divf %149, %150 : vector<8x1xf32>
    %152 = vector.broadcast %151 : vector<8x1xf32> to vector<8x32xf32>
    %153 = arith.subf %145, %152 : vector<8x32xf32>
    %154 = arith.mulf %153, %153 : vector<8x32xf32>
    %cst_90 = arith.constant dense<0.000000e+00> : vector<8xf32>
    %155 = vector.multi_reduction <add>, %154, %cst_90 [1] : vector<8x32xf32> to vector<8xf32>
    %156 = vector.shape_cast %155 : vector<8xf32> to vector<8x1xf32>
    %cst_91 = arith.constant 3.200000e+01 : f32
    %157 = vector.broadcast %cst_91 : f32 to vector<8x1xf32>
    %158 = arith.divf %156, %157 : vector<8x1xf32>
    %cst_92 = arith.constant 9.99999974E-6 : f32
    %159 = vector.broadcast %cst_92 : f32 to vector<8x1xf32>
    %160 = arith.addf %158, %159 : vector<8x1xf32>
    %161 = math.rsqrt %160 : vector<8x1xf32>
    %162 = vector.broadcast %161 : vector<8x1xf32> to vector<8x32xf32>
    %163 = arith.mulf %153, %162 : vector<8x32xf32>
    %164 = vector.broadcast %146 : vector<1x32xf32> to vector<8x32xf32>
    %165 = arith.mulf %163, %164 : vector<8x32xf32>
    %166 = vector.broadcast %147 : vector<1x32xf32> to vector<8x32xf32>
    %167 = arith.addf %165, %166 : vector<8x32xf32>
    %c0_93 = arith.constant 0 : index
    %c0_94 = arith.constant 0 : index
    %c0_95 = arith.constant 0 : index
    %168 = vector.load %arg27[%c0_93, %c0_94, %c0_95] : memref<1x8x32xf32, #tpu.memory_space<vmem>>, vector<1x8x32xf32>
    %169 = vector.shape_cast %168 : vector<1x8x32xf32> to vector<8x32xf32>
    %170 = vector.shape_cast %167 : vector<8x32xf32> to vector<1x8x32xf32>
    tpu.vector_store %arg27[%c0_93, %c0_94, %c0_95], %170 {strides = array<i32>} : memref<1x8x32xf32, #tpu.memory_space<vmem>>, vector<1x8x32xf32>,
    return
  }
  func.func @transform_0(%arg0: i32, %arg1: i32) -> (i32, i32, i32) {
    %c0_i32 = arith.constant 0 : i32
    %c0_i32_0 = arith.constant 0 : i32
    return %arg0, %arg1, %c0_i32 : i32, i32, i32
  }
  func.func @transform_1(%arg0: i32, %arg1: i32) -> (i32, i32, i32, i32) {
    %c0_i32 = arith.constant 0 : i32
    %c0_i32_0 = arith.constant 0 : i32
    %c0_i32_1 = arith.constant 0 : i32
    %c0_i32_2 = arith.constant 0 : i32
    return %arg0, %c0_i32, %c0_i32_0, %c0_i32_1 : i32, i32, i32, i32
  }
  func.func @transform_2(%arg0: i32, %arg1: i32) -> (i32, i32, i32, i32) {
    %c0_i32 = arith.constant 0 : i32
    %c0_i32_0 = arith.constant 0 : i32
    %c0_i32_1 = arith.constant 0 : i32
    %c0_i32_2 = arith.constant 0 : i32
    return %arg0, %c0_i32, %c0_i32_0, %c0_i32_1 : i32, i32, i32, i32
  }
  func.func @transform_3(%arg0: i32, %arg1: i32) -> (i32, i32, i32, i32) {
    %c0_i32 = arith.constant 0 : i32
    %c0_i32_0 = arith.constant 0 : i32
    %c0_i32_1 = arith.constant 0 : i32
    %c0_i32_2 = arith.constant 0 : i32
    return %arg0, %c0_i32, %c0_i32_0, %c0_i32_1 : i32, i32, i32, i32
  }
  func.func @transform_4(%arg0: i32, %arg1: i32) -> (i32, i32, i32, i32) {
    %c0_i32 = arith.constant 0 : i32
    %c0_i32_0 = arith.constant 0 : i32
    %c0_i32_1 = arith.constant 0 : i32
    %c0_i32_2 = arith.constant 0 : i32
    return %arg0, %c0_i32, %c0_i32_0, %c0_i32_1 : i32, i32, i32, i32
  }
  func.func @transform_5(%arg0: i32, %arg1: i32) -> (i32, i32, i32) {
    %c0_i32 = arith.constant 0 : i32
    %c0_i32_0 = arith.constant 0 : i32
    return %arg0, %arg1, %c0_i32 : i32, i32, i32
  }
  func.func @transform_6(%arg0: i32, %arg1: i32) -> (i32, i32, i32) {
    %c0_i32 = arith.constant 0 : i32
    %c0_i32_0 = arith.constant 0 : i32
    %c0_i32_1 = arith.constant 0 : i32
    return %arg0, %c0_i32, %c0_i32_0 : i32, i32, i32
  }
  func.func @transform_7(%arg0: i32, %arg1: i32) -> (i32, i32) {
    %c0_i32 = arith.constant 0 : i32
    %c0_i32_0 = arith.constant 0 : i32
    %c0_i32_1 = arith.constant 0 : i32
    return %c0_i32, %c0_i32_0 : i32, i32
  }
  func.func @transform_8(%arg0: i32, %arg1: i32) -> (i32, i32) {
    %c0_i32 = arith.constant 0 : i32
    %c0_i32_0 = arith.constant 0 : i32
    %c0_i32_1 = arith.constant 0 : i32
    return %c0_i32, %c0_i32_0 : i32, i32
  }
  func.func @transform_9(%arg0: i32, %arg1: i32) -> (i32, i32) {
    %c0_i32 = arith.constant 0 : i32
    %c0_i32_0 = arith.constant 0 : i32
    %c0_i32_1 = arith.constant 0 : i32
    return %c0_i32, %c0_i32_0 : i32, i32
  }
  func.func @transform_10(%arg0: i32, %arg1: i32) -> (i32, i32) {
    %c0_i32 = arith.constant 0 : i32
    %c0_i32_0 = arith.constant 0 : i32
    %c0_i32_1 = arith.constant 0 : i32
    return %c0_i32, %c0_i32_0 : i32, i32
  }
  func.func @transform_11(%arg0: i32, %arg1: i32) -> (i32, i32) {
    %c0_i32 = arith.constant 0 : i32
    %c0_i32_0 = arith.constant 0 : i32
    %c0_i32_1 = arith.constant 0 : i32
    return %c0_i32, %c0_i32_0 : i32, i32
  }
  func.func @transform_12(%arg0: i32, %arg1: i32) -> (i32, i32) {
    %c0_i32 = arith.constant 0 : i32
    %c0_i32_0 = arith.constant 0 : i32
    %c0_i32_1 = arith.constant 0 : i32
    return %c0_i32, %c0_i32_0 : i32, i32
  }
  func.func @transform_13(%arg0: i32, %arg1: i32) -> (i32, i32) {
    %c0_i32 = arith.constant 0 : i32
    %c0_i32_0 = arith.constant 0 : i32
    %c0_i32_1 = arith.constant 0 : i32
    return %c0_i32, %c0_i32_0 : i32, i32
  }
  func.func @transform_14(%arg0: i32, %arg1: i32) -> (i32, i32) {
    %c0_i32 = arith.constant 0 : i32
    %c0_i32_0 = arith.constant 0 : i32
    %c0_i32_1 = arith.constant 0 : i32
    return %c0_i32, %c0_i32_0 : i32, i32
  }
  func.func @transform_15(%arg0: i32, %arg1: i32) -> (i32, i32) {
    %c0_i32 = arith.constant 0 : i32
    %c0_i32_0 = arith.constant 0 : i32
    %c0_i32_1 = arith.constant 0 : i32
    return %c0_i32, %c0_i32_0 : i32, i32
  }
  func.func @transform_16(%arg0: i32, %arg1: i32) -> (i32, i32) {
    %c0_i32 = arith.constant 0 : i32
    %c0_i32_0 = arith.constant 0 : i32
    %c0_i32_1 = arith.constant 0 : i32
    return %c0_i32, %c0_i32_0 : i32, i32
  }
  func.func @transform_17(%arg0: i32, %arg1: i32) -> (i32, i32) {
    %c0_i32 = arith.constant 0 : i32
    %c0_i32_0 = arith.constant 0 : i32
    %c0_i32_1 = arith.constant 0 : i32
    return %c0_i32, %c0_i32_0 : i32, i32
  }
  func.func @transform_18(%arg0: i32, %arg1: i32) -> (i32, i32) {
    %c0_i32 = arith.constant 0 : i32
    %c0_i32_0 = arith.constant 0 : i32
    %c0_i32_1 = arith.constant 0 : i32
    return %c0_i32, %c0_i32_0 : i32, i32
  }
  func.func @transform_19(%arg0: i32, %arg1: i32) -> (i32, i32) {
    %c0_i32 = arith.constant 0 : i32
    %c0_i32_0 = arith.constant 0 : i32
    %c0_i32_1 = arith.constant 0 : i32
    return %c0_i32, %c0_i32_0 : i32, i32
  }
  func.func @transform_20(%arg0: i32, %arg1: i32) -> (i32, i32) {
    %c0_i32 = arith.constant 0 : i32
    %c0_i32_0 = arith.constant 0 : i32
    %c0_i32_1 = arith.constant 0 : i32
    return %c0_i32, %c0_i32_0 : i32, i32
  }
  func.func @transform_21(%arg0: i32, %arg1: i32) -> (i32, i32) {
    %c0_i32 = arith.constant 0 : i32
    %c0_i32_0 = arith.constant 0 : i32
    %c0_i32_1 = arith.constant 0 : i32
    return %c0_i32, %c0_i32_0 : i32, i32
  }
  func.func @transform_22(%arg0: i32, %arg1: i32) -> (i32, i32) {
    %c0_i32 = arith.constant 0 : i32
    %c0_i32_0 = arith.constant 0 : i32
    %c0_i32_1 = arith.constant 0 : i32
    return %c0_i32, %c0_i32_0 : i32, i32
  }
  func.func @transform_23(%arg0: i32, %arg1: i32) -> (i32, i32) {
    %c0_i32 = arith.constant 0 : i32
    %c0_i32_0 = arith.constant 0 : i32
    %c0_i32_1 = arith.constant 0 : i32
    return %c0_i32, %c0_i32_0 : i32, i32
  }
  func.func @transform_24(%arg0: i32, %arg1: i32) -> (i32, i32) {
    %c0_i32 = arith.constant 0 : i32
    %c0_i32_0 = arith.constant 0 : i32
    %c0_i32_1 = arith.constant 0 : i32
    return %c0_i32, %c0_i32_0 : i32, i32
  }
  func.func @transform_25(%arg0: i32, %arg1: i32) -> (i32, i32, i32) {
    %c0_i32 = arith.constant 0 : i32
    %c0_i32_0 = arith.constant 0 : i32
    return %arg0, %arg1, %c0_i32 : i32, i32, i32
  }
  func.func @transform_26(%arg0: i32, %arg1: i32) -> (i32, i32, i32, i32) {
    %c0_i32 = arith.constant 0 : i32
    %c0_i32_0 = arith.constant 0 : i32
    %c0_i32_1 = arith.constant 0 : i32
    return %arg0, %c0_i32, %arg1, %c0_i32_0 : i32, i32, i32, i32
  }
}

module attributes {stable_mosaic.version = 11 : i64} {
  func.func @decoder_layer_kernel(%arg0: i32, %arg1: i32, %arg2: memref<1x8x32xf32, #tpu.memory_space<vmem>>, %arg3: memref<1x4x8x8xbf16, #tpu.memory_space<vmem>>, %arg4: memref<1x4x8x8xbf16, #tpu.memory_space<vmem>>, %arg5: memref<1x4x16x8xbf16, #tpu.memory_space<vmem>>, %arg6: memref<1x4x16x8xbf16, #tpu.memory_space<vmem>>, %arg7: memref<1x8x8xbf16, #tpu.memory_space<vmem>>, %arg8: memref<1x1x16xbf16, #tpu.memory_space<vmem>>, %arg9: memref<32x32xbf16, #tpu.memory_space<vmem>>, %arg10: memref<1x32xf32, #tpu.memory_space<vmem>>, %arg11: memref<32x32xbf16, #tpu.memory_space<vmem>>, %arg12: memref<1x32xf32, #tpu.memory_space<vmem>>, %arg13: memref<1x32xf32, #tpu.memory_space<vmem>>, %arg14: memref<1x32xf32, #tpu.memory_space<vmem>>, %arg15: memref<32x32xbf16, #tpu.memory_space<vmem>>, %arg16: memref<1x32xf32, #tpu.memory_space<vmem>>, %arg17: memref<32x32xbf16, #tpu.memory_space<vmem>>, %arg18: memref<1x32xf32, #tpu.memory_space<vmem>>, %arg19: memref<1x32xf32, #tpu.memory_space<vmem>>, %arg20: memref<1x32xf32, #tpu.memory_space<vmem>>, %arg21: memref<32x64xbf16, #tpu.memory_space<vmem>>, %arg22: memref<1x64xf32, #tpu.memory_space<vmem>>, %arg23: memref<64x32xbf16, #tpu.memory_space<vmem>>, %arg24: memref<1x32xf32, #tpu.memory_space<vmem>>, %arg25: memref<1x32xf32, #tpu.memory_space<vmem>>, %arg26: memref<1x32xf32, #tpu.memory_space<vmem>>, %arg27: memref<1x8x32xf32, #tpu.memory_space<vmem>>, %arg28: memref<1x4x8x16xf32, #tpu.memory_space<vmem>>) attributes {dimension_semantics = [#tpu.dimension_semantics<parallel>, #tpu.dimension_semantics<parallel>], iteration_bounds = array<i64: 2, 1>, scalar_prefetch = 0 : i64, scratch_operands = 0 : i64, tpu.core_type = #tpu.core_type<tc>, window_params = [{transform_indices = @transform_0, window_bounds = array<i64: 1, 8, 32>}, {transform_indices = @transform_1, window_bounds = array<i64: 1, 4, 8, 8>}, {transform_indices = @transform_2, window_bounds = array<i64: 1, 4, 8, 8>}, {transform_indices = @transform_3, window_bounds = array<i64: 1, 4, 16, 8>}, {transform_indices = @transform_4, window_bounds = array<i64: 1, 4, 16, 8>}, {transform_indices = @transform_5, window_bounds = array<i64: 1, 8, 8>}, {transform_indices = @transform_6, window_bounds = array<i64: 1, 1, 16>}, {pipeline_mode = #tpu.pipeline_mode<synchronous>, transform_indices = @transform_7, window_bounds = array<i64: 32, 32>}, {pipeline_mode = #tpu.pipeline_mode<synchronous>, transform_indices = @transform_8, window_bounds = array<i64: 1, 32>}, {pipeline_mode = #tpu.pipeline_mode<synchronous>, transform_indices = @transform_9, window_bounds = array<i64: 32, 32>}, {pipeline_mode = #tpu.pipeline_mode<synchronous>, transform_indices = @transform_10, window_bounds = array<i64: 1, 32>}, {pipeline_mode = #tpu.pipeline_mode<synchronous>, transform_indices = @transform_11, window_bounds = array<i64: 1, 32>}, {pipeline_mode = #tpu.pipeline_mode<synchronous>, transform_indices = @transform_12, window_bounds = array<i64: 1, 32>}, {pipeline_mode = #tpu.pipeline_mode<synchronous>, transform_indices = @transform_13, window_bounds = array<i64: 32, 32>}, {pipeline_mode = #tpu.pipeline_mode<synchronous>, transform_indices = @transform_14, window_bounds = array<i64: 1, 32>}, {pipeline_mode = #tpu.pipeline_mode<synchronous>, transform_indices = @transform_15, window_bounds = array<i64: 32, 32>}, {pipeline_mode = #tpu.pipeline_mode<synchronous>, transform_indices = @transform_16, window_bounds = array<i64: 1, 32>}, {pipeline_mode = #tpu.pipeline_mode<synchronous>, transform_indices = @transform_17, window_bounds = array<i64: 1, 32>}, {pipeline_mode = #tpu.pipeline_mode<synchronous>, transform_indices = @transform_18, window_bounds = array<i64: 1, 32>}, {pipeline_mode = #tpu.pipeline_mode<synchronous>, transform_indices = @transform_19, window_bounds = array<i64: 32, 64>}, {pipeline_mode = #tpu.pipeline_mode<synchronous>, transform_indices = @transform_20, window_bounds = array<i64: 1, 64>}, {pipeline_mode = #tpu.pipeline_mode<synchronous>, transform_indices = @transform_21, window_bounds = array<i64: 64, 32>}, {pipeline_mode = #tpu.pipeline_mode<synchronous>, transform_indices = @transform_22, window_bounds = array<i64: 1, 32>}, {pipeline_mode = #tpu.pipeline_mode<synchronous>, transform_indices = @transform_23, window_bounds = array<i64: 1, 32>}, {pipeline_mode = #tpu.pipeline_mode<synchronous>, transform_indices = @transform_24, window_bounds = array<i64: 1, 32>}, {transform_indices = @transform_25, window_bounds = array<i64: 1, 8, 32>}, {transform_indices = @transform_26, window_bounds = array<i64: 1, 4, 8, 16>}]} {
    %c0 = arith.constant 0 : index
    %c0_0 = arith.constant 0 : index
    %c0_1 = arith.constant 0 : index
    %0 = vector.load %arg2[%c0, %c0_0, %c0_1] : memref<1x8x32xf32, #tpu.memory_space<vmem>>, vector<1x8x32xf32>
    %1 = vector.shape_cast %0 : vector<1x8x32xf32> to vector<8x32xf32>
    %c0_2 = arith.constant 0 : index
    %c0_3 = arith.constant 0 : index
    %c0_4 = arith.constant 0 : index
    %2 = vector.load %arg7[%c0_2, %c0_3, %c0_4] : memref<1x8x8xbf16, #tpu.memory_space<vmem>>, vector<1x8x8xbf16>
    %3 = vector.shape_cast %2 : vector<1x8x8xbf16> to vector<8x8xbf16>
    %4 = arith.extf %3 : vector<8x8xbf16> to vector<8x8xf32>
    %c0_5 = arith.constant 0 : index
    %c0_6 = arith.constant 0 : index
    %c0_7 = arith.constant 0 : index
    %5 = vector.load %arg8[%c0_5, %c0_6, %c0_7] : memref<1x1x16xbf16, #tpu.memory_space<vmem>>, vector<1x1x16xbf16>
    %6 = vector.shape_cast %5 : vector<1x1x16xbf16> to vector<1x16xbf16>
    %7 = arith.extf %6 : vector<1x16xbf16> to vector<1x16xf32>
    %c0_8 = arith.constant 0 : index
    %c0_9 = arith.constant 0 : index
    %c0_10 = arith.constant 0 : index
    %c0_11 = arith.constant 0 : index
    %8 = vector.load %arg3[%c0_8, %c0_9, %c0_10, %c0_11] : memref<1x4x8x8xbf16, #tpu.memory_space<vmem>>, vector<1x4x8x8xbf16>
    %9 = vector.shape_cast %8 : vector<1x4x8x8xbf16> to vector<4x8x8xbf16>
    %c0_12 = arith.constant 0 : index
    %c0_13 = arith.constant 0 : index
    %c0_14 = arith.constant 0 : index
    %c0_15 = arith.constant 0 : index
    %10 = vector.load %arg4[%c0_12, %c0_13, %c0_14, %c0_15] : memref<1x4x8x8xbf16, #tpu.memory_space<vmem>>, vector<1x4x8x8xbf16>
    %11 = vector.shape_cast %10 : vector<1x4x8x8xbf16> to vector<4x8x8xbf16>
    %c0_16 = arith.constant 0 : index
    %c0_17 = arith.constant 0 : index
    %12 = vector.load %arg9[%c0_16, %c0_17] : memref<32x32xbf16, #tpu.memory_space<vmem>>, vector<32x32xbf16>
    %c0_18 = arith.constant 0 : index
    %c0_19 = arith.constant 0 : index
    %13 = vector.load %arg10[%c0_18, %c0_19] : memref<1x32xf32, #tpu.memory_space<vmem>>, vector<1x32xf32>
    %c0_20 = arith.constant 0 : index
    %c0_21 = arith.constant 0 : index
    %14 = vector.load %arg11[%c0_20, %c0_21] : memref<32x32xbf16, #tpu.memory_space<vmem>>, vector<32x32xbf16>
    %c0_22 = arith.constant 0 : index
    %c0_23 = arith.constant 0 : index
    %15 = vector.load %arg12[%c0_22, %c0_23] : memref<1x32xf32, #tpu.memory_space<vmem>>, vector<1x32xf32>
    %16 = arith.truncf %1 : vector<8x32xf32> to vector<8x32xbf16>
    %cst = arith.constant dense<0.000000e+00> : vector<8x32xf32>
    %17 = tpu.matmul %16, %12, %cst {dimension_numbers = #tpu.dot_dimension_numbers<[1], [0], [0], [1], [0, 0, 1, 1], [], []>} : vector<8x32xbf16>, vector<32x32xbf16>, vector<8x32xf32> -> vector<8x32xf32>
    %18 = vector.broadcast %13 : vector<1x32xf32> to vector<8x32xf32>
    %19 = arith.addf %17, %18 : vector<8x32xf32>
    %20 = vector.shape_cast %19 : vector<8x32xf32> to vector<8x4x8xf32>
    %21 = tpu.transpose %20, [1, 0, 2] : vector<8x4x8xf32> -> vector<4x8x8xf32>
    %22 = arith.truncf %21 : vector<4x8x8xf32> to vector<4x8x8xbf16>
    "tpu.trace_start"() <{level = 10 : i32, message = "hqd,hkd->hqk"}> : () -> ()
    %cst_24 = arith.constant dense<0.000000e+00> : vector<4x8x8xf32>
    %23 = tpu.matmul %22, %9, %cst_24 {dimension_numbers = #tpu.dot_dimension_numbers<[2], [2], [1], [1], [0, 0, 0, 1, 1, 1], [0], [0]>} : vector<4x8x8xbf16>, vector<4x8x8xbf16>, vector<4x8x8xf32> -> vector<4x8x8xf32>
    "tpu.trace_stop"() : () -> ()
    %24 = vector.shape_cast %4 : vector<8x8xf32> to vector<1x8x8xf32>
    %25 = vector.broadcast %24 : vector<1x8x8xf32> to vector<4x8x8xf32>
    %26 = arith.addf %23, %25 : vector<4x8x8xf32>
    %cst_25 = arith.constant dense<0xFF800000> : vector<4x8xf32>
    %27 = vector.multi_reduction <maximumf>, %26, %cst_25 [2] : vector<4x8x8xf32> to vector<4x8xf32>
    %28 = vector.shape_cast %27 : vector<4x8xf32> to vector<4x8x1xf32>
    %29 = vector.broadcast %28 : vector<4x8x1xf32> to vector<4x8x8xf32>
    %30 = arith.subf %26, %29 : vector<4x8x8xf32>
    %31 = math.exp %30 : vector<4x8x8xf32>
    %cst_26 = arith.constant dense<0.000000e+00> : vector<4x8xf32>
    %32 = vector.multi_reduction <add>, %31, %cst_26 [2] : vector<4x8x8xf32> to vector<4x8xf32>
    %33 = vector.shape_cast %32 : vector<4x8xf32> to vector<4x8x1xf32>
    %34 = tpu.reciprocal %33 {approx = true} : vector<4x8x1xf32> -> vector<4x8x1xf32>
    %35 = vector.broadcast %34 : vector<4x8x1xf32> to vector<4x8x8xf32>
    %36 = arith.mulf %31, %35 : vector<4x8x8xf32>
    %37 = arith.truncf %36 : vector<4x8x8xf32> to vector<4x8x8xbf16>
    "tpu.trace_start"() <{level = 10 : i32, message = "hqk,hkd->hqd"}> : () -> ()
    %cst_27 = arith.constant dense<0.000000e+00> : vector<4x8x8xf32>
    %38 = tpu.matmul %37, %11, %cst_27 {dimension_numbers = #tpu.dot_dimension_numbers<[2], [1], [1], [2], [0, 0, 0, 1, 1, 2], [0], [0]>} : vector<4x8x8xbf16>, vector<4x8x8xbf16>, vector<4x8x8xf32> -> vector<4x8x8xf32>
    "tpu.trace_stop"() : () -> ()
    %39 = tpu.transpose %38, [1, 0, 2] : vector<4x8x8xf32> -> vector<8x4x8xf32>
    %40 = vector.shape_cast %39 : vector<8x4x8xf32> to vector<8x32xf32>
    %41 = arith.truncf %40 : vector<8x32xf32> to vector<8x32xbf16>
    %cst_28 = arith.constant dense<0.000000e+00> : vector<8x32xf32>
    %42 = tpu.matmul %41, %14, %cst_28 {dimension_numbers = #tpu.dot_dimension_numbers<[1], [0], [0], [1], [0, 0, 1, 1], [], []>} : vector<8x32xbf16>, vector<32x32xbf16>, vector<8x32xf32> -> vector<8x32xf32>
    %43 = vector.broadcast %15 : vector<1x32xf32> to vector<8x32xf32>
    %44 = arith.addf %42, %43 : vector<8x32xf32>
    %45 = arith.addf %1, %44 : vector<8x32xf32>
    %c0_29 = arith.constant 0 : index
    %c0_30 = arith.constant 0 : index
    %46 = vector.load %arg13[%c0_29, %c0_30] : memref<1x32xf32, #tpu.memory_space<vmem>>, vector<1x32xf32>
    %c0_31 = arith.constant 0 : index
    %c0_32 = arith.constant 0 : index
    %47 = vector.load %arg14[%c0_31, %c0_32] : memref<1x32xf32, #tpu.memory_space<vmem>>, vector<1x32xf32>
    %cst_33 = arith.constant dense<0.000000e+00> : vector<8xf32>
    %48 = vector.multi_reduction <add>, %45, %cst_33 [1] : vector<8x32xf32> to vector<8xf32>
    %49 = vector.shape_cast %48 : vector<8xf32> to vector<8x1xf32>
    %cst_34 = arith.constant 3.200000e+01 : f32
    %50 = vector.broadcast %cst_34 : f32 to vector<8x1xf32>
    %51 = arith.divf %49, %50 : vector<8x1xf32>
    %52 = vector.broadcast %51 : vector<8x1xf32> to vector<8x32xf32>
    %53 = arith.subf %45, %52 : vector<8x32xf32>
    %54 = arith.mulf %53, %53 : vector<8x32xf32>
    %cst_35 = arith.constant dense<0.000000e+00> : vector<8xf32>
    %55 = vector.multi_reduction <add>, %54, %cst_35 [1] : vector<8x32xf32> to vector<8xf32>
    %56 = vector.shape_cast %55 : vector<8xf32> to vector<8x1xf32>
    %cst_36 = arith.constant 3.200000e+01 : f32
    %57 = vector.broadcast %cst_36 : f32 to vector<8x1xf32>
    %58 = arith.divf %56, %57 : vector<8x1xf32>
    %cst_37 = arith.constant 9.99999974E-6 : f32
    %59 = vector.broadcast %cst_37 : f32 to vector<8x1xf32>
    %60 = arith.addf %58, %59 : vector<8x1xf32>
    %61 = math.rsqrt %60 : vector<8x1xf32>
    %62 = vector.broadcast %61 : vector<8x1xf32> to vector<8x32xf32>
    %63 = arith.mulf %53, %62 : vector<8x32xf32>
    %64 = vector.broadcast %46 : vector<1x32xf32> to vector<8x32xf32>
    %65 = arith.mulf %63, %64 : vector<8x32xf32>
    %66 = vector.broadcast %47 : vector<1x32xf32> to vector<8x32xf32>
    %67 = arith.addf %65, %66 : vector<8x32xf32>
    %c0_38 = arith.constant 0 : index
    %c0_39 = arith.constant 0 : index
    %c0_40 = arith.constant 0 : index
    %c0_41 = arith.constant 0 : index
    %68 = vector.load %arg5[%c0_38, %c0_39, %c0_40, %c0_41] : memref<1x4x16x8xbf16, #tpu.memory_space<vmem>>, vector<1x4x16x8xbf16>
    %69 = vector.shape_cast %68 : vector<1x4x16x8xbf16> to vector<4x16x8xbf16>
    %c0_42 = arith.constant 0 : index
    %c0_43 = arith.constant 0 : index
    %c0_44 = arith.constant 0 : index
    %c0_45 = arith.constant 0 : index
    %70 = vector.load %arg6[%c0_42, %c0_43, %c0_44, %c0_45] : memref<1x4x16x8xbf16, #tpu.memory_space<vmem>>, vector<1x4x16x8xbf16>
    %71 = vector.shape_cast %70 : vector<1x4x16x8xbf16> to vector<4x16x8xbf16>
    %c0_46 = arith.constant 0 : index
    %c0_47 = arith.constant 0 : index
    %72 = vector.load %arg15[%c0_46, %c0_47] : memref<32x32xbf16, #tpu.memory_space<vmem>>, vector<32x32xbf16>
    %c0_48 = arith.constant 0 : index
    %c0_49 = arith.constant 0 : index
    %73 = vector.load %arg16[%c0_48, %c0_49] : memref<1x32xf32, #tpu.memory_space<vmem>>, vector<1x32xf32>
    %c0_50 = arith.constant 0 : index
    %c0_51 = arith.constant 0 : index
    %74 = vector.load %arg17[%c0_50, %c0_51] : memref<32x32xbf16, #tpu.memory_space<vmem>>, vector<32x32xbf16>
    %c0_52 = arith.constant 0 : index
    %c0_53 = arith.constant 0 : index
    %75 = vector.load %arg18[%c0_52, %c0_53] : memref<1x32xf32, #tpu.memory_space<vmem>>, vector<1x32xf32>
    %76 = arith.truncf %67 : vector<8x32xf32> to vector<8x32xbf16>
    %cst_54 = arith.constant dense<0.000000e+00> : vector<8x32xf32>
    %77 = tpu.matmul %76, %72, %cst_54 {dimension_numbers = #tpu.dot_dimension_numbers<[1], [0], [0], [1], [0, 0, 1, 1], [], []>} : vector<8x32xbf16>, vector<32x32xbf16>, vector<8x32xf32> -> vector<8x32xf32>
    %78 = vector.broadcast %73 : vector<1x32xf32> to vector<8x32xf32>
    %79 = arith.addf %77, %78 : vector<8x32xf32>
    %80 = vector.shape_cast %79 : vector<8x32xf32> to vector<8x4x8xf32>
    %81 = tpu.transpose %80, [1, 0, 2] : vector<8x4x8xf32> -> vector<4x8x8xf32>
    %82 = arith.truncf %81 : vector<4x8x8xf32> to vector<4x8x8xbf16>
    "tpu.trace_start"() <{level = 10 : i32, message = "hqd,hkd->hqk"}> : () -> ()
    %cst_55 = arith.constant dense<0.000000e+00> : vector<4x8x16xf32>
    %83 = tpu.matmul %82, %69, %cst_55 {dimension_numbers = #tpu.dot_dimension_numbers<[2], [2], [1], [1], [0, 0, 0, 1, 1, 1], [0], [0]>} : vector<4x8x8xbf16>, vector<4x16x8xbf16>, vector<4x8x16xf32> -> vector<4x8x16xf32>
    "tpu.trace_stop"() : () -> ()
    %84 = vector.shape_cast %7 : vector<1x16xf32> to vector<1x1x16xf32>
    %85 = vector.broadcast %84 : vector<1x1x16xf32> to vector<4x8x16xf32>
    %86 = arith.addf %83, %85 : vector<4x8x16xf32>
    %cst_56 = arith.constant dense<0xFF800000> : vector<4x8xf32>
    %87 = vector.multi_reduction <maximumf>, %86, %cst_56 [2] : vector<4x8x16xf32> to vector<4x8xf32>
    %88 = vector.shape_cast %87 : vector<4x8xf32> to vector<4x8x1xf32>
    %89 = vector.broadcast %88 : vector<4x8x1xf32> to vector<4x8x16xf32>
    %90 = arith.subf %86, %89 : vector<4x8x16xf32>
    %91 = math.exp %90 : vector<4x8x16xf32>
    %cst_57 = arith.constant dense<0.000000e+00> : vector<4x8xf32>
    %92 = vector.multi_reduction <add>, %91, %cst_57 [2] : vector<4x8x16xf32> to vector<4x8xf32>
    %93 = vector.shape_cast %92 : vector<4x8xf32> to vector<4x8x1xf32>
    %94 = tpu.reciprocal %93 {approx = true} : vector<4x8x1xf32> -> vector<4x8x1xf32>
    %95 = vector.broadcast %94 : vector<4x8x1xf32> to vector<4x8x16xf32>
    %96 = arith.mulf %91, %95 : vector<4x8x16xf32>
    %97 = arith.truncf %96 : vector<4x8x16xf32> to vector<4x8x16xbf16>
    "tpu.trace_start"() <{level = 10 : i32, message = "hqk,hkd->hqd"}> : () -> ()
    %cst_58 = arith.constant dense<0.000000e+00> : vector<4x8x8xf32>
    %98 = tpu.matmul %97, %71, %cst_58 {dimension_numbers = #tpu.dot_dimension_numbers<[2], [1], [1], [2], [0, 0, 0, 1, 1, 2], [0], [0]>} : vector<4x8x16xbf16>, vector<4x16x8xbf16>, vector<4x8x8xf32> -> vector<4x8x8xf32>
    "tpu.trace_stop"() : () -> ()
    %99 = tpu.transpose %98, [1, 0, 2] : vector<4x8x8xf32> -> vector<8x4x8xf32>
    %100 = vector.shape_cast %99 : vector<8x4x8xf32> to vector<8x32xf32>
    %101 = arith.truncf %100 : vector<8x32xf32> to vector<8x32xbf16>
    %cst_59 = arith.constant dense<0.000000e+00> : vector<8x32xf32>
    %102 = tpu.matmul %101, %74, %cst_59 {dimension_numbers = #tpu.dot_dimension_numbers<[1], [0], [0], [1], [0, 0, 1, 1], [], []>} : vector<8x32xbf16>, vector<32x32xbf16>, vector<8x32xf32> -> vector<8x32xf32>
    %103 = vector.broadcast %75 : vector<1x32xf32> to vector<8x32xf32>
    %104 = arith.addf %102, %103 : vector<8x32xf32>
    %c0_60 = arith.constant 0 : index
    %c0_61 = arith.constant 0 : index
    %c0_62 = arith.constant 0 : index
    %c0_63 = arith.constant 0 : index
    %105 = vector.load %arg28[%c0_60, %c0_61, %c0_62, %c0_63] : memref<1x4x8x16xf32, #tpu.memory_space<vmem>>, vector<1x4x8x16xf32>
    %106 = vector.shape_cast %105 : vector<1x4x8x16xf32> to vector<4x8x16xf32>
    %107 = vector.shape_cast %96 : vector<4x8x16xf32> to vector<1x4x8x16xf32>
    tpu.vector_store %arg28[%c0_60, %c0_61, %c0_62, %c0_63], %107 {strides = array<i32>} : memref<1x4x8x16xf32, #tpu.memory_space<vmem>>, vector<1x4x8x16xf32>,
    %108 = arith.addf %67, %104 : vector<8x32xf32>
    %c0_64 = arith.constant 0 : index
    %c0_65 = arith.constant 0 : index
    %109 = vector.load %arg19[%c0_64, %c0_65] : memref<1x32xf32, #tpu.memory_space<vmem>>, vector<1x32xf32>
    %c0_66 = arith.constant 0 : index
    %c0_67 = arith.constant 0 : index
    %110 = vector.load %arg20[%c0_66, %c0_67] : memref<1x32xf32, #tpu.memory_space<vmem>>, vector<1x32xf32>
    %cst_68 = arith.constant dense<0.000000e+00> : vector<8xf32>
    %111 = vector.multi_reduction <add>, %108, %cst_68 [1] : vector<8x32xf32> to vector<8xf32>
    %112 = vector.shape_cast %111 : vector<8xf32> to vector<8x1xf32>
    %cst_69 = arith.constant 3.200000e+01 : f32
    %113 = vector.broadcast %cst_69 : f32 to vector<8x1xf32>
    %114 = arith.divf %112, %113 : vector<8x1xf32>
    %115 = vector.broadcast %114 : vector<8x1xf32> to vector<8x32xf32>
    %116 = arith.subf %108, %115 : vector<8x32xf32>
    %117 = arith.mulf %116, %116 : vector<8x32xf32>
    %cst_70 = arith.constant dense<0.000000e+00> : vector<8xf32>
    %118 = vector.multi_reduction <add>, %117, %cst_70 [1] : vector<8x32xf32> to vector<8xf32>
    %119 = vector.shape_cast %118 : vector<8xf32> to vector<8x1xf32>
    %cst_71 = arith.constant 3.200000e+01 : f32
    %120 = vector.broadcast %cst_71 : f32 to vector<8x1xf32>
    %121 = arith.divf %119, %120 : vector<8x1xf32>
    %cst_72 = arith.constant 9.99999974E-6 : f32
    %122 = vector.broadcast %cst_72 : f32 to vector<8x1xf32>
    %123 = arith.addf %121, %122 : vector<8x1xf32>
    %124 = math.rsqrt %123 : vector<8x1xf32>
    %125 = vector.broadcast %124 : vector<8x1xf32> to vector<8x32xf32>
    %126 = arith.mulf %116, %125 : vector<8x32xf32>
    %127 = vector.broadcast %109 : vector<1x32xf32> to vector<8x32xf32>
    %128 = arith.mulf %126, %127 : vector<8x32xf32>
    %129 = vector.broadcast %110 : vector<1x32xf32> to vector<8x32xf32>
    %130 = arith.addf %128, %129 : vector<8x32xf32>
    %131 = arith.truncf %130 : vector<8x32xf32> to vector<8x32xbf16>
    %c0_73 = arith.constant 0 : index
    %c0_74 = arith.constant 0 : index
    %132 = vector.load %arg21[%c0_73, %c0_74] : memref<32x64xbf16, #tpu.memory_space<vmem>>, vector<32x64xbf16>
    %cst_75 = arith.constant dense<0.000000e+00> : vector<8x64xf32>
    %133 = tpu.matmul %131, %132, %cst_75 {dimension_numbers = #tpu.dot_dimension_numbers<[1], [0], [0], [1], [0, 0, 1, 1], [], []>} : vector<8x32xbf16>, vector<32x64xbf16>, vector<8x64xf32> -> vector<8x64xf32>
    %c0_76 = arith.constant 0 : index
    %c0_77 = arith.constant 0 : index
    %134 = vector.load %arg22[%c0_76, %c0_77] : memref<1x64xf32, #tpu.memory_space<vmem>>, vector<1x64xf32>
    %135 = vector.broadcast %134 : vector<1x64xf32> to vector<8x64xf32>
    %136 = arith.addf %133, %135 : vector<8x64xf32>
    %cst_78 = arith.constant 0.000000e+00 : f32
    %137 = vector.broadcast %cst_78 : f32 to vector<8x64xf32>
    %138 = arith.maximumf %136, %137 : vector<8x64xf32>
    %139 = arith.truncf %138 : vector<8x64xf32> to vector<8x64xbf16>
    %c0_79 = arith.constant 0 : index
    %c0_80 = arith.constant 0 : index
    %140 = vector.load %arg23[%c0_79, %c0_80] : memref<64x32xbf16, #tpu.memory_space<vmem>>, vector<64x32xbf16>
    %cst_81 = arith.constant dense<0.000000e+00> : vector<8x32xf32>
    %141 = tpu.matmul %139, %140, %cst_81 {dimension_numbers = #tpu.dot_dimension_numbers<[1], [0], [0], [1], [0, 0, 1, 1], [], []>} : vector<8x64xbf16>, vector<64x32xbf16>, vector<8x32xf32> -> vector<8x32xf32>
    %c0_82 = arith.constant 0 : index
    %c0_83 = arith.constant 0 : index
    %142 = vector.load %arg24[%c0_82, %c0_83] : memref<1x32xf32, #tpu.memory_space<vmem>>, vector<1x32xf32>
    %143 = vector.broadcast %142 : vector<1x32xf32> to vector<8x32xf32>
    %144 = arith.addf %141, %143 : vector<8x32xf32>
    %145 = arith.addf %130, %144 : vector<8x32xf32>
    %c0_84 = arith.constant 0 : index
    %c0_85 = arith.constant 0 : index
    %146 = vector.load %arg25[%c0_84, %c0_85] : memref<1x32xf32, #tpu.memory_space<vmem>>, vector<1x32xf32>
    %c0_86 = arith.constant 0 : index
    %c0_87 = arith.constant 0 : index
    %147 = vector.load %arg26[%c0_86, %c0_87] : memref<1x32xf32, #tpu.memory_space<vmem>>, vector<1x32xf32>
    %cst_88 = arith.constant dense<0.000000e+00> : vector<8xf32>
    %148 = vector.multi_reduction <add>, %145, %cst_88 [1] : vector<8x32xf32> to vector<8xf32>
    %149 = vector.shape_cast %148 : vector<8xf32> to vector<8x1xf32>
    %cst_89 = arith.constant 3.200000e+01 : f32
    %150 = vector.broadcast %cst_89 : f32 to vector<8x1xf32>
    %151 = arith.divf %149, %150 : vector<8x1xf32>
    %152 = vector.broadcast %151 : vector<8x1xf32> to vector<8x32xf32>
    %153 = arith.subf %145, %152 : vector<8x32xf32>
    %154 = arith.mulf %153, %153 : vector<8x32xf32>
    %cst_90 = arith.constant dense<0.000000e+00> : vector<8xf32>
    %155 = vector.multi_reduction <add>, %154, %cst_90 [1] : vector<8x32xf32> to vector<8xf32>
    %156 = vector.shape_cast %155 : vector<8xf32> to vector<8x1xf32>
    %cst_91 = arith.constant 3.200000e+01 : f32
    %157 = vector.broadcast %cst_91 : f32 to vector<8x1xf32>
    %158 = arith.divf %156, %157 : vector<8x1xf32>
    %cst_92 = arith.constant 9.99999974E-6 : f32
    %159 = vector.broadcast %cst_92 : f32 to vector<8x1xf32>
    %160 = arith.addf %158, %159 : vector<8x1xf32>
    %161 = math.rsqrt %160 : vector<8x1xf32>
    %162 = vector.broadcast %161 : vector<8x1xf32> to vector<8x32xf32>
    %163 = arith.mulf %153, %162 : vector<8x32xf32>
    %164 = vector.broadcast %146 : vector<1x32xf32> to vector<8x32xf32>
    %165 = arith.mulf %163, %164 : vector<8x32xf32>
    %166 = vector.broadcast %147 : vector<1x32xf32> to vector<8x32xf32>
    %167 = arith.addf %165, %166 : vector<8x32xf32>
    %c0_93 = arith.constant 0 : index
    %c0_94 = arith.constant 0 : index
    %c0_95 = arith.constant 0 : index
    %168 = vector.load %arg27[%c0_93, %c0_94, %c0_95] : memref<1x8x32xf32, #tpu.memory_space<vmem>>, vector<1x8x32xf32>
    %169 = vector.shape_cast %168 : vector<1x8x32xf32> to vector<8x32xf32>
    %170 = vector.shape_cast %167 : vector<8x32xf32> to vector<1x8x32xf32>
    tpu.vector_store %arg27[%c0_93, %c0_94, %c0_95], %170 {strides = array<i32>} : memref<1x8x32xf32, #tpu.memory_space<vmem>>, vector<1x8x32xf32>,
    return
  }
  func.func @transform_0(%arg0: i32, %arg1: i32) -> (i32, i32, i32) {
    %c0_i32 = arith.constant 0 : i32
    %c0_i32_0 = arith.constant 0 : i32
    return %arg0, %arg1, %c0_i32 : i32, i32, i32
  }
  func.func @transform_1(%arg0: i32, %arg1: i32) -> (i32, i32, i32, i32) {
    %c0_i32 = arith.constant 0 : i32
    %c0_i32_0 = arith.constant 0 : i32
    %c0_i32_1 = arith.constant 0 : i32
    %c0_i32_2 = arith.constant 0 : i32
    return %arg0, %c0_i32, %c0_i32_0, %c0_i32_1 : i32, i32, i32, i32
  }
  func.func @transform_2(%arg0: i32, %arg1: i32) -> (i32, i32, i32, i32) {
    %c0_i32 = arith.constant 0 : i32
    %c0_i32_0 = arith.constant 0 : i32
    %c0_i32_1 = arith.constant 0 : i32
    %c0_i32_2 = arith.constant 0 : i32
    return %arg0, %c0_i32, %c0_i32_0, %c0_i32_1 : i32, i32, i32, i32
  }
  func.func @transform_3(%arg0: i32, %arg1: i32) -> (i32, i32, i32, i32) {
    %c0_i32 = arith.constant 0 : i32
    %c0_i32_0 = arith.constant 0 : i32
    %c0_i32_1 = arith.constant 0 : i32
    %c0_i32_2 = arith.constant 0 : i32
    return %arg0, %c0_i32, %c0_i32_0, %c0_i32_1 : i32, i32, i32, i32
  }
  func.func @transform_4(%arg0: i32, %arg1: i32) -> (i32, i32, i32, i32) {
    %c0_i32 = arith.constant 0 : i32
    %c0_i32_0 = arith.constant 0 : i32
    %c0_i32_1 = arith.constant 0 : i32
    %c0_i32_2 = arith.constant 0 : i32
    return %arg0, %c0_i32, %c0_i32_0, %c0_i32_1 : i32, i32, i32, i32
  }
  func.func @transform_5(%arg0: i32, %arg1: i32) -> (i32, i32, i32) {
    %c0_i32 = arith.constant 0 : i32
    %c0_i32_0 = arith.constant 0 : i32
    return %arg0, %arg1, %c0_i32 : i32, i32, i32
  }
  func.func @transform_6(%arg0: i32, %arg1: i32) -> (i32, i32, i32) {
    %c0_i32 = arith.constant 0 : i32
    %c0_i32_0 = arith.constant 0 : i32
    %c0_i32_1 = arith.constant 0 : i32
    return %arg0, %c0_i32, %c0_i32_0 : i32, i32, i32
  }
  func.func @transform_7(%arg0: i32, %arg1: i32) -> (i32, i32) {
    %c0_i32 = arith.constant 0 : i32
    %c0_i32_0 = arith.constant 0 : i32
    %c0_i32_1 = arith.constant 0 : i32
    return %c0_i32, %c0_i32_0 : i32, i32
  }
  func.func @transform_8(%arg0: i32, %arg1: i32) -> (i32, i32) {
    %c0_i32 = arith.constant 0 : i32
    %c0_i32_0 = arith.constant 0 : i32
    %c0_i32_1 = arith.constant 0 : i32
    return %c0_i32, %c0_i32_0 : i32, i32
  }
  func.func @transform_9(%arg0: i32, %arg1: i32) -> (i32, i32) {
    %c0_i32 = arith.constant 0 : i32
    %c0_i32_0 = arith.constant 0 : i32
    %c0_i32_1 = arith.constant 0 : i32
    return %c0_i32, %c0_i32_0 : i32, i32
  }
  func.func @transform_10(%arg0: i32, %arg1: i32) -> (i32, i32) {
    %c0_i32 = arith.constant 0 : i32
    %c0_i32_0 = arith.constant 0 : i32
    %c0_i32_1 = arith.constant 0 : i32
    return %c0_i32, %c0_i32_0 : i32, i32
  }
  func.func @transform_11(%arg0: i32, %arg1: i32) -> (i32, i32) {
    %c0_i32 = arith.constant 0 : i32
    %c0_i32_0 = arith.constant 0 : i32
    %c0_i32_1 = arith.constant 0 : i32
    return %c0_i32, %c0_i32_0 : i32, i32
  }
  func.func @transform_12(%arg0: i32, %arg1: i32) -> (i32, i32) {
    %c0_i32 = arith.constant 0 : i32
    %c0_i32_0 = arith.constant 0 : i32
    %c0_i32_1 = arith.constant 0 : i32
    return %c0_i32, %c0_i32_0 : i32, i32
  }
  func.func @transform_13(%arg0: i32, %arg1: i32) -> (i32, i32) {
    %c0_i32 = arith.constant 0 : i32
    %c0_i32_0 = arith.constant 0 : i32
    %c0_i32_1 = arith.constant 0 : i32
    return %c0_i32, %c0_i32_0 : i32, i32
  }
  func.func @transform_14(%arg0: i32, %arg1: i32) -> (i32, i32) {
    %c0_i32 = arith.constant 0 : i32
    %c0_i32_0 = arith.constant 0 : i32
    %c0_i32_1 = arith.constant 0 : i32
    return %c0_i32, %c0_i32_0 : i32, i32
  }
  func.func @transform_15(%arg0: i32, %arg1: i32) -> (i32, i32) {
    %c0_i32 = arith.constant 0 : i32
    %c0_i32_0 = arith.constant 0 : i32
    %c0_i32_1 = arith.constant 0 : i32
    return %c0_i32, %c0_i32_0 : i32, i32
  }
  func.func @transform_16(%arg0: i32, %arg1: i32) -> (i32, i32) {
    %c0_i32 = arith.constant 0 : i32
    %c0_i32_0 = arith.constant 0 : i32
    %c0_i32_1 = arith.constant 0 : i32
    return %c0_i32, %c0_i32_0 : i32, i32
  }
  func.func @transform_17(%arg0: i32, %arg1: i32) -> (i32, i32) {
    %c0_i32 = arith.constant 0 : i32
    %c0_i32_0 = arith.constant 0 : i32
    %c0_i32_1 = arith.constant 0 : i32
    return %c0_i32, %c0_i32_0 : i32, i32
  }
  func.func @transform_18(%arg0: i32, %arg1: i32) -> (i32, i32) {
    %c0_i32 = arith.constant 0 : i32
    %c0_i32_0 = arith.constant 0 : i32
    %c0_i32_1 = arith.constant 0 : i32
    return %c0_i32, %c0_i32_0 : i32, i32
  }
  func.func @transform_19(%arg0: i32, %arg1: i32) -> (i32, i32) {
    %c0_i32 = arith.constant 0 : i32
    %c0_i32_0 = arith.constant 0 : i32
    %c0_i32_1 = arith.constant 0 : i32
    return %c0_i32, %c0_i32_0 : i32, i32
  }
  func.func @transform_20(%arg0: i32, %arg1: i32) -> (i32, i32) {
    %c0_i32 = arith.constant 0 : i32
    %c0_i32_0 = arith.constant 0 : i32
    %c0_i32_1 = arith.constant 0 : i32
    return %c0_i32, %c0_i32_0 : i32, i32
  }
  func.func @transform_21(%arg0: i32, %arg1: i32) -> (i32, i32) {
    %c0_i32 = arith.constant 0 : i32
    %c0_i32_0 = arith.constant 0 : i32
    %c0_i32_1 = arith.constant 0 : i32
    return %c0_i32, %c0_i32_0 : i32, i32
  }
  func.func @transform_22(%arg0: i32, %arg1: i32) -> (i32, i32) {
    %c0_i32 = arith.constant 0 : i32
    %c0_i32_0 = arith.constant 0 : i32
    %c0_i32_1 = arith.constant 0 : i32
    return %c0_i32, %c0_i32_0 : i32, i32
  }
  func.func @transform_23(%arg0: i32, %arg1: i32) -> (i32, i32) {
    %c0_i32 = arith.constant 0 : i32
    %c0_i32_0 = arith.constant 0 : i32
    %c0_i32_1 = arith.constant 0 : i32
    return %c0_i32, %c0_i32_0 : i32, i32
  }
  func.func @transform_24(%arg0: i32, %arg1: i32) -> (i32, i32) {
    %c0_i32 = arith.constant 0 : i32
    %c0_i32_0 = arith.constant 0 : i32
    %c0_i32_1 = arith.constant 0 : i32
    return %c0_i32, %c0_i32_0 : i32, i32
  }
  func.func @transform_25(%arg0: i32, %arg1: i32) -> (i32, i32, i32) {
    %c0_i32 = arith.constant 0 : i32
    %c0_i32_0 = arith.constant 0 : i32
    return %arg0, %arg1, %c0_i32 : i32, i32, i32
  }
  func.func @transform_26(%arg0: i32, %arg1: i32) -> (i32, i32, i32, i32) {
    %c0_i32 = arith.constant 0 : i32
    %c0_i32_0 = arith.constant 0 : i32
    %c0_i32_1 = arith.constant 0 : i32
    return %arg0, %c0_i32, %arg1, %c0_i32_0 : i32, i32, i32, i32
  }
}

</mosaic_0001>

<llo_original>
// kernel: tpu_custom_call.1
$region0: #{tpu_custom_call.1}
  #allocation0 [shape = 'u32[]', space=smem, size = 0x4, offset = 0x4, fixed_abs, tag = 'smem constant byte address 0x4 - core index']
  #allocation1 [shape = 'u32[144,128]{1,0:T(1,128)}', space=vmem, size = 0x12000, scoped, tag = 'internal scratch']
  %s0 = inlined_call_operand.vmem [shape: f32[2,8,32], index: 0, kind: input, shape index: {}]
  %s1 = inlined_call_operand.vmem [shape: bf16[2,4,8,8], index: 1, kind: input, shape index: {}]
  %s2 = inlined_call_operand.vmem [shape: bf16[2,4,8,8], index: 2, kind: input, shape index: {}]
  %s3 = inlined_call_operand.vmem [shape: bf16[2,4,16,8], index: 3, kind: input, shape index: {}]
  %s4 = inlined_call_operand.vmem [shape: bf16[2,4,16,8], index: 4, kind: input, shape index: {}]
  %s5 = inlined_call_operand.vmem [shape: bf16[2,8,8], index: 5, kind: input, shape index: {}]
  %s6 = inlined_call_operand.vmem [shape: bf16[2,1,16], index: 6, kind: input, shape index: {}]
  %s7 = inlined_call_operand.vmem [shape: bf16[32,32], index: 7, kind: input, shape index: {}]
  %s8 = inlined_call_operand.vmem [shape: f32[1,32], index: 8, kind: input, shape index: {}]
  %s9 = inlined_call_operand.vmem [shape: bf16[32,32], index: 9, kind: input, shape index: {}]
  %s10 = inlined_call_operand.vmem [shape: f32[1,32], index: 10, kind: input, shape index: {}]
  %s11 = inlined_call_operand.vmem [shape: f32[1,32], index: 11, kind: input, shape index: {}]
  %s12 = inlined_call_operand.vmem [shape: f32[1,32], index: 12, kind: input, shape index: {}]
  %s13 = inlined_call_operand.vmem [shape: bf16[32,32], index: 13, kind: input, shape index: {}]
  %s14 = inlined_call_operand.vmem [shape: f32[1,32], index: 14, kind: input, shape index: {}]
  %s15 = inlined_call_operand.vmem [shape: bf16[32,32], index: 15, kind: input, shape index: {}]
  %s16 = inlined_call_operand.vmem [shape: f32[1,32], index: 16, kind: input, shape index: {}]
  %s17 = inlined_call_operand.vmem [shape: f32[1,32], index: 17, kind: input, shape index: {}]
  %s18 = inlined_call_operand.vmem [shape: f32[1,32], index: 18, kind: input, shape index: {}]
  %s19 = inlined_call_operand.vmem [shape: bf16[32,64], index: 19, kind: input, shape index: {}]
  %s20 = inlined_call_operand.vmem [shape: f32[1,64], index: 20, kind: input, shape index: {}]
  %s21 = inlined_call_operand.vmem [shape: bf16[64,32], index: 21, kind: input, shape index: {}]
  %s22 = inlined_call_operand.vmem [shape: f32[1,32], index: 22, kind: input, shape index: {}]
  %s23 = inlined_call_operand.vmem [shape: f32[1,32], index: 23, kind: input, shape index: {}]
  %s24 = inlined_call_operand.vmem [shape: f32[1,32], index: 24, kind: input, shape index: {}]
  %s25 = inlined_call_operand.hbm [shape: f32[2,8,32], index: 25, kind: output, shape index: {0}]
  %s26 = inlined_call_operand.hbm [shape: f32[2,4,8,16], index: 26, kind: output, shape index: {1}]
  %27 = xla_tuple %s25, %s26
  %s28 = sld [smem:[#allocation0]]
  $region141: #{tpu_custom_call.1} parent=0
    _
  %s30 = ssub.s32 1, %s28
  %s31 = scalar_select 0, %s30, %s28
  $region1: #{tpu_custom_call.1} parent=0
    #allocation2 [shape = 'u8[8192]{0}', space=vmem, size = 0x2000, scoped, tag = 'output window, operand 0']
    #allocation3 [shape = 's32[2]{0}', space=sflag, size = 0x8, scoped, tag = 'scoped memory for tpu_custom_call.1']
    #allocation4 [shape = 'u8[32768]{0}', space=vmem, size = 0x8000, scoped, tag = 'output window, operand 1']
    #allocation5 [shape = 's32[2]{0}', space=sflag, size = 0x8, scoped, tag = 'scoped memory for tpu_custom_call.1']
    %32 = vsyncpa [#allocation3], 0
    %s33 = scalar_lea.sflag [#allocation3], 1
    %34 = vsyncpa %s33, 0
    %35 = vsyncpa [#allocation5], 0
    %s36 = scalar_lea.sflag [#allocation5], 1
    %37 = vsyncpa %s36, 0
    loop: start=0, step=1, limit=4
    $region2: #{tpu_custom_call.1} parent=1 // loop_pre_header
      _
    $region3: #{tpu_custom_call.1} parent=1 // loop_header
      %s39 = sphi 0, %s43
      %p40 = scmp.ge.s32.totalorder %s39, 4
      %s46 = sphi 0, %s58
      %s47 = sphi 0, %s54
      %s48 = sphi 0, %s46
      %s49 = sphi 0, %s47
      %s50 = sphi 0, %s48
      %s51 = sphi 0, %s49
      %s63 = sphi 0, %s65
      %s66 = sphi 0, %s63
      %s67 = sphi 0, %s66
      %s83 = sphi 0, %s67
      %s89 = sphi 0, %s91
      %s92 = sphi 0, %s89
      %s93 = sphi 0, %s92
      %s109 = sphi 0, %s93
      %s115 = sphi 0, %s117
      %s118 = sphi 0, %s115
      %s119 = sphi 0, %s118
      %s135 = sphi 0, %s119
      %s141 = sphi 0, %s143
      %s144 = sphi 0, %s141
      %s145 = sphi 0, %s144
      %s161 = sphi 0, %s145
      %s167 = sphi 0, %s169
      %s170 = sphi 0, %s167
      %s171 = sphi 0, %s170
      %s187 = sphi 0, %s171
      %s195 = sphi 0, %s197
      %s198 = sphi 0, %s195
      %s199 = sphi 0, %s198
      %s215 = sphi 0, %s199
      %s221 = sphi 0, %s223
      %s224 = sphi 0, %s221
      %s225 = sphi 0, %s224
      %s241 = sphi 0, %s225
      %s245 = sphi 0, %s245
      %s247 = sphi 0, %s245
      %s248 = sphi 0, %s247
      %s262 = sphi 0, %s248
      %s266 = sphi 0, %s266
      %s268 = sphi 0, %s266
      %s269 = sphi 0, %s268
      %s283 = sphi 0, %s269
      %s287 = sphi 0, %s287
      %s289 = sphi 0, %s287
      %s290 = sphi 0, %s289
      %s304 = sphi 0, %s290
      %s308 = sphi 0, %s308
      %s310 = sphi 0, %s308
      %s311 = sphi 0, %s310
      %s325 = sphi 0, %s311
      %s329 = sphi 0, %s329
      %s331 = sphi 0, %s329
      %s332 = sphi 0, %s331
      %s346 = sphi 0, %s332
      %s350 = sphi 0, %s350
      %s352 = sphi 0, %s350
      %s353 = sphi 0, %s352
      %s367 = sphi 0, %s353
      %s371 = sphi 0, %s371
      %s373 = sphi 0, %s371
      %s374 = sphi 0, %s373
      %s388 = sphi 0, %s374
      %s392 = sphi 0, %s392
      %s394 = sphi 0, %s392
      %s395 = sphi 0, %s394
      %s409 = sphi 0, %s395
      %s413 = sphi 0, %s413
      %s415 = sphi 0, %s413
      %s416 = sphi 0, %s415
      %s430 = sphi 0, %s416
      %s434 = sphi 0, %s434
      %s436 = sphi 0, %s434
      %s437 = sphi 0, %s436
      %s451 = sphi 0, %s437
      %s455 = sphi 0, %s455
      %s457 = sphi 0, %s455
      %s458 = sphi 0, %s457
      %s472 = sphi 0, %s458
      %s476 = sphi 0, %s476
      %s478 = sphi 0, %s476
      %s479 = sphi 0, %s478
      %s493 = sphi 0, %s479
      %s497 = sphi 0, %s497
      %s499 = sphi 0, %s497
      %s500 = sphi 0, %s499
      %s514 = sphi 0, %s500
      %s518 = sphi 0, %s518
      %s520 = sphi 0, %s518
      %s521 = sphi 0, %s520
      %s535 = sphi 0, %s521
      %s539 = sphi 0, %s539
      %s541 = sphi 0, %s539
      %s542 = sphi 0, %s541
      %s556 = sphi 0, %s542
      %s560 = sphi 0, %s560
      %s562 = sphi 0, %s560
      %s563 = sphi 0, %s562
      %s577 = sphi 0, %s563
      %s581 = sphi 0, %s581
      %s583 = sphi 0, %s581
      %s584 = sphi 0, %s583
      %s598 = sphi 0, %s584
      %s602 = sphi 0, %s602
      %s604 = sphi 0, %s602
      %s605 = sphi 0, %s604
      %s619 = sphi 0, %s605
      %s627 = sphi 0, %s629
      %s630 = sphi 0, %s627
      %s631 = sphi 0, %s630
      %s647 = sphi 0, %s631
      %s655 = sphi 0, %s657
      %s658 = sphi 0, %s655
      %s659 = sphi 0, %s658
      %s675 = sphi 0, %s659
    $region4: #{tpu_custom_call.1} parent=1 // loop_header_branch
      %42 = sbr.rel (%p40) target = $region8
    $region5: #{tpu_custom_call.1} parent=1 // loop_body
      %s44 = ssub.s32 %s39, 1
      %s45 = ssub.s32 %s39, 2
      %s52 = sadd.s32 1, %s47
      %p53 = scmp.ge.s32.totalorder %s52, 1
      %s54 = scalar_select %p53, 0, %s52
      %s55 = sadd.s32 1, %s46
      %s56 = scalar_select %p53, %s55, %s46
      %p57 = scmp.ge.s32.totalorder %s56, 2
      %s58 = scalar_select %p57, 0, %s56
      %s59 = ssub.s32 %s46, %s58
      %s60 = ssub.s32 %s47, %s54
      %s61 = sor.u32 %s59, %s60
      %p62 = scmp.eq.s32.totalorder %s61, 0
      %s64 = sadd.s32 %s63, 1
      %s65 = scalar_select %p62, %s63, %s64
      %p68 = pneg %p62
      %p69 = scmp.eq.s32.totalorder %s39, 1
      %p70 = por %p68, %p69
      %p71 = scmp.ne.s32.totalorder %s63, %s66
      %p72 = scmp.eq.s32.totalorder %s39, 0
      %p73 = por %p71, %p72
      %p74 = scmp.ne.s32.totalorder %s63, %s66
      %p75 = scmp.eq.s32.totalorder %s44, 1
      %p76 = por %p74, %p75
      %p77 = scmp.ne.s32.totalorder %s66, %s67
      %p78 = scmp.eq.s32.totalorder %s44, 0
      %p79 = por %p77, %p78
      %p80 = scmp.ne.s32.totalorder %s66, %s67
      %p81 = scmp.eq.s32.totalorder %s45, 1
      %p82 = por %p80, %p81
      %p84 = scmp.ne.s32.totalorder %s67, %s83
      %p85 = scmp.eq.s32.totalorder %s45, 0
      %p86 = por %p84, %p85
      %s87 = ssub.s32 %s46, %s58
      %p88 = scmp.eq.s32.totalorder %s87, 0
      %s90 = sadd.s32 %s89, 1
      %s91 = scalar_select %p88, %s89, %s90
      %p94 = pneg %p88
      %p95 = scmp.eq.s32.totalorder %s39, 1
      %p96 = por %p94, %p95
      %p97 = scmp.ne.s32.totalorder %s89, %s92
      %p98 = scmp.eq.s32.totalorder %s39, 0
      %p99 = por %p97, %p98
      %p100 = scmp.ne.s32.totalorder %s89, %s92
      %p101 = scmp.eq.s32.totalorder %s44, 1
      %p102 = por %p100, %p101
      %p103 = scmp.ne.s32.totalorder %s92, %s93
      %p104 = scmp.eq.s32.totalorder %s44, 0
      %p105 = por %p103, %p104
      %p106 = scmp.ne.s32.totalorder %s92, %s93
      %p107 = scmp.eq.s32.totalorder %s45, 1
      %p108 = por %p106, %p107
      %p110 = scmp.ne.s32.totalorder %s93, %s109
      %p111 = scmp.eq.s32.totalorder %s45, 0
      %p112 = por %p110, %p111
      %s113 = ssub.s32 %s46, %s58
      %p114 = scmp.eq.s32.totalorder %s113, 0
      %s116 = sadd.s32 %s115, 1
      %s117 = scalar_select %p114, %s115, %s116
      %p120 = pneg %p114
      %p121 = scmp.eq.s32.totalorder %s39, 1
      %p122 = por %p120, %p121
      %p123 = scmp.ne.s32.totalorder %s115, %s118
      %p124 = scmp.eq.s32.totalorder %s39, 0
      %p125 = por %p123, %p124
      %p126 = scmp.ne.s32.totalorder %s115, %s118
      %p127 = scmp.eq.s32.totalorder %s44, 1
      %p128 = por %p126, %p127
      %p129 = scmp.ne.s32.totalorder %s118, %s119
      %p130 = scmp.eq.s32.totalorder %s44, 0
      %p131 = por %p129, %p130
      %p132 = scmp.ne.s32.totalorder %s118, %s119
      %p133 = scmp.eq.s32.totalorder %s45, 1
      %p134 = por %p132, %p133
      %p136 = scmp.ne.s32.totalorder %s119, %s135
      %p137 = scmp.eq.s32.totalorder %s45, 0
      %p138 = por %p136, %p137
      %s139 = ssub.s32 %s46, %s58
      %p140 = scmp.eq.s32.totalorder %s139, 0
      %s142 = sadd.s32 %s141, 1
      %s143 = scalar_select %p140, %s141, %s142
      %p146 = pneg %p140
      %p147 = scmp.eq.s32.totalorder %s39, 1
      %p148 = por %p146, %p147
      %p149 = scmp.ne.s32.totalorder %s141, %s144
      %p150 = scmp.eq.s32.totalorder %s39, 0
      %p151 = por %p149, %p150
      %p152 = scmp.ne.s32.totalorder %s141, %s144
      %p153 = scmp.eq.s32.totalorder %s44, 1
      %p154 = por %p152, %p153
      %p155 = scmp.ne.s32.totalorder %s144, %s145
      %p156 = scmp.eq.s32.totalorder %s44, 0
      %p157 = por %p155, %p156
      %p158 = scmp.ne.s32.totalorder %s144, %s145
      %p159 = scmp.eq.s32.totalorder %s45, 1
      %p160 = por %p158, %p159
      %p162 = scmp.ne.s32.totalorder %s145, %s161
      %p163 = scmp.eq.s32.totalorder %s45, 0
      %p164 = por %p162, %p163
      %s165 = ssub.s32 %s46, %s58
      %p166 = scmp.eq.s32.totalorder %s165, 0
      %s168 = sadd.s32 %s167, 1
      %s169 = scalar_select %p166, %s167, %s168
      %p172 = pneg %p166
      %p173 = scmp.eq.s32.totalorder %s39, 1
      %p174 = por %p172, %p173
      %p175 = scmp.ne.s32.totalorder %s167, %s170
      %p176 = scmp.eq.s32.totalorder %s39, 0
      %p177 = por %p175, %p176
      %p178 = scmp.ne.s32.totalorder %s167, %s170
      %p179 = scmp.eq.s32.totalorder %s44, 1
      %p180 = por %p178, %p179
      %p181 = scmp.ne.s32.totalorder %s170, %s171
      %p182 = scmp.eq.s32.totalorder %s44, 0
      %p183 = por %p181, %p182
      %p184 = scmp.ne.s32.totalorder %s170, %s171
      %p185 = scmp.eq.s32.totalorder %s45, 1
      %p186 = por %p184, %p185
      %p188 = scmp.ne.s32.totalorder %s171, %s187
      %p189 = scmp.eq.s32.totalorder %s45, 0
      %p190 = por %p188, %p189
      %s191 = ssub.s32 %s46, %s58
      %s192 = ssub.s32 %s47, %s54
      %s193 = sor.u32 %s191, %s192
      %p194 = scmp.eq.s32.totalorder %s193, 0
      %s196 = sadd.s32 %s195, 1
      %s197 = scalar_select %p194, %s195, %s196
      %p200 = pneg %p194
      %p201 = scmp.eq.s32.totalorder %s39, 1
      %p202 = por %p200, %p201
      %p203 = scmp.ne.s32.totalorder %s195, %s198
      %p204 = scmp.eq.s32.totalorder %s39, 0
      %p205 = por %p203, %p204
      %p206 = scmp.ne.s32.totalorder %s195, %s198
      %p207 = scmp.eq.s32.totalorder %s44, 1
      %p208 = por %p206, %p207
      %p209 = scmp.ne.s32.totalorder %s198, %s199
      %p210 = scmp.eq.s32.totalorder %s44, 0
      %p211 = por %p209, %p210
      %p212 = scmp.ne.s32.totalorder %s198, %s199
      %p213 = scmp.eq.s32.totalorder %s45, 1
      %p214 = por %p212, %p213
      %p216 = scmp.ne.s32.totalorder %s199, %s215
      %p217 = scmp.eq.s32.totalorder %s45, 0
      %p218 = por %p216, %p217
      %s219 = ssub.s32 %s46, %s58
      %p220 = scmp.eq.s32.totalorder %s219, 0
      %s222 = sadd.s32 %s221, 1
      %s223 = scalar_select %p220, %s221, %s222
      %p226 = pneg %p220
      %p227 = scmp.eq.s32.totalorder %s39, 1
      %p228 = por %p226, %p227
      %p229 = scmp.ne.s32.totalorder %s221, %s224
      %p230 = scmp.eq.s32.totalorder %s39, 0
      %p231 = por %p229, %p230
      %p232 = scmp.ne.s32.totalorder %s221, %s224
      %p233 = scmp.eq.s32.totalorder %s44, 1
      %p234 = por %p232, %p233
      %p235 = scmp.ne.s32.totalorder %s224, %s225
      %p236 = scmp.eq.s32.totalorder %s44, 0
      %p237 = por %p235, %p236
      %p238 = scmp.ne.s32.totalorder %s224, %s225
      %p239 = scmp.eq.s32.totalorder %s45, 1
      %p240 = por %p238, %p239
      %p242 = scmp.ne.s32.totalorder %s225, %s241
      %p243 = scmp.eq.s32.totalorder %s45, 0
      %p244 = por %p242, %p243
      %s246 = sadd.s32 %s245, 1
      %p249 = scmp.eq.s32.totalorder %s39, 1
      %p250 = scmp.ne.s32.totalorder %s245, %s247
      %p251 = scmp.eq.s32.totalorder %s39, 0
      %p252 = por %p250, %p251
      %p253 = scmp.ne.s32.totalorder %s245, %s247
      %p254 = scmp.eq.s32.totalorder %s44, 1
      %p255 = por %p253, %p254
      %p256 = scmp.ne.s32.totalorder %s247, %s248
      %p257 = scmp.eq.s32.totalorder %s44, 0
      %p258 = por %p256, %p257
      %p259 = scmp.ne.s32.totalorder %s247, %s248
      %p260 = scmp.eq.s32.totalorder %s45, 1
      %p261 = por %p259, %p260
      %p263 = scmp.ne.s32.totalorder %s248, %s262
      %p264 = scmp.eq.s32.totalorder %s45, 0
      %p265 = por %p263, %p264
      %s267 = sadd.s32 %s266, 1
      %p270 = scmp.eq.s32.totalorder %s39, 1
      %p271 = scmp.ne.s32.totalorder %s266, %s268
      %p272 = scmp.eq.s32.totalorder %s39, 0
      %p273 = por %p271, %p272
      %p274 = scmp.ne.s32.totalorder %s266, %s268
      %p275 = scmp.eq.s32.totalorder %s44, 1
      %p276 = por %p274, %p275
      %p277 = scmp.ne.s32.totalorder %s268, %s269
      %p278 = scmp.eq.s32.totalorder %s44, 0
      %p279 = por %p277, %p278
      %p280 = scmp.ne.s32.totalorder %s268, %s269
      %p281 = scmp.eq.s32.totalorder %s45, 1
      %p282 = por %p280, %p281
      %p284 = scmp.ne.s32.totalorder %s269, %s283
      %p285 = scmp.eq.s32.totalorder %s45, 0
      %p286 = por %p284, %p285
      %s288 = sadd.s32 %s287, 1
      %p291 = scmp.eq.s32.totalorder %s39, 1
      %p292 = scmp.ne.s32.totalorder %s287, %s289
      %p293 = scmp.eq.s32.totalorder %s39, 0
      %p294 = por %p292, %p293
      %p295 = scmp.ne.s32.totalorder %s287, %s289
      %p296 = scmp.eq.s32.totalorder %s44, 1
      %p297 = por %p295, %p296
      %p298 = scmp.ne.s32.totalorder %s289, %s290
      %p299 = scmp.eq.s32.totalorder %s44, 0
      %p300 = por %p298, %p299
      %p301 = scmp.ne.s32.totalorder %s289, %s290
      %p302 = scmp.eq.s32.totalorder %s45, 1
      %p303 = por %p301, %p302
      %p305 = scmp.ne.s32.totalorder %s290, %s304
      %p306 = scmp.eq.s32.totalorder %s45, 0
      %p307 = por %p305, %p306
      %s309 = sadd.s32 %s308, 1
      %p312 = scmp.eq.s32.totalorder %s39, 1
      %p313 = scmp.ne.s32.totalorder %s308, %s310
      %p314 = scmp.eq.s32.totalorder %s39, 0
      %p315 = por %p313, %p314
      %p316 = scmp.ne.s32.totalorder %s308, %s310
      %p317 = scmp.eq.s32.totalorder %s44, 1
      %p318 = por %p316, %p317
      %p319 = scmp.ne.s32.totalorder %s310, %s311
      %p320 = scmp.eq.s32.totalorder %s44, 0
      %p321 = por %p319, %p320
      %p322 = scmp.ne.s32.totalorder %s310, %s311
      %p323 = scmp.eq.s32.totalorder %s45, 1
      %p324 = por %p322, %p323
      %p326 = scmp.ne.s32.totalorder %s311, %s325
      %p327 = scmp.eq.s32.totalorder %s45, 0
      %p328 = por %p326, %p327
      %s330 = sadd.s32 %s329, 1
      %p333 = scmp.eq.s32.totalorder %s39, 1
      %p334 = scmp.ne.s32.totalorder %s329, %s331
      %p335 = scmp.eq.s32.totalorder %s39, 0
      %p336 = por %p334, %p335
      %p337 = scmp.ne.s32.totalorder %s329, %s331
      %p338 = scmp.eq.s32.totalorder %s44, 1
      %p339 = por %p337, %p338
      %p340 = scmp.ne.s32.totalorder %s331, %s332
      %p341 = scmp.eq.s32.totalorder %s44, 0
      %p342 = por %p340, %p341
      %p343 = scmp.ne.s32.totalorder %s331, %s332
      %p344 = scmp.eq.s32.totalorder %s45, 1
      %p345 = por %p343, %p344
      %p347 = scmp.ne.s32.totalorder %s332, %s346
      %p348 = scmp.eq.s32.totalorder %s45, 0
      %p349 = por %p347, %p348
      %s351 = sadd.s32 %s350, 1
      %p354 = scmp.eq.s32.totalorder %s39, 1
      %p355 = scmp.ne.s32.totalorder %s350, %s352
      %p356 = scmp.eq.s32.totalorder %s39, 0
      %p357 = por %p355, %p356
      %p358 = scmp.ne.s32.totalorder %s350, %s352
      %p359 = scmp.eq.s32.totalorder %s44, 1
      %p360 = por %p358, %p359
      %p361 = scmp.ne.s32.totalorder %s352, %s353
      %p362 = scmp.eq.s32.totalorder %s44, 0
      %p363 = por %p361, %p362
      %p364 = scmp.ne.s32.totalorder %s352, %s353
      %p365 = scmp.eq.s32.totalorder %s45, 1
      %p366 = por %p364, %p365
      %p368 = scmp.ne.s32.totalorder %s353, %s367
      %p369 = scmp.eq.s32.totalorder %s45, 0
      %p370 = por %p368, %p369
      %s372 = sadd.s32 %s371, 1
      %p375 = scmp.eq.s32.totalorder %s39, 1
      %p376 = scmp.ne.s32.totalorder %s371, %s373
      %p377 = scmp.eq.s32.totalorder %s39, 0
      %p378 = por %p376, %p377
      %p379 = scmp.ne.s32.totalorder %s371, %s373
      %p380 = scmp.eq.s32.totalorder %s44, 1
      %p381 = por %p379, %p380
      %p382 = scmp.ne.s32.totalorder %s373, %s374
      %p383 = scmp.eq.s32.totalorder %s44, 0
      %p384 = por %p382, %p383
      %p385 = scmp.ne.s32.totalorder %s373, %s374
      %p386 = scmp.eq.s32.totalorder %s45, 1
      %p387 = por %p385, %p386
      %p389 = scmp.ne.s32.totalorder %s374, %s388
      %p390 = scmp.eq.s32.totalorder %s45, 0
      %p391 = por %p389, %p390
      %s393 = sadd.s32 %s392, 1
      %p396 = scmp.eq.s32.totalorder %s39, 1
      %p397 = scmp.ne.s32.totalorder %s392, %s394
      %p398 = scmp.eq.s32.totalorder %s39, 0
      %p399 = por %p397, %p398
      %p400 = scmp.ne.s32.totalorder %s392, %s394
      %p401 = scmp.eq.s32.totalorder %s44, 1
      %p402 = por %p400, %p401
      %p403 = scmp.ne.s32.totalorder %s394, %s395
      %p404 = scmp.eq.s32.totalorder %s44, 0
      %p405 = por %p403, %p404
      %p406 = scmp.ne.s32.totalorder %s394, %s395
      %p407 = scmp.eq.s32.totalorder %s45, 1
      %p408 = por %p406, %p407
      %p410 = scmp.ne.s32.totalorder %s395, %s409
      %p411 = scmp.eq.s32.totalorder %s45, 0
      %p412 = por %p410, %p411
      %s414 = sadd.s32 %s413, 1
      %p417 = scmp.eq.s32.totalorder %s39, 1
      %p418 = scmp.ne.s32.totalorder %s413, %s415
      %p419 = scmp.eq.s32.totalorder %s39, 0
      %p420 = por %p418, %p419
      %p421 = scmp.ne.s32.totalorder %s413, %s415
      %p422 = scmp.eq.s32.totalorder %s44, 1
      %p423 = por %p421, %p422
      %p424 = scmp.ne.s32.totalorder %s415, %s416
      %p425 = scmp.eq.s32.totalorder %s44, 0
      %p426 = por %p424, %p425
      %p427 = scmp.ne.s32.totalorder %s415, %s416
      %p428 = scmp.eq.s32.totalorder %s45, 1
      %p429 = por %p427, %p428
      %p431 = scmp.ne.s32.totalorder %s416, %s430
      %p432 = scmp.eq.s32.totalorder %s45, 0
      %p433 = por %p431, %p432
      %s435 = sadd.s32 %s434, 1
      %p438 = scmp.eq.s32.totalorder %s39, 1
      %p439 = scmp.ne.s32.totalorder %s434, %s436
      %p440 = scmp.eq.s32.totalorder %s39, 0
      %p441 = por %p439, %p440
      %p442 = scmp.ne.s32.totalorder %s434, %s436
      %p443 = scmp.eq.s32.totalorder %s44, 1
      %p444 = por %p442, %p443
      %p445 = scmp.ne.s32.totalorder %s436, %s437
      %p446 = scmp.eq.s32.totalorder %s44, 0
      %p447 = por %p445, %p446
      %p448 = scmp.ne.s32.totalorder %s436, %s437
      %p449 = scmp.eq.s32.totalorder %s45, 1
      %p450 = por %p448, %p449
      %p452 = scmp.ne.s32.totalorder %s437, %s451
      %p453 = scmp.eq.s32.totalorder %s45, 0
      %p454 = por %p452, %p453
      %s456 = sadd.s32 %s455, 1
      %p459 = scmp.eq.s32.totalorder %s39, 1
      %p460 = scmp.ne.s32.totalorder %s455, %s457
      %p461 = scmp.eq.s32.totalorder %s39, 0
      %p462 = por %p460, %p461
      %p463 = scmp.ne.s32.totalorder %s455, %s457
      %p464 = scmp.eq.s32.totalorder %s44, 1
      %p465 = por %p463, %p464
      %p466 = scmp.ne.s32.totalorder %s457, %s458
      %p467 = scmp.eq.s32.totalorder %s44, 0
      %p468 = por %p466, %p467
      %p469 = scmp.ne.s32.totalorder %s457, %s458
      %p470 = scmp.eq.s32.totalorder %s45, 1
      %p471 = por %p469, %p470
      %p473 = scmp.ne.s32.totalorder %s458, %s472
      %p474 = scmp.eq.s32.totalorder %s45, 0
      %p475 = por %p473, %p474
      %s477 = sadd.s32 %s476, 1
      %p480 = scmp.eq.s32.totalorder %s39, 1
      %p481 = scmp.ne.s32.totalorder %s476, %s478
      %p482 = scmp.eq.s32.totalorder %s39, 0
      %p483 = por %p481, %p482
      %p484 = scmp.ne.s32.totalorder %s476, %s478
      %p485 = scmp.eq.s32.totalorder %s44, 1
      %p486 = por %p484, %p485
      %p487 = scmp.ne.s32.totalorder %s478, %s479
      %p488 = scmp.eq.s32.totalorder %s44, 0
      %p489 = por %p487, %p488
      %p490 = scmp.ne.s32.totalorder %s478, %s479
      %p491 = scmp.eq.s32.totalorder %s45, 1
      %p492 = por %p490, %p491
      %p494 = scmp.ne.s32.totalorder %s479, %s493
      %p495 = scmp.eq.s32.totalorder %s45, 0
      %p496 = por %p494, %p495
      %s498 = sadd.s32 %s497, 1
      %p501 = scmp.eq.s32.totalorder %s39, 1
      %p502 = scmp.ne.s32.totalorder %s497, %s499
      %p503 = scmp.eq.s32.totalorder %s39, 0
      %p504 = por %p502, %p503
      %p505 = scmp.ne.s32.totalorder %s497, %s499
      %p506 = scmp.eq.s32.totalorder %s44, 1
      %p507 = por %p505, %p506
      %p508 = scmp.ne.s32.totalorder %s499, %s500
      %p509 = scmp.eq.s32.totalorder %s44, 0
      %p510 = por %p508, %p509
      %p511 = scmp.ne.s32.totalorder %s499, %s500
      %p512 = scmp.eq.s32.totalorder %s45, 1
      %p513 = por %p511, %p512
      %p515 = scmp.ne.s32.totalorder %s500, %s514
      %p516 = scmp.eq.s32.totalorder %s45, 0
      %p517 = por %p515, %p516
      %s519 = sadd.s32 %s518, 1
      %p522 = scmp.eq.s32.totalorder %s39, 1
      %p523 = scmp.ne.s32.totalorder %s518, %s520
      %p524 = scmp.eq.s32.totalorder %s39, 0
      %p525 = por %p523, %p524
      %p526 = scmp.ne.s32.totalorder %s518, %s520
      %p527 = scmp.eq.s32.totalorder %s44, 1
      %p528 = por %p526, %p527
      %p529 = scmp.ne.s32.totalorder %s520, %s521
      %p530 = scmp.eq.s32.totalorder %s44, 0
      %p531 = por %p529, %p530
      %p532 = scmp.ne.s32.totalorder %s520, %s521
      %p533 = scmp.eq.s32.totalorder %s45, 1
      %p534 = por %p532, %p533
      %p536 = scmp.ne.s32.totalorder %s521, %s535
      %p537 = scmp.eq.s32.totalorder %s45, 0
      %p538 = por %p536, %p537
      %s540 = sadd.s32 %s539, 1
      %p543 = scmp.eq.s32.totalorder %s39, 1
      %p544 = scmp.ne.s32.totalorder %s539, %s541
      %p545 = scmp.eq.s32.totalorder %s39, 0
      %p546 = por %p544, %p545
      %p547 = scmp.ne.s32.totalorder %s539, %s541
      %p548 = scmp.eq.s32.totalorder %s44, 1
      %p549 = por %p547, %p548
      %p550 = scmp.ne.s32.totalorder %s541, %s542
      %p551 = scmp.eq.s32.totalorder %s44, 0
      %p552 = por %p550, %p551
      %p553 = scmp.ne.s32.totalorder %s541, %s542
      %p554 = scmp.eq.s32.totalorder %s45, 1
      %p555 = por %p553, %p554
      %p557 = scmp.ne.s32.totalorder %s542, %s556
      %p558 = scmp.eq.s32.totalorder %s45, 0
      %p559 = por %p557, %p558
      %s561 = sadd.s32 %s560, 1
      %p564 = scmp.eq.s32.totalorder %s39, 1
      %p565 = scmp.ne.s32.totalorder %s560, %s562
      %p566 = scmp.eq.s32.totalorder %s39, 0
      %p567 = por %p565, %p566
      %p568 = scmp.ne.s32.totalorder %s560, %s562
      %p569 = scmp.eq.s32.totalorder %s44, 1
      %p570 = por %p568, %p569
      %p571 = scmp.ne.s32.totalorder %s562, %s563
      %p572 = scmp.eq.s32.totalorder %s44, 0
      %p573 = por %p571, %p572
      %p574 = scmp.ne.s32.totalorder %s562, %s563
      %p575 = scmp.eq.s32.totalorder %s45, 1
      %p576 = por %p574, %p575
      %p578 = scmp.ne.s32.totalorder %s563, %s577
      %p579 = scmp.eq.s32.totalorder %s45, 0
      %p580 = por %p578, %p579
      %s582 = sadd.s32 %s581, 1
      %p585 = scmp.eq.s32.totalorder %s39, 1
      %p586 = scmp.ne.s32.totalorder %s581, %s583
      %p587 = scmp.eq.s32.totalorder %s39, 0
      %p588 = por %p586, %p587
      %p589 = scmp.ne.s32.totalorder %s581, %s583
      %p590 = scmp.eq.s32.totalorder %s44, 1
      %p591 = por %p589, %p590
      %p592 = scmp.ne.s32.totalorder %s583, %s584
      %p593 = scmp.eq.s32.totalorder %s44, 0
      %p594 = por %p592, %p593
      %p595 = scmp.ne.s32.totalorder %s583, %s584
      %p596 = scmp.eq.s32.totalorder %s45, 1
      %p597 = por %p595, %p596
      %p599 = scmp.ne.s32.totalorder %s584, %s598
      %p600 = scmp.eq.s32.totalorder %s45, 0
      %p601 = por %p599, %p600
      %s603 = sadd.s32 %s602, 1
      %p606 = scmp.eq.s32.totalorder %s39, 1
      %p607 = scmp.ne.s32.totalorder %s602, %s604
      %p608 = scmp.eq.s32.totalorder %s39, 0
      %p609 = por %p607, %p608
      %p610 = scmp.ne.s32.totalorder %s602, %s604
      %p611 = scmp.eq.s32.totalorder %s44, 1
      %p612 = por %p610, %p611
      %p613 = scmp.ne.s32.totalorder %s604, %s605
      %p614 = scmp.eq.s32.totalorder %s44, 0
      %p615 = por %p613, %p614
      %p616 = scmp.ne.s32.totalorder %s604, %s605
      %p617 = scmp.eq.s32.totalorder %s45, 1
      %p618 = por %p616, %p617
      %p620 = scmp.ne.s32.totalorder %s605, %s619
      %p621 = scmp.eq.s32.totalorder %s45, 0
      %p622 = por %p620, %p621
      %s623 = ssub.s32 %s46, %s58
      %s624 = ssub.s32 %s47, %s54
      %s625 = sor.u32 %s623, %s624
      %p626 = scmp.eq.s32.totalorder %s625, 0
      %s628 = sadd.s32 %s627, 1
      %s629 = scalar_select %p626, %s627, %s628
      %p632 = pneg %p626
      %p633 = scmp.eq.s32.totalorder %s39, 1
      %p634 = por %p632, %p633
      %p635 = scmp.ne.s32.totalorder %s627, %s630
      %p636 = scmp.eq.s32.totalorder %s39, 0
      %p637 = por %p635, %p636
      %p638 = scmp.ne.s32.totalorder %s627, %s630
      %p639 = scmp.eq.s32.totalorder %s44, 1
      %p640 = por %p638, %p639
      %p641 = scmp.ne.s32.totalorder %s630, %s631
      %p642 = scmp.eq.s32.totalorder %s44, 0
      %p643 = por %p641, %p642
      %p644 = scmp.ne.s32.totalorder %s630, %s631
      %p645 = scmp.eq.s32.totalorder %s45, 1
      %p646 = por %p644, %p645
      %p648 = scmp.ne.s32.totalorder %s631, %s647
      %p649 = scmp.eq.s32.totalorder %s45, 0
      %p650 = por %p648, %p649
      %s651 = ssub.s32 %s46, %s58
      %s652 = ssub.s32 %s47, %s54
      %s653 = sor.u32 %s651, %s652
      %p654 = scmp.eq.s32.totalorder %s653, 0
      %s656 = sadd.s32 %s655, 1
      %s657 = scalar_select %p654, %s655, %s656
      %p660 = pneg %p654
      %p661 = scmp.eq.s32.totalorder %s39, 1
      %p662 = por %p660, %p661
      %p663 = scmp.ne.s32.totalorder %s655, %s658
      %p664 = scmp.eq.s32.totalorder %s39, 0
      %p665 = por %p663, %p664
      %p666 = scmp.ne.s32.totalorder %s655, %s658
      %p667 = scmp.eq.s32.totalorder %s44, 1
      %p668 = por %p666, %p667
      %p669 = scmp.ne.s32.totalorder %s658, %s659
      %p670 = scmp.eq.s32.totalorder %s44, 0
      %p671 = por %p669, %p670
      %p672 = scmp.ne.s32.totalorder %s658, %s659
      %p673 = scmp.eq.s32.totalorder %s45, 1
      %p674 = por %p672, %p673
      %p676 = scmp.ne.s32.totalorder %s659, %s675
      %p677 = scmp.eq.s32.totalorder %s45, 0
      %p678 = por %p676, %p677
      %p679 = scmp.le.s32.totalorder 1, %s39
      %p680 = scmp.lt.s32.totalorder %s39, 3
      %p681 = pnand %p679, %p680
      %p682 = pneg %p681
      // Predicated region
      $region9: #{tpu_custom_call.1} parent=5 // pred_check
        _
      $region10: #{tpu_custom_call.1} parent=5 // pred_check_branch
        %684 = sbr.rel (%p681) target = $region12
      $region11: #{tpu_custom_call.1} parent=5 // pred_region
        %s685 = ssub.s32 %s39, 1
        // Predicated region
        $region13: #{tpu_custom_call.1} parent=11 // pred_check
          %p686 = pneg %p258
        $region14: #{tpu_custom_call.1} parent=11 // pred_check_branch
          %688 = sbr.rel (%p686) target = $region16
        $region15: #{tpu_custom_call.1} parent=11 // pred_region
          _
        $region16: #{tpu_custom_call.1} parent=11 // pred_fallthru
          _
        // Predicated region
        $region17: #{tpu_custom_call.1} parent=11 // pred_check
          %p689 = pneg %p279
        $region18: #{tpu_custom_call.1} parent=11 // pred_check_branch
          %691 = sbr.rel (%p689) target = $region20
        $region19: #{tpu_custom_call.1} parent=11 // pred_region
          _
        $region20: #{tpu_custom_call.1} parent=11 // pred_fallthru
          _
        // Predicated region
        $region21: #{tpu_custom_call.1} parent=11 // pred_check
          %p692 = pneg %p300
        $region22: #{tpu_custom_call.1} parent=11 // pred_check_branch
          %694 = sbr.rel (%p692) target = $region24
        $region23: #{tpu_custom_call.1} parent=11 // pred_region
          _
        $region24: #{tpu_custom_call.1} parent=11 // pred_fallthru
          _
        // Predicated region
        $region25: #{tpu_custom_call.1} parent=11 // pred_check
          %p695 = pneg %p321
        $region26: #{tpu_custom_call.1} parent=11 // pred_check_branch
          %697 = sbr.rel (%p695) target = $region28
        $region27: #{tpu_custom_call.1} parent=11 // pred_region
          _
        $region28: #{tpu_custom_call.1} parent=11 // pred_fallthru
          _
        // Predicated region
        $region29: #{tpu_custom_call.1} parent=11 // pred_check
          %p698 = pneg %p342
        $region30: #{tpu_custom_call.1} parent=11 // pred_check_branch
          %700 = sbr.rel (%p698) target = $region32
        $region31: #{tpu_custom_call.1} parent=11 // pred_region
          _
        $region32: #{tpu_custom_call.1} parent=11 // pred_fallthru
          _
        // Predicated region
        $region33: #{tpu_custom_call.1} parent=11 // pred_check
          %p701 = pneg %p363
        $region34: #{tpu_custom_call.1} parent=11 // pred_check_branch
          %703 = sbr.rel (%p701) target = $region36
        $region35: #{tpu_custom_call.1} parent=11 // pred_region
          _
        $region36: #{tpu_custom_call.1} parent=11 // pred_fallthru
          _
        // Predicated region
        $region37: #{tpu_custom_call.1} parent=11 // pred_check
          %p704 = pneg %p384
        $region38: #{tpu_custom_call.1} parent=11 // pred_check_branch
          %706 = sbr.rel (%p704) target = $region40
        $region39: #{tpu_custom_call.1} parent=11 // pred_region
          _
        $region40: #{tpu_custom_call.1} parent=11 // pred_fallthru
          _
        // Predicated region
        $region41: #{tpu_custom_call.1} parent=11 // pred_check
          %p707 = pneg %p405
        $region42: #{tpu_custom_call.1} parent=11 // pred_check_branch
          %709 = sbr.rel (%p707) target = $region44
        $region43: #{tpu_custom_call.1} parent=11 // pred_region
          _
        $region44: #{tpu_custom_call.1} parent=11 // pred_fallthru
          _
        // Predicated region
        $region45: #{tpu_custom_call.1} parent=11 // pred_check
          %p710 = pneg %p426
        $region46: #{tpu_custom_call.1} parent=11 // pred_check_branch
          %712 = sbr.rel (%p710) target = $region48
        $region47: #{tpu_custom_call.1} parent=11 // pred_region
          _
        $region48: #{tpu_custom_call.1} parent=11 // pred_fallthru
          _
        // Predicated region
        $region49: #{tpu_custom_call.1} parent=11 // pred_check
          %p713 = pneg %p447
        $region50: #{tpu_custom_call.1} parent=11 // pred_check_branch
          %715 = sbr.rel (%p713) target = $region52
        $region51: #{tpu_custom_call.1} parent=11 // pred_region
          _
        $region52: #{tpu_custom_call.1} parent=11 // pred_fallthru
          _
        // Predicated region
        $region53: #{tpu_custom_call.1} parent=11 // pred_check
          %p716 = pneg %p468
        $region54: #{tpu_custom_call.1} parent=11 // pred_check_branch
          %718 = sbr.rel (%p716) target = $region56
        $region55: #{tpu_custom_call.1} parent=11 // pred_region
          _
        $region56: #{tpu_custom_call.1} parent=11 // pred_fallthru
          _
        // Predicated region
        $region57: #{tpu_custom_call.1} parent=11 // pred_check
          %p719 = pneg %p489
        $region58: #{tpu_custom_call.1} parent=11 // pred_check_branch
          %721 = sbr.rel (%p719) target = $region60
        $region59: #{tpu_custom_call.1} parent=11 // pred_region
          _
        $region60: #{tpu_custom_call.1} parent=11 // pred_fallthru
          _
        // Predicated region
        $region61: #{tpu_custom_call.1} parent=11 // pred_check
          %p722 = pneg %p510
        $region62: #{tpu_custom_call.1} parent=11 // pred_check_branch
          %724 = sbr.rel (%p722) target = $region64
        $region63: #{tpu_custom_call.1} parent=11 // pred_region
          _
        $region64: #{tpu_custom_call.1} parent=11 // pred_fallthru
          _
        // Predicated region
        $region65: #{tpu_custom_call.1} parent=11 // pred_check
          %p725 = pneg %p531
        $region66: #{tpu_custom_call.1} parent=11 // pred_check_branch
          %727 = sbr.rel (%p725) target = $region68
        $region67: #{tpu_custom_call.1} parent=11 // pred_region
          _
        $region68: #{tpu_custom_call.1} parent=11 // pred_fallthru
          _
        // Predicated region
        $region69: #{tpu_custom_call.1} parent=11 // pred_check
          %p728 = pneg %p552
        $region70: #{tpu_custom_call.1} parent=11 // pred_check_branch
          %730 = sbr.rel (%p728) target = $region72
        $region71: #{tpu_custom_call.1} parent=11 // pred_region
          _
        $region72: #{tpu_custom_call.1} parent=11 // pred_fallthru
          _
        // Predicated region
        $region73: #{tpu_custom_call.1} parent=11 // pred_check
          %p731 = pneg %p573
        $region74: #{tpu_custom_call.1} parent=11 // pred_check_branch
          %733 = sbr.rel (%p731) target = $region76
        $region75: #{tpu_custom_call.1} parent=11 // pred_region
          _
        $region76: #{tpu_custom_call.1} parent=11 // pred_fallthru
          _
        // Predicated region
        $region77: #{tpu_custom_call.1} parent=11 // pred_check
          %p734 = pneg %p594
        $region78: #{tpu_custom_call.1} parent=11 // pred_check_branch
          %736 = sbr.rel (%p734) target = $region80
        $region79: #{tpu_custom_call.1} parent=11 // pred_region
          _
        $region80: #{tpu_custom_call.1} parent=11 // pred_fallthru
          _
        // Predicated region
        $region81: #{tpu_custom_call.1} parent=11 // pred_check
          %p737 = pneg %p615
        $region82: #{tpu_custom_call.1} parent=11 // pred_check_branch
          %739 = sbr.rel (%p737) target = $region84
        $region83: #{tpu_custom_call.1} parent=11 // pred_region
          _
        $region84: #{tpu_custom_call.1} parent=11 // pred_fallthru
          _
      $region12: #{tpu_custom_call.1} parent=5 // pred_fallthru
        _
      %p740 = scmp.lt.s32.totalorder %s39, 2
      // Predicated region
      $region85: #{tpu_custom_call.1} parent=5 // pred_check
        %p741 = pneg %p740
      $region86: #{tpu_custom_call.1} parent=5 // pred_check_branch
        %743 = sbr.rel (%p741) target = $region88
      $region87: #{tpu_custom_call.1} parent=5 // pred_region
        // Predicated region
        $region89: #{tpu_custom_call.1} parent=87 // pred_check
          %p744 = pneg %p73
        $region90: #{tpu_custom_call.1} parent=87 // pred_check_branch
          %746 = sbr.rel (%p744) target = $region92
        $region91: #{tpu_custom_call.1} parent=87 // pred_region
          %p747 = scmp.lt.s32.totalorder %s46, 1
          %s748 = scalar_select %p747, %s46, 1
          %p749 = scmp.lt.s32.totalorder %s47, 0
          %s750 = scalar_select %p749, %s47, 0
          %s751 = sadd.s32 %s750, %s748
          %s752 = smul.addr %s751, 8
          %s753 = scalar_lea.vmem %s0, %s752
        $region92: #{tpu_custom_call.1} parent=87 // pred_fallthru
          _
        // Predicated region
        $region93: #{tpu_custom_call.1} parent=87 // pred_check
          %p754 = pneg %p99
        $region94: #{tpu_custom_call.1} parent=87 // pred_check_branch
          %756 = sbr.rel (%p754) target = $region96
        $region95: #{tpu_custom_call.1} parent=87 // pred_region
          %p757 = scmp.lt.s32.totalorder %s46, 1
          %s758 = scalar_select %p757, %s46, 1
          %s759 = smul.addr %s758, 4
          %s760 = smul.addr %s759, 4
          %s761 = scalar_lea.vmem %s1, %s760
        $region96: #{tpu_custom_call.1} parent=87 // pred_fallthru
          _
        // Predicated region
        $region97: #{tpu_custom_call.1} parent=87 // pred_check
          %p762 = pneg %p125
        $region98: #{tpu_custom_call.1} parent=87 // pred_check_branch
          %764 = sbr.rel (%p762) target = $region100
        $region99: #{tpu_custom_call.1} parent=87 // pred_region
          %p765 = scmp.lt.s32.totalorder %s46, 1
          %s766 = scalar_select %p765, %s46, 1
          %s767 = smul.addr %s766, 4
          %s768 = smul.addr %s767, 4
          %s769 = scalar_lea.vmem %s2, %s768
        $region100: #{tpu_custom_call.1} parent=87 // pred_fallthru
          _
        // Predicated region
        $region101: #{tpu_custom_call.1} parent=87 // pred_check
          %p770 = pneg %p151
        $region102: #{tpu_custom_call.1} parent=87 // pred_check_branch
          %772 = sbr.rel (%p770) target = $region104
        $region103: #{tpu_custom_call.1} parent=87 // pred_region
          %p773 = scmp.lt.s32.totalorder %s46, 1
          %s774 = scalar_select %p773, %s46, 1
          %s775 = smul.addr %s774, 8
          %s776 = smul.addr %s775, 4
          %s777 = scalar_lea.vmem %s3, %s776
        $region104: #{tpu_custom_call.1} parent=87 // pred_fallthru
          _
        // Predicated region
        $region105: #{tpu_custom_call.1} parent=87 // pred_check
          %p778 = pneg %p177
        $region106: #{tpu_custom_call.1} parent=87 // pred_check_branch
          %780 = sbr.rel (%p778) target = $region108
        $region107: #{tpu_custom_call.1} parent=87 // pred_region
          %p781 = scmp.lt.s32.totalorder %s46, 1
          %s782 = scalar_select %p781, %s46, 1
          %s783 = smul.addr %s782, 8
          %s784 = smul.addr %s783, 4
          %s785 = scalar_lea.vmem %s4, %s784
        $region108: #{tpu_custom_call.1} parent=87 // pred_fallthru
          _
        // Predicated region
        $region109: #{tpu_custom_call.1} parent=87 // pred_check
          %p786 = pneg %p205
        $region110: #{tpu_custom_call.1} parent=87 // pred_check_branch
          %788 = sbr.rel (%p786) target = $region112
        $region111: #{tpu_custom_call.1} parent=87 // pred_region
          %p789 = scmp.lt.s32.totalorder %s46, 1
          %s790 = scalar_select %p789, %s46, 1
          %p791 = scmp.lt.s32.totalorder %s47, 0
          %s792 = scalar_select %p791, %s47, 0
          %s793 = sadd.s32 %s792, %s790
          %s794 = smul.addr %s793, 4
          %s795 = scalar_lea.vmem %s5, %s794
        $region112: #{tpu_custom_call.1} parent=87 // pred_fallthru
          _
        // Predicated region
        $region113: #{tpu_custom_call.1} parent=87 // pred_check
          %p796 = pneg %p231
        $region114: #{tpu_custom_call.1} parent=87 // pred_check_branch
          %798 = sbr.rel (%p796) target = $region116
        $region115: #{tpu_custom_call.1} parent=87 // pred_region
          %p799 = scmp.lt.s32.totalorder %s46, 1
          %s800 = scalar_select %p799, %s46, 1
          %s801 = scalar_lea.vmem %s6, %s800
        $region116: #{tpu_custom_call.1} parent=87 // pred_fallthru
          _
      $region88: #{tpu_custom_call.1} parent=5 // pred_fallthru
        _
      %p802 = scmp.le.s32.totalorder 1, %s39
      %p803 = scmp.lt.s32.totalorder %s39, 3
      %p804 = pnand %p802, %p803
      %p805 = pneg %p804
      // Predicated region
      $region117: #{tpu_custom_call.1} parent=5 // pred_check
        _
      $region118: #{tpu_custom_call.1} parent=5 // pred_check_branch
        %807 = sbr.rel (%p804) target = $region120
      $region119: #{tpu_custom_call.1} parent=5 // pred_region
        %s808 = ssub.s32 %s39, 1
        %p809 = scmp.lt.s32.totalorder %s48, 1
        %s810 = scalar_select %p809, %s48, 1
        %p811 = scmp.lt.s32.totalorder %s49, 0
        %s812 = scalar_select %p811, %s49, 0
        %s813 = sadd.s32 %s812, %s810
        %s814 = smul.addr %s813, 8
        %s815 = scalar_lea.vmem %s0, %s814
        %p816 = pneg %p79
        %p817 = pneg %p76
        %p818 = scmp.lt.s32.totalorder %s48, 1
        %s819 = scalar_select %p818, %s48, 1
        %s820 = smul.addr %s819, 4
        %s821 = smul.addr %s820, 4
        %s822 = scalar_lea.vmem %s1, %s821
        %p823 = pneg %p105
        %p824 = pneg %p102
        %p825 = scmp.lt.s32.totalorder %s48, 1
        %s826 = scalar_select %p825, %s48, 1
        %s827 = smul.addr %s826, 4
        %s828 = smul.addr %s827, 4
        %s829 = scalar_lea.vmem %s2, %s828
        %p830 = pneg %p131
        %p831 = pneg %p128
        %p832 = scmp.lt.s32.totalorder %s48, 1
        %s833 = scalar_select %p832, %s48, 1
        %s834 = smul.addr %s833, 8
        %s835 = smul.addr %s834, 4
        %s836 = scalar_lea.vmem %s3, %s835
        %p837 = pneg %p157
        %p838 = pneg %p154
        %p839 = scmp.lt.s32.totalorder %s48, 1
        %s840 = scalar_select %p839, %s48, 1
        %s841 = smul.addr %s840, 8
        %s842 = smul.addr %s841, 4
        %s843 = scalar_lea.vmem %s4, %s842
        %p844 = pneg %p183
        %p845 = pneg %p180
        %p846 = scmp.lt.s32.totalorder %s48, 1
        %s847 = scalar_select %p846, %s48, 1
        %p848 = scmp.lt.s32.totalorder %s49, 0
        %s849 = scalar_select %p848, %s49, 0
        %s850 = sadd.s32 %s849, %s847
        %s851 = smul.addr %s850, 4
        %s852 = scalar_lea.vmem %s5, %s851
        %p853 = pneg %p211
        %p854 = pneg %p208
        %p855 = scmp.lt.s32.totalorder %s48, 1
        %s856 = scalar_select %p855, %s48, 1
        %s857 = scalar_lea.vmem %s6, %s856
        %p858 = pneg %p237
        %p859 = pneg %p234
        %p860 = pneg %p258
        %p861 = pneg %p255
        %p862 = pneg %p279
        %p863 = pneg %p276
        %p864 = pneg %p300
        %p865 = pneg %p297
        %p866 = pneg %p321
        %p867 = pneg %p318
        %p868 = pneg %p342
        %p869 = pneg %p339
        %p870 = pneg %p363
        %p871 = pneg %p360
        %p872 = pneg %p384
        %p873 = pneg %p381
        %p874 = pneg %p405
        %p875 = pneg %p402
        %p876 = pneg %p426
        %p877 = pneg %p423
        %p878 = pneg %p447
        %p879 = pneg %p444
        %p880 = pneg %p468
        %p881 = pneg %p465
        %p882 = pneg %p489
        %p883 = pneg %p486
        %p884 = pneg %p510
        %p885 = pneg %p507
        %p886 = pneg %p531
        %p887 = pneg %p528
        %p888 = pneg %p552
        %p889 = pneg %p549
        %p890 = pneg %p573
        %p891 = pneg %p570
        %p892 = pneg %p594
        %p893 = pneg %p591
        %p894 = pneg %p615
        %p895 = pneg %p612
        %p896 = pneg %p643
        %p897 = pneg %p640
        %s898 = sand.u32 %s630, 1
        %s899 = scalar_lea.sflag [#allocation3], %s898
        %s900 = sand.u32 %s630, 1
        %s901 = smul.addr %s900, 8
        %s902 = scalar_lea.vmem [#allocation2], %s901
        %p903 = pneg %p671
        %p904 = pneg %p668
        %s905 = sand.u32 %s658, 1
        %s906 = scalar_lea.sflag [#allocation5], %s905
        %s907 = sand.u32 %s658, 1
        %s908 = smul.addr %s907, 32
        %s909 = scalar_lea.vmem [#allocation4], %s908
        %p910 = scmp.lt.s32.totalorder %s48, 1
        %s911 = scalar_select %p910, %s48, 1
        %p912 = scmp.lt.s32.totalorder %s49, 0
        %s913 = scalar_select %p912, %s49, 0
        %s914 = sadd.s32 %s913, %s911
        %s915 = smul.addr %s914, 8
        %s916 = scalar_lea.vmem %s0, %s915
        %p917 = scmp.lt.s32.totalorder %s48, 1
        %s918 = scalar_select %p917, %s48, 1
        %s919 = smul.addr %s918, 4
        %s920 = smul.addr %s919, 4
        %s921 = scalar_lea.vmem %s1, %s920
        %p922 = scmp.lt.s32.totalorder %s48, 1
        %s923 = scalar_select %p922, %s48, 1
        %s924 = smul.addr %s923, 4
        %s925 = smul.addr %s924, 4
        %s926 = scalar_lea.vmem %s2, %s925
        %p927 = scmp.lt.s32.totalorder %s48, 1
        %s928 = scalar_select %p927, %s48, 1
        %s929 = smul.addr %s928, 8
        %s930 = smul.addr %s929, 4
        %s931 = scalar_lea.vmem %s3, %s930
        %p932 = scmp.lt.s32.totalorder %s48, 1
        %s933 = scalar_select %p932, %s48, 1
        %s934 = smul.addr %s933, 8
        %s935 = smul.addr %s934, 4
        %s936 = scalar_lea.vmem %s4, %s935
        %p937 = scmp.lt.s32.totalorder %s48, 1
        %s938 = scalar_select %p937, %s48, 1
        %p939 = scmp.lt.s32.totalorder %s49, 0
        %s940 = scalar_select %p939, %s49, 0
        %s941 = sadd.s32 %s940, %s938
        %s942 = smul.addr %s941, 4
        %s943 = scalar_lea.vmem %s5, %s942
        %p944 = scmp.lt.s32.totalorder %s48, 1
        %s945 = scalar_select %p944, %s48, 1
        %s946 = scalar_lea.vmem %s6, %s945
        %v948 = vld [vmem:[%s916] sm:$0xff]
        %v949 = vld [vmem:[%s943] sm:$0xf]
        %v950 = vunpack.c.l.bf16 %v949
        %v951 = vld [vmem:[%s946] sm:$0x1]
        %v952 = vunpack.c.l.bf16 %v951
        %v953 = vld [vmem:[%s921] sm:$0xf]
        %v954 = vld [vmem:[%s921 + $0x4] sm:$0xf]
        %v955 = vld [vmem:[%s921 + $0x8] sm:$0xf]
        %v956 = vld [vmem:[%s921 + $0xc] sm:$0xf]
        %v957 = vld [vmem:[%s926] sm:$0xf]
        %v958 = vld [vmem:[%s926 + $0x4] sm:$0xf]
        %v959 = vld [vmem:[%s926 + $0x8] sm:$0xf]
        %v960 = vld [vmem:[%s926 + $0xc] sm:$0xf]
        %v961 = vld [vmem:[%s7] sm:$0xf]
        %v962 = vld [vmem:[%s7 + $0x4] sm:$0xf]
        %v963 = vld [vmem:[%s7 + $0x8] sm:$0xf]
        %v964 = vld [vmem:[%s7 + $0xc] sm:$0xf]
        %v965 = vld [vmem:[%s8] sm:$0x1]
        %v966 = vld [vmem:[%s9] sm:$0xf]
        %v967 = vld [vmem:[%s9 + $0x4] sm:$0xf]
        %v968 = vld [vmem:[%s9 + $0x8] sm:$0xf]
        %v969 = vld [vmem:[%s9 + $0xc] sm:$0xf]
        %v970 = vld [vmem:[%s10] sm:$0x1]
        %v971 = vpack.c.bf16 %v948, %v948
        %v973 = vlaneseq
        %v974 = vshrl.u32 %v973, 7
        %v975 = vsub.s32 0, %v974
        %v976 = vrot.slane %v965, %v975
        %v982 = vunpack.c.l.b16 %v961
        %v983 = vunpack.c.l.b16 %v962
        %v984 = vunpack.c.l.b16 %v963
        %v985 = vunpack.c.l.b16 %v964
        %v986 = vpack.c.b16 %v983, %v982
        %v987 = vpack.c.b16 %v985, %v984
        %vm990 = vcmask 261120
        %v992 = vsel %vm990, %v971, 0
        %994 = vmatprep.subr.bf16.mxu0 0
        %995 = vmatpush1.bf16.msra.mxu0 %v986
        %996 = vmatprep.subr.bf16.mxu0 0
        %997 = vmatpush1.bf16.msra.mxu0 %v987
        %998 = vmatprep.subr.bf16.mxu0 0
        %999 = vmatpush1.bf16.msra.mxu0 0
        %1000 = vmatprep.subr.bf16.mxu0 0
        %1001 = vmatpush1.bf16.msra.mxu0 0
        %1002 = vmatprep.subr.bf16.mxu0 0
        %1003 = vmatpush1.bf16.msra.mxu0 0
        %1004 = vmatprep.subr.bf16.mxu0 0
        %1005 = vmatpush1.bf16.msra.mxu0 0
        %1006 = vmatprep.subr.bf16.mxu0 0
        %1007 = vmatpush1.bf16.msra.mxu0 0
        %1008 = vmatprep.subr.bf16.mxu0 0
        %1009 = vmatpush1.bf16.msra.mxu0 0
        %1010 = vmatprep.subr.bf16.mxu0 0
        %1011 = vmatpush1.bf16.msra.mxu0 0
        %1012 = vmatprep.subr.bf16.mxu0 0
        %1013 = vmatpush1.bf16.msra.mxu0 0
        %1014 = vmatprep.subr.bf16.mxu0 0
        %1015 = vmatpush1.bf16.msra.mxu0 0
        %1016 = vmatprep.subr.bf16.mxu0 0
        %1017 = vmatpush1.bf16.msra.mxu0 0
        %1018 = vmatprep.subr.bf16.mxu0 0
        %1019 = vmatpush1.bf16.msra.mxu0 0
        %1020 = vmatprep.subr.bf16.mxu0 0
        %1021 = vmatpush1.bf16.msra.mxu0 0
        %1022 = vmatprep.subr.bf16.mxu0 0
        %1023 = vmatpush1.bf16.msra.mxu0 0
        %1024 = vmatprep.subr.bf16.mxu0 0
        %1025 = vmatpush1.bf16.msra.mxu0 0
        %1026 = vmatprep.mubr.bf16.mxu0 0
        %1027 = vmatmul.mubr.bf16.gmra.mrb[0].mxu0 %v992
        %v1028 = vpop.f32.mrb[0].mxu0
        %v1029 = vadd.f32 %v976, %v1028
        %v1030 = vpop.f32.mrb[0].mxu0
        %v1031 = vpop.f32.mrb[0].mxu0
        %v1032 = vpop.f32.mrb[0].mxu0
        %1033 = vdwg.mxu0
        %1035 = vrot.lane.b32.xlu0 %v1029, 120
        %v1036 = vpop.permute.xlu0 %1035
        %1038 = vrot.lane.b32.xlu0 %v1029, 112
        %v1039 = vpop.permute.xlu0 %1038
        %1041 = vrot.lane.b32.xlu0 %v1029, 104
        %v1042 = vpop.permute.xlu0 %1041
        %v1044 = vcombine.low %v1029, %v1039
        %v1045 = vcombine.high %v1029, %v1039
        %v1047 = vunpack.c.l.s4 1983009808
        %v1048 = vunpack.c.0.s8 %v1047
        %v1049 = vlaneseq
        %v1050 = vshrl.u32 %v1049, 7
        %v1051 = vsub.s32 %v1048, %v1050
        %v1052 = vrot.slane %v1044, %v1051
        %v1054 = vunpack.c.l.s4 1983009808
        %v1055 = vunpack.c.0.s8 %v1054
        %v1056 = vlaneseq
        %v1057 = vshrl.u32 %v1056, 7
        %v1058 = vsub.s32 %v1055, %v1057
        %v1059 = vrot.slane %v1045, %v1058
        %v1060 = vcombine.low %v1036, %v1042
        %v1061 = vcombine.high %v1036, %v1042
        %v1063 = vunpack.c.l.s4 1983009808
        %v1064 = vunpack.c.0.s8 %v1063
        %v1065 = vlaneseq
        %v1066 = vshrl.u32 %v1065, 7
        %v1067 = vsub.s32 %v1064, %v1066
        %v1068 = vrot.slane %v1060, %v1067
        %v1070 = vunpack.c.l.s4 1983009808
        %v1071 = vunpack.c.0.s8 %v1070
        %v1072 = vlaneseq
        %v1073 = vshrl.u32 %v1072, 7
        %v1074 = vsub.s32 %v1071, %v1073
        %v1075 = vrot.slane %v1061, %v1074
        %v1076 = vcombine.low %v1052, %v1068
        %v1077 = vcombine.high %v1052, %v1068
        %v1079 = vunpack.c.l.s4 1934713408
        %v1080 = vunpack.c.0.s8 %v1079
        %v1081 = vlaneseq
        %v1082 = vshrl.u32 %v1081, 7
        %v1083 = vsub.s32 %v1080, %v1082
        %v1084 = vrot.slane %v1076, %v1083
        %v1086 = vunpack.c.l.s4 1934713408
        %v1087 = vunpack.c.0.s8 %v1086
        %v1088 = vlaneseq
        %v1089 = vshrl.u32 %v1088, 7
        %v1090 = vsub.s32 %v1087, %v1089
        %v1091 = vrot.slane %v1077, %v1090
        %v1092 = vcombine.low %v1059, %v1075
        %v1093 = vcombine.high %v1059, %v1075
        %v1095 = vunpack.c.l.s4 1934713408
        %v1096 = vunpack.c.0.s8 %v1095
        %v1097 = vlaneseq
        %v1098 = vshrl.u32 %v1097, 7
        %v1099 = vsub.s32 %v1096, %v1098
        %v1100 = vrot.slane %v1092, %v1099
        %v1102 = vunpack.c.l.s4 1934713408
        %v1103 = vunpack.c.0.s8 %v1102
        %v1104 = vlaneseq
        %v1105 = vshrl.u32 %v1104, 7
        %v1106 = vsub.s32 %v1103, %v1105
        %v1107 = vrot.slane %v1093, %v1106
        %v1108 = vcombine.high %v1084, 0.0
        %v1109 = vcombine.high %v1091, 0.0
        %v1110 = vcombine.high %v1100, 0.0
        %v1111 = vcombine.high %v1107, 0.0
        %v1112 = vcombine.low %v1084, %v1091
        %v1114 = vunpack.c.l.s4 1983009808
        %v1115 = vunpack.c.0.s8 %v1114
        %v1116 = vlaneseq
        %v1117 = vshrl.u32 %v1116, 7
        %v1118 = vsub.s32 %v1115, %v1117
        %v1119 = vrot.slane %v1112, %v1118
        %v1120 = vcombine.low %v1108, %v1109
        %v1122 = vunpack.c.l.s4 1983009808
        %v1123 = vunpack.c.0.s8 %v1122
        %v1124 = vlaneseq
        %v1125 = vshrl.u32 %v1124, 7
        %v1126 = vsub.s32 %v1123, %v1125
        %v1127 = vrot.slane %v1120, %v1126
        %v1128 = vcombine.low %v1100, %v1107
        %v1130 = vunpack.c.l.s4 1983009808
        %v1131 = vunpack.c.0.s8 %v1130
        %v1132 = vlaneseq
        %v1133 = vshrl.u32 %v1132, 7
        %v1134 = vsub.s32 %v1131, %v1133
        %v1135 = vrot.slane %v1128, %v1134
        %v1136 = vcombine.low %v1110, %v1111
        %v1138 = vunpack.c.l.s4 1983009808
        %v1139 = vunpack.c.0.s8 %v1138
        %v1140 = vlaneseq
        %v1141 = vshrl.u32 %v1140, 7
        %v1142 = vsub.s32 %v1139, %v1141
        %v1143 = vrot.slane %v1136, %v1142
        %v1144 = vcombine.low %v1119, %v1127
        %v1145 = vcombine.high %v1119, %v1127
        %v1147 = vunpack.c.l.s4 1934713408
        %v1148 = vunpack.c.0.s8 %v1147
        %v1149 = vlaneseq
        %v1150 = vshrl.u32 %v1149, 7
        %v1151 = vsub.s32 %v1148, %v1150
        %v1152 = vrot.slane %v1144, %v1151
        %v1154 = vunpack.c.l.s4 1934713408
        %v1155 = vunpack.c.0.s8 %v1154
        %v1156 = vlaneseq
        %v1157 = vshrl.u32 %v1156, 7
        %v1158 = vsub.s32 %v1155, %v1157
        %v1159 = vrot.slane %v1145, %v1158
        %v1160 = vcombine.low %v1135, %v1143
        %v1161 = vcombine.high %v1135, %v1143
        %v1163 = vunpack.c.l.s4 1934713408
        %v1164 = vunpack.c.0.s8 %v1163
        %v1165 = vlaneseq
        %v1166 = vshrl.u32 %v1165, 7
        %v1167 = vsub.s32 %v1164, %v1166
        %v1168 = vrot.slane %v1160, %v1167
        %v1170 = vunpack.c.l.s4 1934713408
        %v1171 = vunpack.c.0.s8 %v1170
        %v1172 = vlaneseq
        %v1173 = vshrl.u32 %v1172, 7
        %v1174 = vsub.s32 %v1171, %v1173
        %v1175 = vrot.slane %v1161, %v1174
        %v1176 = vcombine.low %v1152, %v1168
        %v1177 = vcombine.high %v1152, %v1168
        %v1178 = vcombine.low %v1159, %v1175
        %v1179 = vcombine.high %v1159, %v1175
        %v1180 = vpack.c.bf16 %v1176, %v1176
        %v1181 = vpack.c.bf16 %v1177, %v1177
        %v1182 = vpack.c.bf16 %v1178, %v1178
        %v1183 = vpack.c.bf16 %v1179, %v1179
        %vm1184 = vcmask 64512
        %v1186 = vsel %vm1184, %v1180, 0
        %v1189 = vsel %vm1184, %v953, 0
        %1191 = vmatprep.subr.bf16.mxu0 0
        %1192 = vmatpush1.bf16.xpose.msra.mxu0 %v1189
        %1193 = vmatprep.subr.bf16.mxu0 0
        %1194 = vmatpush1.bf16.xpose.msra.mxu0 0
        %1195 = vmatprep.subr.bf16.mxu0 0
        %1196 = vmatpush1.bf16.xpose.msra.mxu0 0
        %1197 = vmatprep.subr.bf16.mxu0 0
        %1198 = vmatpush1.bf16.xpose.msra.mxu0 0
        %1199 = vmatprep.subr.bf16.mxu0 0
        %1200 = vmatpush1.bf16.xpose.msra.mxu0 0
        %1201 = vmatprep.subr.bf16.mxu0 0
        %1202 = vmatpush1.bf16.xpose.msra.mxu0 0
        %1203 = vmatprep.subr.bf16.mxu0 0
        %1204 = vmatpush1.bf16.xpose.msra.mxu0 0
        %1205 = vmatprep.subr.bf16.mxu0 0
        %1206 = vmatpush1.bf16.xpose.msra.mxu0 0
        %1207 = vmatprep.subr.bf16.mxu0 0
        %1208 = vmatpush1.bf16.xpose.msra.mxu0 0
        %1209 = vmatprep.subr.bf16.mxu0 0
        %1210 = vmatpush1.bf16.xpose.msra.mxu0 0
        %1211 = vmatprep.subr.bf16.mxu0 0
        %1212 = vmatpush1.bf16.xpose.msra.mxu0 0
        %1213 = vmatprep.subr.bf16.mxu0 0
        %1214 = vmatpush1.bf16.xpose.msra.mxu0 0
        %1215 = vmatprep.subr.bf16.mxu0 0
        %1216 = vmatpush1.bf16.xpose.msra.mxu0 0
        %1217 = vmatprep.subr.bf16.mxu0 0
        %1218 = vmatpush1.bf16.xpose.msra.mxu0 0
        %1219 = vmatprep.subr.bf16.mxu0 0
        %1220 = vmatpush1.bf16.xpose.msra.mxu0 0
        %1221 = vmatprep.subr.bf16.mxu0 0
        %1222 = vmatpush1.bf16.xpose.msra.mxu0 0
        %1223 = vmatprep.mubr.bf16.mxu0 0
        %1224 = vmatmul.mubr.bf16.gmra.mrb[0].mxu0 %v1186
        %v1225 = vpop.f32.mrb[0].mxu0
        %v1226 = vadd.f32 %v950, %v1225
        %v1227 = vpop.f32.mrb[0].mxu0
        %v1228 = vpop.f32.mrb[0].mxu0
        %v1229 = vpop.f32.mrb[0].mxu0
        %1230 = vdwg.mxu0
        %v1232 = vsel %vm1184, %v1181, 0
        %v1235 = vsel %vm1184, %v954, 0
        %1237 = vmatprep.subr.bf16.mxu0 0
        %1238 = vmatpush1.bf16.xpose.msra.mxu0 %v1235
        %1239 = vmatprep.subr.bf16.mxu0 0
        %1240 = vmatpush1.bf16.xpose.msra.mxu0 0
        %1241 = vmatprep.subr.bf16.mxu0 0
        %1242 = vmatpush1.bf16.xpose.msra.mxu0 0
        %1243 = vmatprep.subr.bf16.mxu0 0
        %1244 = vmatpush1.bf16.xpose.msra.mxu0 0
        %1245 = vmatprep.subr.bf16.mxu0 0
        %1246 = vmatpush1.bf16.xpose.msra.mxu0 0
        %1247 = vmatprep.subr.bf16.mxu0 0
        %1248 = vmatpush1.bf16.xpose.msra.mxu0 0
        %1249 = vmatprep.subr.bf16.mxu0 0
        %1250 = vmatpush1.bf16.xpose.msra.mxu0 0
        %1251 = vmatprep.subr.bf16.mxu0 0
        %1252 = vmatpush1.bf16.xpose.msra.mxu0 0
        %1253 = vmatprep.subr.bf16.mxu0 0
        %1254 = vmatpush1.bf16.xpose.msra.mxu0 0
        %1255 = vmatprep.subr.bf16.mxu0 0
        %1256 = vmatpush1.bf16.xpose.msra.mxu0 0
        %1257 = vmatprep.subr.bf16.mxu0 0
        %1258 = vmatpush1.bf16.xpose.msra.mxu0 0
        %1259 = vmatprep.subr.bf16.mxu0 0
        %1260 = vmatpush1.bf16.xpose.msra.mxu0 0
        %1261 = vmatprep.subr.bf16.mxu0 0
        %1262 = vmatpush1.bf16.xpose.msra.mxu0 0
        %1263 = vmatprep.subr.bf16.mxu0 0
        %1264 = vmatpush1.bf16.xpose.msra.mxu0 0
        %1265 = vmatprep.subr.bf16.mxu0 0
        %1266 = vmatpush1.bf16.xpose.msra.mxu0 0
        %1267 = vmatprep.subr.bf16.mxu0 0
        %1268 = vmatpush1.bf16.xpose.msra.mxu0 0
        %1269 = vmatprep.mubr.bf16.mxu0 0
        %1270 = vmatmul.mubr.bf16.gmra.mrb[0].mxu0 %v1232
        %v1271 = vpop.f32.mrb[0].mxu0
        %v1272 = vadd.f32 %v950, %v1271
        %v1273 = vpop.f32.mrb[0].mxu0
        %v1274 = vpop.f32.mrb[0].mxu0
        %v1275 = vpop.f32.mrb[0].mxu0
        %1276 = vdwg.mxu0
        %v1278 = vsel %vm1184, %v1182, 0
        %v1281 = vsel %vm1184, %v955, 0
        %1283 = vmatprep.subr.bf16.mxu0 0
        %1284 = vmatpush1.bf16.xpose.msra.mxu0 %v1281
        %1285 = vmatprep.subr.bf16.mxu0 0
        %1286 = vmatpush1.bf16.xpose.msra.mxu0 0
        %1287 = vmatprep.subr.bf16.mxu0 0
        %1288 = vmatpush1.bf16.xpose.msra.mxu0 0
        %1289 = vmatprep.subr.bf16.mxu0 0
        %1290 = vmatpush1.bf16.xpose.msra.mxu0 0
        %1291 = vmatprep.subr.bf16.mxu0 0
        %1292 = vmatpush1.bf16.xpose.msra.mxu0 0
        %1293 = vmatprep.subr.bf16.mxu0 0
        %1294 = vmatpush1.bf16.xpose.msra.mxu0 0
        %1295 = vmatprep.subr.bf16.mxu0 0
        %1296 = vmatpush1.bf16.xpose.msra.mxu0 0
        %1297 = vmatprep.subr.bf16.mxu0 0
        %1298 = vmatpush1.bf16.xpose.msra.mxu0 0
        %1299 = vmatprep.subr.bf16.mxu0 0
        %1300 = vmatpush1.bf16.xpose.msra.mxu0 0
        %1301 = vmatprep.subr.bf16.mxu0 0
        %1302 = vmatpush1.bf16.xpose.msra.mxu0 0
        %1303 = vmatprep.subr.bf16.mxu0 0
        %1304 = vmatpush1.bf16.xpose.msra.mxu0 0
        %1305 = vmatprep.subr.bf16.mxu0 0
        %1306 = vmatpush1.bf16.xpose.msra.mxu0 0
        %1307 = vmatprep.subr.bf16.mxu0 0
        %1308 = vmatpush1.bf16.xpose.msra.mxu0 0
        %1309 = vmatprep.subr.bf16.mxu0 0
        %1310 = vmatpush1.bf16.xpose.msra.mxu0 0
        %1311 = vmatprep.subr.bf16.mxu0 0
        %1312 = vmatpush1.bf16.xpose.msra.mxu0 0
        %1313 = vmatprep.subr.bf16.mxu0 0
        %1314 = vmatpush1.bf16.xpose.msra.mxu0 0
        %1315 = vmatprep.mubr.bf16.mxu0 0
        %1316 = vmatmul.mubr.bf16.gmra.mrb[0].mxu0 %v1278
        %v1317 = vpop.f32.mrb[0].mxu0
        %v1318 = vadd.f32 %v950, %v1317
        %v1319 = vpop.f32.mrb[0].mxu0
        %v1320 = vpop.f32.mrb[0].mxu0
        %v1321 = vpop.f32.mrb[0].mxu0
        %1322 = vdwg.mxu0
        %v1324 = vsel %vm1184, %v1183, 0
        %v1327 = vsel %vm1184, %v956, 0
        %1329 = vmatprep.subr.bf16.mxu0 0
        %1330 = vmatpush1.bf16.xpose.msra.mxu0 %v1327
        %1331 = vmatprep.subr.bf16.mxu0 0
        %1332 = vmatpush1.bf16.xpose.msra.mxu0 0
        %1333 = vmatprep.subr.bf16.mxu0 0
        %1334 = vmatpush1.bf16.xpose.msra.mxu0 0
        %1335 = vmatprep.subr.bf16.mxu0 0
        %1336 = vmatpush1.bf16.xpose.msra.mxu0 0
        %1337 = vmatprep.subr.bf16.mxu0 0
        %1338 = vmatpush1.bf16.xpose.msra.mxu0 0
        %1339 = vmatprep.subr.bf16.mxu0 0
        %1340 = vmatpush1.bf16.xpose.msra.mxu0 0
        %1341 = vmatprep.subr.bf16.mxu0 0
        %1342 = vmatpush1.bf16.xpose.msra.mxu0 0
        %1343 = vmatprep.subr.bf16.mxu0 0
        %1344 = vmatpush1.bf16.xpose.msra.mxu0 0
        %1345 = vmatprep.subr.bf16.mxu0 0
        %1346 = vmatpush1.bf16.xpose.msra.mxu0 0
        %1347 = vmatprep.subr.bf16.mxu0 0
        %1348 = vmatpush1.bf16.xpose.msra.mxu0 0
        %1349 = vmatprep.subr.bf16.mxu0 0
        %1350 = vmatpush1.bf16.xpose.msra.mxu0 0
        %1351 = vmatprep.subr.bf16.mxu0 0
        %1352 = vmatpush1.bf16.xpose.msra.mxu0 0
        %1353 = vmatprep.subr.bf16.mxu0 0
        %1354 = vmatpush1.bf16.xpose.msra.mxu0 0
        %1355 = vmatprep.subr.bf16.mxu0 0
        %1356 = vmatpush1.bf16.xpose.msra.mxu0 0
        %1357 = vmatprep.subr.bf16.mxu0 0
        %1358 = vmatpush1.bf16.xpose.msra.mxu0 0
        %1359 = vmatprep.subr.bf16.mxu0 0
        %1360 = vmatpush1.bf16.xpose.msra.mxu0 0
        %1361 = vmatprep.mubr.bf16.mxu0 0
        %1362 = vmatmul.mubr.bf16.gmra.mrb[0].mxu0 %v1324
        %v1363 = vpop.f32.mrb[0].mxu0
        %v1364 = vadd.f32 %v950, %v1363
        %v1365 = vpop.f32.mrb[0].mxu0
        %v1366 = vpop.f32.mrb[0].mxu0
        %v1367 = vpop.f32.mrb[0].mxu0
        %1368 = vdwg.mxu0
        %v1369 = vsel %vm1184, %v1226, -inf
        %1370 = vmax.xlane.f32.xlu0 %v1369
        %v1371 = vpop.xlane.xlu0 %1370
        %v1372 = vsel %vm1184, %v1272, -inf
        %1373 = vmax.xlane.f32.xlu0 %v1372
        %v1374 = vpop.xlane.xlu0 %1373
        %v1375 = vsel %vm1184, %v1318, -inf
        %1376 = vmax.xlane.f32.xlu0 %v1375
        %v1377 = vpop.xlane.xlu0 %1376
        %v1378 = vsel %vm1184, %v1364, -inf
        %1379 = vmax.xlane.f32.xlu0 %v1378
        %v1380 = vpop.xlane.xlu0 %1379
        %v1381 = vsub.f32 %v1226, %v1371
        %v1382 = vsub.f32 %v1272, %v1374
        %v1383 = vsub.f32 %v1318, %v1377
        %v1384 = vsub.f32 %v1364, %v1380
        %v1385 = vmul.f32 %v1381, 1.442695
        %v1386 = vpow.pop %v1385
        %v1387 = vmul.f32 %v1382, 1.442695
        %v1388 = vpow.pop %v1387
        %v1389 = vmul.f32 %v1383, 1.442695
        %v1390 = vpow.pop %v1389
        %v1391 = vmul.f32 %v1384, 1.442695
        %v1392 = vpow.pop %v1391
        %v1393 = vsel %vm1184, %v1386, 0.0
        %1394 = vadd.xlane.f32.xlu0 %v1393
        %v1395 = vpop.xlane.xlu0 %1394
        %v1396 = vsel %vm1184, %v1388, 0.0
        %1397 = vadd.xlane.f32.xlu0 %v1396
        %v1398 = vpop.xlane.xlu0 %1397
        %v1399 = vsel %vm1184, %v1390, 0.0
        %1400 = vadd.xlane.f32.xlu0 %v1399
        %v1401 = vpop.xlane.xlu0 %1400
        %v1402 = vsel %vm1184, %v1392, 0.0
        %1403 = vadd.xlane.f32.xlu0 %v1402
        %v1404 = vpop.xlane.xlu0 %1403
        %v1405 = vrcp.pop %v1395
        %v1406 = vrcp.pop %v1398
        %v1407 = vrcp.pop %v1401
        %v1408 = vrcp.pop %v1404
        %v1409 = vmul.f32 %v1386, %v1405
        %v1410 = vmul.f32 %v1388, %v1406
        %v1411 = vmul.f32 %v1390, %v1407
        %v1412 = vmul.f32 %v1392, %v1408
        %v1413 = vpack.c.bf16 %v1409, %v1409
        %v1414 = vpack.c.bf16 %v1410, %v1410
        %v1415 = vpack.c.bf16 %v1411, %v1411
        %v1416 = vpack.c.bf16 %v1412, %v1412
        %v1418 = vsel %vm1184, %v1413, 0
        %vm1420 = vcmask 1043456
        %v1422 = vsel %vm1420, %v957, 0
        %1424 = vmatprep.subr.bf16.mxu0 0
        %1425 = vmatpush1.bf16.msra.mxu0 %v1422
        %1426 = vmatprep.subr.bf16.mxu0 0
        %1427 = vmatpush1.bf16.msra.mxu0 0
        %1428 = vmatprep.subr.bf16.mxu0 0
        %1429 = vmatpush1.bf16.msra.mxu0 0
        %1430 = vmatprep.subr.bf16.mxu0 0
        %1431 = vmatpush1.bf16.msra.mxu0 0
        %1432 = vmatprep.subr.bf16.mxu0 0
        %1433 = vmatpush1.bf16.msra.mxu0 0
        %1434 = vmatprep.subr.bf16.mxu0 0
        %1435 = vmatpush1.bf16.msra.mxu0 0
        %1436 = vmatprep.subr.bf16.mxu0 0
        %1437 = vmatpush1.bf16.msra.mxu0 0
        %1438 = vmatprep.subr.bf16.mxu0 0
        %1439 = vmatpush1.bf16.msra.mxu0 0
        %1440 = vmatprep.subr.bf16.mxu0 0
        %1441 = vmatpush1.bf16.msra.mxu0 0
        %1442 = vmatprep.subr.bf16.mxu0 0
        %1443 = vmatpush1.bf16.msra.mxu0 0
        %1444 = vmatprep.subr.bf16.mxu0 0
        %1445 = vmatpush1.bf16.msra.mxu0 0
        %1446 = vmatprep.subr.bf16.mxu0 0
        %1447 = vmatpush1.bf16.msra.mxu0 0
        %1448 = vmatprep.subr.bf16.mxu0 0
        %1449 = vmatpush1.bf16.msra.mxu0 0
        %1450 = vmatprep.subr.bf16.mxu0 0
        %1451 = vmatpush1.bf16.msra.mxu0 0
        %1452 = vmatprep.subr.bf16.mxu0 0
        %1453 = vmatpush1.bf16.msra.mxu0 0
        %1454 = vmatprep.subr.bf16.mxu0 0
        %1455 = vmatpush1.bf16.msra.mxu0 0
        %1456 = vmatprep.mubr.bf16.mxu0 0
        %1457 = vmatmul.mubr.bf16.gmra.mrb[0].mxu0 %v1418
        %v1458 = vpop.f32.mrb[0].mxu0
        %v1459 = vadd.f32 0.0, %v1458
        %v1460 = vpop.f32.mrb[0].mxu0
        %v1461 = vpop.f32.mrb[0].mxu0
        %v1462 = vpop.f32.mrb[0].mxu0
        %1463 = vdwg.mxu0
        %v1465 = vsel %vm1184, %v1414, 0
        %v1468 = vsel %vm1420, %v958, 0
        %1470 = vmatprep.subr.bf16.mxu0 0
        %1471 = vmatpush1.bf16.msra.mxu0 %v1468
        %1472 = vmatprep.subr.bf16.mxu0 0
        %1473 = vmatpush1.bf16.msra.mxu0 0
        %1474 = vmatprep.subr.bf16.mxu0 0
        %1475 = vmatpush1.bf16.msra.mxu0 0
        %1476 = vmatprep.subr.bf16.mxu0 0
        %1477 = vmatpush1.bf16.msra.mxu0 0
        %1478 = vmatprep.subr.bf16.mxu0 0
        %1479 = vmatpush1.bf16.msra.mxu0 0
        %1480 = vmatprep.subr.bf16.mxu0 0
        %1481 = vmatpush1.bf16.msra.mxu0 0
        %1482 = vmatprep.subr.bf16.mxu0 0
        %1483 = vmatpush1.bf16.msra.mxu0 0
        %1484 = vmatprep.subr.bf16.mxu0 0
        %1485 = vmatpush1.bf16.msra.mxu0 0
        %1486 = vmatprep.subr.bf16.mxu0 0
        %1487 = vmatpush1.bf16.msra.mxu0 0
        %1488 = vmatprep.subr.bf16.mxu0 0
        %1489 = vmatpush1.bf16.msra.mxu0 0
        %1490 = vmatprep.subr.bf16.mxu0 0
        %1491 = vmatpush1.bf16.msra.mxu0 0
        %1492 = vmatprep.subr.bf16.mxu0 0
        %1493 = vmatpush1.bf16.msra.mxu0 0
        %1494 = vmatprep.subr.bf16.mxu0 0
        %1495 = vmatpush1.bf16.msra.mxu0 0
        %1496 = vmatprep.subr.bf16.mxu0 0
        %1497 = vmatpush1.bf16.msra.mxu0 0
        %1498 = vmatprep.subr.bf16.mxu0 0
        %1499 = vmatpush1.bf16.msra.mxu0 0
        %1500 = vmatprep.subr.bf16.mxu0 0
        %1501 = vmatpush1.bf16.msra.mxu0 0
        %1502 = vmatprep.mubr.bf16.mxu0 0
        %1503 = vmatmul.mubr.bf16.gmra.mrb[0].mxu0 %v1465
        %v1504 = vpop.f32.mrb[0].mxu0
        %v1505 = vadd.f32 0.0, %v1504
        %v1506 = vpop.f32.mrb[0].mxu0
        %v1507 = vpop.f32.mrb[0].mxu0
        %v1508 = vpop.f32.mrb[0].mxu0
        %1509 = vdwg.mxu0
        %v1511 = vsel %vm1184, %v1415, 0
        %v1514 = vsel %vm1420, %v959, 0
        %1516 = vmatprep.subr.bf16.mxu0 0
        %1517 = vmatpush1.bf16.msra.mxu0 %v1514
        %1518 = vmatprep.subr.bf16.mxu0 0
        %1519 = vmatpush1.bf16.msra.mxu0 0
        %1520 = vmatprep.subr.bf16.mxu0 0
        %1521 = vmatpush1.bf16.msra.mxu0 0
        %1522 = vmatprep.subr.bf16.mxu0 0
        %1523 = vmatpush1.bf16.msra.mxu0 0
        %1524 = vmatprep.subr.bf16.mxu0 0
        %1525 = vmatpush1.bf16.msra.mxu0 0
        %1526 = vmatprep.subr.bf16.mxu0 0
        %1527 = vmatpush1.bf16.msra.mxu0 0
        %1528 = vmatprep.subr.bf16.mxu0 0
        %1529 = vmatpush1.bf16.msra.mxu0 0
        %1530 = vmatprep.subr.bf16.mxu0 0
        %1531 = vmatpush1.bf16.msra.mxu0 0
        %1532 = vmatprep.subr.bf16.mxu0 0
        %1533 = vmatpush1.bf16.msra.mxu0 0
        %1534 = vmatprep.subr.bf16.mxu0 0
        %1535 = vmatpush1.bf16.msra.mxu0 0
        %1536 = vmatprep.subr.bf16.mxu0 0
        %1537 = vmatpush1.bf16.msra.mxu0 0
        %1538 = vmatprep.subr.bf16.mxu0 0
        %1539 = vmatpush1.bf16.msra.mxu0 0
        %1540 = vmatprep.subr.bf16.mxu0 0
        %1541 = vmatpush1.bf16.msra.mxu0 0
        %1542 = vmatprep.subr.bf16.mxu0 0
        %1543 = vmatpush1.bf16.msra.mxu0 0
        %1544 = vmatprep.subr.bf16.mxu0 0
        %1545 = vmatpush1.bf16.msra.mxu0 0
        %1546 = vmatprep.subr.bf16.mxu0 0
        %1547 = vmatpush1.bf16.msra.mxu0 0
        %1548 = vmatprep.mubr.bf16.mxu0 0
        %1549 = vmatmul.mubr.bf16.gmra.mrb[0].mxu0 %v1511
        %v1550 = vpop.f32.mrb[0].mxu0
        %v1551 = vadd.f32 0.0, %v1550
        %v1552 = vpop.f32.mrb[0].mxu0
        %v1553 = vpop.f32.mrb[0].mxu0
        %v1554 = vpop.f32.mrb[0].mxu0
        %1555 = vdwg.mxu0
        %v1557 = vsel %vm1184, %v1416, 0
        %v1560 = vsel %vm1420, %v960, 0
        %1562 = vmatprep.subr.bf16.mxu0 0
        %1563 = vmatpush1.bf16.msra.mxu0 %v1560
        %1564 = vmatprep.subr.bf16.mxu0 0
        %1565 = vmatpush1.bf16.msra.mxu0 0
        %1566 = vmatprep.subr.bf16.mxu0 0
        %1567 = vmatpush1.bf16.msra.mxu0 0
        %1568 = vmatprep.subr.bf16.mxu0 0
        %1569 = vmatpush1.bf16.msra.mxu0 0
        %1570 = vmatprep.subr.bf16.mxu0 0
        %1571 = vmatpush1.bf16.msra.mxu0 0
        %1572 = vmatprep.subr.bf16.mxu0 0
        %1573 = vmatpush1.bf16.msra.mxu0 0
        %1574 = vmatprep.subr.bf16.mxu0 0
        %1575 = vmatpush1.bf16.msra.mxu0 0
        %1576 = vmatprep.subr.bf16.mxu0 0
        %1577 = vmatpush1.bf16.msra.mxu0 0
        %1578 = vmatprep.subr.bf16.mxu0 0
        %1579 = vmatpush1.bf16.msra.mxu0 0
        %1580 = vmatprep.subr.bf16.mxu0 0
        %1581 = vmatpush1.bf16.msra.mxu0 0
        %1582 = vmatprep.subr.bf16.mxu0 0
        %1583 = vmatpush1.bf16.msra.mxu0 0
        %1584 = vmatprep.subr.bf16.mxu0 0
        %1585 = vmatpush1.bf16.msra.mxu0 0
        %1586 = vmatprep.subr.bf16.mxu0 0
        %1587 = vmatpush1.bf16.msra.mxu0 0
        %1588 = vmatprep.subr.bf16.mxu0 0
        %1589 = vmatpush1.bf16.msra.mxu0 0
        %1590 = vmatprep.subr.bf16.mxu0 0
        %1591 = vmatpush1.bf16.msra.mxu0 0
        %1592 = vmatprep.subr.bf16.mxu0 0
        %1593 = vmatpush1.bf16.msra.mxu0 0
        %1594 = vmatprep.mubr.bf16.mxu0 0
        %1595 = vmatmul.mubr.bf16.gmra.mrb[0].mxu0 %v1557
        %v1596 = vpop.f32.mrb[0].mxu0
        %v1597 = vadd.f32 0.0, %v1596
        %v1598 = vpop.f32.mrb[0].mxu0
        %v1599 = vpop.f32.mrb[0].mxu0
        %v1600 = vpop.f32.mrb[0].mxu0
        %1601 = vdwg.mxu0
        %v1602 = vcombine.low %v1459, %v1551
        %v1603 = vcombine.high %v1459, %v1551
        %v1605 = vunpack.c.l.s4 1983009808
        %v1606 = vunpack.c.0.s8 %v1605
        %v1607 = vlaneseq
        %v1608 = vshrl.u32 %v1607, 7
        %v1609 = vsub.s32 %v1606, %v1608
        %v1610 = vrot.slane %v1602, %v1609
        %v1612 = vunpack.c.l.s4 1983009808
        %v1613 = vunpack.c.0.s8 %v1612
        %v1614 = vlaneseq
        %v1615 = vshrl.u32 %v1614, 7
        %v1616 = vsub.s32 %v1613, %v1615
        %v1617 = vrot.slane %v1603, %v1616
        %v1618 = vcombine.low %v1505, %v1597
        %v1619 = vcombine.high %v1505, %v1597
        %v1621 = vunpack.c.l.s4 1983009808
        %v1622 = vunpack.c.0.s8 %v1621
        %v1623 = vlaneseq
        %v1624 = vshrl.u32 %v1623, 7
        %v1625 = vsub.s32 %v1622, %v1624
        %v1626 = vrot.slane %v1618, %v1625
        %v1628 = vunpack.c.l.s4 1983009808
        %v1629 = vunpack.c.0.s8 %v1628
        %v1630 = vlaneseq
        %v1631 = vshrl.u32 %v1630, 7
        %v1632 = vsub.s32 %v1629, %v1631
        %v1633 = vrot.slane %v1619, %v1632
        %v1634 = vcombine.low %v1610, %v1626
        %v1635 = vcombine.high %v1610, %v1626
        %v1637 = vunpack.c.l.s4 1934713408
        %v1638 = vunpack.c.0.s8 %v1637
        %v1639 = vlaneseq
        %v1640 = vshrl.u32 %v1639, 7
        %v1641 = vsub.s32 %v1638, %v1640
        %v1642 = vrot.slane %v1634, %v1641
        %v1644 = vunpack.c.l.s4 1934713408
        %v1645 = vunpack.c.0.s8 %v1644
        %v1646 = vlaneseq
        %v1647 = vshrl.u32 %v1646, 7
        %v1648 = vsub.s32 %v1645, %v1647
        %v1649 = vrot.slane %v1635, %v1648
        %v1650 = vcombine.low %v1617, %v1633
        %v1651 = vcombine.high %v1617, %v1633
        %v1653 = vunpack.c.l.s4 1934713408
        %v1654 = vunpack.c.0.s8 %v1653
        %v1655 = vlaneseq
        %v1656 = vshrl.u32 %v1655, 7
        %v1657 = vsub.s32 %v1654, %v1656
        %v1658 = vrot.slane %v1650, %v1657
        %v1660 = vunpack.c.l.s4 1934713408
        %v1661 = vunpack.c.0.s8 %v1660
        %v1662 = vlaneseq
        %v1663 = vshrl.u32 %v1662, 7
        %v1664 = vsub.s32 %v1661, %v1663
        %v1665 = vrot.slane %v1651, %v1664
        %v1666 = vcombine.high %v1642, 0.0
        %v1667 = vcombine.high %v1649, 0.0
        %v1668 = vcombine.high %v1658, 0.0
        %v1669 = vcombine.high %v1665, 0.0
        %v1670 = vcombine.low %v1642, %v1649
        %v1672 = vunpack.c.l.s4 1983009808
        %v1673 = vunpack.c.0.s8 %v1672
        %v1674 = vlaneseq
        %v1675 = vshrl.u32 %v1674, 7
        %v1676 = vsub.s32 %v1673, %v1675
        %v1677 = vrot.slane %v1670, %v1676
        %v1678 = vcombine.low %v1666, %v1667
        %v1680 = vunpack.c.l.s4 1983009808
        %v1681 = vunpack.c.0.s8 %v1680
        %v1682 = vlaneseq
        %v1683 = vshrl.u32 %v1682, 7
        %v1684 = vsub.s32 %v1681, %v1683
        %v1685 = vrot.slane %v1678, %v1684
        %v1686 = vcombine.low %v1658, %v1665
        %v1688 = vunpack.c.l.s4 1983009808
        %v1689 = vunpack.c.0.s8 %v1688
        %v1690 = vlaneseq
        %v1691 = vshrl.u32 %v1690, 7
        %v1692 = vsub.s32 %v1689, %v1691
        %v1693 = vrot.slane %v1686, %v1692
        %v1694 = vcombine.low %v1668, %v1669
        %v1696 = vunpack.c.l.s4 1983009808
        %v1697 = vunpack.c.0.s8 %v1696
        %v1698 = vlaneseq
        %v1699 = vshrl.u32 %v1698, 7
        %v1700 = vsub.s32 %v1697, %v1699
        %v1701 = vrot.slane %v1694, %v1700
        %v1702 = vcombine.low %v1677, %v1685
        %v1703 = vcombine.high %v1677, %v1685
        %v1705 = vunpack.c.l.s4 1934713408
        %v1706 = vunpack.c.0.s8 %v1705
        %v1707 = vlaneseq
        %v1708 = vshrl.u32 %v1707, 7
        %v1709 = vsub.s32 %v1706, %v1708
        %v1710 = vrot.slane %v1702, %v1709
        %v1712 = vunpack.c.l.s4 1934713408
        %v1713 = vunpack.c.0.s8 %v1712
        %v1714 = vlaneseq
        %v1715 = vshrl.u32 %v1714, 7
        %v1716 = vsub.s32 %v1713, %v1715
        %v1717 = vrot.slane %v1703, %v1716
        %v1718 = vcombine.low %v1693, %v1701
        %v1719 = vcombine.high %v1693, %v1701
        %v1721 = vunpack.c.l.s4 1934713408
        %v1722 = vunpack.c.0.s8 %v1721
        %v1723 = vlaneseq
        %v1724 = vshrl.u32 %v1723, 7
        %v1725 = vsub.s32 %v1722, %v1724
        %v1726 = vrot.slane %v1718, %v1725
        %v1728 = vunpack.c.l.s4 1934713408
        %v1729 = vunpack.c.0.s8 %v1728
        %v1730 = vlaneseq
        %v1731 = vshrl.u32 %v1730, 7
        %v1732 = vsub.s32 %v1729, %v1731
        %v1733 = vrot.slane %v1719, %v1732
        %v1734 = vcombine.low %v1710, %v1726
        %v1735 = vcombine.high %v1710, %v1726
        %v1736 = vcombine.low %v1717, %v1733
        %v1737 = vcombine.high %v1717, %v1733
        %1739 = vrot.lane.b32.xlu0 %v1735, 8
        %v1740 = vpop.permute.xlu0 %1739
        %1743 = vrot.lane.b32.xlu0 %v1736, 16
        %v1744 = vpop.permute.xlu0 %1743
        %1747 = vrot.lane.b32.xlu0 %v1737, 24
        %v1748 = vpop.permute.xlu0 %1747
        %v1750 = vsel %vm1184, %v1734, %v1740
        %vm1751 = vcmask 130048
        %v1752 = vsel %vm1751, %v1750, %v1744
        %vm1753 = vcmask 195584
        %v1754 = vsel %vm1753, %v1752, %v1748
        %v1755 = vpack.c.bf16 %v1754, %v1754
        %v1757 = vlaneseq
        %v1758 = vshrl.u32 %v1757, 7
        %v1759 = vsub.s32 0, %v1758
        %v1760 = vrot.slane %v970, %v1759
        %v1766 = vunpack.c.l.b16 %v966
        %v1767 = vunpack.c.l.b16 %v967
        %v1768 = vunpack.c.l.b16 %v968
        %v1769 = vunpack.c.l.b16 %v969
        %v1770 = vpack.c.b16 %v1767, %v1766
        %v1771 = vpack.c.b16 %v1769, %v1768
        %v1775 = vsel %vm990, %v1755, 0
        %1777 = vmatprep.subr.bf16.mxu0 0
        %1778 = vmatpush1.bf16.msra.mxu0 %v1770
        %1779 = vmatprep.subr.bf16.mxu0 0
        %1780 = vmatpush1.bf16.msra.mxu0 %v1771
        %1781 = vmatprep.subr.bf16.mxu0 0
        %1782 = vmatpush1.bf16.msra.mxu0 0
        %1783 = vmatprep.subr.bf16.mxu0 0
        %1784 = vmatpush1.bf16.msra.mxu0 0
        %1785 = vmatprep.subr.bf16.mxu0 0
        %1786 = vmatpush1.bf16.msra.mxu0 0
        %1787 = vmatprep.subr.bf16.mxu0 0
        %1788 = vmatpush1.bf16.msra.mxu0 0
        %1789 = vmatprep.subr.bf16.mxu0 0
        %1790 = vmatpush1.bf16.msra.mxu0 0
        %1791 = vmatprep.subr.bf16.mxu0 0
        %1792 = vmatpush1.bf16.msra.mxu0 0
        %1793 = vmatprep.subr.bf16.mxu0 0
        %1794 = vmatpush1.bf16.msra.mxu0 0
        %1795 = vmatprep.subr.bf16.mxu0 0
        %1796 = vmatpush1.bf16.msra.mxu0 0
        %1797 = vmatprep.subr.bf16.mxu0 0
        %1798 = vmatpush1.bf16.msra.mxu0 0
        %1799 = vmatprep.subr.bf16.mxu0 0
        %1800 = vmatpush1.bf16.msra.mxu0 0
        %1801 = vmatprep.subr.bf16.mxu0 0
        %1802 = vmatpush1.bf16.msra.mxu0 0
        %1803 = vmatprep.subr.bf16.mxu0 0
        %1804 = vmatpush1.bf16.msra.mxu0 0
        %1805 = vmatprep.subr.bf16.mxu0 0
        %1806 = vmatpush1.bf16.msra.mxu0 0
        %1807 = vmatprep.subr.bf16.mxu0 0
        %1808 = vmatpush1.bf16.msra.mxu0 0
        %1809 = vmatprep.mubr.bf16.mxu0 0
        %1810 = vmatmul.mubr.bf16.gmra.mrb[0].mxu0 %v1775
        %v1811 = vpop.f32.mrb[0].mxu0
        %v1812 = vadd.f32 %v1760, %v1811
        %v1813 = vpop.f32.mrb[0].mxu0
        %v1814 = vpop.f32.mrb[0].mxu0
        %v1815 = vpop.f32.mrb[0].mxu0
        %1816 = vdwg.mxu0
        %v1817 = vadd.f32 %v948, %v1812
        %v1818 = vld [vmem:[%s11] sm:$0x1]
        %v1819 = vld [vmem:[%s12] sm:$0x1]
        %v1820 = vsel %vm990, %v1817, 0.0
        %1821 = vadd.xlane.f32.xlu0 %v1820
        %v1822 = vpop.xlane.xlu0 %1821
        %v1823 = vrcp.pop 32.0
        %v1824 = vmul.f32 %v1822, %v1823
        %v1825 = vsub.f32 %v1817, %v1824
        %v1826 = vmul.f32 %v1825, %v1825
        %v1827 = vsel %vm990, %v1826, 0.0
        %1828 = vadd.xlane.f32.xlu0 %v1827
        %v1829 = vpop.xlane.xlu0 %1828
        %v1830 = vmul.f32 %v1829, %v1823
        %v1831 = vadd.f32 %v1830, 1e-05
        %v1832 = vrsqrt.pop %v1831
        %v1833 = vmul.f32 %v1825, %v1832
        %v1835 = vlaneseq
        %v1836 = vshrl.u32 %v1835, 7
        %v1837 = vsub.s32 0, %v1836
        %v1838 = vrot.slane %v1818, %v1837
        %v1840 = vmul.f32 %v1833, %v1838
        %v1842 = vlaneseq
        %v1843 = vshrl.u32 %v1842, 7
        %v1844 = vsub.s32 0, %v1843
        %v1845 = vrot.slane %v1819, %v1844
        %v1847 = vadd.f32 %v1840, %v1845
        %v1848 = vld [vmem:[%s931] sm:$0xf]
        %v1849 = vld [vmem:[%s931 + $0x4] sm:$0xf]
        %v1850 = vld [vmem:[%s931 + $0x8] sm:$0xf]
        %v1851 = vld [vmem:[%s931 + $0xc] sm:$0xf]
        %v1852 = vld [vmem:[%s931 + $0x10] sm:$0xf]
        %v1853 = vld [vmem:[%s931 + $0x14] sm:$0xf]
        %v1854 = vld [vmem:[%s931 + $0x18] sm:$0xf]
        %v1855 = vld [vmem:[%s931 + $0x1c] sm:$0xf]
        %v1856 = vld [vmem:[%s936] sm:$0xf]
        %v1857 = vld [vmem:[%s936 + $0x4] sm:$0xf]
        %v1858 = vld [vmem:[%s936 + $0x8] sm:$0xf]
        %v1859 = vld [vmem:[%s936 + $0xc] sm:$0xf]
        %v1860 = vld [vmem:[%s936 + $0x10] sm:$0xf]
        %v1861 = vld [vmem:[%s936 + $0x14] sm:$0xf]
        %v1862 = vld [vmem:[%s936 + $0x18] sm:$0xf]
        %v1863 = vld [vmem:[%s936 + $0x1c] sm:$0xf]
        %v1864 = vld [vmem:[%s13] sm:$0xf]
        %v1865 = vld [vmem:[%s13 + $0x4] sm:$0xf]
        %v1866 = vld [vmem:[%s13 + $0x8] sm:$0xf]
        %v1867 = vld [vmem:[%s13 + $0xc] sm:$0xf]
        %v1868 = vld [vmem:[%s14] sm:$0x1]
        %v1869 = vld [vmem:[%s15] sm:$0xf]
        %v1870 = vld [vmem:[%s15 + $0x4] sm:$0xf]
        %v1871 = vld [vmem:[%s15 + $0x8] sm:$0xf]
        %v1872 = vld [vmem:[%s15 + $0xc] sm:$0xf]
        %v1873 = vld [vmem:[%s16] sm:$0x1]
        %v1874 = vpack.c.bf16 %v1847, %v1847
        %v1876 = vlaneseq
        %v1877 = vshrl.u32 %v1876, 7
        %v1878 = vsub.s32 0, %v1877
        %v1879 = vrot.slane %v1868, %v1878
        %v1885 = vunpack.c.l.b16 %v1864
        %v1886 = vunpack.c.l.b16 %v1865
        %v1887 = vunpack.c.l.b16 %v1866
        %v1888 = vunpack.c.l.b16 %v1867
        %v1889 = vpack.c.b16 %v1886, %v1885
        %v1890 = vpack.c.b16 %v1888, %v1887
        %v1894 = vsel %vm990, %v1874, 0
        %1896 = vmatprep.subr.bf16.mxu0 0
        %1897 = vmatpush1.bf16.msra.mxu0 %v1889
        %1898 = vmatprep.subr.bf16.mxu0 0
        %1899 = vmatpush1.bf16.msra.mxu0 %v1890
        %1900 = vmatprep.subr.bf16.mxu0 0
        %1901 = vmatpush1.bf16.msra.mxu0 0
        %1902 = vmatprep.subr.bf16.mxu0 0
        %1903 = vmatpush1.bf16.msra.mxu0 0
        %1904 = vmatprep.subr.bf16.mxu0 0
        %1905 = vmatpush1.bf16.msra.mxu0 0
        %1906 = vmatprep.subr.bf16.mxu0 0
        %1907 = vmatpush1.bf16.msra.mxu0 0
        %1908 = vmatprep.subr.bf16.mxu0 0
        %1909 = vmatpush1.bf16.msra.mxu0 0
        %1910 = vmatprep.subr.bf16.mxu0 0
        %1911 = vmatpush1.bf16.msra.mxu0 0
        %1912 = vmatprep.subr.bf16.mxu0 0
        %1913 = vmatpush1.bf16.msra.mxu0 0
        %1914 = vmatprep.subr.bf16.mxu0 0
        %1915 = vmatpush1.bf16.msra.mxu0 0
        %1916 = vmatprep.subr.bf16.mxu0 0
        %1917 = vmatpush1.bf16.msra.mxu0 0
        %1918 = vmatprep.subr.bf16.mxu0 0
        %1919 = vmatpush1.bf16.msra.mxu0 0
        %1920 = vmatprep.subr.bf16.mxu0 0
        %1921 = vmatpush1.bf16.msra.mxu0 0
        %1922 = vmatprep.subr.bf16.mxu0 0
        %1923 = vmatpush1.bf16.msra.mxu0 0
        %1924 = vmatprep.subr.bf16.mxu0 0
        %1925 = vmatpush1.bf16.msra.mxu0 0
        %1926 = vmatprep.subr.bf16.mxu0 0
        %1927 = vmatpush1.bf16.msra.mxu0 0
        %1928 = vmatprep.mubr.bf16.mxu0 0
        %1929 = vmatmul.mubr.bf16.gmra.mrb[0].mxu0 %v1894
        %v1930 = vpop.f32.mrb[0].mxu0
        %v1931 = vadd.f32 %v1879, %v1930
        %v1932 = vpop.f32.mrb[0].mxu0
        %v1933 = vpop.f32.mrb[0].mxu0
        %v1934 = vpop.f32.mrb[0].mxu0
        %1935 = vdwg.mxu0
        %1937 = vrot.lane.b32.xlu0 %v1931, 120
        %v1938 = vpop.permute.xlu0 %1937
        %1940 = vrot.lane.b32.xlu0 %v1931, 112
        %v1941 = vpop.permute.xlu0 %1940
        %1943 = vrot.lane.b32.xlu0 %v1931, 104
        %v1944 = vpop.permute.xlu0 %1943
        %v1946 = vcombine.low %v1931, %v1941
        %v1947 = vcombine.high %v1931, %v1941
        %v1949 = vunpack.c.l.s4 1983009808
        %v1950 = vunpack.c.0.s8 %v1949
        %v1951 = vlaneseq
        %v1952 = vshrl.u32 %v1951, 7
        %v1953 = vsub.s32 %v1950, %v1952
        %v1954 = vrot.slane %v1946, %v1953
        %v1956 = vunpack.c.l.s4 1983009808
        %v1957 = vunpack.c.0.s8 %v1956
        %v1958 = vlaneseq
        %v1959 = vshrl.u32 %v1958, 7
        %v1960 = vsub.s32 %v1957, %v1959
        %v1961 = vrot.slane %v1947, %v1960
        %v1962 = vcombine.low %v1938, %v1944
        %v1963 = vcombine.high %v1938, %v1944
        %v1965 = vunpack.c.l.s4 1983009808
        %v1966 = vunpack.c.0.s8 %v1965
        %v1967 = vlaneseq
        %v1968 = vshrl.u32 %v1967, 7
        %v1969 = vsub.s32 %v1966, %v1968
        %v1970 = vrot.slane %v1962, %v1969
        %v1972 = vunpack.c.l.s4 1983009808
        %v1973 = vunpack.c.0.s8 %v1972
        %v1974 = vlaneseq
        %v1975 = vshrl.u32 %v1974, 7
        %v1976 = vsub.s32 %v1973, %v1975
        %v1977 = vrot.slane %v1963, %v1976
        %v1978 = vcombine.low %v1954, %v1970
        %v1979 = vcombine.high %v1954, %v1970
        %v1981 = vunpack.c.l.s4 1934713408
        %v1982 = vunpack.c.0.s8 %v1981
        %v1983 = vlaneseq
        %v1984 = vshrl.u32 %v1983, 7
        %v1985 = vsub.s32 %v1982, %v1984
        %v1986 = vrot.slane %v1978, %v1985
        %v1988 = vunpack.c.l.s4 1934713408
        %v1989 = vunpack.c.0.s8 %v1988
        %v1990 = vlaneseq
        %v1991 = vshrl.u32 %v1990, 7
        %v1992 = vsub.s32 %v1989, %v1991
        %v1993 = vrot.slane %v1979, %v1992
        %v1994 = vcombine.low %v1961, %v1977
        %v1995 = vcombine.high %v1961, %v1977
        %v1997 = vunpack.c.l.s4 1934713408
        %v1998 = vunpack.c.0.s8 %v1997
        %v1999 = vlaneseq
        %v2000 = vshrl.u32 %v1999, 7
        %v2001 = vsub.s32 %v1998, %v2000
        %v2002 = vrot.slane %v1994, %v2001
        %v2004 = vunpack.c.l.s4 1934713408
        %v2005 = vunpack.c.0.s8 %v2004
        %v2006 = vlaneseq
        %v2007 = vshrl.u32 %v2006, 7
        %v2008 = vsub.s32 %v2005, %v2007
        %v2009 = vrot.slane %v1995, %v2008
        %v2010 = vcombine.high %v1986, 0.0
        %v2011 = vcombine.high %v1993, 0.0
        %v2012 = vcombine.high %v2002, 0.0
        %v2013 = vcombine.high %v2009, 0.0
        %v2014 = vcombine.low %v1986, %v1993
        %v2016 = vunpack.c.l.s4 1983009808
        %v2017 = vunpack.c.0.s8 %v2016
        %v2018 = vlaneseq
        %v2019 = vshrl.u32 %v2018, 7
        %v2020 = vsub.s32 %v2017, %v2019
        %v2021 = vrot.slane %v2014, %v2020
        %v2022 = vcombine.low %v2010, %v2011
        %v2024 = vunpack.c.l.s4 1983009808
        %v2025 = vunpack.c.0.s8 %v2024
        %v2026 = vlaneseq
        %v2027 = vshrl.u32 %v2026, 7
        %v2028 = vsub.s32 %v2025, %v2027
        %v2029 = vrot.slane %v2022, %v2028
        %v2030 = vcombine.low %v2002, %v2009
        %v2032 = vunpack.c.l.s4 1983009808
        %v2033 = vunpack.c.0.s8 %v2032
        %v2034 = vlaneseq
        %v2035 = vshrl.u32 %v2034, 7
        %v2036 = vsub.s32 %v2033, %v2035
        %v2037 = vrot.slane %v2030, %v2036
        %v2038 = vcombine.low %v2012, %v2013
        %v2040 = vunpack.c.l.s4 1983009808
        %v2041 = vunpack.c.0.s8 %v2040
        %v2042 = vlaneseq
        %v2043 = vshrl.u32 %v2042, 7
        %v2044 = vsub.s32 %v2041, %v2043
        %v2045 = vrot.slane %v2038, %v2044
        %v2046 = vcombine.low %v2021, %v2029
        %v2047 = vcombine.high %v2021, %v2029
        %v2049 = vunpack.c.l.s4 1934713408
        %v2050 = vunpack.c.0.s8 %v2049
        %v2051 = vlaneseq
        %v2052 = vshrl.u32 %v2051, 7
        %v2053 = vsub.s32 %v2050, %v2052
        %v2054 = vrot.slane %v2046, %v2053
        %v2056 = vunpack.c.l.s4 1934713408
        %v2057 = vunpack.c.0.s8 %v2056
        %v2058 = vlaneseq
        %v2059 = vshrl.u32 %v2058, 7
        %v2060 = vsub.s32 %v2057, %v2059
        %v2061 = vrot.slane %v2047, %v2060
        %v2062 = vcombine.low %v2037, %v2045
        %v2063 = vcombine.high %v2037, %v2045
        %v2065 = vunpack.c.l.s4 1934713408
        %v2066 = vunpack.c.0.s8 %v2065
        %v2067 = vlaneseq
        %v2068 = vshrl.u32 %v2067, 7
        %v2069 = vsub.s32 %v2066, %v2068
        %v2070 = vrot.slane %v2062, %v2069
        %v2072 = vunpack.c.l.s4 1934713408
        %v2073 = vunpack.c.0.s8 %v2072
        %v2074 = vlaneseq
        %v2075 = vshrl.u32 %v2074, 7
        %v2076 = vsub.s32 %v2073, %v2075
        %v2077 = vrot.slane %v2063, %v2076
        %v2078 = vcombine.low %v2054, %v2070
        %v2079 = vcombine.high %v2054, %v2070
        %v2080 = vcombine.low %v2061, %v2077
        %v2081 = vcombine.high %v2061, %v2077
        %v2082 = vpack.c.bf16 %v2078, %v2078
        %v2083 = vpack.c.bf16 %v2079, %v2079
        %v2084 = vpack.c.bf16 %v2080, %v2080
        %v2085 = vpack.c.bf16 %v2081, %v2081
        %v2086 = vlaneseq
        %v2087 = vshrl.u32 %v2086, 7
        %v2088 = vsub.s32 0, %v2087
        %v2089 = vrot.slane %v952, %v2088
        %v2092 = vunpack.c.l.b16 %v1848
        %v2093 = vunpack.c.l.b16 %v1849
        %v2094 = vpack.c.b16 %v2093, %v2092
        %v2096 = vsel %vm1184, %v2082, 0
        %v2099 = vsel %vm1184, %v2094, 0
        %2101 = vmatprep.subr.bf16.mxu0 0
        %2102 = vmatpush1.bf16.xpose.msra.mxu0 %v2099
        %2103 = vmatprep.subr.bf16.mxu0 0
        %2104 = vmatpush1.bf16.xpose.msra.mxu0 0
        %2105 = vmatprep.subr.bf16.mxu0 0
        %2106 = vmatpush1.bf16.xpose.msra.mxu0 0
        %2107 = vmatprep.subr.bf16.mxu0 0
        %2108 = vmatpush1.bf16.xpose.msra.mxu0 0
        %2109 = vmatprep.subr.bf16.mxu0 0
        %2110 = vmatpush1.bf16.xpose.msra.mxu0 0
        %2111 = vmatprep.subr.bf16.mxu0 0
        %2112 = vmatpush1.bf16.xpose.msra.mxu0 0
        %2113 = vmatprep.subr.bf16.mxu0 0
        %2114 = vmatpush1.bf16.xpose.msra.mxu0 0
        %2115 = vmatprep.subr.bf16.mxu0 0
        %2116 = vmatpush1.bf16.xpose.msra.mxu0 0
        %2117 = vmatprep.subr.bf16.mxu0 0
        %2118 = vmatpush1.bf16.xpose.msra.mxu0 0
        %2119 = vmatprep.subr.bf16.mxu0 0
        %2120 = vmatpush1.bf16.xpose.msra.mxu0 0
        %2121 = vmatprep.subr.bf16.mxu0 0
        %2122 = vmatpush1.bf16.xpose.msra.mxu0 0
        %2123 = vmatprep.subr.bf16.mxu0 0
        %2124 = vmatpush1.bf16.xpose.msra.mxu0 0
        %2125 = vmatprep.subr.bf16.mxu0 0
        %2126 = vmatpush1.bf16.xpose.msra.mxu0 0
        %2127 = vmatprep.subr.bf16.mxu0 0
        %2128 = vmatpush1.bf16.xpose.msra.mxu0 0
        %2129 = vmatprep.subr.bf16.mxu0 0
        %2130 = vmatpush1.bf16.xpose.msra.mxu0 0
        %2131 = vmatprep.subr.bf16.mxu0 0
        %2132 = vmatpush1.bf16.xpose.msra.mxu0 0
        %2133 = vmatprep.mubr.bf16.mxu0 0
        %2134 = vmatmul.mubr.bf16.gmra.mrb[0].mxu0 %v2096
        %v2135 = vpop.f32.mrb[0].mxu0
        %v2136 = vadd.f32 %v2089, %v2135
        %v2137 = vpop.f32.mrb[0].mxu0
        %v2138 = vpop.f32.mrb[0].mxu0
        %v2139 = vpop.f32.mrb[0].mxu0
        %2140 = vdwg.mxu0
        %v2143 = vunpack.c.l.b16 %v1850
        %v2144 = vunpack.c.l.b16 %v1851
        %v2145 = vpack.c.b16 %v2144, %v2143
        %v2147 = vsel %vm1184, %v2083, 0
        %v2150 = vsel %vm1184, %v2145, 0
        %2152 = vmatprep.subr.bf16.mxu0 0
        %2153 = vmatpush1.bf16.xpose.msra.mxu0 %v2150
        %2154 = vmatprep.subr.bf16.mxu0 0
        %2155 = vmatpush1.bf16.xpose.msra.mxu0 0
        %2156 = vmatprep.subr.bf16.mxu0 0
        %2157 = vmatpush1.bf16.xpose.msra.mxu0 0
        %2158 = vmatprep.subr.bf16.mxu0 0
        %2159 = vmatpush1.bf16.xpose.msra.mxu0 0
        %2160 = vmatprep.subr.bf16.mxu0 0
        %2161 = vmatpush1.bf16.xpose.msra.mxu0 0
        %2162 = vmatprep.subr.bf16.mxu0 0
        %2163 = vmatpush1.bf16.xpose.msra.mxu0 0
        %2164 = vmatprep.subr.bf16.mxu0 0
        %2165 = vmatpush1.bf16.xpose.msra.mxu0 0
        %2166 = vmatprep.subr.bf16.mxu0 0
        %2167 = vmatpush1.bf16.xpose.msra.mxu0 0
        %2168 = vmatprep.subr.bf16.mxu0 0
        %2169 = vmatpush1.bf16.xpose.msra.mxu0 0
        %2170 = vmatprep.subr.bf16.mxu0 0
        %2171 = vmatpush1.bf16.xpose.msra.mxu0 0
        %2172 = vmatprep.subr.bf16.mxu0 0
        %2173 = vmatpush1.bf16.xpose.msra.mxu0 0
        %2174 = vmatprep.subr.bf16.mxu0 0
        %2175 = vmatpush1.bf16.xpose.msra.mxu0 0
        %2176 = vmatprep.subr.bf16.mxu0 0
        %2177 = vmatpush1.bf16.xpose.msra.mxu0 0
        %2178 = vmatprep.subr.bf16.mxu0 0
        %2179 = vmatpush1.bf16.xpose.msra.mxu0 0
        %2180 = vmatprep.subr.bf16.mxu0 0
        %2181 = vmatpush1.bf16.xpose.msra.mxu0 0
        %2182 = vmatprep.subr.bf16.mxu0 0
        %2183 = vmatpush1.bf16.xpose.msra.mxu0 0
        %2184 = vmatprep.mubr.bf16.mxu0 0
        %2185 = vmatmul.mubr.bf16.gmra.mrb[0].mxu0 %v2147
        %v2186 = vpop.f32.mrb[0].mxu0
        %v2187 = vadd.f32 %v2089, %v2186
        %v2188 = vpop.f32.mrb[0].mxu0
        %v2189 = vpop.f32.mrb[0].mxu0
        %v2190 = vpop.f32.mrb[0].mxu0
        %2191 = vdwg.mxu0
        %v2194 = vunpack.c.l.b16 %v1852
        %v2195 = vunpack.c.l.b16 %v1853
        %v2196 = vpack.c.b16 %v2195, %v2194
        %v2198 = vsel %vm1184, %v2084, 0
        %v2201 = vsel %vm1184, %v2196, 0
        %2203 = vmatprep.subr.bf16.mxu0 0
        %2204 = vmatpush1.bf16.xpose.msra.mxu0 %v2201
        %2205 = vmatprep.subr.bf16.mxu0 0
        %2206 = vmatpush1.bf16.xpose.msra.mxu0 0
        %2207 = vmatprep.subr.bf16.mxu0 0
        %2208 = vmatpush1.bf16.xpose.msra.mxu0 0
        %2209 = vmatprep.subr.bf16.mxu0 0
        %2210 = vmatpush1.bf16.xpose.msra.mxu0 0
        %2211 = vmatprep.subr.bf16.mxu0 0
        %2212 = vmatpush1.bf16.xpose.msra.mxu0 0
        %2213 = vmatprep.subr.bf16.mxu0 0
        %2214 = vmatpush1.bf16.xpose.msra.mxu0 0
        %2215 = vmatprep.subr.bf16.mxu0 0
        %2216 = vmatpush1.bf16.xpose.msra.mxu0 0
        %2217 = vmatprep.subr.bf16.mxu0 0
        %2218 = vmatpush1.bf16.xpose.msra.mxu0 0
        %2219 = vmatprep.subr.bf16.mxu0 0
        %2220 = vmatpush1.bf16.xpose.msra.mxu0 0
        %2221 = vmatprep.subr.bf16.mxu0 0
        %2222 = vmatpush1.bf16.xpose.msra.mxu0 0
        %2223 = vmatprep.subr.bf16.mxu0 0
        %2224 = vmatpush1.bf16.xpose.msra.mxu0 0
        %2225 = vmatprep.subr.bf16.mxu0 0
        %2226 = vmatpush1.bf16.xpose.msra.mxu0 0
        %2227 = vmatprep.subr.bf16.mxu0 0
        %2228 = vmatpush1.bf16.xpose.msra.mxu0 0
        %2229 = vmatprep.subr.bf16.mxu0 0
        %2230 = vmatpush1.bf16.xpose.msra.mxu0 0
        %2231 = vmatprep.subr.bf16.mxu0 0
        %2232 = vmatpush1.bf16.xpose.msra.mxu0 0
        %2233 = vmatprep.subr.bf16.mxu0 0
        %2234 = vmatpush1.bf16.xpose.msra.mxu0 0
        %2235 = vmatprep.mubr.bf16.mxu0 0
        %2236 = vmatmul.mubr.bf16.gmra.mrb[0].mxu0 %v2198
        %v2237 = vpop.f32.mrb[0].mxu0
        %v2238 = vadd.f32 %v2089, %v2237
        %v2239 = vpop.f32.mrb[0].mxu0
        %v2240 = vpop.f32.mrb[0].mxu0
        %v2241 = vpop.f32.mrb[0].mxu0
        %2242 = vdwg.mxu0
        %v2245 = vunpack.c.l.b16 %v1854
        %v2246 = vunpack.c.l.b16 %v1855
        %v2247 = vpack.c.b16 %v2246, %v2245
        %v2249 = vsel %vm1184, %v2085, 0
        %v2252 = vsel %vm1184, %v2247, 0
        %2254 = vmatprep.subr.bf16.mxu0 0
        %2255 = vmatpush1.bf16.xpose.msra.mxu0 %v2252
        %2256 = vmatprep.subr.bf16.mxu0 0
        %2257 = vmatpush1.bf16.xpose.msra.mxu0 0
        %2258 = vmatprep.subr.bf16.mxu0 0
        %2259 = vmatpush1.bf16.xpose.msra.mxu0 0
        %2260 = vmatprep.subr.bf16.mxu0 0
        %2261 = vmatpush1.bf16.xpose.msra.mxu0 0
        %2262 = vmatprep.subr.bf16.mxu0 0
        %2263 = vmatpush1.bf16.xpose.msra.mxu0 0
        %2264 = vmatprep.subr.bf16.mxu0 0
        %2265 = vmatpush1.bf16.xpose.msra.mxu0 0
        %2266 = vmatprep.subr.bf16.mxu0 0
        %2267 = vmatpush1.bf16.xpose.msra.mxu0 0
        %2268 = vmatprep.subr.bf16.mxu0 0
        %2269 = vmatpush1.bf16.xpose.msra.mxu0 0
        %2270 = vmatprep.subr.bf16.mxu0 0
        %2271 = vmatpush1.bf16.xpose.msra.mxu0 0
        %2272 = vmatprep.subr.bf16.mxu0 0
        %2273 = vmatpush1.bf16.xpose.msra.mxu0 0
        %2274 = vmatprep.subr.bf16.mxu0 0
        %2275 = vmatpush1.bf16.xpose.msra.mxu0 0
        %2276 = vmatprep.subr.bf16.mxu0 0
        %2277 = vmatpush1.bf16.xpose.msra.mxu0 0
        %2278 = vmatprep.subr.bf16.mxu0 0
        %2279 = vmatpush1.bf16.xpose.msra.mxu0 0
        %2280 = vmatprep.subr.bf16.mxu0 0
        %2281 = vmatpush1.bf16.xpose.msra.mxu0 0
        %2282 = vmatprep.subr.bf16.mxu0 0
        %2283 = vmatpush1.bf16.xpose.msra.mxu0 0
        %2284 = vmatprep.subr.bf16.mxu0 0
        %2285 = vmatpush1.bf16.xpose.msra.mxu0 0
        %2286 = vmatprep.mubr.bf16.mxu0 0
        %2287 = vmatmul.mubr.bf16.gmra.mrb[0].mxu0 %v2249
        %v2288 = vpop.f32.mrb[0].mxu0
        %v2289 = vadd.f32 %v2089, %v2288
        %v2290 = vpop.f32.mrb[0].mxu0
        %v2291 = vpop.f32.mrb[0].mxu0
        %v2292 = vpop.f32.mrb[0].mxu0
        %2293 = vdwg.mxu0
        %v2294 = vsel %vm1751, %v2136, -inf
        %2295 = vmax.xlane.f32.xlu0 %v2294
        %v2296 = vpop.xlane.xlu0 %2295
        %v2297 = vsel %vm1751, %v2187, -inf
        %2298 = vmax.xlane.f32.xlu0 %v2297
        %v2299 = vpop.xlane.xlu0 %2298
        %v2300 = vsel %vm1751, %v2238, -inf
        %2301 = vmax.xlane.f32.xlu0 %v2300
        %v2302 = vpop.xlane.xlu0 %2301
        %v2303 = vsel %vm1751, %v2289, -inf
        %2304 = vmax.xlane.f32.xlu0 %v2303
        %v2305 = vpop.xlane.xlu0 %2304
        %v2306 = vsub.f32 %v2136, %v2296
        %v2307 = vsub.f32 %v2187, %v2299
        %v2308 = vsub.f32 %v2238, %v2302
        %v2309 = vsub.f32 %v2289, %v2305
        %v2310 = vmul.f32 %v2306, 1.442695
        %v2311 = vpow.pop %v2310
        %v2312 = vmul.f32 %v2307, 1.442695
        %v2313 = vpow.pop %v2312
        %v2314 = vmul.f32 %v2308, 1.442695
        %v2315 = vpow.pop %v2314
        %v2316 = vmul.f32 %v2309, 1.442695
        %v2317 = vpow.pop %v2316
        %v2318 = vsel %vm1751, %v2311, 0.0
        %2319 = vadd.xlane.f32.xlu0 %v2318
        %v2320 = vpop.xlane.xlu0 %2319
        %v2321 = vsel %vm1751, %v2313, 0.0
        %2322 = vadd.xlane.f32.xlu0 %v2321
        %v2323 = vpop.xlane.xlu0 %2322
        %v2324 = vsel %vm1751, %v2315, 0.0
        %2325 = vadd.xlane.f32.xlu0 %v2324
        %v2326 = vpop.xlane.xlu0 %2325
        %v2327 = vsel %vm1751, %v2317, 0.0
        %2328 = vadd.xlane.f32.xlu0 %v2327
        %v2329 = vpop.xlane.xlu0 %2328
        %v2330 = vrcp.pop %v2320
        %v2331 = vrcp.pop %v2323
        %v2332 = vrcp.pop %v2326
        %v2333 = vrcp.pop %v2329
        %v2334 = vmul.f32 %v2311, %v2330
        %v2335 = vmul.f32 %v2313, %v2331
        %v2336 = vmul.f32 %v2315, %v2332
        %v2337 = vmul.f32 %v2317, %v2333
        %v2338 = vpack.c.bf16 %v2334, %v2334
        %v2339 = vpack.c.bf16 %v2335, %v2335
        %v2340 = vpack.c.bf16 %v2336, %v2336
        %v2341 = vpack.c.bf16 %v2337, %v2337
        %v2344 = vunpack.c.l.b16 %v1856
        %v2345 = vunpack.c.l.b16 %v1857
        %v2346 = vpack.c.b16 %v2345, %v2344
        %v2349 = vsel %vm1751, %v2338, 0
        %2351 = vmatprep.subr.bf16.mxu0 0
        %2352 = vmatpush1.bf16.msra.mxu0 %v2346
        %2353 = vmatprep.subr.bf16.mxu0 0
        %2354 = vmatpush1.bf16.msra.mxu0 0
        %2355 = vmatprep.subr.bf16.mxu0 0
        %2356 = vmatpush1.bf16.msra.mxu0 0
        %2357 = vmatprep.subr.bf16.mxu0 0
        %2358 = vmatpush1.bf16.msra.mxu0 0
        %2359 = vmatprep.subr.bf16.mxu0 0
        %2360 = vmatpush1.bf16.msra.mxu0 0
        %2361 = vmatprep.subr.bf16.mxu0 0
        %2362 = vmatpush1.bf16.msra.mxu0 0
        %2363 = vmatprep.subr.bf16.mxu0 0
        %2364 = vmatpush1.bf16.msra.mxu0 0
        %2365 = vmatprep.subr.bf16.mxu0 0
        %2366 = vmatpush1.bf16.msra.mxu0 0
        %2367 = vmatprep.subr.bf16.mxu0 0
        %2368 = vmatpush1.bf16.msra.mxu0 0
        %2369 = vmatprep.subr.bf16.mxu0 0
        %2370 = vmatpush1.bf16.msra.mxu0 0
        %2371 = vmatprep.subr.bf16.mxu0 0
        %2372 = vmatpush1.bf16.msra.mxu0 0
        %2373 = vmatprep.subr.bf16.mxu0 0
        %2374 = vmatpush1.bf16.msra.mxu0 0
        %2375 = vmatprep.subr.bf16.mxu0 0
        %2376 = vmatpush1.bf16.msra.mxu0 0
        %2377 = vmatprep.subr.bf16.mxu0 0
        %2378 = vmatpush1.bf16.msra.mxu0 0
        %2379 = vmatprep.subr.bf16.mxu0 0
        %2380 = vmatpush1.bf16.msra.mxu0 0
        %2381 = vmatprep.subr.bf16.mxu0 0
        %2382 = vmatpush1.bf16.msra.mxu0 0
        %2383 = vmatprep.mubr.bf16.mxu0 0
        %2384 = vmatmul.mubr.bf16.gmra.mrb[0].mxu0 %v2349
        %v2385 = vpop.f32.mrb[0].mxu0
        %v2386 = vadd.f32 0.0, %v2385
        %v2387 = vpop.f32.mrb[0].mxu0
        %v2388 = vpop.f32.mrb[0].mxu0
        %v2389 = vpop.f32.mrb[0].mxu0
        %2390 = vdwg.mxu0
        %v2393 = vunpack.c.l.b16 %v1858
        %v2394 = vunpack.c.l.b16 %v1859
        %v2395 = vpack.c.b16 %v2394, %v2393
        %v2398 = vsel %vm1751, %v2339, 0
        %2400 = vmatprep.subr.bf16.mxu0 0
        %2401 = vmatpush1.bf16.msra.mxu0 %v2395
        %2402 = vmatprep.subr.bf16.mxu0 0
        %2403 = vmatpush1.bf16.msra.mxu0 0
        %2404 = vmatprep.subr.bf16.mxu0 0
        %2405 = vmatpush1.bf16.msra.mxu0 0
        %2406 = vmatprep.subr.bf16.mxu0 0
        %2407 = vmatpush1.bf16.msra.mxu0 0
        %2408 = vmatprep.subr.bf16.mxu0 0
        %2409 = vmatpush1.bf16.msra.mxu0 0
        %2410 = vmatprep.subr.bf16.mxu0 0
        %2411 = vmatpush1.bf16.msra.mxu0 0
        %2412 = vmatprep.subr.bf16.mxu0 0
        %2413 = vmatpush1.bf16.msra.mxu0 0
        %2414 = vmatprep.subr.bf16.mxu0 0
        %2415 = vmatpush1.bf16.msra.mxu0 0
        %2416 = vmatprep.subr.bf16.mxu0 0
        %2417 = vmatpush1.bf16.msra.mxu0 0
        %2418 = vmatprep.subr.bf16.mxu0 0
        %2419 = vmatpush1.bf16.msra.mxu0 0
        %2420 = vmatprep.subr.bf16.mxu0 0
        %2421 = vmatpush1.bf16.msra.mxu0 0
        %2422 = vmatprep.subr.bf16.mxu0 0
        %2423 = vmatpush1.bf16.msra.mxu0 0
        %2424 = vmatprep.subr.bf16.mxu0 0
        %2425 = vmatpush1.bf16.msra.mxu0 0
        %2426 = vmatprep.subr.bf16.mxu0 0
        %2427 = vmatpush1.bf16.msra.mxu0 0
        %2428 = vmatprep.subr.bf16.mxu0 0
        %2429 = vmatpush1.bf16.msra.mxu0 0
        %2430 = vmatprep.subr.bf16.mxu0 0
        %2431 = vmatpush1.bf16.msra.mxu0 0
        %2432 = vmatprep.mubr.bf16.mxu0 0
        %2433 = vmatmul.mubr.bf16.gmra.mrb[0].mxu0 %v2398
        %v2434 = vpop.f32.mrb[0].mxu0
        %v2435 = vadd.f32 0.0, %v2434
        %v2436 = vpop.f32.mrb[0].mxu0
        %v2437 = vpop.f32.mrb[0].mxu0
        %v2438 = vpop.f32.mrb[0].mxu0
        %2439 = vdwg.mxu0
        %v2442 = vunpack.c.l.b16 %v1860
        %v2443 = vunpack.c.l.b16 %v1861
        %v2444 = vpack.c.b16 %v2443, %v2442
        %v2447 = vsel %vm1751, %v2340, 0
        %2449 = vmatprep.subr.bf16.mxu0 0
        %2450 = vmatpush1.bf16.msra.mxu0 %v2444
        %2451 = vmatprep.subr.bf16.mxu0 0
        %2452 = vmatpush1.bf16.msra.mxu0 0
        %2453 = vmatprep.subr.bf16.mxu0 0
        %2454 = vmatpush1.bf16.msra.mxu0 0
        %2455 = vmatprep.subr.bf16.mxu0 0
        %2456 = vmatpush1.bf16.msra.mxu0 0
        %2457 = vmatprep.subr.bf16.mxu0 0
        %2458 = vmatpush1.bf16.msra.mxu0 0
        %2459 = vmatprep.subr.bf16.mxu0 0
        %2460 = vmatpush1.bf16.msra.mxu0 0
        %2461 = vmatprep.subr.bf16.mxu0 0
        %2462 = vmatpush1.bf16.msra.mxu0 0
        %2463 = vmatprep.subr.bf16.mxu0 0
        %2464 = vmatpush1.bf16.msra.mxu0 0
        %2465 = vmatprep.subr.bf16.mxu0 0
        %2466 = vmatpush1.bf16.msra.mxu0 0
        %2467 = vmatprep.subr.bf16.mxu0 0
        %2468 = vmatpush1.bf16.msra.mxu0 0
        %2469 = vmatprep.subr.bf16.mxu0 0
        %2470 = vmatpush1.bf16.msra.mxu0 0
        %2471 = vmatprep.subr.bf16.mxu0 0
        %2472 = vmatpush1.bf16.msra.mxu0 0
        %2473 = vmatprep.subr.bf16.mxu0 0
        %2474 = vmatpush1.bf16.msra.mxu0 0
        %2475 = vmatprep.subr.bf16.mxu0 0
        %2476 = vmatpush1.bf16.msra.mxu0 0
        %2477 = vmatprep.subr.bf16.mxu0 0
        %2478 = vmatpush1.bf16.msra.mxu0 0
        %2479 = vmatprep.subr.bf16.mxu0 0
        %2480 = vmatpush1.bf16.msra.mxu0 0
        %2481 = vmatprep.mubr.bf16.mxu0 0
        %2482 = vmatmul.mubr.bf16.gmra.mrb[0].mxu0 %v2447
        %v2483 = vpop.f32.mrb[0].mxu0
        %v2484 = vadd.f32 0.0, %v2483
        %v2485 = vpop.f32.mrb[0].mxu0
        %v2486 = vpop.f32.mrb[0].mxu0
        %v2487 = vpop.f32.mrb[0].mxu0
        %2488 = vdwg.mxu0
        %v2491 = vunpack.c.l.b16 %v1862
        %v2492 = vunpack.c.l.b16 %v1863
        %v2493 = vpack.c.b16 %v2492, %v2491
        %v2496 = vsel %vm1751, %v2341, 0
        %2498 = vmatprep.subr.bf16.mxu0 0
        %2499 = vmatpush1.bf16.msra.mxu0 %v2493
        %2500 = vmatprep.subr.bf16.mxu0 0
        %2501 = vmatpush1.bf16.msra.mxu0 0
        %2502 = vmatprep.subr.bf16.mxu0 0
        %2503 = vmatpush1.bf16.msra.mxu0 0
        %2504 = vmatprep.subr.bf16.mxu0 0
        %2505 = vmatpush1.bf16.msra.mxu0 0
        %2506 = vmatprep.subr.bf16.mxu0 0
        %2507 = vmatpush1.bf16.msra.mxu0 0
        %2508 = vmatprep.subr.bf16.mxu0 0
        %2509 = vmatpush1.bf16.msra.mxu0 0
        %2510 = vmatprep.subr.bf16.mxu0 0
        %2511 = vmatpush1.bf16.msra.mxu0 0
        %2512 = vmatprep.subr.bf16.mxu0 0
        %2513 = vmatpush1.bf16.msra.mxu0 0
        %2514 = vmatprep.subr.bf16.mxu0 0
        %2515 = vmatpush1.bf16.msra.mxu0 0
        %2516 = vmatprep.subr.bf16.mxu0 0
        %2517 = vmatpush1.bf16.msra.mxu0 0
        %2518 = vmatprep.subr.bf16.mxu0 0
        %2519 = vmatpush1.bf16.msra.mxu0 0
        %2520 = vmatprep.subr.bf16.mxu0 0
        %2521 = vmatpush1.bf16.msra.mxu0 0
        %2522 = vmatprep.subr.bf16.mxu0 0
        %2523 = vmatpush1.bf16.msra.mxu0 0
        %2524 = vmatprep.subr.bf16.mxu0 0
        %2525 = vmatpush1.bf16.msra.mxu0 0
        %2526 = vmatprep.subr.bf16.mxu0 0
        %2527 = vmatpush1.bf16.msra.mxu0 0
        %2528 = vmatprep.subr.bf16.mxu0 0
        %2529 = vmatpush1.bf16.msra.mxu0 0
        %2530 = vmatprep.mubr.bf16.mxu0 0
        %2531 = vmatmul.mubr.bf16.gmra.mrb[0].mxu0 %v2496
        %v2532 = vpop.f32.mrb[0].mxu0
        %v2533 = vadd.f32 0.0, %v2532
        %v2534 = vpop.f32.mrb[0].mxu0
        %v2535 = vpop.f32.mrb[0].mxu0
        %v2536 = vpop.f32.mrb[0].mxu0
        %2537 = vdwg.mxu0
        %v2538 = vcombine.low %v2386, %v2484
        %v2539 = vcombine.high %v2386, %v2484
        %v2541 = vunpack.c.l.s4 1983009808
        %v2542 = vunpack.c.0.s8 %v2541
        %v2543 = vlaneseq
        %v2544 = vshrl.u32 %v2543, 7
        %v2545 = vsub.s32 %v2542, %v2544
        %v2546 = vrot.slane %v2538, %v2545
        %v2548 = vunpack.c.l.s4 1983009808
        %v2549 = vunpack.c.0.s8 %v2548
        %v2550 = vlaneseq
        %v2551 = vshrl.u32 %v2550, 7
        %v2552 = vsub.s32 %v2549, %v2551
        %v2553 = vrot.slane %v2539, %v2552
        %v2554 = vcombine.low %v2435, %v2533
        %v2555 = vcombine.high %v2435, %v2533
        %v2557 = vunpack.c.l.s4 1983009808
        %v2558 = vunpack.c.0.s8 %v2557
        %v2559 = vlaneseq
        %v2560 = vshrl.u32 %v2559, 7
        %v2561 = vsub.s32 %v2558, %v2560
        %v2562 = vrot.slane %v2554, %v2561
        %v2564 = vunpack.c.l.s4 1983009808
        %v2565 = vunpack.c.0.s8 %v2564
        %v2566 = vlaneseq
        %v2567 = vshrl.u32 %v2566, 7
        %v2568 = vsub.s32 %v2565, %v2567
        %v2569 = vrot.slane %v2555, %v2568
        %v2570 = vcombine.low %v2546, %v2562
        %v2571 = vcombine.high %v2546, %v2562
        %v2573 = vunpack.c.l.s4 1934713408
        %v2574 = vunpack.c.0.s8 %v2573
        %v2575 = vlaneseq
        %v2576 = vshrl.u32 %v2575, 7
        %v2577 = vsub.s32 %v2574, %v2576
        %v2578 = vrot.slane %v2570, %v2577
        %v2580 = vunpack.c.l.s4 1934713408
        %v2581 = vunpack.c.0.s8 %v2580
        %v2582 = vlaneseq
        %v2583 = vshrl.u32 %v2582, 7
        %v2584 = vsub.s32 %v2581, %v2583
        %v2585 = vrot.slane %v2571, %v2584
        %v2586 = vcombine.low %v2553, %v2569
        %v2587 = vcombine.high %v2553, %v2569
        %v2589 = vunpack.c.l.s4 1934713408
        %v2590 = vunpack.c.0.s8 %v2589
        %v2591 = vlaneseq
        %v2592 = vshrl.u32 %v2591, 7
        %v2593 = vsub.s32 %v2590, %v2592
        %v2594 = vrot.slane %v2586, %v2593
        %v2596 = vunpack.c.l.s4 1934713408
        %v2597 = vunpack.c.0.s8 %v2596
        %v2598 = vlaneseq
        %v2599 = vshrl.u32 %v2598, 7
        %v2600 = vsub.s32 %v2597, %v2599
        %v2601 = vrot.slane %v2587, %v2600
        %v2602 = vcombine.high %v2578, 0.0
        %v2603 = vcombine.high %v2585, 0.0
        %v2604 = vcombine.high %v2594, 0.0
        %v2605 = vcombine.high %v2601, 0.0
        %v2606 = vcombine.low %v2578, %v2585
        %v2608 = vunpack.c.l.s4 1983009808
        %v2609 = vunpack.c.0.s8 %v2608
        %v2610 = vlaneseq
        %v2611 = vshrl.u32 %v2610, 7
        %v2612 = vsub.s32 %v2609, %v2611
        %v2613 = vrot.slane %v2606, %v2612
        %v2614 = vcombine.low %v2602, %v2603
        %v2616 = vunpack.c.l.s4 1983009808
        %v2617 = vunpack.c.0.s8 %v2616
        %v2618 = vlaneseq
        %v2619 = vshrl.u32 %v2618, 7
        %v2620 = vsub.s32 %v2617, %v2619
        %v2621 = vrot.slane %v2614, %v2620
        %v2622 = vcombine.low %v2594, %v2601
        %v2624 = vunpack.c.l.s4 1983009808
        %v2625 = vunpack.c.0.s8 %v2624
        %v2626 = vlaneseq
        %v2627 = vshrl.u32 %v2626, 7
        %v2628 = vsub.s32 %v2625, %v2627
        %v2629 = vrot.slane %v2622, %v2628
        %v2630 = vcombine.low %v2604, %v2605
        %v2632 = vunpack.c.l.s4 1983009808
        %v2633 = vunpack.c.0.s8 %v2632
        %v2634 = vlaneseq
        %v2635 = vshrl.u32 %v2634, 7
        %v2636 = vsub.s32 %v2633, %v2635
        %v2637 = vrot.slane %v2630, %v2636
        %v2638 = vcombine.low %v2613, %v2621
        %v2639 = vcombine.high %v2613, %v2621
        %v2641 = vunpack.c.l.s4 1934713408
        %v2642 = vunpack.c.0.s8 %v2641
        %v2643 = vlaneseq
        %v2644 = vshrl.u32 %v2643, 7
        %v2645 = vsub.s32 %v2642, %v2644
        %v2646 = vrot.slane %v2638, %v2645
        %v2648 = vunpack.c.l.s4 1934713408
        %v2649 = vunpack.c.0.s8 %v2648
        %v2650 = vlaneseq
        %v2651 = vshrl.u32 %v2650, 7
        %v2652 = vsub.s32 %v2649, %v2651
        %v2653 = vrot.slane %v2639, %v2652
        %v2654 = vcombine.low %v2629, %v2637
        %v2655 = vcombine.high %v2629, %v2637
        %v2657 = vunpack.c.l.s4 1934713408
        %v2658 = vunpack.c.0.s8 %v2657
        %v2659 = vlaneseq
        %v2660 = vshrl.u32 %v2659, 7
        %v2661 = vsub.s32 %v2658, %v2660
        %v2662 = vrot.slane %v2654, %v2661
        %v2664 = vunpack.c.l.s4 1934713408
        %v2665 = vunpack.c.0.s8 %v2664
        %v2666 = vlaneseq
        %v2667 = vshrl.u32 %v2666, 7
        %v2668 = vsub.s32 %v2665, %v2667
        %v2669 = vrot.slane %v2655, %v2668
        %v2670 = vcombine.low %v2646, %v2662
        %v2671 = vcombine.high %v2646, %v2662
        %v2672 = vcombine.low %v2653, %v2669
        %v2673 = vcombine.high %v2653, %v2669
        %2675 = vrot.lane.b32.xlu0 %v2671, 8
        %v2676 = vpop.permute.xlu0 %2675
        %2679 = vrot.lane.b32.xlu0 %v2672, 16
        %v2680 = vpop.permute.xlu0 %2679
        %2683 = vrot.lane.b32.xlu0 %v2673, 24
        %v2684 = vpop.permute.xlu0 %2683
        %v2686 = vsel %vm1184, %v2670, %v2676
        %v2687 = vsel %vm1751, %v2686, %v2680
        %v2688 = vsel %vm1753, %v2687, %v2684
        %v2689 = vpack.c.bf16 %v2688, %v2688
        %v2691 = vlaneseq
        %v2692 = vshrl.u32 %v2691, 7
        %v2693 = vsub.s32 0, %v2692
        %v2694 = vrot.slane %v1873, %v2693
        %v2700 = vunpack.c.l.b16 %v1869
        %v2701 = vunpack.c.l.b16 %v1870
        %v2702 = vunpack.c.l.b16 %v1871
        %v2703 = vunpack.c.l.b16 %v1872
        %v2704 = vpack.c.b16 %v2701, %v2700
        %v2705 = vpack.c.b16 %v2703, %v2702
        %v2709 = vsel %vm990, %v2689, 0
        %2711 = vmatprep.subr.bf16.mxu0 0
        %2712 = vmatpush1.bf16.msra.mxu0 %v2704
        %2713 = vmatprep.subr.bf16.mxu0 0
        %2714 = vmatpush1.bf16.msra.mxu0 %v2705
        %2715 = vmatprep.subr.bf16.mxu0 0
        %2716 = vmatpush1.bf16.msra.mxu0 0
        %2717 = vmatprep.subr.bf16.mxu0 0
        %2718 = vmatpush1.bf16.msra.mxu0 0
        %2719 = vmatprep.subr.bf16.mxu0 0
        %2720 = vmatpush1.bf16.msra.mxu0 0
        %2721 = vmatprep.subr.bf16.mxu0 0
        %2722 = vmatpush1.bf16.msra.mxu0 0
        %2723 = vmatprep.subr.bf16.mxu0 0
        %2724 = vmatpush1.bf16.msra.mxu0 0
        %2725 = vmatprep.subr.bf16.mxu0 0
        %2726 = vmatpush1.bf16.msra.mxu0 0
        %2727 = vmatprep.subr.bf16.mxu0 0
        %2728 = vmatpush1.bf16.msra.mxu0 0
        %2729 = vmatprep.subr.bf16.mxu0 0
        %2730 = vmatpush1.bf16.msra.mxu0 0
        %2731 = vmatprep.subr.bf16.mxu0 0
        %2732 = vmatpush1.bf16.msra.mxu0 0
        %2733 = vmatprep.subr.bf16.mxu0 0
        %2734 = vmatpush1.bf16.msra.mxu0 0
        %2735 = vmatprep.subr.bf16.mxu0 0
        %2736 = vmatpush1.bf16.msra.mxu0 0
        %2737 = vmatprep.subr.bf16.mxu0 0
        %2738 = vmatpush1.bf16.msra.mxu0 0
        %2739 = vmatprep.subr.bf16.mxu0 0
        %2740 = vmatpush1.bf16.msra.mxu0 0
        %2741 = vmatprep.subr.bf16.mxu0 0
        %2742 = vmatpush1.bf16.msra.mxu0 0
        %2743 = vmatprep.mubr.bf16.mxu0 0
        %2744 = vmatmul.mubr.bf16.gmra.mrb[0].mxu0 %v2709
        %v2745 = vpop.f32.mrb[0].mxu0
        %v2746 = vadd.f32 %v2694, %v2745
        %v2747 = vpop.f32.mrb[0].mxu0
        %v2748 = vpop.f32.mrb[0].mxu0
        %v2749 = vpop.f32.mrb[0].mxu0
        %2750 = vdwg.mxu0
        %2751 = vst.msk [vmem:[%s909] sm:$0xff] %vm1751, %v2334
        %2752 = vst.msk [vmem:[%s909 + $0x8] sm:$0xff] %vm1751, %v2335
        %2753 = vst.msk [vmem:[%s909 + $0x10] sm:$0xff] %vm1751, %v2336
        %2754 = vst.msk [vmem:[%s909 + $0x18] sm:$0xff] %vm1751, %v2337
        %v2755 = vadd.f32 %v1847, %v2746
        %v2756 = vld [vmem:[%s17] sm:$0x1]
        %v2757 = vld [vmem:[%s18] sm:$0x1]
        %v2758 = vsel %vm990, %v2755, 0.0
        %2759 = vadd.xlane.f32.xlu0 %v2758
        %v2760 = vpop.xlane.xlu0 %2759
        %v2761 = vmul.f32 %v2760, %v1823
        %v2762 = vsub.f32 %v2755, %v2761
        %v2763 = vmul.f32 %v2762, %v2762
        %v2764 = vsel %vm990, %v2763, 0.0
        %2765 = vadd.xlane.f32.xlu0 %v2764
        %v2766 = vpop.xlane.xlu0 %2765
        %v2767 = vmul.f32 %v2766, %v1823
        %v2768 = vadd.f32 %v2767, 1e-05
        %v2769 = vrsqrt.pop %v2768
        %v2770 = vmul.f32 %v2762, %v2769
        %v2772 = vlaneseq
        %v2773 = vshrl.u32 %v2772, 7
        %v2774 = vsub.s32 0, %v2773
        %v2775 = vrot.slane %v2756, %v2774
        %v2777 = vmul.f32 %v2770, %v2775
        %v2779 = vlaneseq
        %v2780 = vshrl.u32 %v2779, 7
        %v2781 = vsub.s32 0, %v2780
        %v2782 = vrot.slane %v2757, %v2781
        %v2784 = vadd.f32 %v2777, %v2782
        %v2785 = vpack.c.bf16 %v2784, %v2784
        %v2786 = vld [vmem:[%s19] sm:$0xf]
        %v2787 = vld [vmem:[%s19 + $0x4] sm:$0xf]
        %v2788 = vld [vmem:[%s19 + $0x8] sm:$0xf]
        %v2789 = vld [vmem:[%s19 + $0xc] sm:$0xf]
        %v2790 = vld [vmem:[%s20] sm:$0x1]
        %v2792 = vlaneseq
        %v2793 = vshrl.u32 %v2792, 7
        %v2794 = vsub.s32 0, %v2793
        %v2795 = vrot.slane %v2790, %v2794
        %v2801 = vunpack.c.l.b16 %v2786
        %v2802 = vunpack.c.l.b16 %v2787
        %v2803 = vunpack.c.l.b16 %v2788
        %v2804 = vunpack.c.l.b16 %v2789
        %v2805 = vpack.c.b16 %v2802, %v2801
        %v2806 = vpack.c.b16 %v2804, %v2803
        %v2810 = vsel %vm990, %v2785, 0
        %2812 = vmatprep.subr.bf16.mxu0 0
        %2813 = vmatpush1.bf16.msra.mxu0 %v2805
        %2814 = vmatprep.subr.bf16.mxu0 0
        %2815 = vmatpush1.bf16.msra.mxu0 %v2806
        %2816 = vmatprep.subr.bf16.mxu0 0
        %2817 = vmatpush1.bf16.msra.mxu0 0
        %2818 = vmatprep.subr.bf16.mxu0 0
        %2819 = vmatpush1.bf16.msra.mxu0 0
        %2820 = vmatprep.subr.bf16.mxu0 0
        %2821 = vmatpush1.bf16.msra.mxu0 0
        %2822 = vmatprep.subr.bf16.mxu0 0
        %2823 = vmatpush1.bf16.msra.mxu0 0
        %2824 = vmatprep.subr.bf16.mxu0 0
        %2825 = vmatpush1.bf16.msra.mxu0 0
        %2826 = vmatprep.subr.bf16.mxu0 0
        %2827 = vmatpush1.bf16.msra.mxu0 0
        %2828 = vmatprep.subr.bf16.mxu0 0
        %2829 = vmatpush1.bf16.msra.mxu0 0
        %2830 = vmatprep.subr.bf16.mxu0 0
        %2831 = vmatpush1.bf16.msra.mxu0 0
        %2832 = vmatprep.subr.bf16.mxu0 0
        %2833 = vmatpush1.bf16.msra.mxu0 0
        %2834 = vmatprep.subr.bf16.mxu0 0
        %2835 = vmatpush1.bf16.msra.mxu0 0
        %2836 = vmatprep.subr.bf16.mxu0 0
        %2837 = vmatpush1.bf16.msra.mxu0 0
        %2838 = vmatprep.subr.bf16.mxu0 0
        %2839 = vmatpush1.bf16.msra.mxu0 0
        %2840 = vmatprep.subr.bf16.mxu0 0
        %2841 = vmatpush1.bf16.msra.mxu0 0
        %2842 = vmatprep.subr.bf16.mxu0 0
        %2843 = vmatpush1.bf16.msra.mxu0 0
        %2844 = vmatprep.mubr.bf16.mxu0 0
        %2845 = vmatmul.mubr.bf16.gmra.mrb[0].mxu0 %v2810
        %v2846 = vpop.f32.mrb[0].mxu0
        %v2847 = vadd.f32 %v2795, %v2846
        %v2848 = vpop.f32.mrb[0].mxu0
        %v2849 = vpop.f32.mrb[0].mxu0
        %v2850 = vpop.f32.mrb[0].mxu0
        %2851 = vdwg.mxu0
        %v2852 = vmax.f32 %v2847, 0.0
        %v2853 = vpack.c.bf16 %v2852, %v2852
        %v2854 = vld [vmem:[%s21] sm:$0xf]
        %v2855 = vld [vmem:[%s21 + $0x4] sm:$0xf]
        %v2856 = vld [vmem:[%s21 + $0x8] sm:$0xf]
        %v2857 = vld [vmem:[%s21 + $0xc] sm:$0xf]
        %v2858 = vld [vmem:[%s21 + $0x10] sm:$0xf]
        %v2859 = vld [vmem:[%s21 + $0x14] sm:$0xf]
        %v2860 = vld [vmem:[%s21 + $0x18] sm:$0xf]
        %v2861 = vld [vmem:[%s21 + $0x1c] sm:$0xf]
        %v2862 = vld [vmem:[%s22] sm:$0x1]
        %v2864 = vlaneseq
        %v2865 = vshrl.u32 %v2864, 7
        %v2866 = vsub.s32 0, %v2865
        %v2867 = vrot.slane %v2862, %v2866
        %v2877 = vunpack.c.l.b16 %v2854
        %v2878 = vunpack.c.l.b16 %v2855
        %v2879 = vunpack.c.l.b16 %v2856
        %v2880 = vunpack.c.l.b16 %v2857
        %v2881 = vunpack.c.l.b16 %v2858
        %v2882 = vunpack.c.l.b16 %v2859
        %v2883 = vunpack.c.l.b16 %v2860
        %v2884 = vunpack.c.l.b16 %v2861
        %v2885 = vpack.c.b16 %v2878, %v2877
        %v2886 = vpack.c.b16 %v2880, %v2879
        %v2887 = vpack.c.b16 %v2882, %v2881
        %v2888 = vpack.c.b16 %v2884, %v2883
        %vm2893 = vcmask 523264
        %v2895 = vsel %vm2893, %v2853, 0
        %2897 = vmatprep.subr.bf16.mxu0 0
        %2898 = vmatpush1.bf16.msra.mxu0 %v2885
        %2899 = vmatprep.subr.bf16.mxu0 0
        %2900 = vmatpush1.bf16.msra.mxu0 %v2886
        %2901 = vmatprep.subr.bf16.mxu0 0
        %2902 = vmatpush1.bf16.msra.mxu0 %v2887
        %2903 = vmatprep.subr.bf16.mxu0 0
        %2904 = vmatpush1.bf16.msra.mxu0 %v2888
        %2905 = vmatprep.subr.bf16.mxu0 0
        %2906 = vmatpush1.bf16.msra.mxu0 0
        %2907 = vmatprep.subr.bf16.mxu0 0
        %2908 = vmatpush1.bf16.msra.mxu0 0
        %2909 = vmatprep.subr.bf16.mxu0 0
        %2910 = vmatpush1.bf16.msra.mxu0 0
        %2911 = vmatprep.subr.bf16.mxu0 0
        %2912 = vmatpush1.bf16.msra.mxu0 0
        %2913 = vmatprep.subr.bf16.mxu0 0
        %2914 = vmatpush1.bf16.msra.mxu0 0
        %2915 = vmatprep.subr.bf16.mxu0 0
        %2916 = vmatpush1.bf16.msra.mxu0 0
        %2917 = vmatprep.subr.bf16.mxu0 0
        %2918 = vmatpush1.bf16.msra.mxu0 0
        %2919 = vmatprep.subr.bf16.mxu0 0
        %2920 = vmatpush1.bf16.msra.mxu0 0
        %2921 = vmatprep.subr.bf16.mxu0 0
        %2922 = vmatpush1.bf16.msra.mxu0 0
        %2923 = vmatprep.subr.bf16.mxu0 0
        %2924 = vmatpush1.bf16.msra.mxu0 0
        %2925 = vmatprep.subr.bf16.mxu0 0
        %2926 = vmatpush1.bf16.msra.mxu0 0
        %2927 = vmatprep.subr.bf16.mxu0 0
        %2928 = vmatpush1.bf16.msra.mxu0 0
        %2929 = vmatprep.mubr.bf16.mxu0 0
        %2930 = vmatmul.mubr.bf16.gmra.mrb[0].mxu0 %v2895
        %v2931 = vpop.f32.mrb[0].mxu0
        %v2932 = vadd.f32 %v2867, %v2931
        %v2933 = vpop.f32.mrb[0].mxu0
        %v2934 = vpop.f32.mrb[0].mxu0
        %v2935 = vpop.f32.mrb[0].mxu0
        %2936 = vdwg.mxu0
        %v2937 = vadd.f32 %v2784, %v2932
        %v2938 = vld [vmem:[%s23] sm:$0x1]
        %v2939 = vld [vmem:[%s24] sm:$0x1]
        %v2940 = vsel %vm990, %v2937, 0.0
        %2941 = vadd.xlane.f32.xlu0 %v2940
        %v2942 = vpop.xlane.xlu0 %2941
        %v2943 = vmul.f32 %v2942, %v1823
        %v2944 = vsub.f32 %v2937, %v2943
        %v2945 = vmul.f32 %v2944, %v2944
        %v2946 = vsel %vm990, %v2945, 0.0
        %2947 = vadd.xlane.f32.xlu0 %v2946
        %v2948 = vpop.xlane.xlu0 %2947
        %v2949 = vmul.f32 %v2948, %v1823
        %v2950 = vadd.f32 %v2949, 1e-05
        %v2951 = vrsqrt.pop %v2950
        %v2952 = vmul.f32 %v2944, %v2951
        %v2954 = vlaneseq
        %v2955 = vshrl.u32 %v2954, 7
        %v2956 = vsub.s32 0, %v2955
        %v2957 = vrot.slane %v2938, %v2956
        %v2959 = vmul.f32 %v2952, %v2957
        %v2961 = vlaneseq
        %v2962 = vshrl.u32 %v2961, 7
        %v2963 = vsub.s32 0, %v2962
        %v2964 = vrot.slane %v2939, %v2963
        %v2966 = vadd.f32 %v2959, %v2964
        %2967 = vst.msk [vmem:[%s902] sm:$0xff] %vm990, %v2966
        %s2968 = sand.u32 %s630, 1
        %s2969 = scalar_lea.sflag [#allocation3], %s2968
        %s2970 = sand.u32 %s630, 1
        %s2971 = smul.addr %s2970, 8
        %s2972 = scalar_lea.vmem [#allocation2], %s2971
        %s2973 = sand.u32 %s658, 1
        %s2974 = scalar_lea.sflag [#allocation5], %s2973
        %s2975 = sand.u32 %s658, 1
        %s2976 = smul.addr %s2975, 32
        %s2977 = scalar_lea.vmem [#allocation4], %s2976
        // Predicated region
        $region121: #{tpu_custom_call.1} parent=119 // pred_check
          %p2978 = pneg %p640
        $region122: #{tpu_custom_call.1} parent=119 // pred_check_branch
          %2980 = sbr.rel (%p2978) target = $region124
        $region123: #{tpu_custom_call.1} parent=119 // pred_region
          %s2982 = ssub.s32 128, 128
          %2983 = vsyncadd %s2969, %s2982
          %s2984 = sadd.s32 %s49, %s48
          %s2985 = smul.addr %s2984, 128
          %s2986 = scalar_lea.hbm %s25, %s2985
          %s2988 = sshll.u32 %s2972, 4
          %s2989 = int_to_ptr.vmem [resolvable:$true] %s2988
          %2991 = dma.vmem_to_hbm [thread:$0]  %s2989, 128, %s2986, %s2969
        $region124: #{tpu_custom_call.1} parent=119 // pred_fallthru
          _
        // Predicated region
        $region125: #{tpu_custom_call.1} parent=119 // pred_check
          %p2992 = pneg %p668
        $region126: #{tpu_custom_call.1} parent=119 // pred_check_branch
          %2994 = sbr.rel (%p2992) target = $region128
        $region127: #{tpu_custom_call.1} parent=119 // pred_region
          %s2996 = ssub.s32 512, 512
          %2997 = vsyncadd %s2974, %s2996
          %s2998 = smul.addr %s48, 4
          %s2999 = sadd.s32 %s49, %s2998
          %s3000 = smul.addr %s2999, 128
          %s3001 = scalar_lea.hbm %s26, %s3000
          %s3002 = sshll.u32 %s2977, 4
          %s3003 = int_to_ptr.vmem [resolvable:$true] %s3002
          %3008 = dma.vmem_to_hbm [thread:$0]  %s3003, 512, %s3001, %s2974, 128, 128, 8
        $region128: #{tpu_custom_call.1} parent=119 // pred_fallthru
          _
      $region120: #{tpu_custom_call.1} parent=5 // pred_fallthru
        _
      %p3009 = scmp.le.s32.totalorder 2, %s39
      // Predicated region
      $region129: #{tpu_custom_call.1} parent=5 // pred_check
        %p3010 = pneg %p3009
      $region130: #{tpu_custom_call.1} parent=5 // pred_check_branch
        %3012 = sbr.rel (%p3010) target = $region132
      $region131: #{tpu_custom_call.1} parent=5 // pred_region
        %s3013 = ssub.s32 %s39, 2
        // Predicated region
        $region133: #{tpu_custom_call.1} parent=131 // pred_check
          %p3014 = pneg %p646
        $region134: #{tpu_custom_call.1} parent=131 // pred_check_branch
          %3016 = sbr.rel (%p3014) target = $region136
        $region135: #{tpu_custom_call.1} parent=131 // pred_region
          %s3017 = sand.u32 %s631, 1
          %s3018 = scalar_lea.sflag [#allocation3], %s3017
          %s3019 = sand.u32 %s631, 1
          %s3020 = smul.addr %s3019, 8
          %s3021 = scalar_lea.vmem [#allocation2], %s3020
          %3022 = dma.done %s3018, 128
        $region136: #{tpu_custom_call.1} parent=131 // pred_fallthru
          _
        // Predicated region
        $region137: #{tpu_custom_call.1} parent=131 // pred_check
          %p3023 = pneg %p674
        $region138: #{tpu_custom_call.1} parent=131 // pred_check_branch
          %3025 = sbr.rel (%p3023) target = $region140
        $region139: #{tpu_custom_call.1} parent=131 // pred_region
          %s3026 = sand.u32 %s659, 1
          %s3027 = scalar_lea.sflag [#allocation5], %s3026
          %s3028 = sand.u32 %s659, 1
          %s3029 = smul.addr %s3028, 32
          %s3030 = scalar_lea.vmem [#allocation4], %s3029
          %3031 = dma.done %s3027, 512
        $region140: #{tpu_custom_call.1} parent=131 // pred_fallthru
          _
      $region132: #{tpu_custom_call.1} parent=5 // pred_fallthru
        _
    $region6: #{tpu_custom_call.1} parent=1 // loop_footer
      %s43 = sadd.s32 1, %s39
    $region7: #{tpu_custom_call.1} parent=1 // loop_footer_branch
      %38 = sbr.rel target = $region3
    $region8: #{tpu_custom_call.1} parent=1 // loop_exit
      _
    %3032 = vsyncpa [#allocation3], 1
    %s3033 = scalar_lea.sflag [#allocation3], 1
    %3034 = vsyncpa %s3033, 1
    %3035 = vsyncpa [#allocation5], 1
    %s3036 = scalar_lea.sflag [#allocation5], 1
    %3037 = vsyncpa %s3036, 1

// kernel: tpu_custom_call.1
$region0: #{tpu_custom_call.1}
  #allocation0 [shape = 'u32[]', space=smem, size = 0x4, offset = 0x4, fixed_abs, tag = 'smem constant byte address 0x4 - core index']
  #allocation1 [shape = 'u32[144,128]{1,0:T(1,128)}', space=vmem, size = 0x12000, scoped, tag = 'internal scratch']
  %s0 = inlined_call_operand.vmem [shape: f32[2,8,32], index: 0, kind: input, shape index: {}]
  %s1 = inlined_call_operand.vmem [shape: bf16[2,4,8,8], index: 1, kind: input, shape index: {}]
  %s2 = inlined_call_operand.vmem [shape: bf16[2,4,8,8], index: 2, kind: input, shape index: {}]
  %s3 = inlined_call_operand.vmem [shape: bf16[2,4,16,8], index: 3, kind: input, shape index: {}]
  %s4 = inlined_call_operand.vmem [shape: bf16[2,4,16,8], index: 4, kind: input, shape index: {}]
  %s5 = inlined_call_operand.vmem [shape: bf16[2,8,8], index: 5, kind: input, shape index: {}]
  %s6 = inlined_call_operand.vmem [shape: bf16[2,1,16], index: 6, kind: input, shape index: {}]
  %s7 = inlined_call_operand.vmem [shape: bf16[32,32], index: 7, kind: input, shape index: {}]
  %s8 = inlined_call_operand.vmem [shape: f32[1,32], index: 8, kind: input, shape index: {}]
  %s9 = inlined_call_operand.vmem [shape: bf16[32,32], index: 9, kind: input, shape index: {}]
  %s10 = inlined_call_operand.vmem [shape: f32[1,32], index: 10, kind: input, shape index: {}]
  %s11 = inlined_call_operand.vmem [shape: f32[1,32], index: 11, kind: input, shape index: {}]
  %s12 = inlined_call_operand.vmem [shape: f32[1,32], index: 12, kind: input, shape index: {}]
  %s13 = inlined_call_operand.vmem [shape: bf16[32,32], index: 13, kind: input, shape index: {}]
  %s14 = inlined_call_operand.vmem [shape: f32[1,32], index: 14, kind: input, shape index: {}]
  %s15 = inlined_call_operand.vmem [shape: bf16[32,32], index: 15, kind: input, shape index: {}]
  %s16 = inlined_call_operand.vmem [shape: f32[1,32], index: 16, kind: input, shape index: {}]
  %s17 = inlined_call_operand.vmem [shape: f32[1,32], index: 17, kind: input, shape index: {}]
  %s18 = inlined_call_operand.vmem [shape: f32[1,32], index: 18, kind: input, shape index: {}]
  %s19 = inlined_call_operand.vmem [shape: bf16[32,64], index: 19, kind: input, shape index: {}]
  %s20 = inlined_call_operand.vmem [shape: f32[1,64], index: 20, kind: input, shape index: {}]
  %s21 = inlined_call_operand.vmem [shape: bf16[64,32], index: 21, kind: input, shape index: {}]
  %s22 = inlined_call_operand.vmem [shape: f32[1,32], index: 22, kind: input, shape index: {}]
  %s23 = inlined_call_operand.vmem [shape: f32[1,32], index: 23, kind: input, shape index: {}]
  %s24 = inlined_call_operand.vmem [shape: f32[1,32], index: 24, kind: input, shape index: {}]
  %s25 = inlined_call_operand.hbm [shape: f32[2,8,32], index: 25, kind: output, shape index: {0}]
  %s26 = inlined_call_operand.hbm [shape: f32[2,4,8,16], index: 26, kind: output, shape index: {1}]
  %27 = xla_tuple %s25, %s26
  %s28 = sld [smem:[#allocation0]]
  $region141: #{tpu_custom_call.1} parent=0
    _
  %s30 = ssub.s32 1, %s28
  %s31 = scalar_select 0, %s30, %s28
  $region1: #{tpu_custom_call.1} parent=0
    #allocation2 [shape = 'u8[8192]{0}', space=vmem, size = 0x2000, scoped, tag = 'output window, operand 0']
    #allocation3 [shape = 's32[2]{0}', space=sflag, size = 0x8, scoped, tag = 'scoped memory for tpu_custom_call.1']
    #allocation4 [shape = 'u8[32768]{0}', space=vmem, size = 0x8000, scoped, tag = 'output window, operand 1']
    #allocation5 [shape = 's32[2]{0}', space=sflag, size = 0x8, scoped, tag = 'scoped memory for tpu_custom_call.1']
    %32 = vsyncpa [#allocation3], 0
    %s33 = scalar_lea.sflag [#allocation3], 1
    %34 = vsyncpa %s33, 0
    %35 = vsyncpa [#allocation5], 0
    %s36 = scalar_lea.sflag [#allocation5], 1
    %37 = vsyncpa %s36, 0
    loop: start=0, step=1, limit=4
    $region2: #{tpu_custom_call.1} parent=1 // loop_pre_header
      _
    $region3: #{tpu_custom_call.1} parent=1 // loop_header
      %s39 = sphi 0, %s43
      %p40 = scmp.ge.s32.totalorder %s39, 4
      %s46 = sphi 0, %s58
      %s47 = sphi 0, %s54
      %s48 = sphi 0, %s46
      %s49 = sphi 0, %s47
      %s50 = sphi 0, %s48
      %s51 = sphi 0, %s49
      %s63 = sphi 0, %s65
      %s66 = sphi 0, %s63
      %s67 = sphi 0, %s66
      %s83 = sphi 0, %s67
      %s89 = sphi 0, %s91
      %s92 = sphi 0, %s89
      %s93 = sphi 0, %s92
      %s109 = sphi 0, %s93
      %s115 = sphi 0, %s117
      %s118 = sphi 0, %s115
      %s119 = sphi 0, %s118
      %s135 = sphi 0, %s119
      %s141 = sphi 0, %s143
      %s144 = sphi 0, %s141
      %s145 = sphi 0, %s144
      %s161 = sphi 0, %s145
      %s167 = sphi 0, %s169
      %s170 = sphi 0, %s167
      %s171 = sphi 0, %s170
      %s187 = sphi 0, %s171
      %s195 = sphi 0, %s197
      %s198 = sphi 0, %s195
      %s199 = sphi 0, %s198
      %s215 = sphi 0, %s199
      %s221 = sphi 0, %s223
      %s224 = sphi 0, %s221
      %s225 = sphi 0, %s224
      %s241 = sphi 0, %s225
      %s245 = sphi 0, %s245
      %s247 = sphi 0, %s245
      %s248 = sphi 0, %s247
      %s262 = sphi 0, %s248
      %s266 = sphi 0, %s266
      %s268 = sphi 0, %s266
      %s269 = sphi 0, %s268
      %s283 = sphi 0, %s269
      %s287 = sphi 0, %s287
      %s289 = sphi 0, %s287
      %s290 = sphi 0, %s289
      %s304 = sphi 0, %s290
      %s308 = sphi 0, %s308
      %s310 = sphi 0, %s308
      %s311 = sphi 0, %s310
      %s325 = sphi 0, %s311
      %s329 = sphi 0, %s329
      %s331 = sphi 0, %s329
      %s332 = sphi 0, %s331
      %s346 = sphi 0, %s332
      %s350 = sphi 0, %s350
      %s352 = sphi 0, %s350
      %s353 = sphi 0, %s352
      %s367 = sphi 0, %s353
      %s371 = sphi 0, %s371
      %s373 = sphi 0, %s371
      %s374 = sphi 0, %s373
      %s388 = sphi 0, %s374
      %s392 = sphi 0, %s392
      %s394 = sphi 0, %s392
      %s395 = sphi 0, %s394
      %s409 = sphi 0, %s395
      %s413 = sphi 0, %s413
      %s415 = sphi 0, %s413
      %s416 = sphi 0, %s415
      %s430 = sphi 0, %s416
      %s434 = sphi 0, %s434
      %s436 = sphi 0, %s434
      %s437 = sphi 0, %s436
      %s451 = sphi 0, %s437
      %s455 = sphi 0, %s455
      %s457 = sphi 0, %s455
      %s458 = sphi 0, %s457
      %s472 = sphi 0, %s458
      %s476 = sphi 0, %s476
      %s478 = sphi 0, %s476
      %s479 = sphi 0, %s478
      %s493 = sphi 0, %s479
      %s497 = sphi 0, %s497
      %s499 = sphi 0, %s497
      %s500 = sphi 0, %s499
      %s514 = sphi 0, %s500
      %s518 = sphi 0, %s518
      %s520 = sphi 0, %s518
      %s521 = sphi 0, %s520
      %s535 = sphi 0, %s521
      %s539 = sphi 0, %s539
      %s541 = sphi 0, %s539
      %s542 = sphi 0, %s541
      %s556 = sphi 0, %s542
      %s560 = sphi 0, %s560
      %s562 = sphi 0, %s560
      %s563 = sphi 0, %s562
      %s577 = sphi 0, %s563
      %s581 = sphi 0, %s581
      %s583 = sphi 0, %s581
      %s584 = sphi 0, %s583
      %s598 = sphi 0, %s584
      %s602 = sphi 0, %s602
      %s604 = sphi 0, %s602
      %s605 = sphi 0, %s604
      %s619 = sphi 0, %s605
      %s627 = sphi 0, %s629
      %s630 = sphi 0, %s627
      %s631 = sphi 0, %s630
      %s647 = sphi 0, %s631
      %s655 = sphi 0, %s657
      %s658 = sphi 0, %s655
      %s659 = sphi 0, %s658
      %s675 = sphi 0, %s659
    $region4: #{tpu_custom_call.1} parent=1 // loop_header_branch
      %42 = sbr.rel (%p40) target = $region8
    $region5: #{tpu_custom_call.1} parent=1 // loop_body
      %s44 = ssub.s32 %s39, 1
      %s45 = ssub.s32 %s39, 2
      %s52 = sadd.s32 1, %s47
      %p53 = scmp.ge.s32.totalorder %s52, 1
      %s54 = scalar_select %p53, 0, %s52
      %s55 = sadd.s32 1, %s46
      %s56 = scalar_select %p53, %s55, %s46
      %p57 = scmp.ge.s32.totalorder %s56, 2
      %s58 = scalar_select %p57, 0, %s56
      %s59 = ssub.s32 %s46, %s58
      %s60 = ssub.s32 %s47, %s54
      %s61 = sor.u32 %s59, %s60
      %p62 = scmp.eq.s32.totalorder %s61, 0
      %s64 = sadd.s32 %s63, 1
      %s65 = scalar_select %p62, %s63, %s64
      %p68 = pneg %p62
      %p69 = scmp.eq.s32.totalorder %s39, 1
      %p70 = por %p68, %p69
      %p71 = scmp.ne.s32.totalorder %s63, %s66
      %p72 = scmp.eq.s32.totalorder %s39, 0
      %p73 = por %p71, %p72
      %p74 = scmp.ne.s32.totalorder %s63, %s66
      %p75 = scmp.eq.s32.totalorder %s44, 1
      %p76 = por %p74, %p75
      %p77 = scmp.ne.s32.totalorder %s66, %s67
      %p78 = scmp.eq.s32.totalorder %s44, 0
      %p79 = por %p77, %p78
      %p80 = scmp.ne.s32.totalorder %s66, %s67
      %p81 = scmp.eq.s32.totalorder %s45, 1
      %p82 = por %p80, %p81
      %p84 = scmp.ne.s32.totalorder %s67, %s83
      %p85 = scmp.eq.s32.totalorder %s45, 0
      %p86 = por %p84, %p85
      %s87 = ssub.s32 %s46, %s58
      %p88 = scmp.eq.s32.totalorder %s87, 0
      %s90 = sadd.s32 %s89, 1
      %s91 = scalar_select %p88, %s89, %s90
      %p94 = pneg %p88
      %p95 = scmp.eq.s32.totalorder %s39, 1
      %p96 = por %p94, %p95
      %p97 = scmp.ne.s32.totalorder %s89, %s92
      %p98 = scmp.eq.s32.totalorder %s39, 0
      %p99 = por %p97, %p98
      %p100 = scmp.ne.s32.totalorder %s89, %s92
      %p101 = scmp.eq.s32.totalorder %s44, 1
      %p102 = por %p100, %p101
      %p103 = scmp.ne.s32.totalorder %s92, %s93
      %p104 = scmp.eq.s32.totalorder %s44, 0
      %p105 = por %p103, %p104
      %p106 = scmp.ne.s32.totalorder %s92, %s93
      %p107 = scmp.eq.s32.totalorder %s45, 1
      %p108 = por %p106, %p107
      %p110 = scmp.ne.s32.totalorder %s93, %s109
      %p111 = scmp.eq.s32.totalorder %s45, 0
      %p112 = por %p110, %p111
      %s113 = ssub.s32 %s46, %s58
      %p114 = scmp.eq.s32.totalorder %s113, 0
      %s116 = sadd.s32 %s115, 1
      %s117 = scalar_select %p114, %s115, %s116
      %p120 = pneg %p114
      %p121 = scmp.eq.s32.totalorder %s39, 1
      %p122 = por %p120, %p121
      %p123 = scmp.ne.s32.totalorder %s115, %s118
      %p124 = scmp.eq.s32.totalorder %s39, 0
      %p125 = por %p123, %p124
      %p126 = scmp.ne.s32.totalorder %s115, %s118
      %p127 = scmp.eq.s32.totalorder %s44, 1
      %p128 = por %p126, %p127
      %p129 = scmp.ne.s32.totalorder %s118, %s119
      %p130 = scmp.eq.s32.totalorder %s44, 0
      %p131 = por %p129, %p130
      %p132 = scmp.ne.s32.totalorder %s118, %s119
      %p133 = scmp.eq.s32.totalorder %s45, 1
      %p134 = por %p132, %p133
      %p136 = scmp.ne.s32.totalorder %s119, %s135
      %p137 = scmp.eq.s32.totalorder %s45, 0
      %p138 = por %p136, %p137
      %s139 = ssub.s32 %s46, %s58
      %p140 = scmp.eq.s32.totalorder %s139, 0
      %s142 = sadd.s32 %s141, 1
      %s143 = scalar_select %p140, %s141, %s142
      %p146 = pneg %p140
      %p147 = scmp.eq.s32.totalorder %s39, 1
      %p148 = por %p146, %p147
      %p149 = scmp.ne.s32.totalorder %s141, %s144
      %p150 = scmp.eq.s32.totalorder %s39, 0
      %p151 = por %p149, %p150
      %p152 = scmp.ne.s32.totalorder %s141, %s144
      %p153 = scmp.eq.s32.totalorder %s44, 1
      %p154 = por %p152, %p153
      %p155 = scmp.ne.s32.totalorder %s144, %s145
      %p156 = scmp.eq.s32.totalorder %s44, 0
      %p157 = por %p155, %p156
      %p158 = scmp.ne.s32.totalorder %s144, %s145
      %p159 = scmp.eq.s32.totalorder %s45, 1
      %p160 = por %p158, %p159
      %p162 = scmp.ne.s32.totalorder %s145, %s161
      %p163 = scmp.eq.s32.totalorder %s45, 0
      %p164 = por %p162, %p163
      %s165 = ssub.s32 %s46, %s58
      %p166 = scmp.eq.s32.totalorder %s165, 0
      %s168 = sadd.s32 %s167, 1
      %s169 = scalar_select %p166, %s167, %s168
      %p172 = pneg %p166
      %p173 = scmp.eq.s32.totalorder %s39, 1
      %p174 = por %p172, %p173
      %p175 = scmp.ne.s32.totalorder %s167, %s170
      %p176 = scmp.eq.s32.totalorder %s39, 0
      %p177 = por %p175, %p176
      %p178 = scmp.ne.s32.totalorder %s167, %s170
      %p179 = scmp.eq.s32.totalorder %s44, 1
      %p180 = por %p178, %p179
      %p181 = scmp.ne.s32.totalorder %s170, %s171
      %p182 = scmp.eq.s32.totalorder %s44, 0
      %p183 = por %p181, %p182
      %p184 = scmp.ne.s32.totalorder %s170, %s171
      %p185 = scmp.eq.s32.totalorder %s45, 1
      %p186 = por %p184, %p185
      %p188 = scmp.ne.s32.totalorder %s171, %s187
      %p189 = scmp.eq.s32.totalorder %s45, 0
      %p190 = por %p188, %p189
      %s191 = ssub.s32 %s46, %s58
      %s192 = ssub.s32 %s47, %s54
      %s193 = sor.u32 %s191, %s192
      %p194 = scmp.eq.s32.totalorder %s193, 0
      %s196 = sadd.s32 %s195, 1
      %s197 = scalar_select %p194, %s195, %s196
      %p200 = pneg %p194
      %p201 = scmp.eq.s32.totalorder %s39, 1
      %p202 = por %p200, %p201
      %p203 = scmp.ne.s32.totalorder %s195, %s198
      %p204 = scmp.eq.s32.totalorder %s39, 0
      %p205 = por %p203, %p204
      %p206 = scmp.ne.s32.totalorder %s195, %s198
      %p207 = scmp.eq.s32.totalorder %s44, 1
      %p208 = por %p206, %p207
      %p209 = scmp.ne.s32.totalorder %s198, %s199
      %p210 = scmp.eq.s32.totalorder %s44, 0
      %p211 = por %p209, %p210
      %p212 = scmp.ne.s32.totalorder %s198, %s199
      %p213 = scmp.eq.s32.totalorder %s45, 1
      %p214 = por %p212, %p213
      %p216 = scmp.ne.s32.totalorder %s199, %s215
      %p217 = scmp.eq.s32.totalorder %s45, 0
      %p218 = por %p216, %p217
      %s219 = ssub.s32 %s46, %s58
      %p220 = scmp.eq.s32.totalorder %s219, 0
      %s222 = sadd.s32 %s221, 1
      %s223 = scalar_select %p220, %s221, %s222
      %p226 = pneg %p220
      %p227 = scmp.eq.s32.totalorder %s39, 1
      %p228 = por %p226, %p227
      %p229 = scmp.ne.s32.totalorder %s221, %s224
      %p230 = scmp.eq.s32.totalorder %s39, 0
      %p231 = por %p229, %p230
      %p232 = scmp.ne.s32.totalorder %s221, %s224
      %p233 = scmp.eq.s32.totalorder %s44, 1
      %p234 = por %p232, %p233
      %p235 = scmp.ne.s32.totalorder %s224, %s225
      %p236 = scmp.eq.s32.totalorder %s44, 0
      %p237 = por %p235, %p236
      %p238 = scmp.ne.s32.totalorder %s224, %s225
      %p239 = scmp.eq.s32.totalorder %s45, 1
      %p240 = por %p238, %p239
      %p242 = scmp.ne.s32.totalorder %s225, %s241
      %p243 = scmp.eq.s32.totalorder %s45, 0
      %p244 = por %p242, %p243
      %s246 = sadd.s32 %s245, 1
      %p249 = scmp.eq.s32.totalorder %s39, 1
      %p250 = scmp.ne.s32.totalorder %s245, %s247
      %p251 = scmp.eq.s32.totalorder %s39, 0
      %p252 = por %p250, %p251
      %p253 = scmp.ne.s32.totalorder %s245, %s247
      %p254 = scmp.eq.s32.totalorder %s44, 1
      %p255 = por %p253, %p254
      %p256 = scmp.ne.s32.totalorder %s247, %s248
      %p257 = scmp.eq.s32.totalorder %s44, 0
      %p258 = por %p256, %p257
      %p259 = scmp.ne.s32.totalorder %s247, %s248
      %p260 = scmp.eq.s32.totalorder %s45, 1
      %p261 = por %p259, %p260
      %p263 = scmp.ne.s32.totalorder %s248, %s262
      %p264 = scmp.eq.s32.totalorder %s45, 0
      %p265 = por %p263, %p264
      %s267 = sadd.s32 %s266, 1
      %p270 = scmp.eq.s32.totalorder %s39, 1
      %p271 = scmp.ne.s32.totalorder %s266, %s268
      %p272 = scmp.eq.s32.totalorder %s39, 0
      %p273 = por %p271, %p272
      %p274 = scmp.ne.s32.totalorder %s266, %s268
      %p275 = scmp.eq.s32.totalorder %s44, 1
      %p276 = por %p274, %p275
      %p277 = scmp.ne.s32.totalorder %s268, %s269
      %p278 = scmp.eq.s32.totalorder %s44, 0
      %p279 = por %p277, %p278
      %p280 = scmp.ne.s32.totalorder %s268, %s269
      %p281 = scmp.eq.s32.totalorder %s45, 1
      %p282 = por %p280, %p281
      %p284 = scmp.ne.s32.totalorder %s269, %s283
      %p285 = scmp.eq.s32.totalorder %s45, 0
      %p286 = por %p284, %p285
      %s288 = sadd.s32 %s287, 1
      %p291 = scmp.eq.s32.totalorder %s39, 1
      %p292 = scmp.ne.s32.totalorder %s287, %s289
      %p293 = scmp.eq.s32.totalorder %s39, 0
      %p294 = por %p292, %p293
      %p295 = scmp.ne.s32.totalorder %s287, %s289
      %p296 = scmp.eq.s32.totalorder %s44, 1
      %p297 = por %p295, %p296
      %p298 = scmp.ne.s32.totalorder %s289, %s290
      %p299 = scmp.eq.s32.totalorder %s44, 0
      %p300 = por %p298, %p299
      %p301 = scmp.ne.s32.totalorder %s289, %s290
      %p302 = scmp.eq.s32.totalorder %s45, 1
      %p303 = por %p301, %p302
      %p305 = scmp.ne.s32.totalorder %s290, %s304
      %p306 = scmp.eq.s32.totalorder %s45, 0
      %p307 = por %p305, %p306
      %s309 = sadd.s32 %s308, 1
      %p312 = scmp.eq.s32.totalorder %s39, 1
      %p313 = scmp.ne.s32.totalorder %s308, %s310
      %p314 = scmp.eq.s32.totalorder %s39, 0
      %p315 = por %p313, %p314
      %p316 = scmp.ne.s32.totalorder %s308, %s310
      %p317 = scmp.eq.s32.totalorder %s44, 1
      %p318 = por %p316, %p317
      %p319 = scmp.ne.s32.totalorder %s310, %s311
      %p320 = scmp.eq.s32.totalorder %s44, 0
      %p321 = por %p319, %p320
      %p322 = scmp.ne.s32.totalorder %s310, %s311
      %p323 = scmp.eq.s32.totalorder %s45, 1
      %p324 = por %p322, %p323
      %p326 = scmp.ne.s32.totalorder %s311, %s325
      %p327 = scmp.eq.s32.totalorder %s45, 0
      %p328 = por %p326, %p327
      %s330 = sadd.s32 %s329, 1
      %p333 = scmp.eq.s32.totalorder %s39, 1
      %p334 = scmp.ne.s32.totalorder %s329, %s331
      %p335 = scmp.eq.s32.totalorder %s39, 0
      %p336 = por %p334, %p335
      %p337 = scmp.ne.s32.totalorder %s329, %s331
      %p338 = scmp.eq.s32.totalorder %s44, 1
      %p339 = por %p337, %p338
      %p340 = scmp.ne.s32.totalorder %s331, %s332
      %p341 = scmp.eq.s32.totalorder %s44, 0
      %p342 = por %p340, %p341
      %p343 = scmp.ne.s32.totalorder %s331, %s332
      %p344 = scmp.eq.s32.totalorder %s45, 1
      %p345 = por %p343, %p344
      %p347 = scmp.ne.s32.totalorder %s332, %s346
      %p348 = scmp.eq.s32.totalorder %s45, 0
      %p349 = por %p347, %p348
      %s351 = sadd.s32 %s350, 1
      %p354 = scmp.eq.s32.totalorder %s39, 1
      %p355 = scmp.ne.s32.totalorder %s350, %s352
      %p356 = scmp.eq.s32.totalorder %s39, 0
      %p357 = por %p355, %p356
      %p358 = scmp.ne.s32.totalorder %s350, %s352
      %p359 = scmp.eq.s32.totalorder %s44, 1
      %p360 = por %p358, %p359
      %p361 = scmp.ne.s32.totalorder %s352, %s353
      %p362 = scmp.eq.s32.totalorder %s44, 0
      %p363 = por %p361, %p362
      %p364 = scmp.ne.s32.totalorder %s352, %s353
      %p365 = scmp.eq.s32.totalorder %s45, 1
      %p366 = por %p364, %p365
      %p368 = scmp.ne.s32.totalorder %s353, %s367
      %p369 = scmp.eq.s32.totalorder %s45, 0
      %p370 = por %p368, %p369
      %s372 = sadd.s32 %s371, 1
      %p375 = scmp.eq.s32.totalorder %s39, 1
      %p376 = scmp.ne.s32.totalorder %s371, %s373
      %p377 = scmp.eq.s32.totalorder %s39, 0
      %p378 = por %p376, %p377
      %p379 = scmp.ne.s32.totalorder %s371, %s373
      %p380 = scmp.eq.s32.totalorder %s44, 1
      %p381 = por %p379, %p380
      %p382 = scmp.ne.s32.totalorder %s373, %s374
      %p383 = scmp.eq.s32.totalorder %s44, 0
      %p384 = por %p382, %p383
      %p385 = scmp.ne.s32.totalorder %s373, %s374
      %p386 = scmp.eq.s32.totalorder %s45, 1
      %p387 = por %p385, %p386
      %p389 = scmp.ne.s32.totalorder %s374, %s388
      %p390 = scmp.eq.s32.totalorder %s45, 0
      %p391 = por %p389, %p390
      %s393 = sadd.s32 %s392, 1
      %p396 = scmp.eq.s32.totalorder %s39, 1
      %p397 = scmp.ne.s32.totalorder %s392, %s394
      %p398 = scmp.eq.s32.totalorder %s39, 0
      %p399 = por %p397, %p398
      %p400 = scmp.ne.s32.totalorder %s392, %s394
      %p401 = scmp.eq.s32.totalorder %s44, 1
      %p402 = por %p400, %p401
      %p403 = scmp.ne.s32.totalorder %s394, %s395
      %p404 = scmp.eq.s32.totalorder %s44, 0
      %p405 = por %p403, %p404
      %p406 = scmp.ne.s32.totalorder %s394, %s395
      %p407 = scmp.eq.s32.totalorder %s45, 1
      %p408 = por %p406, %p407
      %p410 = scmp.ne.s32.totalorder %s395, %s409
      %p411 = scmp.eq.s32.totalorder %s45, 0
      %p412 = por %p410, %p411
      %s414 = sadd.s32 %s413, 1
      %p417 = scmp.eq.s32.totalorder %s39, 1
      %p418 = scmp.ne.s32.totalorder %s413, %s415
      %p419 = scmp.eq.s32.totalorder %s39, 0
      %p420 = por %p418, %p419
      %p421 = scmp.ne.s32.totalorder %s413, %s415
      %p422 = scmp.eq.s32.totalorder %s44, 1
      %p423 = por %p421, %p422
      %p424 = scmp.ne.s32.totalorder %s415, %s416
      %p425 = scmp.eq.s32.totalorder %s44, 0
      %p426 = por %p424, %p425
      %p427 = scmp.ne.s32.totalorder %s415, %s416
      %p428 = scmp.eq.s32.totalorder %s45, 1
      %p429 = por %p427, %p428
      %p431 = scmp.ne.s32.totalorder %s416, %s430
      %p432 = scmp.eq.s32.totalorder %s45, 0
      %p433 = por %p431, %p432
      %s435 = sadd.s32 %s434, 1
      %p438 = scmp.eq.s32.totalorder %s39, 1
      %p439 = scmp.ne.s32.totalorder %s434, %s436
      %p440 = scmp.eq.s32.totalorder %s39, 0
      %p441 = por %p439, %p440
      %p442 = scmp.ne.s32.totalorder %s434, %s436
      %p443 = scmp.eq.s32.totalorder %s44, 1
      %p444 = por %p442, %p443
      %p445 = scmp.ne.s32.totalorder %s436, %s437
      %p446 = scmp.eq.s32.totalorder %s44, 0
      %p447 = por %p445, %p446
      %p448 = scmp.ne.s32.totalorder %s436, %s437
      %p449 = scmp.eq.s32.totalorder %s45, 1
      %p450 = por %p448, %p449
      %p452 = scmp.ne.s32.totalorder %s437, %s451
      %p453 = scmp.eq.s32.totalorder %s45, 0
      %p454 = por %p452, %p453
      %s456 = sadd.s32 %s455, 1
      %p459 = scmp.eq.s32.totalorder %s39, 1
      %p460 = scmp.ne.s32.totalorder %s455, %s457
      %p461 = scmp.eq.s32.totalorder %s39, 0
      %p462 = por %p460, %p461
      %p463 = scmp.ne.s32.totalorder %s455, %s457
      %p464 = scmp.eq.s32.totalorder %s44, 1
      %p465 = por %p463, %p464
      %p466 = scmp.ne.s32.totalorder %s457, %s458
      %p467 = scmp.eq.s32.totalorder %s44, 0
      %p468 = por %p466, %p467
      %p469 = scmp.ne.s32.totalorder %s457, %s458
      %p470 = scmp.eq.s32.totalorder %s45, 1
      %p471 = por %p469, %p470
      %p473 = scmp.ne.s32.totalorder %s458, %s472
      %p474 = scmp.eq.s32.totalorder %s45, 0
      %p475 = por %p473, %p474
      %s477 = sadd.s32 %s476, 1
      %p480 = scmp.eq.s32.totalorder %s39, 1
      %p481 = scmp.ne.s32.totalorder %s476, %s478
      %p482 = scmp.eq.s32.totalorder %s39, 0
      %p483 = por %p481, %p482
      %p484 = scmp.ne.s32.totalorder %s476, %s478
      %p485 = scmp.eq.s32.totalorder %s44, 1
      %p486 = por %p484, %p485
      %p487 = scmp.ne.s32.totalorder %s478, %s479
      %p488 = scmp.eq.s32.totalorder %s44, 0
      %p489 = por %p487, %p488
      %p490 = scmp.ne.s32.totalorder %s478, %s479
      %p491 = scmp.eq.s32.totalorder %s45, 1
      %p492 = por %p490, %p491
      %p494 = scmp.ne.s32.totalorder %s479, %s493
      %p495 = scmp.eq.s32.totalorder %s45, 0
      %p496 = por %p494, %p495
      %s498 = sadd.s32 %s497, 1
      %p501 = scmp.eq.s32.totalorder %s39, 1
      %p502 = scmp.ne.s32.totalorder %s497, %s499
      %p503 = scmp.eq.s32.totalorder %s39, 0
      %p504 = por %p502, %p503
      %p505 = scmp.ne.s32.totalorder %s497, %s499
      %p506 = scmp.eq.s32.totalorder %s44, 1
      %p507 = por %p505, %p506
      %p508 = scmp.ne.s32.totalorder %s499, %s500
      %p509 = scmp.eq.s32.totalorder %s44, 0
      %p510 = por %p508, %p509
      %p511 = scmp.ne.s32.totalorder %s499, %s500
      %p512 = scmp.eq.s32.totalorder %s45, 1
      %p513 = por %p511, %p512
      %p515 = scmp.ne.s32.totalorder %s500, %s514
      %p516 = scmp.eq.s32.totalorder %s45, 0
      %p517 = por %p515, %p516
      %s519 = sadd.s32 %s518, 1
      %p522 = scmp.eq.s32.totalorder %s39, 1
      %p523 = scmp.ne.s32.totalorder %s518, %s520
      %p524 = scmp.eq.s32.totalorder %s39, 0
      %p525 = por %p523, %p524
      %p526 = scmp.ne.s32.totalorder %s518, %s520
      %p527 = scmp.eq.s32.totalorder %s44, 1
      %p528 = por %p526, %p527
      %p529 = scmp.ne.s32.totalorder %s520, %s521
      %p530 = scmp.eq.s32.totalorder %s44, 0
      %p531 = por %p529, %p530
      %p532 = scmp.ne.s32.totalorder %s520, %s521
      %p533 = scmp.eq.s32.totalorder %s45, 1
      %p534 = por %p532, %p533
      %p536 = scmp.ne.s32.totalorder %s521, %s535
      %p537 = scmp.eq.s32.totalorder %s45, 0
      %p538 = por %p536, %p537
      %s540 = sadd.s32 %s539, 1
      %p543 = scmp.eq.s32.totalorder %s39, 1
      %p544 = scmp.ne.s32.totalorder %s539, %s541
      %p545 = scmp.eq.s32.totalorder %s39, 0
      %p546 = por %p544, %p545
      %p547 = scmp.ne.s32.totalorder %s539, %s541
      %p548 = scmp.eq.s32.totalorder %s44, 1
      %p549 = por %p547, %p548
      %p550 = scmp.ne.s32.totalorder %s541, %s542
      %p551 = scmp.eq.s32.totalorder %s44, 0
      %p552 = por %p550, %p551
      %p553 = scmp.ne.s32.totalorder %s541, %s542
      %p554 = scmp.eq.s32.totalorder %s45, 1
      %p555 = por %p553, %p554
      %p557 = scmp.ne.s32.totalorder %s542, %s556
      %p558 = scmp.eq.s32.totalorder %s45, 0
      %p559 = por %p557, %p558
      %s561 = sadd.s32 %s560, 1
      %p564 = scmp.eq.s32.totalorder %s39, 1
      %p565 = scmp.ne.s32.totalorder %s560, %s562
      %p566 = scmp.eq.s32.totalorder %s39, 0
      %p567 = por %p565, %p566
      %p568 = scmp.ne.s32.totalorder %s560, %s562
      %p569 = scmp.eq.s32.totalorder %s44, 1
      %p570 = por %p568, %p569
      %p571 = scmp.ne.s32.totalorder %s562, %s563
      %p572 = scmp.eq.s32.totalorder %s44, 0
      %p573 = por %p571, %p572
      %p574 = scmp.ne.s32.totalorder %s562, %s563
      %p575 = scmp.eq.s32.totalorder %s45, 1
      %p576 = por %p574, %p575
      %p578 = scmp.ne.s32.totalorder %s563, %s577
      %p579 = scmp.eq.s32.totalorder %s45, 0
      %p580 = por %p578, %p579
      %s582 = sadd.s32 %s581, 1
      %p585 = scmp.eq.s32.totalorder %s39, 1
      %p586 = scmp.ne.s32.totalorder %s581, %s583
      %p587 = scmp.eq.s32.totalorder %s39, 0
      %p588 = por %p586, %p587
      %p589 = scmp.ne.s32.totalorder %s581, %s583
      %p590 = scmp.eq.s32.totalorder %s44, 1
      %p591 = por %p589, %p590
      %p592 = scmp.ne.s32.totalorder %s583, %s584
      %p593 = scmp.eq.s32.totalorder %s44, 0
      %p594 = por %p592, %p593
      %p595 = scmp.ne.s32.totalorder %s583, %s584
      %p596 = scmp.eq.s32.totalorder %s45, 1
      %p597 = por %p595, %p596
      %p599 = scmp.ne.s32.totalorder %s584, %s598
      %p600 = scmp.eq.s32.totalorder %s45, 0
      %p601 = por %p599, %p600
      %s603 = sadd.s32 %s602, 1
      %p606 = scmp.eq.s32.totalorder %s39, 1
      %p607 = scmp.ne.s32.totalorder %s602, %s604
      %p608 = scmp.eq.s32.totalorder %s39, 0
      %p609 = por %p607, %p608
      %p610 = scmp.ne.s32.totalorder %s602, %s604
      %p611 = scmp.eq.s32.totalorder %s44, 1
      %p612 = por %p610, %p611
      %p613 = scmp.ne.s32.totalorder %s604, %s605
      %p614 = scmp.eq.s32.totalorder %s44, 0
      %p615 = por %p613, %p614
      %p616 = scmp.ne.s32.totalorder %s604, %s605
      %p617 = scmp.eq.s32.totalorder %s45, 1
      %p618 = por %p616, %p617
      %p620 = scmp.ne.s32.totalorder %s605, %s619
      %p621 = scmp.eq.s32.totalorder %s45, 0
      %p622 = por %p620, %p621
      %s623 = ssub.s32 %s46, %s58
      %s624 = ssub.s32 %s47, %s54
      %s625 = sor.u32 %s623, %s624
      %p626 = scmp.eq.s32.totalorder %s625, 0
      %s628 = sadd.s32 %s627, 1
      %s629 = scalar_select %p626, %s627, %s628
      %p632 = pneg %p626
      %p633 = scmp.eq.s32.totalorder %s39, 1
      %p634 = por %p632, %p633
      %p635 = scmp.ne.s32.totalorder %s627, %s630
      %p636 = scmp.eq.s32.totalorder %s39, 0
      %p637 = por %p635, %p636
      %p638 = scmp.ne.s32.totalorder %s627, %s630
      %p639 = scmp.eq.s32.totalorder %s44, 1
      %p640 = por %p638, %p639
      %p641 = scmp.ne.s32.totalorder %s630, %s631
      %p642 = scmp.eq.s32.totalorder %s44, 0
      %p643 = por %p641, %p642
      %p644 = scmp.ne.s32.totalorder %s630, %s631
      %p645 = scmp.eq.s32.totalorder %s45, 1
      %p646 = por %p644, %p645
      %p648 = scmp.ne.s32.totalorder %s631, %s647
      %p649 = scmp.eq.s32.totalorder %s45, 0
      %p650 = por %p648, %p649
      %s651 = ssub.s32 %s46, %s58
      %s652 = ssub.s32 %s47, %s54
      %s653 = sor.u32 %s651, %s652
      %p654 = scmp.eq.s32.totalorder %s653, 0
      %s656 = sadd.s32 %s655, 1
      %s657 = scalar_select %p654, %s655, %s656
      %p660 = pneg %p654
      %p661 = scmp.eq.s32.totalorder %s39, 1
      %p662 = por %p660, %p661
      %p663 = scmp.ne.s32.totalorder %s655, %s658
      %p664 = scmp.eq.s32.totalorder %s39, 0
      %p665 = por %p663, %p664
      %p666 = scmp.ne.s32.totalorder %s655, %s658
      %p667 = scmp.eq.s32.totalorder %s44, 1
      %p668 = por %p666, %p667
      %p669 = scmp.ne.s32.totalorder %s658, %s659
      %p670 = scmp.eq.s32.totalorder %s44, 0
      %p671 = por %p669, %p670
      %p672 = scmp.ne.s32.totalorder %s658, %s659
      %p673 = scmp.eq.s32.totalorder %s45, 1
      %p674 = por %p672, %p673
      %p676 = scmp.ne.s32.totalorder %s659, %s675
      %p677 = scmp.eq.s32.totalorder %s45, 0
      %p678 = por %p676, %p677
      %p679 = scmp.le.s32.totalorder 1, %s39
      %p680 = scmp.lt.s32.totalorder %s39, 3
      %p681 = pnand %p679, %p680
      %p682 = pneg %p681
      // Predicated region
      $region9: #{tpu_custom_call.1} parent=5 // pred_check
        _
      $region10: #{tpu_custom_call.1} parent=5 // pred_check_branch
        %684 = sbr.rel (%p681) target = $region12
      $region11: #{tpu_custom_call.1} parent=5 // pred_region
        %s685 = ssub.s32 %s39, 1
        // Predicated region
        $region13: #{tpu_custom_call.1} parent=11 // pred_check
          %p686 = pneg %p258
        $region14: #{tpu_custom_call.1} parent=11 // pred_check_branch
          %688 = sbr.rel (%p686) target = $region16
        $region15: #{tpu_custom_call.1} parent=11 // pred_region
          _
        $region16: #{tpu_custom_call.1} parent=11 // pred_fallthru
          _
        // Predicated region
        $region17: #{tpu_custom_call.1} parent=11 // pred_check
          %p689 = pneg %p279
        $region18: #{tpu_custom_call.1} parent=11 // pred_check_branch
          %691 = sbr.rel (%p689) target = $region20
        $region19: #{tpu_custom_call.1} parent=11 // pred_region
          _
        $region20: #{tpu_custom_call.1} parent=11 // pred_fallthru
          _
        // Predicated region
        $region21: #{tpu_custom_call.1} parent=11 // pred_check
          %p692 = pneg %p300
        $region22: #{tpu_custom_call.1} parent=11 // pred_check_branch
          %694 = sbr.rel (%p692) target = $region24
        $region23: #{tpu_custom_call.1} parent=11 // pred_region
          _
        $region24: #{tpu_custom_call.1} parent=11 // pred_fallthru
          _
        // Predicated region
        $region25: #{tpu_custom_call.1} parent=11 // pred_check
          %p695 = pneg %p321
        $region26: #{tpu_custom_call.1} parent=11 // pred_check_branch
          %697 = sbr.rel (%p695) target = $region28
        $region27: #{tpu_custom_call.1} parent=11 // pred_region
          _
        $region28: #{tpu_custom_call.1} parent=11 // pred_fallthru
          _
        // Predicated region
        $region29: #{tpu_custom_call.1} parent=11 // pred_check
          %p698 = pneg %p342
        $region30: #{tpu_custom_call.1} parent=11 // pred_check_branch
          %700 = sbr.rel (%p698) target = $region32
        $region31: #{tpu_custom_call.1} parent=11 // pred_region
          _
        $region32: #{tpu_custom_call.1} parent=11 // pred_fallthru
          _
        // Predicated region
        $region33: #{tpu_custom_call.1} parent=11 // pred_check
          %p701 = pneg %p363
        $region34: #{tpu_custom_call.1} parent=11 // pred_check_branch
          %703 = sbr.rel (%p701) target = $region36
        $region35: #{tpu_custom_call.1} parent=11 // pred_region
          _
        $region36: #{tpu_custom_call.1} parent=11 // pred_fallthru
          _
        // Predicated region
        $region37: #{tpu_custom_call.1} parent=11 // pred_check
          %p704 = pneg %p384
        $region38: #{tpu_custom_call.1} parent=11 // pred_check_branch
          %706 = sbr.rel (%p704) target = $region40
        $region39: #{tpu_custom_call.1} parent=11 // pred_region
          _
        $region40: #{tpu_custom_call.1} parent=11 // pred_fallthru
          _
        // Predicated region
        $region41: #{tpu_custom_call.1} parent=11 // pred_check
          %p707 = pneg %p405
        $region42: #{tpu_custom_call.1} parent=11 // pred_check_branch
          %709 = sbr.rel (%p707) target = $region44
        $region43: #{tpu_custom_call.1} parent=11 // pred_region
          _
        $region44: #{tpu_custom_call.1} parent=11 // pred_fallthru
          _
        // Predicated region
        $region45: #{tpu_custom_call.1} parent=11 // pred_check
          %p710 = pneg %p426
        $region46: #{tpu_custom_call.1} parent=11 // pred_check_branch
          %712 = sbr.rel (%p710) target = $region48
        $region47: #{tpu_custom_call.1} parent=11 // pred_region
          _
        $region48: #{tpu_custom_call.1} parent=11 // pred_fallthru
          _
        // Predicated region
        $region49: #{tpu_custom_call.1} parent=11 // pred_check
          %p713 = pneg %p447
        $region50: #{tpu_custom_call.1} parent=11 // pred_check_branch
          %715 = sbr.rel (%p713) target = $region52
        $region51: #{tpu_custom_call.1} parent=11 // pred_region
          _
        $region52: #{tpu_custom_call.1} parent=11 // pred_fallthru
          _
        // Predicated region
        $region53: #{tpu_custom_call.1} parent=11 // pred_check
          %p716 = pneg %p468
        $region54: #{tpu_custom_call.1} parent=11 // pred_check_branch
          %718 = sbr.rel (%p716) target = $region56
        $region55: #{tpu_custom_call.1} parent=11 // pred_region
          _
        $region56: #{tpu_custom_call.1} parent=11 // pred_fallthru
          _
        // Predicated region
        $region57: #{tpu_custom_call.1} parent=11 // pred_check
          %p719 = pneg %p489
        $region58: #{tpu_custom_call.1} parent=11 // pred_check_branch
          %721 = sbr.rel (%p719) target = $region60
        $region59: #{tpu_custom_call.1} parent=11 // pred_region
          _
        $region60: #{tpu_custom_call.1} parent=11 // pred_fallthru
          _
        // Predicated region
        $region61: #{tpu_custom_call.1} parent=11 // pred_check
          %p722 = pneg %p510
        $region62: #{tpu_custom_call.1} parent=11 // pred_check_branch
          %724 = sbr.rel (%p722) target = $region64
        $region63: #{tpu_custom_call.1} parent=11 // pred_region
          _
        $region64: #{tpu_custom_call.1} parent=11 // pred_fallthru
          _
        // Predicated region
        $region65: #{tpu_custom_call.1} parent=11 // pred_check
          %p725 = pneg %p531
        $region66: #{tpu_custom_call.1} parent=11 // pred_check_branch
          %727 = sbr.rel (%p725) target = $region68
        $region67: #{tpu_custom_call.1} parent=11 // pred_region
          _
        $region68: #{tpu_custom_call.1} parent=11 // pred_fallthru
          _
        // Predicated region
        $region69: #{tpu_custom_call.1} parent=11 // pred_check
          %p728 = pneg %p552
        $region70: #{tpu_custom_call.1} parent=11 // pred_check_branch
          %730 = sbr.rel (%p728) target = $region72
        $region71: #{tpu_custom_call.1} parent=11 // pred_region
          _
        $region72: #{tpu_custom_call.1} parent=11 // pred_fallthru
          _
        // Predicated region
        $region73: #{tpu_custom_call.1} parent=11 // pred_check
          %p731 = pneg %p573
        $region74: #{tpu_custom_call.1} parent=11 // pred_check_branch
          %733 = sbr.rel (%p731) target = $region76
        $region75: #{tpu_custom_call.1} parent=11 // pred_region
          _
        $region76: #{tpu_custom_call.1} parent=11 // pred_fallthru
          _
        // Predicated region
        $region77: #{tpu_custom_call.1} parent=11 // pred_check
          %p734 = pneg %p594
        $region78: #{tpu_custom_call.1} parent=11 // pred_check_branch
          %736 = sbr.rel (%p734) target = $region80
        $region79: #{tpu_custom_call.1} parent=11 // pred_region
          _
        $region80: #{tpu_custom_call.1} parent=11 // pred_fallthru
          _
        // Predicated region
        $region81: #{tpu_custom_call.1} parent=11 // pred_check
          %p737 = pneg %p615
        $region82: #{tpu_custom_call.1} parent=11 // pred_check_branch
          %739 = sbr.rel (%p737) target = $region84
        $region83: #{tpu_custom_call.1} parent=11 // pred_region
          _
        $region84: #{tpu_custom_call.1} parent=11 // pred_fallthru
          _
      $region12: #{tpu_custom_call.1} parent=5 // pred_fallthru
        _
      %p740 = scmp.lt.s32.totalorder %s39, 2
      // Predicated region
      $region85: #{tpu_custom_call.1} parent=5 // pred_check
        %p741 = pneg %p740
      $region86: #{tpu_custom_call.1} parent=5 // pred_check_branch
        %743 = sbr.rel (%p741) target = $region88
      $region87: #{tpu_custom_call.1} parent=5 // pred_region
        // Predicated region
        $region89: #{tpu_custom_call.1} parent=87 // pred_check
          %p744 = pneg %p73
        $region90: #{tpu_custom_call.1} parent=87 // pred_check_branch
          %746 = sbr.rel (%p744) target = $region92
        $region91: #{tpu_custom_call.1} parent=87 // pred_region
          %p747 = scmp.lt.s32.totalorder %s46, 1
          %s748 = scalar_select %p747, %s46, 1
          %p749 = scmp.lt.s32.totalorder %s47, 0
          %s750 = scalar_select %p749, %s47, 0
          %s751 = sadd.s32 %s750, %s748
          %s752 = smul.addr %s751, 8
          %s753 = scalar_lea.vmem %s0, %s752
        $region92: #{tpu_custom_call.1} parent=87 // pred_fallthru
          _
        // Predicated region
        $region93: #{tpu_custom_call.1} parent=87 // pred_check
          %p754 = pneg %p99
        $region94: #{tpu_custom_call.1} parent=87 // pred_check_branch
          %756 = sbr.rel (%p754) target = $region96
        $region95: #{tpu_custom_call.1} parent=87 // pred_region
          %p757 = scmp.lt.s32.totalorder %s46, 1
          %s758 = scalar_select %p757, %s46, 1
          %s759 = smul.addr %s758, 4
          %s760 = smul.addr %s759, 4
          %s761 = scalar_lea.vmem %s1, %s760
        $region96: #{tpu_custom_call.1} parent=87 // pred_fallthru
          _
        // Predicated region
        $region97: #{tpu_custom_call.1} parent=87 // pred_check
          %p762 = pneg %p125
        $region98: #{tpu_custom_call.1} parent=87 // pred_check_branch
          %764 = sbr.rel (%p762) target = $region100
        $region99: #{tpu_custom_call.1} parent=87 // pred_region
          %p765 = scmp.lt.s32.totalorder %s46, 1
          %s766 = scalar_select %p765, %s46, 1
          %s767 = smul.addr %s766, 4
          %s768 = smul.addr %s767, 4
          %s769 = scalar_lea.vmem %s2, %s768
        $region100: #{tpu_custom_call.1} parent=87 // pred_fallthru
          _
        // Predicated region
        $region101: #{tpu_custom_call.1} parent=87 // pred_check
          %p770 = pneg %p151
        $region102: #{tpu_custom_call.1} parent=87 // pred_check_branch
          %772 = sbr.rel (%p770) target = $region104
        $region103: #{tpu_custom_call.1} parent=87 // pred_region
          %p773 = scmp.lt.s32.totalorder %s46, 1
          %s774 = scalar_select %p773, %s46, 1
          %s775 = smul.addr %s774, 8
          %s776 = smul.addr %s775, 4
          %s777 = scalar_lea.vmem %s3, %s776
        $region104: #{tpu_custom_call.1} parent=87 // pred_fallthru
          _
        // Predicated region
        $region105: #{tpu_custom_call.1} parent=87 // pred_check
          %p778 = pneg %p177
        $region106: #{tpu_custom_call.1} parent=87 // pred_check_branch
          %780 = sbr.rel (%p778) target = $region108
        $region107: #{tpu_custom_call.1} parent=87 // pred_region
          %p781 = scmp.lt.s32.totalorder %s46, 1
          %s782 = scalar_select %p781, %s46, 1
          %s783 = smul.addr %s782, 8
          %s784 = smul.addr %s783, 4
          %s785 = scalar_lea.vmem %s4, %s784
        $region108: #{tpu_custom_call.1} parent=87 // pred_fallthru
          _
        // Predicated region
        $region109: #{tpu_custom_call.1} parent=87 // pred_check
          %p786 = pneg %p205
        $region110: #{tpu_custom_call.1} parent=87 // pred_check_branch
          %788 = sbr.rel (%p786) target = $region112
        $region111: #{tpu_custom_call.1} parent=87 // pred_region
          %p789 = scmp.lt.s32.totalorder %s46, 1
          %s790 = scalar_select %p789, %s46, 1
          %p791 = scmp.lt.s32.totalorder %s47, 0
          %s792 = scalar_select %p791, %s47, 0
          %s793 = sadd.s32 %s792, %s790
          %s794 = smul.addr %s793, 4
          %s795 = scalar_lea.vmem %s5, %s794
        $region112: #{tpu_custom_call.1} parent=87 // pred_fallthru
          _
        // Predicated region
        $region113: #{tpu_custom_call.1} parent=87 // pred_check
          %p796 = pneg %p231
        $region114: #{tpu_custom_call.1} parent=87 // pred_check_branch
          %798 = sbr.rel (%p796) target = $region116
        $region115: #{tpu_custom_call.1} parent=87 // pred_region
          %p799 = scmp.lt.s32.totalorder %s46, 1
          %s800 = scalar_select %p799, %s46, 1
          %s801 = scalar_lea.vmem %s6, %s800
        $region116: #{tpu_custom_call.1} parent=87 // pred_fallthru
          _
      $region88: #{tpu_custom_call.1} parent=5 // pred_fallthru
        _
      %p802 = scmp.le.s32.totalorder 1, %s39
      %p803 = scmp.lt.s32.totalorder %s39, 3
      %p804 = pnand %p802, %p803
      %p805 = pneg %p804
      // Predicated region
      $region117: #{tpu_custom_call.1} parent=5 // pred_check
        _
      $region118: #{tpu_custom_call.1} parent=5 // pred_check_branch
        %807 = sbr.rel (%p804) target = $region120
      $region119: #{tpu_custom_call.1} parent=5 // pred_region
        %s808 = ssub.s32 %s39, 1
        %p809 = scmp.lt.s32.totalorder %s48, 1
        %s810 = scalar_select %p809, %s48, 1
        %p811 = scmp.lt.s32.totalorder %s49, 0
        %s812 = scalar_select %p811, %s49, 0
        %s813 = sadd.s32 %s812, %s810
        %s814 = smul.addr %s813, 8
        %s815 = scalar_lea.vmem %s0, %s814
        %p816 = pneg %p79
        %p817 = pneg %p76
        %p818 = scmp.lt.s32.totalorder %s48, 1
        %s819 = scalar_select %p818, %s48, 1
        %s820 = smul.addr %s819, 4
        %s821 = smul.addr %s820, 4
        %s822 = scalar_lea.vmem %s1, %s821
        %p823 = pneg %p105
        %p824 = pneg %p102
        %p825 = scmp.lt.s32.totalorder %s48, 1
        %s826 = scalar_select %p825, %s48, 1
        %s827 = smul.addr %s826, 4
        %s828 = smul.addr %s827, 4
        %s829 = scalar_lea.vmem %s2, %s828
        %p830 = pneg %p131
        %p831 = pneg %p128
        %p832 = scmp.lt.s32.totalorder %s48, 1
        %s833 = scalar_select %p832, %s48, 1
        %s834 = smul.addr %s833, 8
        %s835 = smul.addr %s834, 4
        %s836 = scalar_lea.vmem %s3, %s835
        %p837 = pneg %p157
        %p838 = pneg %p154
        %p839 = scmp.lt.s32.totalorder %s48, 1
        %s840 = scalar_select %p839, %s48, 1
        %s841 = smul.addr %s840, 8
        %s842 = smul.addr %s841, 4
        %s843 = scalar_lea.vmem %s4, %s842
        %p844 = pneg %p183
        %p845 = pneg %p180
        %p846 = scmp.lt.s32.totalorder %s48, 1
        %s847 = scalar_select %p846, %s48, 1
        %p848 = scmp.lt.s32.totalorder %s49, 0
        %s849 = scalar_select %p848, %s49, 0
        %s850 = sadd.s32 %s849, %s847
        %s851 = smul.addr %s850, 4
        %s852 = scalar_lea.vmem %s5, %s851
        %p853 = pneg %p211
        %p854 = pneg %p208
        %p855 = scmp.lt.s32.totalorder %s48, 1
        %s856 = scalar_select %p855, %s48, 1
        %s857 = scalar_lea.vmem %s6, %s856
        %p858 = pneg %p237
        %p859 = pneg %p234
        %p860 = pneg %p258
        %p861 = pneg %p255
        %p862 = pneg %p279
        %p863 = pneg %p276
        %p864 = pneg %p300
        %p865 = pneg %p297
        %p866 = pneg %p321
        %p867 = pneg %p318
        %p868 = pneg %p342
        %p869 = pneg %p339
        %p870 = pneg %p363
        %p871 = pneg %p360
        %p872 = pneg %p384
        %p873 = pneg %p381
        %p874 = pneg %p405
        %p875 = pneg %p402
        %p876 = pneg %p426
        %p877 = pneg %p423
        %p878 = pneg %p447
        %p879 = pneg %p444
        %p880 = pneg %p468
        %p881 = pneg %p465
        %p882 = pneg %p489
        %p883 = pneg %p486
        %p884 = pneg %p510
        %p885 = pneg %p507
        %p886 = pneg %p531
        %p887 = pneg %p528
        %p888 = pneg %p552
        %p889 = pneg %p549
        %p890 = pneg %p573
        %p891 = pneg %p570
        %p892 = pneg %p594
        %p893 = pneg %p591
        %p894 = pneg %p615
        %p895 = pneg %p612
        %p896 = pneg %p643
        %p897 = pneg %p640
        %s898 = sand.u32 %s630, 1
        %s899 = scalar_lea.sflag [#allocation3], %s898
        %s900 = sand.u32 %s630, 1
        %s901 = smul.addr %s900, 8
        %s902 = scalar_lea.vmem [#allocation2], %s901
        %p903 = pneg %p671
        %p904 = pneg %p668
        %s905 = sand.u32 %s658, 1
        %s906 = scalar_lea.sflag [#allocation5], %s905
        %s907 = sand.u32 %s658, 1
        %s908 = smul.addr %s907, 32
        %s909 = scalar_lea.vmem [#allocation4], %s908
        %p910 = scmp.lt.s32.totalorder %s48, 1
        %s911 = scalar_select %p910, %s48, 1
        %p912 = scmp.lt.s32.totalorder %s49, 0
        %s913 = scalar_select %p912, %s49, 0
        %s914 = sadd.s32 %s913, %s911
        %s915 = smul.addr %s914, 8
        %s916 = scalar_lea.vmem %s0, %s915
        %p917 = scmp.lt.s32.totalorder %s48, 1
        %s918 = scalar_select %p917, %s48, 1
        %s919 = smul.addr %s918, 4
        %s920 = smul.addr %s919, 4
        %s921 = scalar_lea.vmem %s1, %s920
        %p922 = scmp.lt.s32.totalorder %s48, 1
        %s923 = scalar_select %p922, %s48, 1
        %s924 = smul.addr %s923, 4
        %s925 = smul.addr %s924, 4
        %s926 = scalar_lea.vmem %s2, %s925
        %p927 = scmp.lt.s32.totalorder %s48, 1
        %s928 = scalar_select %p927, %s48, 1
        %s929 = smul.addr %s928, 8
        %s930 = smul.addr %s929, 4
        %s931 = scalar_lea.vmem %s3, %s930
        %p932 = scmp.lt.s32.totalorder %s48, 1
        %s933 = scalar_select %p932, %s48, 1
        %s934 = smul.addr %s933, 8
        %s935 = smul.addr %s934, 4
        %s936 = scalar_lea.vmem %s4, %s935
        %p937 = scmp.lt.s32.totalorder %s48, 1
        %s938 = scalar_select %p937, %s48, 1
        %p939 = scmp.lt.s32.totalorder %s49, 0
        %s940 = scalar_select %p939, %s49, 0
        %s941 = sadd.s32 %s940, %s938
        %s942 = smul.addr %s941, 4
        %s943 = scalar_lea.vmem %s5, %s942
        %p944 = scmp.lt.s32.totalorder %s48, 1
        %s945 = scalar_select %p944, %s48, 1
        %s946 = scalar_lea.vmem %s6, %s945
        %v948 = vld [vmem:[%s916] sm:$0xff]
        %v949 = vld [vmem:[%s943] sm:$0xf]
        %v950 = vunpack.c.l.bf16 %v949
        %v951 = vld [vmem:[%s946] sm:$0x1]
        %v952 = vunpack.c.l.bf16 %v951
        %v953 = vld [vmem:[%s921] sm:$0xf]
        %v954 = vld [vmem:[%s921 + $0x4] sm:$0xf]
        %v955 = vld [vmem:[%s921 + $0x8] sm:$0xf]
        %v956 = vld [vmem:[%s921 + $0xc] sm:$0xf]
        %v957 = vld [vmem:[%s926] sm:$0xf]
        %v958 = vld [vmem:[%s926 + $0x4] sm:$0xf]
        %v959 = vld [vmem:[%s926 + $0x8] sm:$0xf]
        %v960 = vld [vmem:[%s926 + $0xc] sm:$0xf]
        %v961 = vld [vmem:[%s7] sm:$0xf]
        %v962 = vld [vmem:[%s7 + $0x4] sm:$0xf]
        %v963 = vld [vmem:[%s7 + $0x8] sm:$0xf]
        %v964 = vld [vmem:[%s7 + $0xc] sm:$0xf]
        %v965 = vld [vmem:[%s8] sm:$0x1]
        %v966 = vld [vmem:[%s9] sm:$0xf]
        %v967 = vld [vmem:[%s9 + $0x4] sm:$0xf]
        %v968 = vld [vmem:[%s9 + $0x8] sm:$0xf]
        %v969 = vld [vmem:[%s9 + $0xc] sm:$0xf]
        %v970 = vld [vmem:[%s10] sm:$0x1]
        %v971 = vpack.c.bf16 %v948, %v948
        %v973 = vlaneseq
        %v974 = vshrl.u32 %v973, 7
        %v975 = vsub.s32 0, %v974
        %v976 = vrot.slane %v965, %v975
        %v982 = vunpack.c.l.b16 %v961
        %v983 = vunpack.c.l.b16 %v962
        %v984 = vunpack.c.l.b16 %v963
        %v985 = vunpack.c.l.b16 %v964
        %v986 = vpack.c.b16 %v983, %v982
        %v987 = vpack.c.b16 %v985, %v984
        %vm990 = vcmask 261120
        %v992 = vsel %vm990, %v971, 0
        %994 = vmatprep.subr.bf16.mxu0 0
        %995 = vmatpush1.bf16.msra.mxu0 %v986
        %996 = vmatprep.subr.bf16.mxu0 0
        %997 = vmatpush1.bf16.msra.mxu0 %v987
        %998 = vmatprep.subr.bf16.mxu0 0
        %999 = vmatpush1.bf16.msra.mxu0 0
        %1000 = vmatprep.subr.bf16.mxu0 0
        %1001 = vmatpush1.bf16.msra.mxu0 0
        %1002 = vmatprep.subr.bf16.mxu0 0
        %1003 = vmatpush1.bf16.msra.mxu0 0
        %1004 = vmatprep.subr.bf16.mxu0 0
        %1005 = vmatpush1.bf16.msra.mxu0 0
        %1006 = vmatprep.subr.bf16.mxu0 0
        %1007 = vmatpush1.bf16.msra.mxu0 0
        %1008 = vmatprep.subr.bf16.mxu0 0
        %1009 = vmatpush1.bf16.msra.mxu0 0
        %1010 = vmatprep.subr.bf16.mxu0 0
        %1011 = vmatpush1.bf16.msra.mxu0 0
        %1012 = vmatprep.subr.bf16.mxu0 0
        %1013 = vmatpush1.bf16.msra.mxu0 0
        %1014 = vmatprep.subr.bf16.mxu0 0
        %1015 = vmatpush1.bf16.msra.mxu0 0
        %1016 = vmatprep.subr.bf16.mxu0 0
        %1017 = vmatpush1.bf16.msra.mxu0 0
        %1018 = vmatprep.subr.bf16.mxu0 0
        %1019 = vmatpush1.bf16.msra.mxu0 0
        %1020 = vmatprep.subr.bf16.mxu0 0
        %1021 = vmatpush1.bf16.msra.mxu0 0
        %1022 = vmatprep.subr.bf16.mxu0 0
        %1023 = vmatpush1.bf16.msra.mxu0 0
        %1024 = vmatprep.subr.bf16.mxu0 0
        %1025 = vmatpush1.bf16.msra.mxu0 0
        %1026 = vmatprep.mubr.bf16.mxu0 0
        %1027 = vmatmul.mubr.bf16.gmra.mrb[0].mxu0 %v992
        %v1028 = vpop.f32.mrb[0].mxu0
        %v1029 = vadd.f32 %v976, %v1028
        %v1030 = vpop.f32.mrb[0].mxu0
        %v1031 = vpop.f32.mrb[0].mxu0
        %v1032 = vpop.f32.mrb[0].mxu0
        %1033 = vdwg.mxu0
        %1035 = vrot.lane.b32.xlu0 %v1029, 120
        %v1036 = vpop.permute.xlu0 %1035
        %1038 = vrot.lane.b32.xlu0 %v1029, 112
        %v1039 = vpop.permute.xlu0 %1038
        %1041 = vrot.lane.b32.xlu0 %v1029, 104
        %v1042 = vpop.permute.xlu0 %1041
        %v1044 = vcombine.low %v1029, %v1039
        %v1045 = vcombine.high %v1029, %v1039
        %v1047 = vunpack.c.l.s4 1983009808
        %v1048 = vunpack.c.0.s8 %v1047
        %v1049 = vlaneseq
        %v1050 = vshrl.u32 %v1049, 7
        %v1051 = vsub.s32 %v1048, %v1050
        %v1052 = vrot.slane %v1044, %v1051
        %v1054 = vunpack.c.l.s4 1983009808
        %v1055 = vunpack.c.0.s8 %v1054
        %v1056 = vlaneseq
        %v1057 = vshrl.u32 %v1056, 7
        %v1058 = vsub.s32 %v1055, %v1057
        %v1059 = vrot.slane %v1045, %v1058
        %v1060 = vcombine.low %v1036, %v1042
        %v1061 = vcombine.high %v1036, %v1042
        %v1063 = vunpack.c.l.s4 1983009808
        %v1064 = vunpack.c.0.s8 %v1063
        %v1065 = vlaneseq
        %v1066 = vshrl.u32 %v1065, 7
        %v1067 = vsub.s32 %v1064, %v1066
        %v1068 = vrot.slane %v1060, %v1067
        %v1070 = vunpack.c.l.s4 1983009808
        %v1071 = vunpack.c.0.s8 %v1070
        %v1072 = vlaneseq
        %v1073 = vshrl.u32 %v1072, 7
        %v1074 = vsub.s32 %v1071, %v1073
        %v1075 = vrot.slane %v1061, %v1074
        %v1076 = vcombine.low %v1052, %v1068
        %v1077 = vcombine.high %v1052, %v1068
        %v1079 = vunpack.c.l.s4 1934713408
        %v1080 = vunpack.c.0.s8 %v1079
        %v1081 = vlaneseq
        %v1082 = vshrl.u32 %v1081, 7
        %v1083 = vsub.s32 %v1080, %v1082
        %v1084 = vrot.slane %v1076, %v1083
        %v1086 = vunpack.c.l.s4 1934713408
        %v1087 = vunpack.c.0.s8 %v1086
        %v1088 = vlaneseq
        %v1089 = vshrl.u32 %v1088, 7
        %v1090 = vsub.s32 %v1087, %v1089
        %v1091 = vrot.slane %v1077, %v1090
        %v1092 = vcombine.low %v1059, %v1075
        %v1093 = vcombine.high %v1059, %v1075
        %v1095 = vunpack.c.l.s4 1934713408
        %v1096 = vunpack.c.0.s8 %v1095
        %v1097 = vlaneseq
        %v1098 = vshrl.u32 %v1097, 7
        %v1099 = vsub.s32 %v1096, %v1098
        %v1100 = vrot.slane %v1092, %v1099
        %v1102 = vunpack.c.l.s4 1934713408
        %v1103 = vunpack.c.0.s8 %v1102
        %v1104 = vlaneseq
        %v1105 = vshrl.u32 %v1104, 7
        %v1106 = vsub.s32 %v1103, %v1105
        %v1107 = vrot.slane %v1093, %v1106
        %v1108 = vcombine.high %v1084, 0.0
        %v1109 = vcombine.high %v1091, 0.0
        %v1110 = vcombine.high %v1100, 0.0
        %v1111 = vcombine.high %v1107, 0.0
        %v1112 = vcombine.low %v1084, %v1091
        %v1114 = vunpack.c.l.s4 1983009808
        %v1115 = vunpack.c.0.s8 %v1114
        %v1116 = vlaneseq
        %v1117 = vshrl.u32 %v1116, 7
        %v1118 = vsub.s32 %v1115, %v1117
        %v1119 = vrot.slane %v1112, %v1118
        %v1120 = vcombine.low %v1108, %v1109
        %v1122 = vunpack.c.l.s4 1983009808
        %v1123 = vunpack.c.0.s8 %v1122
        %v1124 = vlaneseq
        %v1125 = vshrl.u32 %v1124, 7
        %v1126 = vsub.s32 %v1123, %v1125
        %v1127 = vrot.slane %v1120, %v1126
        %v1128 = vcombine.low %v1100, %v1107
        %v1130 = vunpack.c.l.s4 1983009808
        %v1131 = vunpack.c.0.s8 %v1130
        %v1132 = vlaneseq
        %v1133 = vshrl.u32 %v1132, 7
        %v1134 = vsub.s32 %v1131, %v1133
        %v1135 = vrot.slane %v1128, %v1134
        %v1136 = vcombine.low %v1110, %v1111
        %v1138 = vunpack.c.l.s4 1983009808
        %v1139 = vunpack.c.0.s8 %v1138
        %v1140 = vlaneseq
        %v1141 = vshrl.u32 %v1140, 7
        %v1142 = vsub.s32 %v1139, %v1141
        %v1143 = vrot.slane %v1136, %v1142
        %v1144 = vcombine.low %v1119, %v1127
        %v1145 = vcombine.high %v1119, %v1127
        %v1147 = vunpack.c.l.s4 1934713408
        %v1148 = vunpack.c.0.s8 %v1147
        %v1149 = vlaneseq
        %v1150 = vshrl.u32 %v1149, 7
        %v1151 = vsub.s32 %v1148, %v1150
        %v1152 = vrot.slane %v1144, %v1151
        %v1154 = vunpack.c.l.s4 1934713408
        %v1155 = vunpack.c.0.s8 %v1154
        %v1156 = vlaneseq
        %v1157 = vshrl.u32 %v1156, 7
        %v1158 = vsub.s32 %v1155, %v1157
        %v1159 = vrot.slane %v1145, %v1158
        %v1160 = vcombine.low %v1135, %v1143
        %v1161 = vcombine.high %v1135, %v1143
        %v1163 = vunpack.c.l.s4 1934713408
        %v1164 = vunpack.c.0.s8 %v1163
        %v1165 = vlaneseq
        %v1166 = vshrl.u32 %v1165, 7
        %v1167 = vsub.s32 %v1164, %v1166
        %v1168 = vrot.slane %v1160, %v1167
        %v1170 = vunpack.c.l.s4 1934713408
        %v1171 = vunpack.c.0.s8 %v1170
        %v1172 = vlaneseq
        %v1173 = vshrl.u32 %v1172, 7
        %v1174 = vsub.s32 %v1171, %v1173
        %v1175 = vrot.slane %v1161, %v1174
        %v1176 = vcombine.low %v1152, %v1168
        %v1177 = vcombine.high %v1152, %v1168
        %v1178 = vcombine.low %v1159, %v1175
        %v1179 = vcombine.high %v1159, %v1175
        %v1180 = vpack.c.bf16 %v1176, %v1176
        %v1181 = vpack.c.bf16 %v1177, %v1177
        %v1182 = vpack.c.bf16 %v1178, %v1178
        %v1183 = vpack.c.bf16 %v1179, %v1179
        %vm1184 = vcmask 64512
        %v1186 = vsel %vm1184, %v1180, 0
        %v1189 = vsel %vm1184, %v953, 0
        %1191 = vmatprep.subr.bf16.mxu0 0
        %1192 = vmatpush1.bf16.xpose.msra.mxu0 %v1189
        %1193 = vmatprep.subr.bf16.mxu0 0
        %1194 = vmatpush1.bf16.xpose.msra.mxu0 0
        %1195 = vmatprep.subr.bf16.mxu0 0
        %1196 = vmatpush1.bf16.xpose.msra.mxu0 0
        %1197 = vmatprep.subr.bf16.mxu0 0
        %1198 = vmatpush1.bf16.xpose.msra.mxu0 0
        %1199 = vmatprep.subr.bf16.mxu0 0
        %1200 = vmatpush1.bf16.xpose.msra.mxu0 0
        %1201 = vmatprep.subr.bf16.mxu0 0
        %1202 = vmatpush1.bf16.xpose.msra.mxu0 0
        %1203 = vmatprep.subr.bf16.mxu0 0
        %1204 = vmatpush1.bf16.xpose.msra.mxu0 0
        %1205 = vmatprep.subr.bf16.mxu0 0
        %1206 = vmatpush1.bf16.xpose.msra.mxu0 0
        %1207 = vmatprep.subr.bf16.mxu0 0
        %1208 = vmatpush1.bf16.xpose.msra.mxu0 0
        %1209 = vmatprep.subr.bf16.mxu0 0
        %1210 = vmatpush1.bf16.xpose.msra.mxu0 0
        %1211 = vmatprep.subr.bf16.mxu0 0
        %1212 = vmatpush1.bf16.xpose.msra.mxu0 0
        %1213 = vmatprep.subr.bf16.mxu0 0
        %1214 = vmatpush1.bf16.xpose.msra.mxu0 0
        %1215 = vmatprep.subr.bf16.mxu0 0
        %1216 = vmatpush1.bf16.xpose.msra.mxu0 0
        %1217 = vmatprep.subr.bf16.mxu0 0
        %1218 = vmatpush1.bf16.xpose.msra.mxu0 0
        %1219 = vmatprep.subr.bf16.mxu0 0
        %1220 = vmatpush1.bf16.xpose.msra.mxu0 0
        %1221 = vmatprep.subr.bf16.mxu0 0
        %1222 = vmatpush1.bf16.xpose.msra.mxu0 0
        %1223 = vmatprep.mubr.bf16.mxu0 0
        %1224 = vmatmul.mubr.bf16.gmra.mrb[0].mxu0 %v1186
        %v1225 = vpop.f32.mrb[0].mxu0
        %v1226 = vadd.f32 %v950, %v1225
        %v1227 = vpop.f32.mrb[0].mxu0
        %v1228 = vpop.f32.mrb[0].mxu0
        %v1229 = vpop.f32.mrb[0].mxu0
        %1230 = vdwg.mxu0
        %v1232 = vsel %vm1184, %v1181, 0
        %v1235 = vsel %vm1184, %v954, 0
        %1237 = vmatprep.subr.bf16.mxu0 0
        %1238 = vmatpush1.bf16.xpose.msra.mxu0 %v1235
        %1239 = vmatprep.subr.bf16.mxu0 0
        %1240 = vmatpush1.bf16.xpose.msra.mxu0 0
        %1241 = vmatprep.subr.bf16.mxu0 0
        %1242 = vmatpush1.bf16.xpose.msra.mxu0 0
        %1243 = vmatprep.subr.bf16.mxu0 0
        %1244 = vmatpush1.bf16.xpose.msra.mxu0 0
        %1245 = vmatprep.subr.bf16.mxu0 0
        %1246 = vmatpush1.bf16.xpose.msra.mxu0 0
        %1247 = vmatprep.subr.bf16.mxu0 0
        %1248 = vmatpush1.bf16.xpose.msra.mxu0 0
        %1249 = vmatprep.subr.bf16.mxu0 0
        %1250 = vmatpush1.bf16.xpose.msra.mxu0 0
        %1251 = vmatprep.subr.bf16.mxu0 0
        %1252 = vmatpush1.bf16.xpose.msra.mxu0 0
        %1253 = vmatprep.subr.bf16.mxu0 0
        %1254 = vmatpush1.bf16.xpose.msra.mxu0 0
        %1255 = vmatprep.subr.bf16.mxu0 0
        %1256 = vmatpush1.bf16.xpose.msra.mxu0 0
        %1257 = vmatprep.subr.bf16.mxu0 0
        %1258 = vmatpush1.bf16.xpose.msra.mxu0 0
        %1259 = vmatprep.subr.bf16.mxu0 0
        %1260 = vmatpush1.bf16.xpose.msra.mxu0 0
        %1261 = vmatprep.subr.bf16.mxu0 0
        %1262 = vmatpush1.bf16.xpose.msra.mxu0 0
        %1263 = vmatprep.subr.bf16.mxu0 0
        %1264 = vmatpush1.bf16.xpose.msra.mxu0 0
        %1265 = vmatprep.subr.bf16.mxu0 0
        %1266 = vmatpush1.bf16.xpose.msra.mxu0 0
        %1267 = vmatprep.subr.bf16.mxu0 0
        %1268 = vmatpush1.bf16.xpose.msra.mxu0 0
        %1269 = vmatprep.mubr.bf16.mxu0 0
        %1270 = vmatmul.mubr.bf16.gmra.mrb[0].mxu0 %v1232
        %v1271 = vpop.f32.mrb[0].mxu0
        %v1272 = vadd.f32 %v950, %v1271
        %v1273 = vpop.f32.mrb[0].mxu0
        %v1274 = vpop.f32.mrb[0].mxu0
        %v1275 = vpop.f32.mrb[0].mxu0
        %1276 = vdwg.mxu0
        %v1278 = vsel %vm1184, %v1182, 0
        %v1281 = vsel %vm1184, %v955, 0
        %1283 = vmatprep.subr.bf16.mxu0 0
        %1284 = vmatpush1.bf16.xpose.msra.mxu0 %v1281
        %1285 = vmatprep.subr.bf16.mxu0 0
        %1286 = vmatpush1.bf16.xpose.msra.mxu0 0
        %1287 = vmatprep.subr.bf16.mxu0 0
        %1288 = vmatpush1.bf16.xpose.msra.mxu0 0
        %1289 = vmatprep.subr.bf16.mxu0 0
        %1290 = vmatpush1.bf16.xpose.msra.mxu0 0
        %1291 = vmatprep.subr.bf16.mxu0 0
        %1292 = vmatpush1.bf16.xpose.msra.mxu0 0
        %1293 = vmatprep.subr.bf16.mxu0 0
        %1294 = vmatpush1.bf16.xpose.msra.mxu0 0
        %1295 = vmatprep.subr.bf16.mxu0 0
        %1296 = vmatpush1.bf16.xpose.msra.mxu0 0
        %1297 = vmatprep.subr.bf16.mxu0 0
        %1298 = vmatpush1.bf16.xpose.msra.mxu0 0
        %1299 = vmatprep.subr.bf16.mxu0 0
        %1300 = vmatpush1.bf16.xpose.msra.mxu0 0
        %1301 = vmatprep.subr.bf16.mxu0 0
        %1302 = vmatpush1.bf16.xpose.msra.mxu0 0
        %1303 = vmatprep.subr.bf16.mxu0 0
        %1304 = vmatpush1.bf16.xpose.msra.mxu0 0
        %1305 = vmatprep.subr.bf16.mxu0 0
        %1306 = vmatpush1.bf16.xpose.msra.mxu0 0
        %1307 = vmatprep.subr.bf16.mxu0 0
        %1308 = vmatpush1.bf16.xpose.msra.mxu0 0
        %1309 = vmatprep.subr.bf16.mxu0 0
        %1310 = vmatpush1.bf16.xpose.msra.mxu0 0
        %1311 = vmatprep.subr.bf16.mxu0 0
        %1312 = vmatpush1.bf16.xpose.msra.mxu0 0
        %1313 = vmatprep.subr.bf16.mxu0 0
        %1314 = vmatpush1.bf16.xpose.msra.mxu0 0
        %1315 = vmatprep.mubr.bf16.mxu0 0
        %1316 = vmatmul.mubr.bf16.gmra.mrb[0].mxu0 %v1278
        %v1317 = vpop.f32.mrb[0].mxu0
        %v1318 = vadd.f32 %v950, %v1317
        %v1319 = vpop.f32.mrb[0].mxu0
        %v1320 = vpop.f32.mrb[0].mxu0
        %v1321 = vpop.f32.mrb[0].mxu0
        %1322 = vdwg.mxu0
        %v1324 = vsel %vm1184, %v1183, 0
        %v1327 = vsel %vm1184, %v956, 0
        %1329 = vmatprep.subr.bf16.mxu0 0
        %1330 = vmatpush1.bf16.xpose.msra.mxu0 %v1327
        %1331 = vmatprep.subr.bf16.mxu0 0
        %1332 = vmatpush1.bf16.xpose.msra.mxu0 0
        %1333 = vmatprep.subr.bf16.mxu0 0
        %1334 = vmatpush1.bf16.xpose.msra.mxu0 0
        %1335 = vmatprep.subr.bf16.mxu0 0
        %1336 = vmatpush1.bf16.xpose.msra.mxu0 0
        %1337 = vmatprep.subr.bf16.mxu0 0
        %1338 = vmatpush1.bf16.xpose.msra.mxu0 0
        %1339 = vmatprep.subr.bf16.mxu0 0
        %1340 = vmatpush1.bf16.xpose.msra.mxu0 0
        %1341 = vmatprep.subr.bf16.mxu0 0
        %1342 = vmatpush1.bf16.xpose.msra.mxu0 0
        %1343 = vmatprep.subr.bf16.mxu0 0
        %1344 = vmatpush1.bf16.xpose.msra.mxu0 0
        %1345 = vmatprep.subr.bf16.mxu0 0
        %1346 = vmatpush1.bf16.xpose.msra.mxu0 0
        %1347 = vmatprep.subr.bf16.mxu0 0
        %1348 = vmatpush1.bf16.xpose.msra.mxu0 0
        %1349 = vmatprep.subr.bf16.mxu0 0
        %1350 = vmatpush1.bf16.xpose.msra.mxu0 0
        %1351 = vmatprep.subr.bf16.mxu0 0
        %1352 = vmatpush1.bf16.xpose.msra.mxu0 0
        %1353 = vmatprep.subr.bf16.mxu0 0
        %1354 = vmatpush1.bf16.xpose.msra.mxu0 0
        %1355 = vmatprep.subr.bf16.mxu0 0
        %1356 = vmatpush1.bf16.xpose.msra.mxu0 0
        %1357 = vmatprep.subr.bf16.mxu0 0
        %1358 = vmatpush1.bf16.xpose.msra.mxu0 0
        %1359 = vmatprep.subr.bf16.mxu0 0
        %1360 = vmatpush1.bf16.xpose.msra.mxu0 0
        %1361 = vmatprep.mubr.bf16.mxu0 0
        %1362 = vmatmul.mubr.bf16.gmra.mrb[0].mxu0 %v1324
        %v1363 = vpop.f32.mrb[0].mxu0
        %v1364 = vadd.f32 %v950, %v1363
        %v1365 = vpop.f32.mrb[0].mxu0
        %v1366 = vpop.f32.mrb[0].mxu0
        %v1367 = vpop.f32.mrb[0].mxu0
        %1368 = vdwg.mxu0
        %v1369 = vsel %vm1184, %v1226, -inf
        %1370 = vmax.xlane.f32.xlu0 %v1369
        %v1371 = vpop.xlane.xlu0 %1370
        %v1372 = vsel %vm1184, %v1272, -inf
        %1373 = vmax.xlane.f32.xlu0 %v1372
        %v1374 = vpop.xlane.xlu0 %1373
        %v1375 = vsel %vm1184, %v1318, -inf
        %1376 = vmax.xlane.f32.xlu0 %v1375
        %v1377 = vpop.xlane.xlu0 %1376
        %v1378 = vsel %vm1184, %v1364, -inf
        %1379 = vmax.xlane.f32.xlu0 %v1378
        %v1380 = vpop.xlane.xlu0 %1379
        %v1381 = vsub.f32 %v1226, %v1371
        %v1382 = vsub.f32 %v1272, %v1374
        %v1383 = vsub.f32 %v1318, %v1377
        %v1384 = vsub.f32 %v1364, %v1380
        %v1385 = vmul.f32 %v1381, 1.442695
        %v1386 = vpow.pop %v1385
        %v1387 = vmul.f32 %v1382, 1.442695
        %v1388 = vpow.pop %v1387
        %v1389 = vmul.f32 %v1383, 1.442695
        %v1390 = vpow.pop %v1389
        %v1391 = vmul.f32 %v1384, 1.442695
        %v1392 = vpow.pop %v1391
        %v1393 = vsel %vm1184, %v1386, 0.0
        %1394 = vadd.xlane.f32.xlu0 %v1393
        %v1395 = vpop.xlane.xlu0 %1394
        %v1396 = vsel %vm1184, %v1388, 0.0
        %1397 = vadd.xlane.f32.xlu0 %v1396
        %v1398 = vpop.xlane.xlu0 %1397
        %v1399 = vsel %vm1184, %v1390, 0.0
        %1400 = vadd.xlane.f32.xlu0 %v1399
        %v1401 = vpop.xlane.xlu0 %1400
        %v1402 = vsel %vm1184, %v1392, 0.0
        %1403 = vadd.xlane.f32.xlu0 %v1402
        %v1404 = vpop.xlane.xlu0 %1403
        %v1405 = vrcp.pop %v1395
        %v1406 = vrcp.pop %v1398
        %v1407 = vrcp.pop %v1401
        %v1408 = vrcp.pop %v1404
        %v1409 = vmul.f32 %v1386, %v1405
        %v1410 = vmul.f32 %v1388, %v1406
        %v1411 = vmul.f32 %v1390, %v1407
        %v1412 = vmul.f32 %v1392, %v1408
        %v1413 = vpack.c.bf16 %v1409, %v1409
        %v1414 = vpack.c.bf16 %v1410, %v1410
        %v1415 = vpack.c.bf16 %v1411, %v1411
        %v1416 = vpack.c.bf16 %v1412, %v1412
        %v1418 = vsel %vm1184, %v1413, 0
        %vm1420 = vcmask 1043456
        %v1422 = vsel %vm1420, %v957, 0
        %1424 = vmatprep.subr.bf16.mxu0 0
        %1425 = vmatpush1.bf16.msra.mxu0 %v1422
        %1426 = vmatprep.subr.bf16.mxu0 0
        %1427 = vmatpush1.bf16.msra.mxu0 0
        %1428 = vmatprep.subr.bf16.mxu0 0
        %1429 = vmatpush1.bf16.msra.mxu0 0
        %1430 = vmatprep.subr.bf16.mxu0 0
        %1431 = vmatpush1.bf16.msra.mxu0 0
        %1432 = vmatprep.subr.bf16.mxu0 0
        %1433 = vmatpush1.bf16.msra.mxu0 0
        %1434 = vmatprep.subr.bf16.mxu0 0
        %1435 = vmatpush1.bf16.msra.mxu0 0
        %1436 = vmatprep.subr.bf16.mxu0 0
        %1437 = vmatpush1.bf16.msra.mxu0 0
        %1438 = vmatprep.subr.bf16.mxu0 0
        %1439 = vmatpush1.bf16.msra.mxu0 0
        %1440 = vmatprep.subr.bf16.mxu0 0
        %1441 = vmatpush1.bf16.msra.mxu0 0
        %1442 = vmatprep.subr.bf16.mxu0 0
        %1443 = vmatpush1.bf16.msra.mxu0 0
        %1444 = vmatprep.subr.bf16.mxu0 0
        %1445 = vmatpush1.bf16.msra.mxu0 0
        %1446 = vmatprep.subr.bf16.mxu0 0
        %1447 = vmatpush1.bf16.msra.mxu0 0
        %1448 = vmatprep.subr.bf16.mxu0 0
        %1449 = vmatpush1.bf16.msra.mxu0 0
        %1450 = vmatprep.subr.bf16.mxu0 0
        %1451 = vmatpush1.bf16.msra.mxu0 0
        %1452 = vmatprep.subr.bf16.mxu0 0
        %1453 = vmatpush1.bf16.msra.mxu0 0
        %1454 = vmatprep.subr.bf16.mxu0 0
        %1455 = vmatpush1.bf16.msra.mxu0 0
        %1456 = vmatprep.mubr.bf16.mxu0 0
        %1457 = vmatmul.mubr.bf16.gmra.mrb[0].mxu0 %v1418
        %v1458 = vpop.f32.mrb[0].mxu0
        %v1459 = vadd.f32 0.0, %v1458
        %v1460 = vpop.f32.mrb[0].mxu0
        %v1461 = vpop.f32.mrb[0].mxu0
        %v1462 = vpop.f32.mrb[0].mxu0
        %1463 = vdwg.mxu0
        %v1465 = vsel %vm1184, %v1414, 0
        %v1468 = vsel %vm1420, %v958, 0
        %1470 = vmatprep.subr.bf16.mxu0 0
        %1471 = vmatpush1.bf16.msra.mxu0 %v1468
        %1472 = vmatprep.subr.bf16.mxu0 0
        %1473 = vmatpush1.bf16.msra.mxu0 0
        %1474 = vmatprep.subr.bf16.mxu0 0
        %1475 = vmatpush1.bf16.msra.mxu0 0
        %1476 = vmatprep.subr.bf16.mxu0 0
        %1477 = vmatpush1.bf16.msra.mxu0 0
        %1478 = vmatprep.subr.bf16.mxu0 0
        %1479 = vmatpush1.bf16.msra.mxu0 0
        %1480 = vmatprep.subr.bf16.mxu0 0
        %1481 = vmatpush1.bf16.msra.mxu0 0
        %1482 = vmatprep.subr.bf16.mxu0 0
        %1483 = vmatpush1.bf16.msra.mxu0 0
        %1484 = vmatprep.subr.bf16.mxu0 0
        %1485 = vmatpush1.bf16.msra.mxu0 0
        %1486 = vmatprep.subr.bf16.mxu0 0
        %1487 = vmatpush1.bf16.msra.mxu0 0
        %1488 = vmatprep.subr.bf16.mxu0 0
        %1489 = vmatpush1.bf16.msra.mxu0 0
        %1490 = vmatprep.subr.bf16.mxu0 0
        %1491 = vmatpush1.bf16.msra.mxu0 0
        %1492 = vmatprep.subr.bf16.mxu0 0
        %1493 = vmatpush1.bf16.msra.mxu0 0
        %1494 = vmatprep.subr.bf16.mxu0 0
        %1495 = vmatpush1.bf16.msra.mxu0 0
        %1496 = vmatprep.subr.bf16.mxu0 0
        %1497 = vmatpush1.bf16.msra.mxu0 0
        %1498 = vmatprep.subr.bf16.mxu0 0
        %1499 = vmatpush1.bf16.msra.mxu0 0
        %1500 = vmatprep.subr.bf16.mxu0 0
        %1501 = vmatpush1.bf16.msra.mxu0 0
        %1502 = vmatprep.mubr.bf16.mxu0 0
        %1503 = vmatmul.mubr.bf16.gmra.mrb[0].mxu0 %v1465
        %v1504 = vpop.f32.mrb[0].mxu0
        %v1505 = vadd.f32 0.0, %v1504
        %v1506 = vpop.f32.mrb[0].mxu0
        %v1507 = vpop.f32.mrb[0].mxu0
        %v1508 = vpop.f32.mrb[0].mxu0
        %1509 = vdwg.mxu0
        %v1511 = vsel %vm1184, %v1415, 0
        %v1514 = vsel %vm1420, %v959, 0
        %1516 = vmatprep.subr.bf16.mxu0 0
        %1517 = vmatpush1.bf16.msra.mxu0 %v1514
        %1518 = vmatprep.subr.bf16.mxu0 0
        %1519 = vmatpush1.bf16.msra.mxu0 0
        %1520 = vmatprep.subr.bf16.mxu0 0
        %1521 = vmatpush1.bf16.msra.mxu0 0
        %1522 = vmatprep.subr.bf16.mxu0 0
        %1523 = vmatpush1.bf16.msra.mxu0 0
        %1524 = vmatprep.subr.bf16.mxu0 0
        %1525 = vmatpush1.bf16.msra.mxu0 0
        %1526 = vmatprep.subr.bf16.mxu0 0
        %1527 = vmatpush1.bf16.msra.mxu0 0
        %1528 = vmatprep.subr.bf16.mxu0 0
        %1529 = vmatpush1.bf16.msra.mxu0 0
        %1530 = vmatprep.subr.bf16.mxu0 0
        %1531 = vmatpush1.bf16.msra.mxu0 0
        %1532 = vmatprep.subr.bf16.mxu0 0
        %1533 = vmatpush1.bf16.msra.mxu0 0
        %1534 = vmatprep.subr.bf16.mxu0 0
        %1535 = vmatpush1.bf16.msra.mxu0 0
        %1536 = vmatprep.subr.bf16.mxu0 0
        %1537 = vmatpush1.bf16.msra.mxu0 0
        %1538 = vmatprep.subr.bf16.mxu0 0
        %1539 = vmatpush1.bf16.msra.mxu0 0
        %1540 = vmatprep.subr.bf16.mxu0 0
        %1541 = vmatpush1.bf16.msra.mxu0 0
        %1542 = vmatprep.subr.bf16.mxu0 0
        %1543 = vmatpush1.bf16.msra.mxu0 0
        %1544 = vmatprep.subr.bf16.mxu0 0
        %1545 = vmatpush1.bf16.msra.mxu0 0
        %1546 = vmatprep.subr.bf16.mxu0 0
        %1547 = vmatpush1.bf16.msra.mxu0 0
        %1548 = vmatprep.mubr.bf16.mxu0 0
        %1549 = vmatmul.mubr.bf16.gmra.mrb[0].mxu0 %v1511
        %v1550 = vpop.f32.mrb[0].mxu0
        %v1551 = vadd.f32 0.0, %v1550
        %v1552 = vpop.f32.mrb[0].mxu0
        %v1553 = vpop.f32.mrb[0].mxu0
        %v1554 = vpop.f32.mrb[0].mxu0
        %1555 = vdwg.mxu0
        %v1557 = vsel %vm1184, %v1416, 0
        %v1560 = vsel %vm1420, %v960, 0
        %1562 = vmatprep.subr.bf16.mxu0 0
        %1563 = vmatpush1.bf16.msra.mxu0 %v1560
        %1564 = vmatprep.subr.bf16.mxu0 0
        %1565 = vmatpush1.bf16.msra.mxu0 0
        %1566 = vmatprep.subr.bf16.mxu0 0
        %1567 = vmatpush1.bf16.msra.mxu0 0
        %1568 = vmatprep.subr.bf16.mxu0 0
        %1569 = vmatpush1.bf16.msra.mxu0 0
        %1570 = vmatprep.subr.bf16.mxu0 0
        %1571 = vmatpush1.bf16.msra.mxu0 0
        %1572 = vmatprep.subr.bf16.mxu0 0
        %1573 = vmatpush1.bf16.msra.mxu0 0
        %1574 = vmatprep.subr.bf16.mxu0 0
        %1575 = vmatpush1.bf16.msra.mxu0 0
        %1576 = vmatprep.subr.bf16.mxu0 0
        %1577 = vmatpush1.bf16.msra.mxu0 0
        %1578 = vmatprep.subr.bf16.mxu0 0
        %1579 = vmatpush1.bf16.msra.mxu0 0
        %1580 = vmatprep.subr.bf16.mxu0 0
        %1581 = vmatpush1.bf16.msra.mxu0 0
        %1582 = vmatprep.subr.bf16.mxu0 0
        %1583 = vmatpush1.bf16.msra.mxu0 0
        %1584 = vmatprep.subr.bf16.mxu0 0
        %1585 = vmatpush1.bf16.msra.mxu0 0
        %1586 = vmatprep.subr.bf16.mxu0 0
        %1587 = vmatpush1.bf16.msra.mxu0 0
        %1588 = vmatprep.subr.bf16.mxu0 0
        %1589 = vmatpush1.bf16.msra.mxu0 0
        %1590 = vmatprep.subr.bf16.mxu0 0
        %1591 = vmatpush1.bf16.msra.mxu0 0
        %1592 = vmatprep.subr.bf16.mxu0 0
        %1593 = vmatpush1.bf16.msra.mxu0 0
        %1594 = vmatprep.mubr.bf16.mxu0 0
        %1595 = vmatmul.mubr.bf16.gmra.mrb[0].mxu0 %v1557
        %v1596 = vpop.f32.mrb[0].mxu0
        %v1597 = vadd.f32 0.0, %v1596
        %v1598 = vpop.f32.mrb[0].mxu0
        %v1599 = vpop.f32.mrb[0].mxu0
        %v1600 = vpop.f32.mrb[0].mxu0
        %1601 = vdwg.mxu0
        %v1602 = vcombine.low %v1459, %v1551
        %v1603 = vcombine.high %v1459, %v1551
        %v1605 = vunpack.c.l.s4 1983009808
        %v1606 = vunpack.c.0.s8 %v1605
        %v1607 = vlaneseq
        %v1608 = vshrl.u32 %v1607, 7
        %v1609 = vsub.s32 %v1606, %v1608
        %v1610 = vrot.slane %v1602, %v1609
        %v1612 = vunpack.c.l.s4 1983009808
        %v1613 = vunpack.c.0.s8 %v1612
        %v1614 = vlaneseq
        %v1615 = vshrl.u32 %v1614, 7
        %v1616 = vsub.s32 %v1613, %v1615
        %v1617 = vrot.slane %v1603, %v1616
        %v1618 = vcombine.low %v1505, %v1597
        %v1619 = vcombine.high %v1505, %v1597
        %v1621 = vunpack.c.l.s4 1983009808
        %v1622 = vunpack.c.0.s8 %v1621
        %v1623 = vlaneseq
        %v1624 = vshrl.u32 %v1623, 7
        %v1625 = vsub.s32 %v1622, %v1624
        %v1626 = vrot.slane %v1618, %v1625
        %v1628 = vunpack.c.l.s4 1983009808
        %v1629 = vunpack.c.0.s8 %v1628
        %v1630 = vlaneseq
        %v1631 = vshrl.u32 %v1630, 7
        %v1632 = vsub.s32 %v1629, %v1631
        %v1633 = vrot.slane %v1619, %v1632
        %v1634 = vcombine.low %v1610, %v1626
        %v1635 = vcombine.high %v1610, %v1626
        %v1637 = vunpack.c.l.s4 1934713408
        %v1638 = vunpack.c.0.s8 %v1637
        %v1639 = vlaneseq
        %v1640 = vshrl.u32 %v1639, 7
        %v1641 = vsub.s32 %v1638, %v1640
        %v1642 = vrot.slane %v1634, %v1641
        %v1644 = vunpack.c.l.s4 1934713408
        %v1645 = vunpack.c.0.s8 %v1644
        %v1646 = vlaneseq
        %v1647 = vshrl.u32 %v1646, 7
        %v1648 = vsub.s32 %v1645, %v1647
        %v1649 = vrot.slane %v1635, %v1648
        %v1650 = vcombine.low %v1617, %v1633
        %v1651 = vcombine.high %v1617, %v1633
        %v1653 = vunpack.c.l.s4 1934713408
        %v1654 = vunpack.c.0.s8 %v1653
        %v1655 = vlaneseq
        %v1656 = vshrl.u32 %v1655, 7
        %v1657 = vsub.s32 %v1654, %v1656
        %v1658 = vrot.slane %v1650, %v1657
        %v1660 = vunpack.c.l.s4 1934713408
        %v1661 = vunpack.c.0.s8 %v1660
        %v1662 = vlaneseq
        %v1663 = vshrl.u32 %v1662, 7
        %v1664 = vsub.s32 %v1661, %v1663
        %v1665 = vrot.slane %v1651, %v1664
        %v1666 = vcombine.high %v1642, 0.0
        %v1667 = vcombine.high %v1649, 0.0
        %v1668 = vcombine.high %v1658, 0.0
        %v1669 = vcombine.high %v1665, 0.0
        %v1670 = vcombine.low %v1642, %v1649
        %v1672 = vunpack.c.l.s4 1983009808
        %v1673 = vunpack.c.0.s8 %v1672
        %v1674 = vlaneseq
        %v1675 = vshrl.u32 %v1674, 7
        %v1676 = vsub.s32 %v1673, %v1675
        %v1677 = vrot.slane %v1670, %v1676
        %v1678 = vcombine.low %v1666, %v1667
        %v1680 = vunpack.c.l.s4 1983009808
        %v1681 = vunpack.c.0.s8 %v1680
        %v1682 = vlaneseq
        %v1683 = vshrl.u32 %v1682, 7
        %v1684 = vsub.s32 %v1681, %v1683
        %v1685 = vrot.slane %v1678, %v1684
        %v1686 = vcombine.low %v1658, %v1665
        %v1688 = vunpack.c.l.s4 1983009808
        %v1689 = vunpack.c.0.s8 %v1688
        %v1690 = vlaneseq
        %v1691 = vshrl.u32 %v1690, 7
        %v1692 = vsub.s32 %v1689, %v1691
        %v1693 = vrot.slane %v1686, %v1692
        %v1694 = vcombine.low %v1668, %v1669
        %v1696 = vunpack.c.l.s4 1983009808
        %v1697 = vunpack.c.0.s8 %v1696
        %v1698 = vlaneseq
        %v1699 = vshrl.u32 %v1698, 7
        %v1700 = vsub.s32 %v1697, %v1699
        %v1701 = vrot.slane %v1694, %v1700
        %v1702 = vcombine.low %v1677, %v1685
        %v1703 = vcombine.high %v1677, %v1685
        %v1705 = vunpack.c.l.s4 1934713408
        %v1706 = vunpack.c.0.s8 %v1705
        %v1707 = vlaneseq
        %v1708 = vshrl.u32 %v1707, 7
        %v1709 = vsub.s32 %v1706, %v1708
        %v1710 = vrot.slane %v1702, %v1709
        %v1712 = vunpack.c.l.s4 1934713408
        %v1713 = vunpack.c.0.s8 %v1712
        %v1714 = vlaneseq
        %v1715 = vshrl.u32 %v1714, 7
        %v1716 = vsub.s32 %v1713, %v1715
        %v1717 = vrot.slane %v1703, %v1716
        %v1718 = vcombine.low %v1693, %v1701
        %v1719 = vcombine.high %v1693, %v1701
        %v1721 = vunpack.c.l.s4 1934713408
        %v1722 = vunpack.c.0.s8 %v1721
        %v1723 = vlaneseq
        %v1724 = vshrl.u32 %v1723, 7
        %v1725 = vsub.s32 %v1722, %v1724
        %v1726 = vrot.slane %v1718, %v1725
        %v1728 = vunpack.c.l.s4 1934713408
        %v1729 = vunpack.c.0.s8 %v1728
        %v1730 = vlaneseq
        %v1731 = vshrl.u32 %v1730, 7
        %v1732 = vsub.s32 %v1729, %v1731
        %v1733 = vrot.slane %v1719, %v1732
        %v1734 = vcombine.low %v1710, %v1726
        %v1735 = vcombine.high %v1710, %v1726
        %v1736 = vcombine.low %v1717, %v1733
        %v1737 = vcombine.high %v1717, %v1733
        %1739 = vrot.lane.b32.xlu0 %v1735, 8
        %v1740 = vpop.permute.xlu0 %1739
        %1743 = vrot.lane.b32.xlu0 %v1736, 16
        %v1744 = vpop.permute.xlu0 %1743
        %1747 = vrot.lane.b32.xlu0 %v1737, 24
        %v1748 = vpop.permute.xlu0 %1747
        %v1750 = vsel %vm1184, %v1734, %v1740
        %vm1751 = vcmask 130048
        %v1752 = vsel %vm1751, %v1750, %v1744
        %vm1753 = vcmask 195584
        %v1754 = vsel %vm1753, %v1752, %v1748
        %v1755 = vpack.c.bf16 %v1754, %v1754
        %v1757 = vlaneseq
        %v1758 = vshrl.u32 %v1757, 7
        %v1759 = vsub.s32 0, %v1758
        %v1760 = vrot.slane %v970, %v1759
        %v1766 = vunpack.c.l.b16 %v966
        %v1767 = vunpack.c.l.b16 %v967
        %v1768 = vunpack.c.l.b16 %v968
        %v1769 = vunpack.c.l.b16 %v969
        %v1770 = vpack.c.b16 %v1767, %v1766
        %v1771 = vpack.c.b16 %v1769, %v1768
        %v1775 = vsel %vm990, %v1755, 0
        %1777 = vmatprep.subr.bf16.mxu0 0
        %1778 = vmatpush1.bf16.msra.mxu0 %v1770
        %1779 = vmatprep.subr.bf16.mxu0 0
        %1780 = vmatpush1.bf16.msra.mxu0 %v1771
        %1781 = vmatprep.subr.bf16.mxu0 0
        %1782 = vmatpush1.bf16.msra.mxu0 0
        %1783 = vmatprep.subr.bf16.mxu0 0
        %1784 = vmatpush1.bf16.msra.mxu0 0
        %1785 = vmatprep.subr.bf16.mxu0 0
        %1786 = vmatpush1.bf16.msra.mxu0 0
        %1787 = vmatprep.subr.bf16.mxu0 0
        %1788 = vmatpush1.bf16.msra.mxu0 0
        %1789 = vmatprep.subr.bf16.mxu0 0
        %1790 = vmatpush1.bf16.msra.mxu0 0
        %1791 = vmatprep.subr.bf16.mxu0 0
        %1792 = vmatpush1.bf16.msra.mxu0 0
        %1793 = vmatprep.subr.bf16.mxu0 0
        %1794 = vmatpush1.bf16.msra.mxu0 0
        %1795 = vmatprep.subr.bf16.mxu0 0
        %1796 = vmatpush1.bf16.msra.mxu0 0
        %1797 = vmatprep.subr.bf16.mxu0 0
        %1798 = vmatpush1.bf16.msra.mxu0 0
        %1799 = vmatprep.subr.bf16.mxu0 0
        %1800 = vmatpush1.bf16.msra.mxu0 0
        %1801 = vmatprep.subr.bf16.mxu0 0
        %1802 = vmatpush1.bf16.msra.mxu0 0
        %1803 = vmatprep.subr.bf16.mxu0 0
        %1804 = vmatpush1.bf16.msra.mxu0 0
        %1805 = vmatprep.subr.bf16.mxu0 0
        %1806 = vmatpush1.bf16.msra.mxu0 0
        %1807 = vmatprep.subr.bf16.mxu0 0
        %1808 = vmatpush1.bf16.msra.mxu0 0
        %1809 = vmatprep.mubr.bf16.mxu0 0
        %1810 = vmatmul.mubr.bf16.gmra.mrb[0].mxu0 %v1775
        %v1811 = vpop.f32.mrb[0].mxu0
        %v1812 = vadd.f32 %v1760, %v1811
        %v1813 = vpop.f32.mrb[0].mxu0
        %v1814 = vpop.f32.mrb[0].mxu0
        %v1815 = vpop.f32.mrb[0].mxu0
        %1816 = vdwg.mxu0
        %v1817 = vadd.f32 %v948, %v1812
        %v1818 = vld [vmem:[%s11] sm:$0x1]
        %v1819 = vld [vmem:[%s12] sm:$0x1]
        %v1820 = vsel %vm990, %v1817, 0.0
        %1821 = vadd.xlane.f32.xlu0 %v1820
        %v1822 = vpop.xlane.xlu0 %1821
        %v1823 = vrcp.pop 32.0
        %v1824 = vmul.f32 %v1822, %v1823
        %v1825 = vsub.f32 %v1817, %v1824
        %v1826 = vmul.f32 %v1825, %v1825
        %v1827 = vsel %vm990, %v1826, 0.0
        %1828 = vadd.xlane.f32.xlu0 %v1827
        %v1829 = vpop.xlane.xlu0 %1828
        %v1830 = vmul.f32 %v1829, %v1823
        %v1831 = vadd.f32 %v1830, 1e-05
        %v1832 = vrsqrt.pop %v1831
        %v1833 = vmul.f32 %v1825, %v1832
        %v1835 = vlaneseq
        %v1836 = vshrl.u32 %v1835, 7
        %v1837 = vsub.s32 0, %v1836
        %v1838 = vrot.slane %v1818, %v1837
        %v1840 = vmul.f32 %v1833, %v1838
        %v1842 = vlaneseq
        %v1843 = vshrl.u32 %v1842, 7
        %v1844 = vsub.s32 0, %v1843
        %v1845 = vrot.slane %v1819, %v1844
        %v1847 = vadd.f32 %v1840, %v1845
        %v1848 = vld [vmem:[%s931] sm:$0xf]
        %v1849 = vld [vmem:[%s931 + $0x4] sm:$0xf]
        %v1850 = vld [vmem:[%s931 + $0x8] sm:$0xf]
        %v1851 = vld [vmem:[%s931 + $0xc] sm:$0xf]
        %v1852 = vld [vmem:[%s931 + $0x10] sm:$0xf]
        %v1853 = vld [vmem:[%s931 + $0x14] sm:$0xf]
        %v1854 = vld [vmem:[%s931 + $0x18] sm:$0xf]
        %v1855 = vld [vmem:[%s931 + $0x1c] sm:$0xf]
        %v1856 = vld [vmem:[%s936] sm:$0xf]
        %v1857 = vld [vmem:[%s936 + $0x4] sm:$0xf]
        %v1858 = vld [vmem:[%s936 + $0x8] sm:$0xf]
        %v1859 = vld [vmem:[%s936 + $0xc] sm:$0xf]
        %v1860 = vld [vmem:[%s936 + $0x10] sm:$0xf]
        %v1861 = vld [vmem:[%s936 + $0x14] sm:$0xf]
        %v1862 = vld [vmem:[%s936 + $0x18] sm:$0xf]
        %v1863 = vld [vmem:[%s936 + $0x1c] sm:$0xf]
        %v1864 = vld [vmem:[%s13] sm:$0xf]
        %v1865 = vld [vmem:[%s13 + $0x4] sm:$0xf]
        %v1866 = vld [vmem:[%s13 + $0x8] sm:$0xf]
        %v1867 = vld [vmem:[%s13 + $0xc] sm:$0xf]
        %v1868 = vld [vmem:[%s14] sm:$0x1]
        %v1869 = vld [vmem:[%s15] sm:$0xf]
        %v1870 = vld [vmem:[%s15 + $0x4] sm:$0xf]
        %v1871 = vld [vmem:[%s15 + $0x8] sm:$0xf]
        %v1872 = vld [vmem:[%s15 + $0xc] sm:$0xf]
        %v1873 = vld [vmem:[%s16] sm:$0x1]
        %v1874 = vpack.c.bf16 %v1847, %v1847
        %v1876 = vlaneseq
        %v1877 = vshrl.u32 %v1876, 7
        %v1878 = vsub.s32 0, %v1877
        %v1879 = vrot.slane %v1868, %v1878
        %v1885 = vunpack.c.l.b16 %v1864
        %v1886 = vunpack.c.l.b16 %v1865
        %v1887 = vunpack.c.l.b16 %v1866
        %v1888 = vunpack.c.l.b16 %v1867
        %v1889 = vpack.c.b16 %v1886, %v1885
        %v1890 = vpack.c.b16 %v1888, %v1887
        %v1894 = vsel %vm990, %v1874, 0
        %1896 = vmatprep.subr.bf16.mxu0 0
        %1897 = vmatpush1.bf16.msra.mxu0 %v1889
        %1898 = vmatprep.subr.bf16.mxu0 0
        %1899 = vmatpush1.bf16.msra.mxu0 %v1890
        %1900 = vmatprep.subr.bf16.mxu0 0
        %1901 = vmatpush1.bf16.msra.mxu0 0
        %1902 = vmatprep.subr.bf16.mxu0 0
        %1903 = vmatpush1.bf16.msra.mxu0 0
        %1904 = vmatprep.subr.bf16.mxu0 0
        %1905 = vmatpush1.bf16.msra.mxu0 0
        %1906 = vmatprep.subr.bf16.mxu0 0
        %1907 = vmatpush1.bf16.msra.mxu0 0
        %1908 = vmatprep.subr.bf16.mxu0 0
        %1909 = vmatpush1.bf16.msra.mxu0 0
        %1910 = vmatprep.subr.bf16.mxu0 0
        %1911 = vmatpush1.bf16.msra.mxu0 0
        %1912 = vmatprep.subr.bf16.mxu0 0
        %1913 = vmatpush1.bf16.msra.mxu0 0
        %1914 = vmatprep.subr.bf16.mxu0 0
        %1915 = vmatpush1.bf16.msra.mxu0 0
        %1916 = vmatprep.subr.bf16.mxu0 0
        %1917 = vmatpush1.bf16.msra.mxu0 0
        %1918 = vmatprep.subr.bf16.mxu0 0
        %1919 = vmatpush1.bf16.msra.mxu0 0
        %1920 = vmatprep.subr.bf16.mxu0 0
        %1921 = vmatpush1.bf16.msra.mxu0 0
        %1922 = vmatprep.subr.bf16.mxu0 0
        %1923 = vmatpush1.bf16.msra.mxu0 0
        %1924 = vmatprep.subr.bf16.mxu0 0
        %1925 = vmatpush1.bf16.msra.mxu0 0
        %1926 = vmatprep.subr.bf16.mxu0 0
        %1927 = vmatpush1.bf16.msra.mxu0 0
        %1928 = vmatprep.mubr.bf16.mxu0 0
        %1929 = vmatmul.mubr.bf16.gmra.mrb[0].mxu0 %v1894
        %v1930 = vpop.f32.mrb[0].mxu0
        %v1931 = vadd.f32 %v1879, %v1930
        %v1932 = vpop.f32.mrb[0].mxu0
        %v1933 = vpop.f32.mrb[0].mxu0
        %v1934 = vpop.f32.mrb[0].mxu0
        %1935 = vdwg.mxu0
        %1937 = vrot.lane.b32.xlu0 %v1931, 120
        %v1938 = vpop.permute.xlu0 %1937
        %1940 = vrot.lane.b32.xlu0 %v1931, 112
        %v1941 = vpop.permute.xlu0 %1940
        %1943 = vrot.lane.b32.xlu0 %v1931, 104
        %v1944 = vpop.permute.xlu0 %1943
        %v1946 = vcombine.low %v1931, %v1941
        %v1947 = vcombine.high %v1931, %v1941
        %v1949 = vunpack.c.l.s4 1983009808
        %v1950 = vunpack.c.0.s8 %v1949
        %v1951 = vlaneseq
        %v1952 = vshrl.u32 %v1951, 7
        %v1953 = vsub.s32 %v1950, %v1952
        %v1954 = vrot.slane %v1946, %v1953
        %v1956 = vunpack.c.l.s4 1983009808
        %v1957 = vunpack.c.0.s8 %v1956
        %v1958 = vlaneseq
        %v1959 = vshrl.u32 %v1958, 7
        %v1960 = vsub.s32 %v1957, %v1959
        %v1961 = vrot.slane %v1947, %v1960
        %v1962 = vcombine.low %v1938, %v1944
        %v1963 = vcombine.high %v1938, %v1944
        %v1965 = vunpack.c.l.s4 1983009808
        %v1966 = vunpack.c.0.s8 %v1965
        %v1967 = vlaneseq
        %v1968 = vshrl.u32 %v1967, 7
        %v1969 = vsub.s32 %v1966, %v1968
        %v1970 = vrot.slane %v1962, %v1969
        %v1972 = vunpack.c.l.s4 1983009808
        %v1973 = vunpack.c.0.s8 %v1972
        %v1974 = vlaneseq
        %v1975 = vshrl.u32 %v1974, 7
        %v1976 = vsub.s32 %v1973, %v1975
        %v1977 = vrot.slane %v1963, %v1976
        %v1978 = vcombine.low %v1954, %v1970
        %v1979 = vcombine.high %v1954, %v1970
        %v1981 = vunpack.c.l.s4 1934713408
        %v1982 = vunpack.c.0.s8 %v1981
        %v1983 = vlaneseq
        %v1984 = vshrl.u32 %v1983, 7
        %v1985 = vsub.s32 %v1982, %v1984
        %v1986 = vrot.slane %v1978, %v1985
        %v1988 = vunpack.c.l.s4 1934713408
        %v1989 = vunpack.c.0.s8 %v1988
        %v1990 = vlaneseq
        %v1991 = vshrl.u32 %v1990, 7
        %v1992 = vsub.s32 %v1989, %v1991
        %v1993 = vrot.slane %v1979, %v1992
        %v1994 = vcombine.low %v1961, %v1977
        %v1995 = vcombine.high %v1961, %v1977
        %v1997 = vunpack.c.l.s4 1934713408
        %v1998 = vunpack.c.0.s8 %v1997
        %v1999 = vlaneseq
        %v2000 = vshrl.u32 %v1999, 7
        %v2001 = vsub.s32 %v1998, %v2000
        %v2002 = vrot.slane %v1994, %v2001
        %v2004 = vunpack.c.l.s4 1934713408
        %v2005 = vunpack.c.0.s8 %v2004
        %v2006 = vlaneseq
        %v2007 = vshrl.u32 %v2006, 7
        %v2008 = vsub.s32 %v2005, %v2007
        %v2009 = vrot.slane %v1995, %v2008
        %v2010 = vcombine.high %v1986, 0.0
        %v2011 = vcombine.high %v1993, 0.0
        %v2012 = vcombine.high %v2002, 0.0
        %v2013 = vcombine.high %v2009, 0.0
        %v2014 = vcombine.low %v1986, %v1993
        %v2016 = vunpack.c.l.s4 1983009808
        %v2017 = vunpack.c.0.s8 %v2016
        %v2018 = vlaneseq
        %v2019 = vshrl.u32 %v2018, 7
        %v2020 = vsub.s32 %v2017, %v2019
        %v2021 = vrot.slane %v2014, %v2020
        %v2022 = vcombine.low %v2010, %v2011
        %v2024 = vunpack.c.l.s4 1983009808
        %v2025 = vunpack.c.0.s8 %v2024
        %v2026 = vlaneseq
        %v2027 = vshrl.u32 %v2026, 7
        %v2028 = vsub.s32 %v2025, %v2027
        %v2029 = vrot.slane %v2022, %v2028
        %v2030 = vcombine.low %v2002, %v2009
        %v2032 = vunpack.c.l.s4 1983009808
        %v2033 = vunpack.c.0.s8 %v2032
        %v2034 = vlaneseq
        %v2035 = vshrl.u32 %v2034, 7
        %v2036 = vsub.s32 %v2033, %v2035
        %v2037 = vrot.slane %v2030, %v2036
        %v2038 = vcombine.low %v2012, %v2013
        %v2040 = vunpack.c.l.s4 1983009808
        %v2041 = vunpack.c.0.s8 %v2040
        %v2042 = vlaneseq
        %v2043 = vshrl.u32 %v2042, 7
        %v2044 = vsub.s32 %v2041, %v2043
        %v2045 = vrot.slane %v2038, %v2044
        %v2046 = vcombine.low %v2021, %v2029
        %v2047 = vcombine.high %v2021, %v2029
        %v2049 = vunpack.c.l.s4 1934713408
        %v2050 = vunpack.c.0.s8 %v2049
        %v2051 = vlaneseq
        %v2052 = vshrl.u32 %v2051, 7
        %v2053 = vsub.s32 %v2050, %v2052
        %v2054 = vrot.slane %v2046, %v2053
        %v2056 = vunpack.c.l.s4 1934713408
        %v2057 = vunpack.c.0.s8 %v2056
        %v2058 = vlaneseq
        %v2059 = vshrl.u32 %v2058, 7
        %v2060 = vsub.s32 %v2057, %v2059
        %v2061 = vrot.slane %v2047, %v2060
        %v2062 = vcombine.low %v2037, %v2045
        %v2063 = vcombine.high %v2037, %v2045
        %v2065 = vunpack.c.l.s4 1934713408
        %v2066 = vunpack.c.0.s8 %v2065
        %v2067 = vlaneseq
        %v2068 = vshrl.u32 %v2067, 7
        %v2069 = vsub.s32 %v2066, %v2068
        %v2070 = vrot.slane %v2062, %v2069
        %v2072 = vunpack.c.l.s4 1934713408
        %v2073 = vunpack.c.0.s8 %v2072
        %v2074 = vlaneseq
        %v2075 = vshrl.u32 %v2074, 7
        %v2076 = vsub.s32 %v2073, %v2075
        %v2077 = vrot.slane %v2063, %v2076
        %v2078 = vcombine.low %v2054, %v2070
        %v2079 = vcombine.high %v2054, %v2070
        %v2080 = vcombine.low %v2061, %v2077
        %v2081 = vcombine.high %v2061, %v2077
        %v2082 = vpack.c.bf16 %v2078, %v2078
        %v2083 = vpack.c.bf16 %v2079, %v2079
        %v2084 = vpack.c.bf16 %v2080, %v2080
        %v2085 = vpack.c.bf16 %v2081, %v2081
        %v2086 = vlaneseq
        %v2087 = vshrl.u32 %v2086, 7
        %v2088 = vsub.s32 0, %v2087
        %v2089 = vrot.slane %v952, %v2088
        %v2092 = vunpack.c.l.b16 %v1848
        %v2093 = vunpack.c.l.b16 %v1849
        %v2094 = vpack.c.b16 %v2093, %v2092
        %v2096 = vsel %vm1184, %v2082, 0
        %v2099 = vsel %vm1184, %v2094, 0
        %2101 = vmatprep.subr.bf16.mxu0 0
        %2102 = vmatpush1.bf16.xpose.msra.mxu0 %v2099
        %2103 = vmatprep.subr.bf16.mxu0 0
        %2104 = vmatpush1.bf16.xpose.msra.mxu0 0
        %2105 = vmatprep.subr.bf16.mxu0 0
        %2106 = vmatpush1.bf16.xpose.msra.mxu0 0
        %2107 = vmatprep.subr.bf16.mxu0 0
        %2108 = vmatpush1.bf16.xpose.msra.mxu0 0
        %2109 = vmatprep.subr.bf16.mxu0 0
        %2110 = vmatpush1.bf16.xpose.msra.mxu0 0
        %2111 = vmatprep.subr.bf16.mxu0 0
        %2112 = vmatpush1.bf16.xpose.msra.mxu0 0
        %2113 = vmatprep.subr.bf16.mxu0 0
        %2114 = vmatpush1.bf16.xpose.msra.mxu0 0
        %2115 = vmatprep.subr.bf16.mxu0 0
        %2116 = vmatpush1.bf16.xpose.msra.mxu0 0
        %2117 = vmatprep.subr.bf16.mxu0 0
        %2118 = vmatpush1.bf16.xpose.msra.mxu0 0
        %2119 = vmatprep.subr.bf16.mxu0 0
        %2120 = vmatpush1.bf16.xpose.msra.mxu0 0
        %2121 = vmatprep.subr.bf16.mxu0 0
        %2122 = vmatpush1.bf16.xpose.msra.mxu0 0
        %2123 = vmatprep.subr.bf16.mxu0 0
        %2124 = vmatpush1.bf16.xpose.msra.mxu0 0
        %2125 = vmatprep.subr.bf16.mxu0 0
        %2126 = vmatpush1.bf16.xpose.msra.mxu0 0
        %2127 = vmatprep.subr.bf16.mxu0 0
        %2128 = vmatpush1.bf16.xpose.msra.mxu0 0
        %2129 = vmatprep.subr.bf16.mxu0 0
        %2130 = vmatpush1.bf16.xpose.msra.mxu0 0
        %2131 = vmatprep.subr.bf16.mxu0 0
        %2132 = vmatpush1.bf16.xpose.msra.mxu0 0
        %2133 = vmatprep.mubr.bf16.mxu0 0
        %2134 = vmatmul.mubr.bf16.gmra.mrb[0].mxu0 %v2096
        %v2135 = vpop.f32.mrb[0].mxu0
        %v2136 = vadd.f32 %v2089, %v2135
        %v2137 = vpop.f32.mrb[0].mxu0
        %v2138 = vpop.f32.mrb[0].mxu0
        %v2139 = vpop.f32.mrb[0].mxu0
        %2140 = vdwg.mxu0
        %v2143 = vunpack.c.l.b16 %v1850
        %v2144 = vunpack.c.l.b16 %v1851
        %v2145 = vpack.c.b16 %v2144, %v2143
        %v2147 = vsel %vm1184, %v2083, 0
        %v2150 = vsel %vm1184, %v2145, 0
        %2152 = vmatprep.subr.bf16.mxu0 0
        %2153 = vmatpush1.bf16.xpose.msra.mxu0 %v2150
        %2154 = vmatprep.subr.bf16.mxu0 0
        %2155 = vmatpush1.bf16.xpose.msra.mxu0 0
        %2156 = vmatprep.subr.bf16.mxu0 0
        %2157 = vmatpush1.bf16.xpose.msra.mxu0 0
        %2158 = vmatprep.subr.bf16.mxu0 0
        %2159 = vmatpush1.bf16.xpose.msra.mxu0 0
        %2160 = vmatprep.subr.bf16.mxu0 0
        %2161 = vmatpush1.bf16.xpose.msra.mxu0 0
        %2162 = vmatprep.subr.bf16.mxu0 0
        %2163 = vmatpush1.bf16.xpose.msra.mxu0 0
        %2164 = vmatprep.subr.bf16.mxu0 0
        %2165 = vmatpush1.bf16.xpose.msra.mxu0 0
        %2166 = vmatprep.subr.bf16.mxu0 0
        %2167 = vmatpush1.bf16.xpose.msra.mxu0 0
        %2168 = vmatprep.subr.bf16.mxu0 0
        %2169 = vmatpush1.bf16.xpose.msra.mxu0 0
        %2170 = vmatprep.subr.bf16.mxu0 0
        %2171 = vmatpush1.bf16.xpose.msra.mxu0 0
        %2172 = vmatprep.subr.bf16.mxu0 0
        %2173 = vmatpush1.bf16.xpose.msra.mxu0 0
        %2174 = vmatprep.subr.bf16.mxu0 0
        %2175 = vmatpush1.bf16.xpose.msra.mxu0 0
        %2176 = vmatprep.subr.bf16.mxu0 0
        %2177 = vmatpush1.bf16.xpose.msra.mxu0 0
        %2178 = vmatprep.subr.bf16.mxu0 0
        %2179 = vmatpush1.bf16.xpose.msra.mxu0 0
        %2180 = vmatprep.subr.bf16.mxu0 0
        %2181 = vmatpush1.bf16.xpose.msra.mxu0 0
        %2182 = vmatprep.subr.bf16.mxu0 0
        %2183 = vmatpush1.bf16.xpose.msra.mxu0 0
        %2184 = vmatprep.mubr.bf16.mxu0 0
        %2185 = vmatmul.mubr.bf16.gmra.mrb[0].mxu0 %v2147
        %v2186 = vpop.f32.mrb[0].mxu0
        %v2187 = vadd.f32 %v2089, %v2186
        %v2188 = vpop.f32.mrb[0].mxu0
        %v2189 = vpop.f32.mrb[0].mxu0
        %v2190 = vpop.f32.mrb[0].mxu0
        %2191 = vdwg.mxu0
        %v2194 = vunpack.c.l.b16 %v1852
        %v2195 = vunpack.c.l.b16 %v1853
        %v2196 = vpack.c.b16 %v2195, %v2194
        %v2198 = vsel %vm1184, %v2084, 0
        %v2201 = vsel %vm1184, %v2196, 0
        %2203 = vmatprep.subr.bf16.mxu0 0
        %2204 = vmatpush1.bf16.xpose.msra.mxu0 %v2201
        %2205 = vmatprep.subr.bf16.mxu0 0
        %2206 = vmatpush1.bf16.xpose.msra.mxu0 0
        %2207 = vmatprep.subr.bf16.mxu0 0
        %2208 = vmatpush1.bf16.xpose.msra.mxu0 0
        %2209 = vmatprep.subr.bf16.mxu0 0
        %2210 = vmatpush1.bf16.xpose.msra.mxu0 0
        %2211 = vmatprep.subr.bf16.mxu0 0
        %2212 = vmatpush1.bf16.xpose.msra.mxu0 0
        %2213 = vmatprep.subr.bf16.mxu0 0
        %2214 = vmatpush1.bf16.xpose.msra.mxu0 0
        %2215 = vmatprep.subr.bf16.mxu0 0
        %2216 = vmatpush1.bf16.xpose.msra.mxu0 0
        %2217 = vmatprep.subr.bf16.mxu0 0
        %2218 = vmatpush1.bf16.xpose.msra.mxu0 0
        %2219 = vmatprep.subr.bf16.mxu0 0
        %2220 = vmatpush1.bf16.xpose.msra.mxu0 0
        %2221 = vmatprep.subr.bf16.mxu0 0
        %2222 = vmatpush1.bf16.xpose.msra.mxu0 0
        %2223 = vmatprep.subr.bf16.mxu0 0
        %2224 = vmatpush1.bf16.xpose.msra.mxu0 0
        %2225 = vmatprep.subr.bf16.mxu0 0
        %2226 = vmatpush1.bf16.xpose.msra.mxu0 0
        %2227 = vmatprep.subr.bf16.mxu0 0
        %2228 = vmatpush1.bf16.xpose.msra.mxu0 0
        %2229 = vmatprep.subr.bf16.mxu0 0
        %2230 = vmatpush1.bf16.xpose.msra.mxu0 0
        %2231 = vmatprep.subr.bf16.mxu0 0
        %2232 = vmatpush1.bf16.xpose.msra.mxu0 0
        %2233 = vmatprep.subr.bf16.mxu0 0
        %2234 = vmatpush1.bf16.xpose.msra.mxu0 0
        %2235 = vmatprep.mubr.bf16.mxu0 0
        %2236 = vmatmul.mubr.bf16.gmra.mrb[0].mxu0 %v2198
        %v2237 = vpop.f32.mrb[0].mxu0
        %v2238 = vadd.f32 %v2089, %v2237
        %v2239 = vpop.f32.mrb[0].mxu0
        %v2240 = vpop.f32.mrb[0].mxu0
        %v2241 = vpop.f32.mrb[0].mxu0
        %2242 = vdwg.mxu0
        %v2245 = vunpack.c.l.b16 %v1854
        %v2246 = vunpack.c.l.b16 %v1855
        %v2247 = vpack.c.b16 %v2246, %v2245
        %v2249 = vsel %vm1184, %v2085, 0
        %v2252 = vsel %vm1184, %v2247, 0
        %2254 = vmatprep.subr.bf16.mxu0 0
        %2255 = vmatpush1.bf16.xpose.msra.mxu0 %v2252
        %2256 = vmatprep.subr.bf16.mxu0 0
        %2257 = vmatpush1.bf16.xpose.msra.mxu0 0
        %2258 = vmatprep.subr.bf16.mxu0 0
        %2259 = vmatpush1.bf16.xpose.msra.mxu0 0
        %2260 = vmatprep.subr.bf16.mxu0 0
        %2261 = vmatpush1.bf16.xpose.msra.mxu0 0
        %2262 = vmatprep.subr.bf16.mxu0 0
        %2263 = vmatpush1.bf16.xpose.msra.mxu0 0
        %2264 = vmatprep.subr.bf16.mxu0 0
        %2265 = vmatpush1.bf16.xpose.msra.mxu0 0
        %2266 = vmatprep.subr.bf16.mxu0 0
        %2267 = vmatpush1.bf16.xpose.msra.mxu0 0
        %2268 = vmatprep.subr.bf16.mxu0 0
        %2269 = vmatpush1.bf16.xpose.msra.mxu0 0
        %2270 = vmatprep.subr.bf16.mxu0 0
        %2271 = vmatpush1.bf16.xpose.msra.mxu0 0
        %2272 = vmatprep.subr.bf16.mxu0 0
        %2273 = vmatpush1.bf16.xpose.msra.mxu0 0
        %2274 = vmatprep.subr.bf16.mxu0 0
        %2275 = vmatpush1.bf16.xpose.msra.mxu0 0
        %2276 = vmatprep.subr.bf16.mxu0 0
        %2277 = vmatpush1.bf16.xpose.msra.mxu0 0
        %2278 = vmatprep.subr.bf16.mxu0 0
        %2279 = vmatpush1.bf16.xpose.msra.mxu0 0
        %2280 = vmatprep.subr.bf16.mxu0 0
        %2281 = vmatpush1.bf16.xpose.msra.mxu0 0
        %2282 = vmatprep.subr.bf16.mxu0 0
        %2283 = vmatpush1.bf16.xpose.msra.mxu0 0
        %2284 = vmatprep.subr.bf16.mxu0 0
        %2285 = vmatpush1.bf16.xpose.msra.mxu0 0
        %2286 = vmatprep.mubr.bf16.mxu0 0
        %2287 = vmatmul.mubr.bf16.gmra.mrb[0].mxu0 %v2249
        %v2288 = vpop.f32.mrb[0].mxu0
        %v2289 = vadd.f32 %v2089, %v2288
        %v2290 = vpop.f32.mrb[0].mxu0
        %v2291 = vpop.f32.mrb[0].mxu0
        %v2292 = vpop.f32.mrb[0].mxu0
        %2293 = vdwg.mxu0
        %v2294 = vsel %vm1751, %v2136, -inf
        %2295 = vmax.xlane.f32.xlu0 %v2294
        %v2296 = vpop.xlane.xlu0 %2295
        %v2297 = vsel %vm1751, %v2187, -inf
        %2298 = vmax.xlane.f32.xlu0 %v2297
        %v2299 = vpop.xlane.xlu0 %2298
        %v2300 = vsel %vm1751, %v2238, -inf
        %2301 = vmax.xlane.f32.xlu0 %v2300
        %v2302 = vpop.xlane.xlu0 %2301
        %v2303 = vsel %vm1751, %v2289, -inf
        %2304 = vmax.xlane.f32.xlu0 %v2303
        %v2305 = vpop.xlane.xlu0 %2304
        %v2306 = vsub.f32 %v2136, %v2296
        %v2307 = vsub.f32 %v2187, %v2299
        %v2308 = vsub.f32 %v2238, %v2302
        %v2309 = vsub.f32 %v2289, %v2305
        %v2310 = vmul.f32 %v2306, 1.442695
        %v2311 = vpow.pop %v2310
        %v2312 = vmul.f32 %v2307, 1.442695
        %v2313 = vpow.pop %v2312
        %v2314 = vmul.f32 %v2308, 1.442695
        %v2315 = vpow.pop %v2314
        %v2316 = vmul.f32 %v2309, 1.442695
        %v2317 = vpow.pop %v2316
        %v2318 = vsel %vm1751, %v2311, 0.0
        %2319 = vadd.xlane.f32.xlu0 %v2318
        %v2320 = vpop.xlane.xlu0 %2319
        %v2321 = vsel %vm1751, %v2313, 0.0
        %2322 = vadd.xlane.f32.xlu0 %v2321
        %v2323 = vpop.xlane.xlu0 %2322
        %v2324 = vsel %vm1751, %v2315, 0.0
        %2325 = vadd.xlane.f32.xlu0 %v2324
        %v2326 = vpop.xlane.xlu0 %2325
        %v2327 = vsel %vm1751, %v2317, 0.0
        %2328 = vadd.xlane.f32.xlu0 %v2327
        %v2329 = vpop.xlane.xlu0 %2328
        %v2330 = vrcp.pop %v2320
        %v2331 = vrcp.pop %v2323
        %v2332 = vrcp.pop %v2326
        %v2333 = vrcp.pop %v2329
        %v2334 = vmul.f32 %v2311, %v2330
        %v2335 = vmul.f32 %v2313, %v2331
        %v2336 = vmul.f32 %v2315, %v2332
        %v2337 = vmul.f32 %v2317, %v2333
        %v2338 = vpack.c.bf16 %v2334, %v2334
        %v2339 = vpack.c.bf16 %v2335, %v2335
        %v2340 = vpack.c.bf16 %v2336, %v2336
        %v2341 = vpack.c.bf16 %v2337, %v2337
        %v2344 = vunpack.c.l.b16 %v1856
        %v2345 = vunpack.c.l.b16 %v1857
        %v2346 = vpack.c.b16 %v2345, %v2344
        %v2349 = vsel %vm1751, %v2338, 0
        %2351 = vmatprep.subr.bf16.mxu0 0
        %2352 = vmatpush1.bf16.msra.mxu0 %v2346
        %2353 = vmatprep.subr.bf16.mxu0 0
        %2354 = vmatpush1.bf16.msra.mxu0 0
        %2355 = vmatprep.subr.bf16.mxu0 0
        %2356 = vmatpush1.bf16.msra.mxu0 0
        %2357 = vmatprep.subr.bf16.mxu0 0
        %2358 = vmatpush1.bf16.msra.mxu0 0
        %2359 = vmatprep.subr.bf16.mxu0 0
        %2360 = vmatpush1.bf16.msra.mxu0 0
        %2361 = vmatprep.subr.bf16.mxu0 0
        %2362 = vmatpush1.bf16.msra.mxu0 0
        %2363 = vmatprep.subr.bf16.mxu0 0
        %2364 = vmatpush1.bf16.msra.mxu0 0
        %2365 = vmatprep.subr.bf16.mxu0 0
        %2366 = vmatpush1.bf16.msra.mxu0 0
        %2367 = vmatprep.subr.bf16.mxu0 0
        %2368 = vmatpush1.bf16.msra.mxu0 0
        %2369 = vmatprep.subr.bf16.mxu0 0
        %2370 = vmatpush1.bf16.msra.mxu0 0
        %2371 = vmatprep.subr.bf16.mxu0 0
        %2372 = vmatpush1.bf16.msra.mxu0 0
        %2373 = vmatprep.subr.bf16.mxu0 0
        %2374 = vmatpush1.bf16.msra.mxu0 0
        %2375 = vmatprep.subr.bf16.mxu0 0
        %2376 = vmatpush1.bf16.msra.mxu0 0
        %2377 = vmatprep.subr.bf16.mxu0 0
        %2378 = vmatpush1.bf16.msra.mxu0 0
        %2379 = vmatprep.subr.bf16.mxu0 0
        %2380 = vmatpush1.bf16.msra.mxu0 0
        %2381 = vmatprep.subr.bf16.mxu0 0
        %2382 = vmatpush1.bf16.msra.mxu0 0
        %2383 = vmatprep.mubr.bf16.mxu0 0
        %2384 = vmatmul.mubr.bf16.gmra.mrb[0].mxu0 %v2349
        %v2385 = vpop.f32.mrb[0].mxu0
        %v2386 = vadd.f32 0.0, %v2385
        %v2387 = vpop.f32.mrb[0].mxu0
        %v2388 = vpop.f32.mrb[0].mxu0
        %v2389 = vpop.f32.mrb[0].mxu0
        %2390 = vdwg.mxu0
        %v2393 = vunpack.c.l.b16 %v1858
        %v2394 = vunpack.c.l.b16 %v1859
        %v2395 = vpack.c.b16 %v2394, %v2393
        %v2398 = vsel %vm1751, %v2339, 0
        %2400 = vmatprep.subr.bf16.mxu0 0
        %2401 = vmatpush1.bf16.msra.mxu0 %v2395
        %2402 = vmatprep.subr.bf16.mxu0 0
        %2403 = vmatpush1.bf16.msra.mxu0 0
        %2404 = vmatprep.subr.bf16.mxu0 0
        %2405 = vmatpush1.bf16.msra.mxu0 0
        %2406 = vmatprep.subr.bf16.mxu0 0
        %2407 = vmatpush1.bf16.msra.mxu0 0
        %2408 = vmatprep.subr.bf16.mxu0 0
        %2409 = vmatpush1.bf16.msra.mxu0 0
        %2410 = vmatprep.subr.bf16.mxu0 0
        %2411 = vmatpush1.bf16.msra.mxu0 0
        %2412 = vmatprep.subr.bf16.mxu0 0
        %2413 = vmatpush1.bf16.msra.mxu0 0
        %2414 = vmatprep.subr.bf16.mxu0 0
        %2415 = vmatpush1.bf16.msra.mxu0 0
        %2416 = vmatprep.subr.bf16.mxu0 0
        %2417 = vmatpush1.bf16.msra.mxu0 0
        %2418 = vmatprep.subr.bf16.mxu0 0
        %2419 = vmatpush1.bf16.msra.mxu0 0
        %2420 = vmatprep.subr.bf16.mxu0 0
        %2421 = vmatpush1.bf16.msra.mxu0 0
        %2422 = vmatprep.subr.bf16.mxu0 0
        %2423 = vmatpush1.bf16.msra.mxu0 0
        %2424 = vmatprep.subr.bf16.mxu0 0
        %2425 = vmatpush1.bf16.msra.mxu0 0
        %2426 = vmatprep.subr.bf16.mxu0 0
        %2427 = vmatpush1.bf16.msra.mxu0 0
        %2428 = vmatprep.subr.bf16.mxu0 0
        %2429 = vmatpush1.bf16.msra.mxu0 0
        %2430 = vmatprep.subr.bf16.mxu0 0
        %2431 = vmatpush1.bf16.msra.mxu0 0
        %2432 = vmatprep.mubr.bf16.mxu0 0
        %2433 = vmatmul.mubr.bf16.gmra.mrb[0].mxu0 %v2398
        %v2434 = vpop.f32.mrb[0].mxu0
        %v2435 = vadd.f32 0.0, %v2434
        %v2436 = vpop.f32.mrb[0].mxu0
        %v2437 = vpop.f32.mrb[0].mxu0
        %v2438 = vpop.f32.mrb[0].mxu0
        %2439 = vdwg.mxu0
        %v2442 = vunpack.c.l.b16 %v1860
        %v2443 = vunpack.c.l.b16 %v1861
        %v2444 = vpack.c.b16 %v2443, %v2442
        %v2447 = vsel %vm1751, %v2340, 0
        %2449 = vmatprep.subr.bf16.mxu0 0
        %2450 = vmatpush1.bf16.msra.mxu0 %v2444
        %2451 = vmatprep.subr.bf16.mxu0 0
        %2452 = vmatpush1.bf16.msra.mxu0 0
        %2453 = vmatprep.subr.bf16.mxu0 0
        %2454 = vmatpush1.bf16.msra.mxu0 0
        %2455 = vmatprep.subr.bf16.mxu0 0
        %2456 = vmatpush1.bf16.msra.mxu0 0
        %2457 = vmatprep.subr.bf16.mxu0 0
        %2458 = vmatpush1.bf16.msra.mxu0 0
        %2459 = vmatprep.subr.bf16.mxu0 0
        %2460 = vmatpush1.bf16.msra.mxu0 0
        %2461 = vmatprep.subr.bf16.mxu0 0
        %2462 = vmatpush1.bf16.msra.mxu0 0
        %2463 = vmatprep.subr.bf16.mxu0 0
        %2464 = vmatpush1.bf16.msra.mxu0 0
        %2465 = vmatprep.subr.bf16.mxu0 0
        %2466 = vmatpush1.bf16.msra.mxu0 0
        %2467 = vmatprep.subr.bf16.mxu0 0
        %2468 = vmatpush1.bf16.msra.mxu0 0
        %2469 = vmatprep.subr.bf16.mxu0 0
        %2470 = vmatpush1.bf16.msra.mxu0 0
        %2471 = vmatprep.subr.bf16.mxu0 0
        %2472 = vmatpush1.bf16.msra.mxu0 0
        %2473 = vmatprep.subr.bf16.mxu0 0
        %2474 = vmatpush1.bf16.msra.mxu0 0
        %2475 = vmatprep.subr.bf16.mxu0 0
        %2476 = vmatpush1.bf16.msra.mxu0 0
        %2477 = vmatprep.subr.bf16.mxu0 0
        %2478 = vmatpush1.bf16.msra.mxu0 0
        %2479 = vmatprep.subr.bf16.mxu0 0
        %2480 = vmatpush1.bf16.msra.mxu0 0
        %2481 = vmatprep.mubr.bf16.mxu0 0
        %2482 = vmatmul.mubr.bf16.gmra.mrb[0].mxu0 %v2447
        %v2483 = vpop.f32.mrb[0].mxu0
        %v2484 = vadd.f32 0.0, %v2483
        %v2485 = vpop.f32.mrb[0].mxu0
        %v2486 = vpop.f32.mrb[0].mxu0
        %v2487 = vpop.f32.mrb[0].mxu0
        %2488 = vdwg.mxu0
        %v2491 = vunpack.c.l.b16 %v1862
        %v2492 = vunpack.c.l.b16 %v1863
        %v2493 = vpack.c.b16 %v2492, %v2491
        %v2496 = vsel %vm1751, %v2341, 0
        %2498 = vmatprep.subr.bf16.mxu0 0
        %2499 = vmatpush1.bf16.msra.mxu0 %v2493
        %2500 = vmatprep.subr.bf16.mxu0 0
        %2501 = vmatpush1.bf16.msra.mxu0 0
        %2502 = vmatprep.subr.bf16.mxu0 0
        %2503 = vmatpush1.bf16.msra.mxu0 0
        %2504 = vmatprep.subr.bf16.mxu0 0
        %2505 = vmatpush1.bf16.msra.mxu0 0
        %2506 = vmatprep.subr.bf16.mxu0 0
        %2507 = vmatpush1.bf16.msra.mxu0 0
        %2508 = vmatprep.subr.bf16.mxu0 0
        %2509 = vmatpush1.bf16.msra.mxu0 0
        %2510 = vmatprep.subr.bf16.mxu0 0
        %2511 = vmatpush1.bf16.msra.mxu0 0
        %2512 = vmatprep.subr.bf16.mxu0 0
        %2513 = vmatpush1.bf16.msra.mxu0 0
        %2514 = vmatprep.subr.bf16.mxu0 0
        %2515 = vmatpush1.bf16.msra.mxu0 0
        %2516 = vmatprep.subr.bf16.mxu0 0
        %2517 = vmatpush1.bf16.msra.mxu0 0
        %2518 = vmatprep.subr.bf16.mxu0 0
        %2519 = vmatpush1.bf16.msra.mxu0 0
        %2520 = vmatprep.subr.bf16.mxu0 0
        %2521 = vmatpush1.bf16.msra.mxu0 0
        %2522 = vmatprep.subr.bf16.mxu0 0
        %2523 = vmatpush1.bf16.msra.mxu0 0
        %2524 = vmatprep.subr.bf16.mxu0 0
        %2525 = vmatpush1.bf16.msra.mxu0 0
        %2526 = vmatprep.subr.bf16.mxu0 0
        %2527 = vmatpush1.bf16.msra.mxu0 0
        %2528 = vmatprep.subr.bf16.mxu0 0
        %2529 = vmatpush1.bf16.msra.mxu0 0
        %2530 = vmatprep.mubr.bf16.mxu0 0
        %2531 = vmatmul.mubr.bf16.gmra.mrb[0].mxu0 %v2496
        %v2532 = vpop.f32.mrb[0].mxu0
        %v2533 = vadd.f32 0.0, %v2532
        %v2534 = vpop.f32.mrb[0].mxu0
        %v2535 = vpop.f32.mrb[0].mxu0
        %v2536 = vpop.f32.mrb[0].mxu0
        %2537 = vdwg.mxu0
        %v2538 = vcombine.low %v2386, %v2484
        %v2539 = vcombine.high %v2386, %v2484
        %v2541 = vunpack.c.l.s4 1983009808
        %v2542 = vunpack.c.0.s8 %v2541
        %v2543 = vlaneseq
        %v2544 = vshrl.u32 %v2543, 7
        %v2545 = vsub.s32 %v2542, %v2544
        %v2546 = vrot.slane %v2538, %v2545
        %v2548 = vunpack.c.l.s4 1983009808
        %v2549 = vunpack.c.0.s8 %v2548
        %v2550 = vlaneseq
        %v2551 = vshrl.u32 %v2550, 7
        %v2552 = vsub.s32 %v2549, %v2551
        %v2553 = vrot.slane %v2539, %v2552
        %v2554 = vcombine.low %v2435, %v2533
        %v2555 = vcombine.high %v2435, %v2533
        %v2557 = vunpack.c.l.s4 1983009808
        %v2558 = vunpack.c.0.s8 %v2557
        %v2559 = vlaneseq
        %v2560 = vshrl.u32 %v2559, 7
        %v2561 = vsub.s32 %v2558, %v2560
        %v2562 = vrot.slane %v2554, %v2561
        %v2564 = vunpack.c.l.s4 1983009808
        %v2565 = vunpack.c.0.s8 %v2564
        %v2566 = vlaneseq
        %v2567 = vshrl.u32 %v2566, 7
        %v2568 = vsub.s32 %v2565, %v2567
        %v2569 = vrot.slane %v2555, %v2568
        %v2570 = vcombine.low %v2546, %v2562
        %v2571 = vcombine.high %v2546, %v2562
        %v2573 = vunpack.c.l.s4 1934713408
        %v2574 = vunpack.c.0.s8 %v2573
        %v2575 = vlaneseq
        %v2576 = vshrl.u32 %v2575, 7
        %v2577 = vsub.s32 %v2574, %v2576
        %v2578 = vrot.slane %v2570, %v2577
        %v2580 = vunpack.c.l.s4 1934713408
        %v2581 = vunpack.c.0.s8 %v2580
        %v2582 = vlaneseq
        %v2583 = vshrl.u32 %v2582, 7
        %v2584 = vsub.s32 %v2581, %v2583
        %v2585 = vrot.slane %v2571, %v2584
        %v2586 = vcombine.low %v2553, %v2569
        %v2587 = vcombine.high %v2553, %v2569
        %v2589 = vunpack.c.l.s4 1934713408
        %v2590 = vunpack.c.0.s8 %v2589
        %v2591 = vlaneseq
        %v2592 = vshrl.u32 %v2591, 7
        %v2593 = vsub.s32 %v2590, %v2592
        %v2594 = vrot.slane %v2586, %v2593
        %v2596 = vunpack.c.l.s4 1934713408
        %v2597 = vunpack.c.0.s8 %v2596
        %v2598 = vlaneseq
        %v2599 = vshrl.u32 %v2598, 7
        %v2600 = vsub.s32 %v2597, %v2599
        %v2601 = vrot.slane %v2587, %v2600
        %v2602 = vcombine.high %v2578, 0.0
        %v2603 = vcombine.high %v2585, 0.0
        %v2604 = vcombine.high %v2594, 0.0
        %v2605 = vcombine.high %v2601, 0.0
        %v2606 = vcombine.low %v2578, %v2585
        %v2608 = vunpack.c.l.s4 1983009808
        %v2609 = vunpack.c.0.s8 %v2608
        %v2610 = vlaneseq
        %v2611 = vshrl.u32 %v2610, 7
        %v2612 = vsub.s32 %v2609, %v2611
        %v2613 = vrot.slane %v2606, %v2612
        %v2614 = vcombine.low %v2602, %v2603
        %v2616 = vunpack.c.l.s4 1983009808
        %v2617 = vunpack.c.0.s8 %v2616
        %v2618 = vlaneseq
        %v2619 = vshrl.u32 %v2618, 7
        %v2620 = vsub.s32 %v2617, %v2619
        %v2621 = vrot.slane %v2614, %v2620
        %v2622 = vcombine.low %v2594, %v2601
        %v2624 = vunpack.c.l.s4 1983009808
        %v2625 = vunpack.c.0.s8 %v2624
        %v2626 = vlaneseq
        %v2627 = vshrl.u32 %v2626, 7
        %v2628 = vsub.s32 %v2625, %v2627
        %v2629 = vrot.slane %v2622, %v2628
        %v2630 = vcombine.low %v2604, %v2605
        %v2632 = vunpack.c.l.s4 1983009808
        %v2633 = vunpack.c.0.s8 %v2632
        %v2634 = vlaneseq
        %v2635 = vshrl.u32 %v2634, 7
        %v2636 = vsub.s32 %v2633, %v2635
        %v2637 = vrot.slane %v2630, %v2636
        %v2638 = vcombine.low %v2613, %v2621
        %v2639 = vcombine.high %v2613, %v2621
        %v2641 = vunpack.c.l.s4 1934713408
        %v2642 = vunpack.c.0.s8 %v2641
        %v2643 = vlaneseq
        %v2644 = vshrl.u32 %v2643, 7
        %v2645 = vsub.s32 %v2642, %v2644
        %v2646 = vrot.slane %v2638, %v2645
        %v2648 = vunpack.c.l.s4 1934713408
        %v2649 = vunpack.c.0.s8 %v2648
        %v2650 = vlaneseq
        %v2651 = vshrl.u32 %v2650, 7
        %v2652 = vsub.s32 %v2649, %v2651
        %v2653 = vrot.slane %v2639, %v2652
        %v2654 = vcombine.low %v2629, %v2637
        %v2655 = vcombine.high %v2629, %v2637
        %v2657 = vunpack.c.l.s4 1934713408
        %v2658 = vunpack.c.0.s8 %v2657
        %v2659 = vlaneseq
        %v2660 = vshrl.u32 %v2659, 7
        %v2661 = vsub.s32 %v2658, %v2660
        %v2662 = vrot.slane %v2654, %v2661
        %v2664 = vunpack.c.l.s4 1934713408
        %v2665 = vunpack.c.0.s8 %v2664
        %v2666 = vlaneseq
        %v2667 = vshrl.u32 %v2666, 7
        %v2668 = vsub.s32 %v2665, %v2667
        %v2669 = vrot.slane %v2655, %v2668
        %v2670 = vcombine.low %v2646, %v2662
        %v2671 = vcombine.high %v2646, %v2662
        %v2672 = vcombine.low %v2653, %v2669
        %v2673 = vcombine.high %v2653, %v2669
        %2675 = vrot.lane.b32.xlu0 %v2671, 8
        %v2676 = vpop.permute.xlu0 %2675
        %2679 = vrot.lane.b32.xlu0 %v2672, 16
        %v2680 = vpop.permute.xlu0 %2679
        %2683 = vrot.lane.b32.xlu0 %v2673, 24
        %v2684 = vpop.permute.xlu0 %2683
        %v2686 = vsel %vm1184, %v2670, %v2676
        %v2687 = vsel %vm1751, %v2686, %v2680
        %v2688 = vsel %vm1753, %v2687, %v2684
        %v2689 = vpack.c.bf16 %v2688, %v2688
        %v2691 = vlaneseq
        %v2692 = vshrl.u32 %v2691, 7
        %v2693 = vsub.s32 0, %v2692
        %v2694 = vrot.slane %v1873, %v2693
        %v2700 = vunpack.c.l.b16 %v1869
        %v2701 = vunpack.c.l.b16 %v1870
        %v2702 = vunpack.c.l.b16 %v1871
        %v2703 = vunpack.c.l.b16 %v1872
        %v2704 = vpack.c.b16 %v2701, %v2700
        %v2705 = vpack.c.b16 %v2703, %v2702
        %v2709 = vsel %vm990, %v2689, 0
        %2711 = vmatprep.subr.bf16.mxu0 0
        %2712 = vmatpush1.bf16.msra.mxu0 %v2704
        %2713 = vmatprep.subr.bf16.mxu0 0
        %2714 = vmatpush1.bf16.msra.mxu0 %v2705
        %2715 = vmatprep.subr.bf16.mxu0 0
        %2716 = vmatpush1.bf16.msra.mxu0 0
        %2717 = vmatprep.subr.bf16.mxu0 0
        %2718 = vmatpush1.bf16.msra.mxu0 0
        %2719 = vmatprep.subr.bf16.mxu0 0
        %2720 = vmatpush1.bf16.msra.mxu0 0
        %2721 = vmatprep.subr.bf16.mxu0 0
        %2722 = vmatpush1.bf16.msra.mxu0 0
        %2723 = vmatprep.subr.bf16.mxu0 0
        %2724 = vmatpush1.bf16.msra.mxu0 0
        %2725 = vmatprep.subr.bf16.mxu0 0
        %2726 = vmatpush1.bf16.msra.mxu0 0
        %2727 = vmatprep.subr.bf16.mxu0 0
        %2728 = vmatpush1.bf16.msra.mxu0 0
        %2729 = vmatprep.subr.bf16.mxu0 0
        %2730 = vmatpush1.bf16.msra.mxu0 0
        %2731 = vmatprep.subr.bf16.mxu0 0
        %2732 = vmatpush1.bf16.msra.mxu0 0
        %2733 = vmatprep.subr.bf16.mxu0 0
        %2734 = vmatpush1.bf16.msra.mxu0 0
        %2735 = vmatprep.subr.bf16.mxu0 0
        %2736 = vmatpush1.bf16.msra.mxu0 0
        %2737 = vmatprep.subr.bf16.mxu0 0
        %2738 = vmatpush1.bf16.msra.mxu0 0
        %2739 = vmatprep.subr.bf16.mxu0 0
        %2740 = vmatpush1.bf16.msra.mxu0 0
        %2741 = vmatprep.subr.bf16.mxu0 0
        %2742 = vmatpush1.bf16.msra.mxu0 0
        %2743 = vmatprep.mubr.bf16.mxu0 0
        %2744 = vmatmul.mubr.bf16.gmra.mrb[0].mxu0 %v2709
        %v2745 = vpop.f32.mrb[0].mxu0
        %v2746 = vadd.f32 %v2694, %v2745
        %v2747 = vpop.f32.mrb[0].mxu0
        %v2748 = vpop.f32.mrb[0].mxu0
        %v2749 = vpop.f32.mrb[0].mxu0
        %2750 = vdwg.mxu0
        %2751 = vst.msk [vmem:[%s909] sm:$0xff] %vm1751, %v2334
        %2752 = vst.msk [vmem:[%s909 + $0x8] sm:$0xff] %vm1751, %v2335
        %2753 = vst.msk [vmem:[%s909 + $0x10] sm:$0xff] %vm1751, %v2336
        %2754 = vst.msk [vmem:[%s909 + $0x18] sm:$0xff] %vm1751, %v2337
        %v2755 = vadd.f32 %v1847, %v2746
        %v2756 = vld [vmem:[%s17] sm:$0x1]
        %v2757 = vld [vmem:[%s18] sm:$0x1]
        %v2758 = vsel %vm990, %v2755, 0.0
        %2759 = vadd.xlane.f32.xlu0 %v2758
        %v2760 = vpop.xlane.xlu0 %2759
        %v2761 = vmul.f32 %v2760, %v1823
        %v2762 = vsub.f32 %v2755, %v2761
        %v2763 = vmul.f32 %v2762, %v2762
        %v2764 = vsel %vm990, %v2763, 0.0
        %2765 = vadd.xlane.f32.xlu0 %v2764
        %v2766 = vpop.xlane.xlu0 %2765
        %v2767 = vmul.f32 %v2766, %v1823
        %v2768 = vadd.f32 %v2767, 1e-05
        %v2769 = vrsqrt.pop %v2768
        %v2770 = vmul.f32 %v2762, %v2769
        %v2772 = vlaneseq
        %v2773 = vshrl.u32 %v2772, 7
        %v2774 = vsub.s32 0, %v2773
        %v2775 = vrot.slane %v2756, %v2774
        %v2777 = vmul.f32 %v2770, %v2775
        %v2779 = vlaneseq
        %v2780 = vshrl.u32 %v2779, 7
        %v2781 = vsub.s32 0, %v2780
        %v2782 = vrot.slane %v2757, %v2781
        %v2784 = vadd.f32 %v2777, %v2782
        %v2785 = vpack.c.bf16 %v2784, %v2784
        %v2786 = vld [vmem:[%s19] sm:$0xf]
        %v2787 = vld [vmem:[%s19 + $0x4] sm:$0xf]
        %v2788 = vld [vmem:[%s19 + $0x8] sm:$0xf]
        %v2789 = vld [vmem:[%s19 + $0xc] sm:$0xf]
        %v2790 = vld [vmem:[%s20] sm:$0x1]
        %v2792 = vlaneseq
        %v2793 = vshrl.u32 %v2792, 7
        %v2794 = vsub.s32 0, %v2793
        %v2795 = vrot.slane %v2790, %v2794
        %v2801 = vunpack.c.l.b16 %v2786
        %v2802 = vunpack.c.l.b16 %v2787
        %v2803 = vunpack.c.l.b16 %v2788
        %v2804 = vunpack.c.l.b16 %v2789
        %v2805 = vpack.c.b16 %v2802, %v2801
        %v2806 = vpack.c.b16 %v2804, %v2803
        %v2810 = vsel %vm990, %v2785, 0
        %2812 = vmatprep.subr.bf16.mxu0 0
        %2813 = vmatpush1.bf16.msra.mxu0 %v2805
        %2814 = vmatprep.subr.bf16.mxu0 0
        %2815 = vmatpush1.bf16.msra.mxu0 %v2806
        %2816 = vmatprep.subr.bf16.mxu0 0
        %2817 = vmatpush1.bf16.msra.mxu0 0
        %2818 = vmatprep.subr.bf16.mxu0 0
        %2819 = vmatpush1.bf16.msra.mxu0 0
        %2820 = vmatprep.subr.bf16.mxu0 0
        %2821 = vmatpush1.bf16.msra.mxu0 0
        %2822 = vmatprep.subr.bf16.mxu0 0
        %2823 = vmatpush1.bf16.msra.mxu0 0
        %2824 = vmatprep.subr.bf16.mxu0 0
        %2825 = vmatpush1.bf16.msra.mxu0 0
        %2826 = vmatprep.subr.bf16.mxu0 0
        %2827 = vmatpush1.bf16.msra.mxu0 0
        %2828 = vmatprep.subr.bf16.mxu0 0
        %2829 = vmatpush1.bf16.msra.mxu0 0
        %2830 = vmatprep.subr.bf16.mxu0 0
        %2831 = vmatpush1.bf16.msra.mxu0 0
        %2832 = vmatprep.subr.bf16.mxu0 0
        %2833 = vmatpush1.bf16.msra.mxu0 0
        %2834 = vmatprep.subr.bf16.mxu0 0
        %2835 = vmatpush1.bf16.msra.mxu0 0
        %2836 = vmatprep.subr.bf16.mxu0 0
        %2837 = vmatpush1.bf16.msra.mxu0 0
        %2838 = vmatprep.subr.bf16.mxu0 0
        %2839 = vmatpush1.bf16.msra.mxu0 0
        %2840 = vmatprep.subr.bf16.mxu0 0
        %2841 = vmatpush1.bf16.msra.mxu0 0
        %2842 = vmatprep.subr.bf16.mxu0 0
        %2843 = vmatpush1.bf16.msra.mxu0 0
        %2844 = vmatprep.mubr.bf16.mxu0 0
        %2845 = vmatmul.mubr.bf16.gmra.mrb[0].mxu0 %v2810
        %v2846 = vpop.f32.mrb[0].mxu0
        %v2847 = vadd.f32 %v2795, %v2846
        %v2848 = vpop.f32.mrb[0].mxu0
        %v2849 = vpop.f32.mrb[0].mxu0
        %v2850 = vpop.f32.mrb[0].mxu0
        %2851 = vdwg.mxu0
        %v2852 = vmax.f32 %v2847, 0.0
        %v2853 = vpack.c.bf16 %v2852, %v2852
        %v2854 = vld [vmem:[%s21] sm:$0xf]
        %v2855 = vld [vmem:[%s21 + $0x4] sm:$0xf]
        %v2856 = vld [vmem:[%s21 + $0x8] sm:$0xf]
        %v2857 = vld [vmem:[%s21 + $0xc] sm:$0xf]
        %v2858 = vld [vmem:[%s21 + $0x10] sm:$0xf]
        %v2859 = vld [vmem:[%s21 + $0x14] sm:$0xf]
        %v2860 = vld [vmem:[%s21 + $0x18] sm:$0xf]
        %v2861 = vld [vmem:[%s21 + $0x1c] sm:$0xf]
        %v2862 = vld [vmem:[%s22] sm:$0x1]
        %v2864 = vlaneseq
        %v2865 = vshrl.u32 %v2864, 7
        %v2866 = vsub.s32 0, %v2865
        %v2867 = vrot.slane %v2862, %v2866
        %v2877 = vunpack.c.l.b16 %v2854
        %v2878 = vunpack.c.l.b16 %v2855
        %v2879 = vunpack.c.l.b16 %v2856
        %v2880 = vunpack.c.l.b16 %v2857
        %v2881 = vunpack.c.l.b16 %v2858
        %v2882 = vunpack.c.l.b16 %v2859
        %v2883 = vunpack.c.l.b16 %v2860
        %v2884 = vunpack.c.l.b16 %v2861
        %v2885 = vpack.c.b16 %v2878, %v2877
        %v2886 = vpack.c.b16 %v2880, %v2879
        %v2887 = vpack.c.b16 %v2882, %v2881
        %v2888 = vpack.c.b16 %v2884, %v2883
        %vm2893 = vcmask 523264
        %v2895 = vsel %vm2893, %v2853, 0
        %2897 = vmatprep.subr.bf16.mxu0 0
        %2898 = vmatpush1.bf16.msra.mxu0 %v2885
        %2899 = vmatprep.subr.bf16.mxu0 0
        %2900 = vmatpush1.bf16.msra.mxu0 %v2886
        %2901 = vmatprep.subr.bf16.mxu0 0
        %2902 = vmatpush1.bf16.msra.mxu0 %v2887
        %2903 = vmatprep.subr.bf16.mxu0 0
        %2904 = vmatpush1.bf16.msra.mxu0 %v2888
        %2905 = vmatprep.subr.bf16.mxu0 0
        %2906 = vmatpush1.bf16.msra.mxu0 0
        %2907 = vmatprep.subr.bf16.mxu0 0
        %2908 = vmatpush1.bf16.msra.mxu0 0
        %2909 = vmatprep.subr.bf16.mxu0 0
        %2910 = vmatpush1.bf16.msra.mxu0 0
        %2911 = vmatprep.subr.bf16.mxu0 0
        %2912 = vmatpush1.bf16.msra.mxu0 0
        %2913 = vmatprep.subr.bf16.mxu0 0
        %2914 = vmatpush1.bf16.msra.mxu0 0
        %2915 = vmatprep.subr.bf16.mxu0 0
        %2916 = vmatpush1.bf16.msra.mxu0 0
        %2917 = vmatprep.subr.bf16.mxu0 0
        %2918 = vmatpush1.bf16.msra.mxu0 0
        %2919 = vmatprep.subr.bf16.mxu0 0
        %2920 = vmatpush1.bf16.msra.mxu0 0
        %2921 = vmatprep.subr.bf16.mxu0 0
        %2922 = vmatpush1.bf16.msra.mxu0 0
        %2923 = vmatprep.subr.bf16.mxu0 0
        %2924 = vmatpush1.bf16.msra.mxu0 0
        %2925 = vmatprep.subr.bf16.mxu0 0
        %2926 = vmatpush1.bf16.msra.mxu0 0
        %2927 = vmatprep.subr.bf16.mxu0 0
        %2928 = vmatpush1.bf16.msra.mxu0 0
        %2929 = vmatprep.mubr.bf16.mxu0 0
        %2930 = vmatmul.mubr.bf16.gmra.mrb[0].mxu0 %v2895
        %v2931 = vpop.f32.mrb[0].mxu0
        %v2932 = vadd.f32 %v2867, %v2931
        %v2933 = vpop.f32.mrb[0].mxu0
        %v2934 = vpop.f32.mrb[0].mxu0
        %v2935 = vpop.f32.mrb[0].mxu0
        %2936 = vdwg.mxu0
        %v2937 = vadd.f32 %v2784, %v2932
        %v2938 = vld [vmem:[%s23] sm:$0x1]
        %v2939 = vld [vmem:[%s24] sm:$0x1]
        %v2940 = vsel %vm990, %v2937, 0.0
        %2941 = vadd.xlane.f32.xlu0 %v2940
        %v2942 = vpop.xlane.xlu0 %2941
        %v2943 = vmul.f32 %v2942, %v1823
        %v2944 = vsub.f32 %v2937, %v2943
        %v2945 = vmul.f32 %v2944, %v2944
        %v2946 = vsel %vm990, %v2945, 0.0
        %2947 = vadd.xlane.f32.xlu0 %v2946
        %v2948 = vpop.xlane.xlu0 %2947
        %v2949 = vmul.f32 %v2948, %v1823
        %v2950 = vadd.f32 %v2949, 1e-05
        %v2951 = vrsqrt.pop %v2950
        %v2952 = vmul.f32 %v2944, %v2951
        %v2954 = vlaneseq
        %v2955 = vshrl.u32 %v2954, 7
        %v2956 = vsub.s32 0, %v2955
        %v2957 = vrot.slane %v2938, %v2956
        %v2959 = vmul.f32 %v2952, %v2957
        %v2961 = vlaneseq
        %v2962 = vshrl.u32 %v2961, 7
        %v2963 = vsub.s32 0, %v2962
        %v2964 = vrot.slane %v2939, %v2963
        %v2966 = vadd.f32 %v2959, %v2964
        %2967 = vst.msk [vmem:[%s902] sm:$0xff] %vm990, %v2966
        %s2968 = sand.u32 %s630, 1
        %s2969 = scalar_lea.sflag [#allocation3], %s2968
        %s2970 = sand.u32 %s630, 1
        %s2971 = smul.addr %s2970, 8
        %s2972 = scalar_lea.vmem [#allocation2], %s2971
        %s2973 = sand.u32 %s658, 1
        %s2974 = scalar_lea.sflag [#allocation5], %s2973
        %s2975 = sand.u32 %s658, 1
        %s2976 = smul.addr %s2975, 32
        %s2977 = scalar_lea.vmem [#allocation4], %s2976
        // Predicated region
        $region121: #{tpu_custom_call.1} parent=119 // pred_check
          %p2978 = pneg %p640
        $region122: #{tpu_custom_call.1} parent=119 // pred_check_branch
          %2980 = sbr.rel (%p2978) target = $region124
        $region123: #{tpu_custom_call.1} parent=119 // pred_region
          %s2982 = ssub.s32 128, 128
          %2983 = vsyncadd %s2969, %s2982
          %s2984 = sadd.s32 %s49, %s48
          %s2985 = smul.addr %s2984, 128
          %s2986 = scalar_lea.hbm %s25, %s2985
          %s2988 = sshll.u32 %s2972, 4
          %s2989 = int_to_ptr.vmem [resolvable:$true] %s2988
          %2991 = dma.vmem_to_hbm [thread:$0]  %s2989, 128, %s2986, %s2969
        $region124: #{tpu_custom_call.1} parent=119 // pred_fallthru
          _
        // Predicated region
        $region125: #{tpu_custom_call.1} parent=119 // pred_check
          %p2992 = pneg %p668
        $region126: #{tpu_custom_call.1} parent=119 // pred_check_branch
          %2994 = sbr.rel (%p2992) target = $region128
        $region127: #{tpu_custom_call.1} parent=119 // pred_region
          %s2996 = ssub.s32 512, 512
          %2997 = vsyncadd %s2974, %s2996
          %s2998 = smul.addr %s48, 4
          %s2999 = sadd.s32 %s49, %s2998
          %s3000 = smul.addr %s2999, 128
          %s3001 = scalar_lea.hbm %s26, %s3000
          %s3002 = sshll.u32 %s2977, 4
          %s3003 = int_to_ptr.vmem [resolvable:$true] %s3002
          %3008 = dma.vmem_to_hbm [thread:$0]  %s3003, 512, %s3001, %s2974, 128, 128, 8
        $region128: #{tpu_custom_call.1} parent=119 // pred_fallthru
          _
      $region120: #{tpu_custom_call.1} parent=5 // pred_fallthru
        _
      %p3009 = scmp.le.s32.totalorder 2, %s39
      // Predicated region
      $region129: #{tpu_custom_call.1} parent=5 // pred_check
        %p3010 = pneg %p3009
      $region130: #{tpu_custom_call.1} parent=5 // pred_check_branch
        %3012 = sbr.rel (%p3010) target = $region132
      $region131: #{tpu_custom_call.1} parent=5 // pred_region
        %s3013 = ssub.s32 %s39, 2
        // Predicated region
        $region133: #{tpu_custom_call.1} parent=131 // pred_check
          %p3014 = pneg %p646
        $region134: #{tpu_custom_call.1} parent=131 // pred_check_branch
          %3016 = sbr.rel (%p3014) target = $region136
        $region135: #{tpu_custom_call.1} parent=131 // pred_region
          %s3017 = sand.u32 %s631, 1
          %s3018 = scalar_lea.sflag [#allocation3], %s3017
          %s3019 = sand.u32 %s631, 1
          %s3020 = smul.addr %s3019, 8
          %s3021 = scalar_lea.vmem [#allocation2], %s3020
          %3022 = dma.done %s3018, 128
        $region136: #{tpu_custom_call.1} parent=131 // pred_fallthru
          _
        // Predicated region
        $region137: #{tpu_custom_call.1} parent=131 // pred_check
          %p3023 = pneg %p674
        $region138: #{tpu_custom_call.1} parent=131 // pred_check_branch
          %3025 = sbr.rel (%p3023) target = $region140
        $region139: #{tpu_custom_call.1} parent=131 // pred_region
          %s3026 = sand.u32 %s659, 1
          %s3027 = scalar_lea.sflag [#allocation5], %s3026
          %s3028 = sand.u32 %s659, 1
          %s3029 = smul.addr %s3028, 32
          %s3030 = scalar_lea.vmem [#allocation4], %s3029
          %3031 = dma.done %s3027, 512
        $region140: #{tpu_custom_call.1} parent=131 // pred_fallthru
          _
      $region132: #{tpu_custom_call.1} parent=5 // pred_fallthru
        _
    $region6: #{tpu_custom_call.1} parent=1 // loop_footer
      %s43 = sadd.s32 1, %s39
    $region7: #{tpu_custom_call.1} parent=1 // loop_footer_branch
      %38 = sbr.rel target = $region3
    $region8: #{tpu_custom_call.1} parent=1 // loop_exit
      _
    %3032 = vsyncpa [#allocation3], 1
    %s3033 = scalar_lea.sflag [#allocation3], 1
    %3034 = vsyncpa %s3033, 1
    %3035 = vsyncpa [#allocation5], 1
    %s3036 = scalar_lea.sflag [#allocation5], 1
    %3037 = vsyncpa %s3036, 1

</llo_original>
